<compile_context>
chip_gen: v7x
topology: tpu7x:2x2x1
jax: 0.10.0
libtpu: 0.0.40
codegen_flags: <defaults>
</compile_context>

<pallas_src>
import jax
import jax.numpy as jnp
from jax.experimental import pallas as pl
from jax.experimental.pallas import tpu as pltpu

_DILATIONS = (1, 2, 4, 8, 16)
_PAD = max(_DILATIONS)  # halo needed by the largest dilation


# -----------------------------------------------------------------------------
# Fused kernel: (im2col'd) stride-2 conv  ->  5 dilated convs + prefix sums +
# concat + BN(eval) + PReLU, one batch sample per grid step.
# -----------------------------------------------------------------------------
def _stride_esp_kernel(xcol_ref, wc1_ref, wfd_ref, shift_ref, alpha_ref,
                       o_ref, xpad_ref):
    # xcol_ref : [1, Ho, Wo, 9*nIn]  bf16   im2col taps of the stride-2 conv
    # wc1_ref  : [9*nIn, n]          bf16   c1 weight (im2col layout)
    # wfd_ref  : [45, n, nOut]       bf16   fused dilated weights (BN scale folded,
    #                                        prefix-sum/concat folded into columns)
    # shift_ref/alpha_ref : [1, nOut] f32   BN shift / PReLU alpha
    # o_ref    : [1, Ho*Wo, nOut]    f32
    # xpad_ref : VMEM scratch [Ho+2P, Wo+2P, n] bf16 (zero-padded output1)
    _, Ho, Wo, K1 = xcol_ref.shape
    n = wc1_ref.shape[-1]
    nOut = o_ref.shape[-1]

    # ---- c1: stride-2 3x3 conv as ONE MXU matmul (im2col fusion) ----
    # NOTE: Wo is assumed to be a multiple of 8 so these reshapes are layout-compatible.
    xcol = xcol_ref[0].reshape(Ho * Wo, K1)
    out1 = jax.lax.dot_general(
        xcol, wc1_ref[...],
        dimension_numbers=(((1,), (0,)), ((), ())),
        preferred_element_type=jnp.float32,
    ).astype(jnp.bfloat16)                                   # [Ho*Wo, n]

    # ---- zero-pad output1 inside VMEM (no HBM pad round trip) ----
    xpad_ref[...] = jnp.zeros(xpad_ref.shape, xpad_ref.dtype)
    xpad_ref[_PAD:_PAD + Ho, _PAD:_PAD + Wo, :] = out1.reshape(Ho, Wo, n)

    # ---- d1,d2,d4,d8,d16 + prefix sums + concat + BN scale: one accumulation ----
    acc = jnp.zeros((Ho * Wo, nOut), jnp.float32)
    for di, dil in enumerate(_DILATIONS):
        for dx in range(3):
            # hoist the (sublane-crossing) W-axis slice out of the dy loop
            c0 = _PAD + (dx - 1) * dil
            xw = xpad_ref[:, c0:c0 + Wo, :]                  # [Ho+2P, Wo, n]
            for dy in range(3):
                r0 = _PAD + (dy - 1) * dil
                ys = xw[r0:r0 + Ho].reshape(Ho * Wo, n)      # major-dim slice (cheap)
                acc = acc + jax.lax.dot_general(
                    ys, wfd_ref[di * 9 + dy * 3 + dx],
                    dimension_numbers=(((1,), (0,)), ((), ())),
                    preferred_element_type=jnp.float32)

    # ---- epilogue: folded BN shift + per-channel PReLU (f32 on the VPU) ----
    y = acc + shift_ref[...]
    y = jnp.where(y > 0, y, alpha_ref[...] * y)
    o_ref[0] = y.astype(o_ref.dtype)


# -----------------------------------------------------------------------------
# Wrapper (takes PyTorch-style NCHW input).
# -----------------------------------------------------------------------------
def stride_esp_forward(params, x_nchw):
    x = jnp.transpose(x_nchw, (0, 2, 3, 1)).astype(jnp.bfloat16)   # NCHW -> NHWC
    N, H, W, nIn = x.shape
    Ho = (H - 1) // 2 + 1
    Wo = (W - 1) // 2 + 1
    n = params["w_c1_col"].shape[-1]
    nOut = params["w_fused"].shape[-1]
    n_taps = params["w_fused"].shape[0]

    # im2col for the stride-2 conv: gather the 9 strided tap planes once with XLA so
    # the kernel's c1 becomes a single [Ho*Wo, 9*nIn] x [9*nIn, n] matmul.
    xp = jnp.pad(x, ((0, 0), (1, 1), (1, 1), (0, 0)))
    taps = [xp[:, ky:ky + 2 * Ho:2, kx:kx + 2 * Wo:2, :]
            for ky in range(3) for kx in range(3)]
    xcol = jnp.concatenate(taps, axis=-1)                          # [N, Ho, Wo, 9*nIn]

    out = pl.pallas_call(
        _stride_esp_kernel,
        out_shape=jax.ShapeDtypeStruct((N, Ho * Wo, nOut), jnp.float32),
        grid=(N,),
        in_specs=[
            pl.BlockSpec((1, Ho, Wo, 9 * nIn), lambda b: (b, 0, 0, 0)),
            pl.BlockSpec((9 * nIn, n), lambda b: (0, 0)),
            pl.BlockSpec((n_taps, n, nOut), lambda b: (0, 0, 0)),
            pl.BlockSpec((1, nOut), lambda b: (0, 0)),
            pl.BlockSpec((1, nOut), lambda b: (0, 0)),
        ],
        out_specs=pl.BlockSpec((1, Ho * Wo, nOut), lambda b: (b, 0, 0)),
        scratch_shapes=[pltpu.VMEM((Ho + 2 * _PAD, Wo + 2 * _PAD, n), jnp.bfloat16)],
        compiler_params=pltpu.CompilerParams(
            dimension_semantics=("parallel",),        # shard batch across v7x's 2 TCs
            vmem_limit_bytes=32 * 1024 * 1024,
        ),
    )(xcol, params["w_c1_col"], params["w_fused"], params["shift"], params["alpha"])

    out = out.reshape(N, Ho, Wo, nOut)
    return jnp.transpose(out, (0, 3, 1, 2))                        # NHWC -> NCHW


# -----------------------------------------------------------------------------
# Parameter construction (deterministic, synthetic) + weight fusion.
# -----------------------------------------------------------------------------
def make_params(key, nIn, nOut):
    n = nOut // 5
    n1 = nOut - 4 * n
    ks = jax.random.split(key, 11)

    def conv_w(k, cout, cin):                      # PyTorch OIHW layout
        return 0.1 * jax.random.normal(k, (cout, cin, 3, 3), jnp.float32)

    w_c1 = conv_w(ks[0], n, nIn)
    w_d1 = conv_w(ks[1], n1, n)
    w_d2 = conv_w(ks[2], n, n)
    w_d4 = conv_w(ks[3], n, n)
    w_d8 = conv_w(ks[4], n, n)
    w_d16 = conv_w(ks[5], n, n)
    gamma = 0.5 + jax.random.uniform(ks[6], (nOut,), jnp.float32)
    beta = 0.1 * jax.random.normal(ks[7], (nOut,), jnp.float32)
    rmean = 0.1 * jax.random.normal(ks[8], (nOut,), jnp.float32)
    rvar = 0.5 + jax.random.uniform(ks[9], (nOut,), jnp.float32)
    alpha = 0.25 + 0.05 * jax.random.normal(ks[10], (nOut,), jnp.float32)

    scale = gamma * jax.lax.rsqrt(rvar + 1e-3)     # BN eps = 1e-3 (matches module)
    shift = beta - rmean * scale

    raw = dict(w_c1=w_c1, w_d1=w_d1, w_d2=w_d2, w_d4=w_d4, w_d8=w_d8, w_d16=w_d16,
               scale=scale, shift=shift, alpha=alpha)

    # c1 as an im2col weight [9*nIn, n]; row order matches the wrapper tap order.
    w_c1_col = jnp.transpose(w_c1, (2, 3, 1, 0)).reshape(9 * nIn, n)

    # Fused dilated-branch weight [5*9, n, nOut]:
    #   combine = cat([d1, d2, d2+d4, d2+d4+d8, d2+d4+d8+d16])  is expressed by placing
    #   each dilation's weight into the appropriate output-channel column groups, and
    #   the eval-mode BN scale is folded into the columns.
    def hwio(w):
        return jnp.transpose(w, (2, 3, 1, 0))      # OIHW -> [3,3,cin,cout]

    def place(w, groups):
        full = jnp.zeros((3, 3, n, nOut), jnp.float32)
        for g in groups:
            lo = 0 if g == 0 else n1 + (g - 1) * n
            hi = n1 if g == 0 else lo + n
            full = full.at[:, :, :, lo:hi].set(w)
        return full

    w_fused = jnp.stack([
        place(hwio(w_d1), [0]),
        place(hwio(w_d2), [1, 2, 3, 4]),
        place(hwio(w_d4), [2, 3, 4]),
        place(hwio(w_d8), [3, 4]),
        place(hwio(w_d16), [4]),
    ], axis=0) * scale[None, None, None, None, :]
    w_fused = w_fused.reshape(5 * 9, n, nOut)

    params = dict(
        w_c1_col=w_c1_col.astype(jnp.bfloat16),
        w_fused=w_fused.astype(jnp.bfloat16),
        shift=shift.reshape(1, nOut),
        alpha=alpha.reshape(1, nOut),
    )
    return params, raw


# -----------------------------------------------------------------------------
# Pure-JAX (f32) reference of the PyTorch module, for a numerical sanity check.
# -----------------------------------------------------------------------------
def stride_esp_reference(raw, x_nchw):
    def conv(x, w, stride, dil):
        return jax.lax.conv_general_dilated(
            x, w, window_strides=(stride, stride),
            padding=((dil, dil), (dil, dil)),
            rhs_dilation=(dil, dil),
            dimension_numbers=("NCHW", "OIHW", "NCHW"))

    out1 = conv(x_nchw, raw["w_c1"], 2, 1)
    d1 = conv(out1, raw["w_d1"], 1, 1)
    d2 = conv(out1, raw["w_d2"], 1, 2)
    d4 = conv(out1, raw["w_d4"], 1, 4)
    d8 = conv(out1, raw["w_d8"], 1, 8)
    d16 = conv(out1, raw["w_d16"], 1, 16)
    add1 = d2
    add2 = add1 + d4
    add3 = add2 + d8
    add4 = add3 + d16
    comb = jnp.concatenate([d1, add1, add2, add3, add4], axis=1)
    y = (comb * raw["scale"][None, :, None, None]
         + raw["shift"][None, :, None, None])
    return jnp.where(y > 0, y, raw["alpha"][None, :, None, None] * y)


if __name__ == "__main__":
    key = jax.random.PRNGKey(0)
    kp, kx = jax.random.split(key)

    N, nIn, nOut, H, W = 2, 8, 20, 16, 16          # nOut=20 -> n=4, n1=4
    params, raw = make_params(kp, nIn, nOut)
    x = jax.random.normal(kx, (N, nIn, H, W), jnp.float32)   # NCHW input

    out = jax.block_until_ready(stride_esp_forward(params, x))

    assert out.shape == (N, nOut, H // 2, W // 2), out.shape
    assert bool(jnp.all(jnp.isfinite(out)))

    ref = stride_esp_reference(raw, x)
    err = float(jnp.max(jnp.abs(out - ref)))
    assert err < 5e-2, f"max |err| = {err}"        # loose tolerance: bf16 matmul operands
    print("KERNEL_OK")
</pallas_src>

<mosaic_0001>
module attributes {stable_mosaic.version = 11 : i64} {
  func.func @_stride_esp_kernel(%arg0: i32, %arg1: memref<1x8x8x72xbf16, #tpu.memory_space<vmem>>, %arg2: memref<72x4xbf16, #tpu.memory_space<vmem>>, %arg3: memref<45x4x20xbf16, #tpu.memory_space<vmem>>, %arg4: memref<1x20xf32, #tpu.memory_space<vmem>>, %arg5: memref<1x20xf32, #tpu.memory_space<vmem>>, %arg6: memref<1x64x20xf32, #tpu.memory_space<vmem>>, %arg7: memref<40x40x4xbf16, #tpu.memory_space<vmem>>) attributes {dimension_semantics = [#tpu.dimension_semantics<parallel>], iteration_bounds = array<i64: 2>, scalar_prefetch = 0 : i64, scratch_operands = 1 : i64, tpu.core_type = #tpu.core_type<tc>, window_params = [{transform_indices = @transform_0, window_bounds = array<i64: 1, 8, 8, 72>}, {pipeline_mode = #tpu.pipeline_mode<synchronous>, transform_indices = @transform_1, window_bounds = array<i64: 72, 4>}, {pipeline_mode = #tpu.pipeline_mode<synchronous>, transform_indices = @transform_2, window_bounds = array<i64: 45, 4, 20>}, {pipeline_mode = #tpu.pipeline_mode<synchronous>, transform_indices = @transform_3, window_bounds = array<i64: 1, 20>}, {pipeline_mode = #tpu.pipeline_mode<synchronous>, transform_indices = @transform_4, window_bounds = array<i64: 1, 20>}, {transform_indices = @transform_5, window_bounds = array<i64: 1, 64, 20>}]} {
    %c0 = arith.constant 0 : index
    %c0_0 = arith.constant 0 : index
    %c0_1 = arith.constant 0 : index
    %c0_2 = arith.constant 0 : index
    %0 = vector.load %arg1[%c0, %c0_0, %c0_1, %c0_2] : memref<1x8x8x72xbf16, #tpu.memory_space<vmem>>, vector<1x8x8x72xbf16>
    %1 = vector.shape_cast %0 : vector<1x8x8x72xbf16> to vector<8x8x72xbf16>
    %2 = vector.shape_cast %1 : vector<8x8x72xbf16> to vector<64x72xbf16>
    %c0_3 = arith.constant 0 : index
    %c0_4 = arith.constant 0 : index
    %3 = vector.load %arg2[%c0_3, %c0_4] : memref<72x4xbf16, #tpu.memory_space<vmem>>, vector<72x4xbf16>
    %cst = arith.constant dense<0.000000e+00> : vector<64x4xf32>
    %4 = tpu.matmul %2, %3, %cst {dimension_numbers = #tpu.dot_dimension_numbers<[1], [0], [0], [1], [0, 0, 1, 1], [], []>} : vector<64x72xbf16>, vector<72x4xbf16>, vector<64x4xf32> -> vector<64x4xf32>
    %5 = arith.truncf %4 : vector<64x4xf32> to vector<64x4xbf16>
    %cst_5 = arith.constant 0.000000e+00 : bf16
    %6 = vector.broadcast %cst_5 : bf16 to vector<40x40x4xbf16>
    %c0_6 = arith.constant 0 : index
    %c0_7 = arith.constant 0 : index
    %c0_8 = arith.constant 0 : index
    %7 = vector.load %arg7[%c0_6, %c0_7, %c0_8] : memref<40x40x4xbf16, #tpu.memory_space<vmem>>, vector<40x40x4xbf16>
    tpu.vector_store %arg7[%c0_6, %c0_7, %c0_8], %6 {strides = array<i32>} : memref<40x40x4xbf16, #tpu.memory_space<vmem>>, vector<40x40x4xbf16>,
    %8 = vector.shape_cast %5 : vector<64x4xbf16> to vector<8x8x4xbf16>
    %c16 = arith.constant 16 : index
    %c16_9 = arith.constant 16 : index
    %c0_10 = arith.constant 0 : index
    %9 = vector.load %arg7[%c16, %c16_9, %c0_10] : memref<40x40x4xbf16, #tpu.memory_space<vmem>>, vector<8x8x4xbf16>
    tpu.vector_store %arg7[%c16, %c16_9, %c0_10], %8 {strides = array<i32>} : memref<40x40x4xbf16, #tpu.memory_space<vmem>>, vector<8x8x4xbf16>,
    %cst_11 = arith.constant 0.000000e+00 : f32
    %10 = vector.broadcast %cst_11 : f32 to vector<64x20xf32>
    %c0_12 = arith.constant 0 : index
    %c15 = arith.constant 15 : index
    %c0_13 = arith.constant 0 : index
    %11 = vector.load %arg7[%c0_12, %c15, %c0_13] : memref<40x40x4xbf16, #tpu.memory_space<vmem>>, vector<40x8x4xbf16>
    %12 = vector.extract_strided_slice %11 {offsets = [15, 0, 0], sizes = [8, 8, 4], strides = [1, 1, 1]} : vector<40x8x4xbf16> to vector<8x8x4xbf16>
    %13 = vector.shape_cast %12 : vector<8x8x4xbf16> to vector<64x4xbf16>
    %c0_14 = arith.constant 0 : index
    %c0_15 = arith.constant 0 : index
    %c0_16 = arith.constant 0 : index
    %14 = vector.load %arg3[%c0_14, %c0_15, %c0_16] : memref<45x4x20xbf16, #tpu.memory_space<vmem>>, vector<1x4x20xbf16>
    %15 = vector.shape_cast %14 : vector<1x4x20xbf16> to vector<4x20xbf16>
    %cst_17 = arith.constant dense<0.000000e+00> : vector<64x20xf32>
    %16 = tpu.matmul %13, %15, %cst_17 {dimension_numbers = #tpu.dot_dimension_numbers<[1], [0], [0], [1], [0, 0, 1, 1], [], []>} : vector<64x4xbf16>, vector<4x20xbf16>, vector<64x20xf32> -> vector<64x20xf32>
    %17 = arith.addf %10, %16 : vector<64x20xf32>
    %18 = vector.extract_strided_slice %11 {offsets = [16, 0, 0], sizes = [8, 8, 4], strides = [1, 1, 1]} : vector<40x8x4xbf16> to vector<8x8x4xbf16>
    %19 = vector.shape_cast %18 : vector<8x8x4xbf16> to vector<64x4xbf16>
    %c3 = arith.constant 3 : index
    %c0_18 = arith.constant 0 : index
    %c0_19 = arith.constant 0 : index
    %20 = vector.load %arg3[%c3, %c0_18, %c0_19] : memref<45x4x20xbf16, #tpu.memory_space<vmem>>, vector<1x4x20xbf16>
    %21 = vector.shape_cast %20 : vector<1x4x20xbf16> to vector<4x20xbf16>
    %cst_20 = arith.constant dense<0.000000e+00> : vector<64x20xf32>
    %22 = tpu.matmul %19, %21, %cst_20 {dimension_numbers = #tpu.dot_dimension_numbers<[1], [0], [0], [1], [0, 0, 1, 1], [], []>} : vector<64x4xbf16>, vector<4x20xbf16>, vector<64x20xf32> -> vector<64x20xf32>
    %23 = arith.addf %17, %22 : vector<64x20xf32>
    %24 = vector.extract_strided_slice %11 {offsets = [17, 0, 0], sizes = [8, 8, 4], strides = [1, 1, 1]} : vector<40x8x4xbf16> to vector<8x8x4xbf16>
    %25 = vector.shape_cast %24 : vector<8x8x4xbf16> to vector<64x4xbf16>
    %c6 = arith.constant 6 : index
    %c0_21 = arith.constant 0 : index
    %c0_22 = arith.constant 0 : index
    %26 = vector.load %arg3[%c6, %c0_21, %c0_22] : memref<45x4x20xbf16, #tpu.memory_space<vmem>>, vector<1x4x20xbf16>
    %27 = vector.shape_cast %26 : vector<1x4x20xbf16> to vector<4x20xbf16>
    %cst_23 = arith.constant dense<0.000000e+00> : vector<64x20xf32>
    %28 = tpu.matmul %25, %27, %cst_23 {dimension_numbers = #tpu.dot_dimension_numbers<[1], [0], [0], [1], [0, 0, 1, 1], [], []>} : vector<64x4xbf16>, vector<4x20xbf16>, vector<64x20xf32> -> vector<64x20xf32>
    %29 = arith.addf %23, %28 : vector<64x20xf32>
    %c0_24 = arith.constant 0 : index
    %c16_25 = arith.constant 16 : index
    %c0_26 = arith.constant 0 : index
    %30 = vector.load %arg7[%c0_24, %c16_25, %c0_26] : memref<40x40x4xbf16, #tpu.memory_space<vmem>>, vector<40x8x4xbf16>
    %31 = vector.extract_strided_slice %30 {offsets = [15, 0, 0], sizes = [8, 8, 4], strides = [1, 1, 1]} : vector<40x8x4xbf16> to vector<8x8x4xbf16>
    %32 = vector.shape_cast %31 : vector<8x8x4xbf16> to vector<64x4xbf16>
    %c1 = arith.constant 1 : index
    %c0_27 = arith.constant 0 : index
    %c0_28 = arith.constant 0 : index
    %33 = vector.load %arg3[%c1, %c0_27, %c0_28] : memref<45x4x20xbf16, #tpu.memory_space<vmem>>, vector<1x4x20xbf16>
    %34 = vector.shape_cast %33 : vector<1x4x20xbf16> to vector<4x20xbf16>
    %cst_29 = arith.constant dense<0.000000e+00> : vector<64x20xf32>
    %35 = tpu.matmul %32, %34, %cst_29 {dimension_numbers = #tpu.dot_dimension_numbers<[1], [0], [0], [1], [0, 0, 1, 1], [], []>} : vector<64x4xbf16>, vector<4x20xbf16>, vector<64x20xf32> -> vector<64x20xf32>
    %36 = arith.addf %29, %35 : vector<64x20xf32>
    %37 = vector.extract_strided_slice %30 {offsets = [16, 0, 0], sizes = [8, 8, 4], strides = [1, 1, 1]} : vector<40x8x4xbf16> to vector<8x8x4xbf16>
    %38 = vector.shape_cast %37 : vector<8x8x4xbf16> to vector<64x4xbf16>
    %c4 = arith.constant 4 : index
    %c0_30 = arith.constant 0 : index
    %c0_31 = arith.constant 0 : index
    %39 = vector.load %arg3[%c4, %c0_30, %c0_31] : memref<45x4x20xbf16, #tpu.memory_space<vmem>>, vector<1x4x20xbf16>
    %40 = vector.shape_cast %39 : vector<1x4x20xbf16> to vector<4x20xbf16>
    %cst_32 = arith.constant dense<0.000000e+00> : vector<64x20xf32>
    %41 = tpu.matmul %38, %40, %cst_32 {dimension_numbers = #tpu.dot_dimension_numbers<[1], [0], [0], [1], [0, 0, 1, 1], [], []>} : vector<64x4xbf16>, vector<4x20xbf16>, vector<64x20xf32> -> vector<64x20xf32>
    %42 = arith.addf %36, %41 : vector<64x20xf32>
    %43 = vector.extract_strided_slice %30 {offsets = [17, 0, 0], sizes = [8, 8, 4], strides = [1, 1, 1]} : vector<40x8x4xbf16> to vector<8x8x4xbf16>
    %44 = vector.shape_cast %43 : vector<8x8x4xbf16> to vector<64x4xbf16>
    %c7 = arith.constant 7 : index
    %c0_33 = arith.constant 0 : index
    %c0_34 = arith.constant 0 : index
    %45 = vector.load %arg3[%c7, %c0_33, %c0_34] : memref<45x4x20xbf16, #tpu.memory_space<vmem>>, vector<1x4x20xbf16>
    %46 = vector.shape_cast %45 : vector<1x4x20xbf16> to vector<4x20xbf16>
    %cst_35 = arith.constant dense<0.000000e+00> : vector<64x20xf32>
    %47 = tpu.matmul %44, %46, %cst_35 {dimension_numbers = #tpu.dot_dimension_numbers<[1], [0], [0], [1], [0, 0, 1, 1], [], []>} : vector<64x4xbf16>, vector<4x20xbf16>, vector<64x20xf32> -> vector<64x20xf32>
    %48 = arith.addf %42, %47 : vector<64x20xf32>
    %c0_36 = arith.constant 0 : index
    %c17 = arith.constant 17 : index
    %c0_37 = arith.constant 0 : index
    %49 = vector.load %arg7[%c0_36, %c17, %c0_37] : memref<40x40x4xbf16, #tpu.memory_space<vmem>>, vector<40x8x4xbf16>
    %50 = vector.extract_strided_slice %49 {offsets = [15, 0, 0], sizes = [8, 8, 4], strides = [1, 1, 1]} : vector<40x8x4xbf16> to vector<8x8x4xbf16>
    %51 = vector.shape_cast %50 : vector<8x8x4xbf16> to vector<64x4xbf16>
    %c2 = arith.constant 2 : index
    %c0_38 = arith.constant 0 : index
    %c0_39 = arith.constant 0 : index
    %52 = vector.load %arg3[%c2, %c0_38, %c0_39] : memref<45x4x20xbf16, #tpu.memory_space<vmem>>, vector<1x4x20xbf16>
    %53 = vector.shape_cast %52 : vector<1x4x20xbf16> to vector<4x20xbf16>
    %cst_40 = arith.constant dense<0.000000e+00> : vector<64x20xf32>
    %54 = tpu.matmul %51, %53, %cst_40 {dimension_numbers = #tpu.dot_dimension_numbers<[1], [0], [0], [1], [0, 0, 1, 1], [], []>} : vector<64x4xbf16>, vector<4x20xbf16>, vector<64x20xf32> -> vector<64x20xf32>
    %55 = arith.addf %48, %54 : vector<64x20xf32>
    %56 = vector.extract_strided_slice %49 {offsets = [16, 0, 0], sizes = [8, 8, 4], strides = [1, 1, 1]} : vector<40x8x4xbf16> to vector<8x8x4xbf16>
    %57 = vector.shape_cast %56 : vector<8x8x4xbf16> to vector<64x4xbf16>
    %c5 = arith.constant 5 : index
    %c0_41 = arith.constant 0 : index
    %c0_42 = arith.constant 0 : index
    %58 = vector.load %arg3[%c5, %c0_41, %c0_42] : memref<45x4x20xbf16, #tpu.memory_space<vmem>>, vector<1x4x20xbf16>
    %59 = vector.shape_cast %58 : vector<1x4x20xbf16> to vector<4x20xbf16>
    %cst_43 = arith.constant dense<0.000000e+00> : vector<64x20xf32>
    %60 = tpu.matmul %57, %59, %cst_43 {dimension_numbers = #tpu.dot_dimension_numbers<[1], [0], [0], [1], [0, 0, 1, 1], [], []>} : vector<64x4xbf16>, vector<4x20xbf16>, vector<64x20xf32> -> vector<64x20xf32>
    %61 = arith.addf %55, %60 : vector<64x20xf32>
    %62 = vector.extract_strided_slice %49 {offsets = [17, 0, 0], sizes = [8, 8, 4], strides = [1, 1, 1]} : vector<40x8x4xbf16> to vector<8x8x4xbf16>
    %63 = vector.shape_cast %62 : vector<8x8x4xbf16> to vector<64x4xbf16>
    %c8 = arith.constant 8 : index
    %c0_44 = arith.constant 0 : index
    %c0_45 = arith.constant 0 : index
    %64 = vector.load %arg3[%c8, %c0_44, %c0_45] : memref<45x4x20xbf16, #tpu.memory_space<vmem>>, vector<1x4x20xbf16>
    %65 = vector.shape_cast %64 : vector<1x4x20xbf16> to vector<4x20xbf16>
    %cst_46 = arith.constant dense<0.000000e+00> : vector<64x20xf32>
    %66 = tpu.matmul %63, %65, %cst_46 {dimension_numbers = #tpu.dot_dimension_numbers<[1], [0], [0], [1], [0, 0, 1, 1], [], []>} : vector<64x4xbf16>, vector<4x20xbf16>, vector<64x20xf32> -> vector<64x20xf32>
    %67 = arith.addf %61, %66 : vector<64x20xf32>
    %c0_47 = arith.constant 0 : index
    %c14 = arith.constant 14 : index
    %c0_48 = arith.constant 0 : index
    %68 = vector.load %arg7[%c0_47, %c14, %c0_48] : memref<40x40x4xbf16, #tpu.memory_space<vmem>>, vector<40x8x4xbf16>
    %69 = vector.extract_strided_slice %68 {offsets = [14, 0, 0], sizes = [8, 8, 4], strides = [1, 1, 1]} : vector<40x8x4xbf16> to vector<8x8x4xbf16>
    %70 = vector.shape_cast %69 : vector<8x8x4xbf16> to vector<64x4xbf16>
    %c9 = arith.constant 9 : index
    %c0_49 = arith.constant 0 : index
    %c0_50 = arith.constant 0 : index
    %71 = vector.load %arg3[%c9, %c0_49, %c0_50] : memref<45x4x20xbf16, #tpu.memory_space<vmem>>, vector<1x4x20xbf16>
    %72 = vector.shape_cast %71 : vector<1x4x20xbf16> to vector<4x20xbf16>
    %cst_51 = arith.constant dense<0.000000e+00> : vector<64x20xf32>
    %73 = tpu.matmul %70, %72, %cst_51 {dimension_numbers = #tpu.dot_dimension_numbers<[1], [0], [0], [1], [0, 0, 1, 1], [], []>} : vector<64x4xbf16>, vector<4x20xbf16>, vector<64x20xf32> -> vector<64x20xf32>
    %74 = arith.addf %67, %73 : vector<64x20xf32>
    %75 = vector.extract_strided_slice %68 {offsets = [16, 0, 0], sizes = [8, 8, 4], strides = [1, 1, 1]} : vector<40x8x4xbf16> to vector<8x8x4xbf16>
    %76 = vector.shape_cast %75 : vector<8x8x4xbf16> to vector<64x4xbf16>
    %c12 = arith.constant 12 : index
    %c0_52 = arith.constant 0 : index
    %c0_53 = arith.constant 0 : index
    %77 = vector.load %arg3[%c12, %c0_52, %c0_53] : memref<45x4x20xbf16, #tpu.memory_space<vmem>>, vector<1x4x20xbf16>
    %78 = vector.shape_cast %77 : vector<1x4x20xbf16> to vector<4x20xbf16>
    %cst_54 = arith.constant dense<0.000000e+00> : vector<64x20xf32>
    %79 = tpu.matmul %76, %78, %cst_54 {dimension_numbers = #tpu.dot_dimension_numbers<[1], [0], [0], [1], [0, 0, 1, 1], [], []>} : vector<64x4xbf16>, vector<4x20xbf16>, vector<64x20xf32> -> vector<64x20xf32>
    %80 = arith.addf %74, %79 : vector<64x20xf32>
    %81 = vector.extract_strided_slice %68 {offsets = [18, 0, 0], sizes = [8, 8, 4], strides = [1, 1, 1]} : vector<40x8x4xbf16> to vector<8x8x4xbf16>
    %82 = vector.shape_cast %81 : vector<8x8x4xbf16> to vector<64x4xbf16>
    %c15_55 = arith.constant 15 : index
    %c0_56 = arith.constant 0 : index
    %c0_57 = arith.constant 0 : index
    %83 = vector.load %arg3[%c15_55, %c0_56, %c0_57] : memref<45x4x20xbf16, #tpu.memory_space<vmem>>, vector<1x4x20xbf16>
    %84 = vector.shape_cast %83 : vector<1x4x20xbf16> to vector<4x20xbf16>
    %cst_58 = arith.constant dense<0.000000e+00> : vector<64x20xf32>
    %85 = tpu.matmul %82, %84, %cst_58 {dimension_numbers = #tpu.dot_dimension_numbers<[1], [0], [0], [1], [0, 0, 1, 1], [], []>} : vector<64x4xbf16>, vector<4x20xbf16>, vector<64x20xf32> -> vector<64x20xf32>
    %86 = arith.addf %80, %85 : vector<64x20xf32>
    %c0_59 = arith.constant 0 : index
    %c16_60 = arith.constant 16 : index
    %c0_61 = arith.constant 0 : index
    %87 = vector.load %arg7[%c0_59, %c16_60, %c0_61] : memref<40x40x4xbf16, #tpu.memory_space<vmem>>, vector<40x8x4xbf16>
    %88 = vector.extract_strided_slice %87 {offsets = [14, 0, 0], sizes = [8, 8, 4], strides = [1, 1, 1]} : vector<40x8x4xbf16> to vector<8x8x4xbf16>
    %89 = vector.shape_cast %88 : vector<8x8x4xbf16> to vector<64x4xbf16>
    %c10 = arith.constant 10 : index
    %c0_62 = arith.constant 0 : index
    %c0_63 = arith.constant 0 : index
    %90 = vector.load %arg3[%c10, %c0_62, %c0_63] : memref<45x4x20xbf16, #tpu.memory_space<vmem>>, vector<1x4x20xbf16>
    %91 = vector.shape_cast %90 : vector<1x4x20xbf16> to vector<4x20xbf16>
    %cst_64 = arith.constant dense<0.000000e+00> : vector<64x20xf32>
    %92 = tpu.matmul %89, %91, %cst_64 {dimension_numbers = #tpu.dot_dimension_numbers<[1], [0], [0], [1], [0, 0, 1, 1], [], []>} : vector<64x4xbf16>, vector<4x20xbf16>, vector<64x20xf32> -> vector<64x20xf32>
    %93 = arith.addf %86, %92 : vector<64x20xf32>
    %94 = vector.extract_strided_slice %87 {offsets = [16, 0, 0], sizes = [8, 8, 4], strides = [1, 1, 1]} : vector<40x8x4xbf16> to vector<8x8x4xbf16>
    %95 = vector.shape_cast %94 : vector<8x8x4xbf16> to vector<64x4xbf16>
    %c13 = arith.constant 13 : index
    %c0_65 = arith.constant 0 : index
    %c0_66 = arith.constant 0 : index
    %96 = vector.load %arg3[%c13, %c0_65, %c0_66] : memref<45x4x20xbf16, #tpu.memory_space<vmem>>, vector<1x4x20xbf16>
    %97 = vector.shape_cast %96 : vector<1x4x20xbf16> to vector<4x20xbf16>
    %cst_67 = arith.constant dense<0.000000e+00> : vector<64x20xf32>
    %98 = tpu.matmul %95, %97, %cst_67 {dimension_numbers = #tpu.dot_dimension_numbers<[1], [0], [0], [1], [0, 0, 1, 1], [], []>} : vector<64x4xbf16>, vector<4x20xbf16>, vector<64x20xf32> -> vector<64x20xf32>
    %99 = arith.addf %93, %98 : vector<64x20xf32>
    %100 = vector.extract_strided_slice %87 {offsets = [18, 0, 0], sizes = [8, 8, 4], strides = [1, 1, 1]} : vector<40x8x4xbf16> to vector<8x8x4xbf16>
    %101 = vector.shape_cast %100 : vector<8x8x4xbf16> to vector<64x4xbf16>
    %c16_68 = arith.constant 16 : index
    %c0_69 = arith.constant 0 : index
    %c0_70 = arith.constant 0 : index
    %102 = vector.load %arg3[%c16_68, %c0_69, %c0_70] : memref<45x4x20xbf16, #tpu.memory_space<vmem>>, vector<1x4x20xbf16>
    %103 = vector.shape_cast %102 : vector<1x4x20xbf16> to vector<4x20xbf16>
    %cst_71 = arith.constant dense<0.000000e+00> : vector<64x20xf32>
    %104 = tpu.matmul %101, %103, %cst_71 {dimension_numbers = #tpu.dot_dimension_numbers<[1], [0], [0], [1], [0, 0, 1, 1], [], []>} : vector<64x4xbf16>, vector<4x20xbf16>, vector<64x20xf32> -> vector<64x20xf32>
    %105 = arith.addf %99, %104 : vector<64x20xf32>
    %c0_72 = arith.constant 0 : index
    %c18 = arith.constant 18 : index
    %c0_73 = arith.constant 0 : index
    %106 = vector.load %arg7[%c0_72, %c18, %c0_73] : memref<40x40x4xbf16, #tpu.memory_space<vmem>>, vector<40x8x4xbf16>
    %107 = vector.extract_strided_slice %106 {offsets = [14, 0, 0], sizes = [8, 8, 4], strides = [1, 1, 1]} : vector<40x8x4xbf16> to vector<8x8x4xbf16>
    %108 = vector.shape_cast %107 : vector<8x8x4xbf16> to vector<64x4xbf16>
    %c11 = arith.constant 11 : index
    %c0_74 = arith.constant 0 : index
    %c0_75 = arith.constant 0 : index
    %109 = vector.load %arg3[%c11, %c0_74, %c0_75] : memref<45x4x20xbf16, #tpu.memory_space<vmem>>, vector<1x4x20xbf16>
    %110 = vector.shape_cast %109 : vector<1x4x20xbf16> to vector<4x20xbf16>
    %cst_76 = arith.constant dense<0.000000e+00> : vector<64x20xf32>
    %111 = tpu.matmul %108, %110, %cst_76 {dimension_numbers = #tpu.dot_dimension_numbers<[1], [0], [0], [1], [0, 0, 1, 1], [], []>} : vector<64x4xbf16>, vector<4x20xbf16>, vector<64x20xf32> -> vector<64x20xf32>
    %112 = arith.addf %105, %111 : vector<64x20xf32>
    %113 = vector.extract_strided_slice %106 {offsets = [16, 0, 0], sizes = [8, 8, 4], strides = [1, 1, 1]} : vector<40x8x4xbf16> to vector<8x8x4xbf16>
    %114 = vector.shape_cast %113 : vector<8x8x4xbf16> to vector<64x4xbf16>
    %c14_77 = arith.constant 14 : index
    %c0_78 = arith.constant 0 : index
    %c0_79 = arith.constant 0 : index
    %115 = vector.load %arg3[%c14_77, %c0_78, %c0_79] : memref<45x4x20xbf16, #tpu.memory_space<vmem>>, vector<1x4x20xbf16>
    %116 = vector.shape_cast %115 : vector<1x4x20xbf16> to vector<4x20xbf16>
    %cst_80 = arith.constant dense<0.000000e+00> : vector<64x20xf32>
    %117 = tpu.matmul %114, %116, %cst_80 {dimension_numbers = #tpu.dot_dimension_numbers<[1], [0], [0], [1], [0, 0, 1, 1], [], []>} : vector<64x4xbf16>, vector<4x20xbf16>, vector<64x20xf32> -> vector<64x20xf32>
    %118 = arith.addf %112, %117 : vector<64x20xf32>
    %119 = vector.extract_strided_slice %106 {offsets = [18, 0, 0], sizes = [8, 8, 4], strides = [1, 1, 1]} : vector<40x8x4xbf16> to vector<8x8x4xbf16>
    %120 = vector.shape_cast %119 : vector<8x8x4xbf16> to vector<64x4xbf16>
    %c17_81 = arith.constant 17 : index
    %c0_82 = arith.constant 0 : index
    %c0_83 = arith.constant 0 : index
    %121 = vector.load %arg3[%c17_81, %c0_82, %c0_83] : memref<45x4x20xbf16, #tpu.memory_space<vmem>>, vector<1x4x20xbf16>
    %122 = vector.shape_cast %121 : vector<1x4x20xbf16> to vector<4x20xbf16>
    %cst_84 = arith.constant dense<0.000000e+00> : vector<64x20xf32>
    %123 = tpu.matmul %120, %122, %cst_84 {dimension_numbers = #tpu.dot_dimension_numbers<[1], [0], [0], [1], [0, 0, 1, 1], [], []>} : vector<64x4xbf16>, vector<4x20xbf16>, vector<64x20xf32> -> vector<64x20xf32>
    %124 = arith.addf %118, %123 : vector<64x20xf32>
    %c0_85 = arith.constant 0 : index
    %c12_86 = arith.constant 12 : index
    %c0_87 = arith.constant 0 : index
    %125 = vector.load %arg7[%c0_85, %c12_86, %c0_87] : memref<40x40x4xbf16, #tpu.memory_space<vmem>>, vector<40x8x4xbf16>
    %126 = vector.extract_strided_slice %125 {offsets = [12, 0, 0], sizes = [8, 8, 4], strides = [1, 1, 1]} : vector<40x8x4xbf16> to vector<8x8x4xbf16>
    %127 = vector.shape_cast %126 : vector<8x8x4xbf16> to vector<64x4xbf16>
    %c18_88 = arith.constant 18 : index
    %c0_89 = arith.constant 0 : index
    %c0_90 = arith.constant 0 : index
    %128 = vector.load %arg3[%c18_88, %c0_89, %c0_90] : memref<45x4x20xbf16, #tpu.memory_space<vmem>>, vector<1x4x20xbf16>
    %129 = vector.shape_cast %128 : vector<1x4x20xbf16> to vector<4x20xbf16>
    %cst_91 = arith.constant dense<0.000000e+00> : vector<64x20xf32>
    %130 = tpu.matmul %127, %129, %cst_91 {dimension_numbers = #tpu.dot_dimension_numbers<[1], [0], [0], [1], [0, 0, 1, 1], [], []>} : vector<64x4xbf16>, vector<4x20xbf16>, vector<64x20xf32> -> vector<64x20xf32>
    %131 = arith.addf %124, %130 : vector<64x20xf32>
    %132 = vector.extract_strided_slice %125 {offsets = [16, 0, 0], sizes = [8, 8, 4], strides = [1, 1, 1]} : vector<40x8x4xbf16> to vector<8x8x4xbf16>
    %133 = vector.shape_cast %132 : vector<8x8x4xbf16> to vector<64x4xbf16>
    %c21 = arith.constant 21 : index
    %c0_92 = arith.constant 0 : index
    %c0_93 = arith.constant 0 : index
    %134 = vector.load %arg3[%c21, %c0_92, %c0_93] : memref<45x4x20xbf16, #tpu.memory_space<vmem>>, vector<1x4x20xbf16>
    %135 = vector.shape_cast %134 : vector<1x4x20xbf16> to vector<4x20xbf16>
    %cst_94 = arith.constant dense<0.000000e+00> : vector<64x20xf32>
    %136 = tpu.matmul %133, %135, %cst_94 {dimension_numbers = #tpu.dot_dimension_numbers<[1], [0], [0], [1], [0, 0, 1, 1], [], []>} : vector<64x4xbf16>, vector<4x20xbf16>, vector<64x20xf32> -> vector<64x20xf32>
    %137 = arith.addf %131, %136 : vector<64x20xf32>
    %138 = vector.extract_strided_slice %125 {offsets = [20, 0, 0], sizes = [8, 8, 4], strides = [1, 1, 1]} : vector<40x8x4xbf16> to vector<8x8x4xbf16>
    %139 = vector.shape_cast %138 : vector<8x8x4xbf16> to vector<64x4xbf16>
    %c24 = arith.constant 24 : index
    %c0_95 = arith.constant 0 : index
    %c0_96 = arith.constant 0 : index
    %140 = vector.load %arg3[%c24, %c0_95, %c0_96] : memref<45x4x20xbf16, #tpu.memory_space<vmem>>, vector<1x4x20xbf16>
    %141 = vector.shape_cast %140 : vector<1x4x20xbf16> to vector<4x20xbf16>
    %cst_97 = arith.constant dense<0.000000e+00> : vector<64x20xf32>
    %142 = tpu.matmul %139, %141, %cst_97 {dimension_numbers = #tpu.dot_dimension_numbers<[1], [0], [0], [1], [0, 0, 1, 1], [], []>} : vector<64x4xbf16>, vector<4x20xbf16>, vector<64x20xf32> -> vector<64x20xf32>
    %143 = arith.addf %137, %142 : vector<64x20xf32>
    %c0_98 = arith.constant 0 : index
    %c16_99 = arith.constant 16 : index
    %c0_100 = arith.constant 0 : index
    %144 = vector.load %arg7[%c0_98, %c16_99, %c0_100] : memref<40x40x4xbf16, #tpu.memory_space<vmem>>, vector<40x8x4xbf16>
    %145 = vector.extract_strided_slice %144 {offsets = [12, 0, 0], sizes = [8, 8, 4], strides = [1, 1, 1]} : vector<40x8x4xbf16> to vector<8x8x4xbf16>
    %146 = vector.shape_cast %145 : vector<8x8x4xbf16> to vector<64x4xbf16>
    %c19 = arith.constant 19 : index
    %c0_101 = arith.constant 0 : index
    %c0_102 = arith.constant 0 : index
    %147 = vector.load %arg3[%c19, %c0_101, %c0_102] : memref<45x4x20xbf16, #tpu.memory_space<vmem>>, vector<1x4x20xbf16>
    %148 = vector.shape_cast %147 : vector<1x4x20xbf16> to vector<4x20xbf16>
    %cst_103 = arith.constant dense<0.000000e+00> : vector<64x20xf32>
    %149 = tpu.matmul %146, %148, %cst_103 {dimension_numbers = #tpu.dot_dimension_numbers<[1], [0], [0], [1], [0, 0, 1, 1], [], []>} : vector<64x4xbf16>, vector<4x20xbf16>, vector<64x20xf32> -> vector<64x20xf32>
    %150 = arith.addf %143, %149 : vector<64x20xf32>
    %151 = vector.extract_strided_slice %144 {offsets = [16, 0, 0], sizes = [8, 8, 4], strides = [1, 1, 1]} : vector<40x8x4xbf16> to vector<8x8x4xbf16>
    %152 = vector.shape_cast %151 : vector<8x8x4xbf16> to vector<64x4xbf16>
    %c22 = arith.constant 22 : index
    %c0_104 = arith.constant 0 : index
    %c0_105 = arith.constant 0 : index
    %153 = vector.load %arg3[%c22, %c0_104, %c0_105] : memref<45x4x20xbf16, #tpu.memory_space<vmem>>, vector<1x4x20xbf16>
    %154 = vector.shape_cast %153 : vector<1x4x20xbf16> to vector<4x20xbf16>
    %cst_106 = arith.constant dense<0.000000e+00> : vector<64x20xf32>
    %155 = tpu.matmul %152, %154, %cst_106 {dimension_numbers = #tpu.dot_dimension_numbers<[1], [0], [0], [1], [0, 0, 1, 1], [], []>} : vector<64x4xbf16>, vector<4x20xbf16>, vector<64x20xf32> -> vector<64x20xf32>
    %156 = arith.addf %150, %155 : vector<64x20xf32>
    %157 = vector.extract_strided_slice %144 {offsets = [20, 0, 0], sizes = [8, 8, 4], strides = [1, 1, 1]} : vector<40x8x4xbf16> to vector<8x8x4xbf16>
    %158 = vector.shape_cast %157 : vector<8x8x4xbf16> to vector<64x4xbf16>
    %c25 = arith.constant 25 : index
    %c0_107 = arith.constant 0 : index
    %c0_108 = arith.constant 0 : index
    %159 = vector.load %arg3[%c25, %c0_107, %c0_108] : memref<45x4x20xbf16, #tpu.memory_space<vmem>>, vector<1x4x20xbf16>
    %160 = vector.shape_cast %159 : vector<1x4x20xbf16> to vector<4x20xbf16>
    %cst_109 = arith.constant dense<0.000000e+00> : vector<64x20xf32>
    %161 = tpu.matmul %158, %160, %cst_109 {dimension_numbers = #tpu.dot_dimension_numbers<[1], [0], [0], [1], [0, 0, 1, 1], [], []>} : vector<64x4xbf16>, vector<4x20xbf16>, vector<64x20xf32> -> vector<64x20xf32>
    %162 = arith.addf %156, %161 : vector<64x20xf32>
    %c0_110 = arith.constant 0 : index
    %c20 = arith.constant 20 : index
    %c0_111 = arith.constant 0 : index
    %163 = vector.load %arg7[%c0_110, %c20, %c0_111] : memref<40x40x4xbf16, #tpu.memory_space<vmem>>, vector<40x8x4xbf16>
    %164 = vector.extract_strided_slice %163 {offsets = [12, 0, 0], sizes = [8, 8, 4], strides = [1, 1, 1]} : vector<40x8x4xbf16> to vector<8x8x4xbf16>
    %165 = vector.shape_cast %164 : vector<8x8x4xbf16> to vector<64x4xbf16>
    %c20_112 = arith.constant 20 : index
    %c0_113 = arith.constant 0 : index
    %c0_114 = arith.constant 0 : index
    %166 = vector.load %arg3[%c20_112, %c0_113, %c0_114] : memref<45x4x20xbf16, #tpu.memory_space<vmem>>, vector<1x4x20xbf16>
    %167 = vector.shape_cast %166 : vector<1x4x20xbf16> to vector<4x20xbf16>
    %cst_115 = arith.constant dense<0.000000e+00> : vector<64x20xf32>
    %168 = tpu.matmul %165, %167, %cst_115 {dimension_numbers = #tpu.dot_dimension_numbers<[1], [0], [0], [1], [0, 0, 1, 1], [], []>} : vector<64x4xbf16>, vector<4x20xbf16>, vector<64x20xf32> -> vector<64x20xf32>
    %169 = arith.addf %162, %168 : vector<64x20xf32>
    %170 = vector.extract_strided_slice %163 {offsets = [16, 0, 0], sizes = [8, 8, 4], strides = [1, 1, 1]} : vector<40x8x4xbf16> to vector<8x8x4xbf16>
    %171 = vector.shape_cast %170 : vector<8x8x4xbf16> to vector<64x4xbf16>
    %c23 = arith.constant 23 : index
    %c0_116 = arith.constant 0 : index
    %c0_117 = arith.constant 0 : index
    %172 = vector.load %arg3[%c23, %c0_116, %c0_117] : memref<45x4x20xbf16, #tpu.memory_space<vmem>>, vector<1x4x20xbf16>
    %173 = vector.shape_cast %172 : vector<1x4x20xbf16> to vector<4x20xbf16>
    %cst_118 = arith.constant dense<0.000000e+00> : vector<64x20xf32>
    %174 = tpu.matmul %171, %173, %cst_118 {dimension_numbers = #tpu.dot_dimension_numbers<[1], [0], [0], [1], [0, 0, 1, 1], [], []>} : vector<64x4xbf16>, vector<4x20xbf16>, vector<64x20xf32> -> vector<64x20xf32>
    %175 = arith.addf %169, %174 : vector<64x20xf32>
    %176 = vector.extract_strided_slice %163 {offsets = [20, 0, 0], sizes = [8, 8, 4], strides = [1, 1, 1]} : vector<40x8x4xbf16> to vector<8x8x4xbf16>
    %177 = vector.shape_cast %176 : vector<8x8x4xbf16> to vector<64x4xbf16>
    %c26 = arith.constant 26 : index
    %c0_119 = arith.constant 0 : index
    %c0_120 = arith.constant 0 : index
    %178 = vector.load %arg3[%c26, %c0_119, %c0_120] : memref<45x4x20xbf16, #tpu.memory_space<vmem>>, vector<1x4x20xbf16>
    %179 = vector.shape_cast %178 : vector<1x4x20xbf16> to vector<4x20xbf16>
    %cst_121 = arith.constant dense<0.000000e+00> : vector<64x20xf32>
    %180 = tpu.matmul %177, %179, %cst_121 {dimension_numbers = #tpu.dot_dimension_numbers<[1], [0], [0], [1], [0, 0, 1, 1], [], []>} : vector<64x4xbf16>, vector<4x20xbf16>, vector<64x20xf32> -> vector<64x20xf32>
    %181 = arith.addf %175, %180 : vector<64x20xf32>
    %c0_122 = arith.constant 0 : index
    %c8_123 = arith.constant 8 : index
    %c0_124 = arith.constant 0 : index
    %182 = vector.load %arg7[%c0_122, %c8_123, %c0_124] : memref<40x40x4xbf16, #tpu.memory_space<vmem>>, vector<40x8x4xbf16>
    %183 = vector.extract_strided_slice %182 {offsets = [8, 0, 0], sizes = [8, 8, 4], strides = [1, 1, 1]} : vector<40x8x4xbf16> to vector<8x8x4xbf16>
    %184 = vector.shape_cast %183 : vector<8x8x4xbf16> to vector<64x4xbf16>
    %c27 = arith.constant 27 : index
    %c0_125 = arith.constant 0 : index
    %c0_126 = arith.constant 0 : index
    %185 = vector.load %arg3[%c27, %c0_125, %c0_126] : memref<45x4x20xbf16, #tpu.memory_space<vmem>>, vector<1x4x20xbf16>
    %186 = vector.shape_cast %185 : vector<1x4x20xbf16> to vector<4x20xbf16>
    %cst_127 = arith.constant dense<0.000000e+00> : vector<64x20xf32>
    %187 = tpu.matmul %184, %186, %cst_127 {dimension_numbers = #tpu.dot_dimension_numbers<[1], [0], [0], [1], [0, 0, 1, 1], [], []>} : vector<64x4xbf16>, vector<4x20xbf16>, vector<64x20xf32> -> vector<64x20xf32>
    %188 = arith.addf %181, %187 : vector<64x20xf32>
    %189 = vector.extract_strided_slice %182 {offsets = [16, 0, 0], sizes = [8, 8, 4], strides = [1, 1, 1]} : vector<40x8x4xbf16> to vector<8x8x4xbf16>
    %190 = vector.shape_cast %189 : vector<8x8x4xbf16> to vector<64x4xbf16>
    %c30 = arith.constant 30 : index
    %c0_128 = arith.constant 0 : index
    %c0_129 = arith.constant 0 : index
    %191 = vector.load %arg3[%c30, %c0_128, %c0_129] : memref<45x4x20xbf16, #tpu.memory_space<vmem>>, vector<1x4x20xbf16>
    %192 = vector.shape_cast %191 : vector<1x4x20xbf16> to vector<4x20xbf16>
    %cst_130 = arith.constant dense<0.000000e+00> : vector<64x20xf32>
    %193 = tpu.matmul %190, %192, %cst_130 {dimension_numbers = #tpu.dot_dimension_numbers<[1], [0], [0], [1], [0, 0, 1, 1], [], []>} : vector<64x4xbf16>, vector<4x20xbf16>, vector<64x20xf32> -> vector<64x20xf32>
    %194 = arith.addf %188, %193 : vector<64x20xf32>
    %195 = vector.extract_strided_slice %182 {offsets = [24, 0, 0], sizes = [8, 8, 4], strides = [1, 1, 1]} : vector<40x8x4xbf16> to vector<8x8x4xbf16>
    %196 = vector.shape_cast %195 : vector<8x8x4xbf16> to vector<64x4xbf16>
    %c33 = arith.constant 33 : index
    %c0_131 = arith.constant 0 : index
    %c0_132 = arith.constant 0 : index
    %197 = vector.load %arg3[%c33, %c0_131, %c0_132] : memref<45x4x20xbf16, #tpu.memory_space<vmem>>, vector<1x4x20xbf16>
    %198 = vector.shape_cast %197 : vector<1x4x20xbf16> to vector<4x20xbf16>
    %cst_133 = arith.constant dense<0.000000e+00> : vector<64x20xf32>
    %199 = tpu.matmul %196, %198, %cst_133 {dimension_numbers = #tpu.dot_dimension_numbers<[1], [0], [0], [1], [0, 0, 1, 1], [], []>} : vector<64x4xbf16>, vector<4x20xbf16>, vector<64x20xf32> -> vector<64x20xf32>
    %200 = arith.addf %194, %199 : vector<64x20xf32>
    %c0_134 = arith.constant 0 : index
    %c16_135 = arith.constant 16 : index
    %c0_136 = arith.constant 0 : index
    %201 = vector.load %arg7[%c0_134, %c16_135, %c0_136] : memref<40x40x4xbf16, #tpu.memory_space<vmem>>, vector<40x8x4xbf16>
    %202 = vector.extract_strided_slice %201 {offsets = [8, 0, 0], sizes = [8, 8, 4], strides = [1, 1, 1]} : vector<40x8x4xbf16> to vector<8x8x4xbf16>
    %203 = vector.shape_cast %202 : vector<8x8x4xbf16> to vector<64x4xbf16>
    %c28 = arith.constant 28 : index
    %c0_137 = arith.constant 0 : index
    %c0_138 = arith.constant 0 : index
    %204 = vector.load %arg3[%c28, %c0_137, %c0_138] : memref<45x4x20xbf16, #tpu.memory_space<vmem>>, vector<1x4x20xbf16>
    %205 = vector.shape_cast %204 : vector<1x4x20xbf16> to vector<4x20xbf16>
    %cst_139 = arith.constant dense<0.000000e+00> : vector<64x20xf32>
    %206 = tpu.matmul %203, %205, %cst_139 {dimension_numbers = #tpu.dot_dimension_numbers<[1], [0], [0], [1], [0, 0, 1, 1], [], []>} : vector<64x4xbf16>, vector<4x20xbf16>, vector<64x20xf32> -> vector<64x20xf32>
    %207 = arith.addf %200, %206 : vector<64x20xf32>
    %208 = vector.extract_strided_slice %201 {offsets = [16, 0, 0], sizes = [8, 8, 4], strides = [1, 1, 1]} : vector<40x8x4xbf16> to vector<8x8x4xbf16>
    %209 = vector.shape_cast %208 : vector<8x8x4xbf16> to vector<64x4xbf16>
    %c31 = arith.constant 31 : index
    %c0_140 = arith.constant 0 : index
    %c0_141 = arith.constant 0 : index
    %210 = vector.load %arg3[%c31, %c0_140, %c0_141] : memref<45x4x20xbf16, #tpu.memory_space<vmem>>, vector<1x4x20xbf16>
    %211 = vector.shape_cast %210 : vector<1x4x20xbf16> to vector<4x20xbf16>
    %cst_142 = arith.constant dense<0.000000e+00> : vector<64x20xf32>
    %212 = tpu.matmul %209, %211, %cst_142 {dimension_numbers = #tpu.dot_dimension_numbers<[1], [0], [0], [1], [0, 0, 1, 1], [], []>} : vector<64x4xbf16>, vector<4x20xbf16>, vector<64x20xf32> -> vector<64x20xf32>
    %213 = arith.addf %207, %212 : vector<64x20xf32>
    %214 = vector.extract_strided_slice %201 {offsets = [24, 0, 0], sizes = [8, 8, 4], strides = [1, 1, 1]} : vector<40x8x4xbf16> to vector<8x8x4xbf16>
    %215 = vector.shape_cast %214 : vector<8x8x4xbf16> to vector<64x4xbf16>
    %c34 = arith.constant 34 : index
    %c0_143 = arith.constant 0 : index
    %c0_144 = arith.constant 0 : index
    %216 = vector.load %arg3[%c34, %c0_143, %c0_144] : memref<45x4x20xbf16, #tpu.memory_space<vmem>>, vector<1x4x20xbf16>
    %217 = vector.shape_cast %216 : vector<1x4x20xbf16> to vector<4x20xbf16>
    %cst_145 = arith.constant dense<0.000000e+00> : vector<64x20xf32>
    %218 = tpu.matmul %215, %217, %cst_145 {dimension_numbers = #tpu.dot_dimension_numbers<[1], [0], [0], [1], [0, 0, 1, 1], [], []>} : vector<64x4xbf16>, vector<4x20xbf16>, vector<64x20xf32> -> vector<64x20xf32>
    %219 = arith.addf %213, %218 : vector<64x20xf32>
    %c0_146 = arith.constant 0 : index
    %c24_147 = arith.constant 24 : index
    %c0_148 = arith.constant 0 : index
    %220 = vector.load %arg7[%c0_146, %c24_147, %c0_148] : memref<40x40x4xbf16, #tpu.memory_space<vmem>>, vector<40x8x4xbf16>
    %221 = vector.extract_strided_slice %220 {offsets = [8, 0, 0], sizes = [8, 8, 4], strides = [1, 1, 1]} : vector<40x8x4xbf16> to vector<8x8x4xbf16>
    %222 = vector.shape_cast %221 : vector<8x8x4xbf16> to vector<64x4xbf16>
    %c29 = arith.constant 29 : index
    %c0_149 = arith.constant 0 : index
    %c0_150 = arith.constant 0 : index
    %223 = vector.load %arg3[%c29, %c0_149, %c0_150] : memref<45x4x20xbf16, #tpu.memory_space<vmem>>, vector<1x4x20xbf16>
    %224 = vector.shape_cast %223 : vector<1x4x20xbf16> to vector<4x20xbf16>
    %cst_151 = arith.constant dense<0.000000e+00> : vector<64x20xf32>
    %225 = tpu.matmul %222, %224, %cst_151 {dimension_numbers = #tpu.dot_dimension_numbers<[1], [0], [0], [1], [0, 0, 1, 1], [], []>} : vector<64x4xbf16>, vector<4x20xbf16>, vector<64x20xf32> -> vector<64x20xf32>
    %226 = arith.addf %219, %225 : vector<64x20xf32>
    %227 = vector.extract_strided_slice %220 {offsets = [16, 0, 0], sizes = [8, 8, 4], strides = [1, 1, 1]} : vector<40x8x4xbf16> to vector<8x8x4xbf16>
    %228 = vector.shape_cast %227 : vector<8x8x4xbf16> to vector<64x4xbf16>
    %c32 = arith.constant 32 : index
    %c0_152 = arith.constant 0 : index
    %c0_153 = arith.constant 0 : index
    %229 = vector.load %arg3[%c32, %c0_152, %c0_153] : memref<45x4x20xbf16, #tpu.memory_space<vmem>>, vector<1x4x20xbf16>
    %230 = vector.shape_cast %229 : vector<1x4x20xbf16> to vector<4x20xbf16>
    %cst_154 = arith.constant dense<0.000000e+00> : vector<64x20xf32>
    %231 = tpu.matmul %228, %230, %cst_154 {dimension_numbers = #tpu.dot_dimension_numbers<[1], [0], [0], [1], [0, 0, 1, 1], [], []>} : vector<64x4xbf16>, vector<4x20xbf16>, vector<64x20xf32> -> vector<64x20xf32>
    %232 = arith.addf %226, %231 : vector<64x20xf32>
    %233 = vector.extract_strided_slice %220 {offsets = [24, 0, 0], sizes = [8, 8, 4], strides = [1, 1, 1]} : vector<40x8x4xbf16> to vector<8x8x4xbf16>
    %234 = vector.shape_cast %233 : vector<8x8x4xbf16> to vector<64x4xbf16>
    %c35 = arith.constant 35 : index
    %c0_155 = arith.constant 0 : index
    %c0_156 = arith.constant 0 : index
    %235 = vector.load %arg3[%c35, %c0_155, %c0_156] : memref<45x4x20xbf16, #tpu.memory_space<vmem>>, vector<1x4x20xbf16>
    %236 = vector.shape_cast %235 : vector<1x4x20xbf16> to vector<4x20xbf16>
    %cst_157 = arith.constant dense<0.000000e+00> : vector<64x20xf32>
    %237 = tpu.matmul %234, %236, %cst_157 {dimension_numbers = #tpu.dot_dimension_numbers<[1], [0], [0], [1], [0, 0, 1, 1], [], []>} : vector<64x4xbf16>, vector<4x20xbf16>, vector<64x20xf32> -> vector<64x20xf32>
    %238 = arith.addf %232, %237 : vector<64x20xf32>
    %c0_158 = arith.constant 0 : index
    %c0_159 = arith.constant 0 : index
    %c0_160 = arith.constant 0 : index
    %239 = vector.load %arg7[%c0_158, %c0_159, %c0_160] : memref<40x40x4xbf16, #tpu.memory_space<vmem>>, vector<40x8x4xbf16>
    %240 = vector.extract_strided_slice %239 {offsets = [0, 0, 0], sizes = [8, 8, 4], strides = [1, 1, 1]} : vector<40x8x4xbf16> to vector<8x8x4xbf16>
    %241 = vector.shape_cast %240 : vector<8x8x4xbf16> to vector<64x4xbf16>
    %c36 = arith.constant 36 : index
    %c0_161 = arith.constant 0 : index
    %c0_162 = arith.constant 0 : index
    %242 = vector.load %arg3[%c36, %c0_161, %c0_162] : memref<45x4x20xbf16, #tpu.memory_space<vmem>>, vector<1x4x20xbf16>
    %243 = vector.shape_cast %242 : vector<1x4x20xbf16> to vector<4x20xbf16>
    %cst_163 = arith.constant dense<0.000000e+00> : vector<64x20xf32>
    %244 = tpu.matmul %241, %243, %cst_163 {dimension_numbers = #tpu.dot_dimension_numbers<[1], [0], [0], [1], [0, 0, 1, 1], [], []>} : vector<64x4xbf16>, vector<4x20xbf16>, vector<64x20xf32> -> vector<64x20xf32>
    %245 = arith.addf %238, %244 : vector<64x20xf32>
    %246 = vector.extract_strided_slice %239 {offsets = [16, 0, 0], sizes = [8, 8, 4], strides = [1, 1, 1]} : vector<40x8x4xbf16> to vector<8x8x4xbf16>
    %247 = vector.shape_cast %246 : vector<8x8x4xbf16> to vector<64x4xbf16>
    %c39 = arith.constant 39 : index
    %c0_164 = arith.constant 0 : index
    %c0_165 = arith.constant 0 : index
    %248 = vector.load %arg3[%c39, %c0_164, %c0_165] : memref<45x4x20xbf16, #tpu.memory_space<vmem>>, vector<1x4x20xbf16>
    %249 = vector.shape_cast %248 : vector<1x4x20xbf16> to vector<4x20xbf16>
    %cst_166 = arith.constant dense<0.000000e+00> : vector<64x20xf32>
    %250 = tpu.matmul %247, %249, %cst_166 {dimension_numbers = #tpu.dot_dimension_numbers<[1], [0], [0], [1], [0, 0, 1, 1], [], []>} : vector<64x4xbf16>, vector<4x20xbf16>, vector<64x20xf32> -> vector<64x20xf32>
    %251 = arith.addf %245, %250 : vector<64x20xf32>
    %252 = vector.extract_strided_slice %239 {offsets = [32, 0, 0], sizes = [8, 8, 4], strides = [1, 1, 1]} : vector<40x8x4xbf16> to vector<8x8x4xbf16>
    %253 = vector.shape_cast %252 : vector<8x8x4xbf16> to vector<64x4xbf16>
    %c42 = arith.constant 42 : index
    %c0_167 = arith.constant 0 : index
    %c0_168 = arith.constant 0 : index
    %254 = vector.load %arg3[%c42, %c0_167, %c0_168] : memref<45x4x20xbf16, #tpu.memory_space<vmem>>, vector<1x4x20xbf16>
    %255 = vector.shape_cast %254 : vector<1x4x20xbf16> to vector<4x20xbf16>
    %cst_169 = arith.constant dense<0.000000e+00> : vector<64x20xf32>
    %256 = tpu.matmul %253, %255, %cst_169 {dimension_numbers = #tpu.dot_dimension_numbers<[1], [0], [0], [1], [0, 0, 1, 1], [], []>} : vector<64x4xbf16>, vector<4x20xbf16>, vector<64x20xf32> -> vector<64x20xf32>
    %257 = arith.addf %251, %256 : vector<64x20xf32>
    %c0_170 = arith.constant 0 : index
    %c16_171 = arith.constant 16 : index
    %c0_172 = arith.constant 0 : index
    %258 = vector.load %arg7[%c0_170, %c16_171, %c0_172] : memref<40x40x4xbf16, #tpu.memory_space<vmem>>, vector<40x8x4xbf16>
    %259 = vector.extract_strided_slice %258 {offsets = [0, 0, 0], sizes = [8, 8, 4], strides = [1, 1, 1]} : vector<40x8x4xbf16> to vector<8x8x4xbf16>
    %260 = vector.shape_cast %259 : vector<8x8x4xbf16> to vector<64x4xbf16>
    %c37 = arith.constant 37 : index
    %c0_173 = arith.constant 0 : index
    %c0_174 = arith.constant 0 : index
    %261 = vector.load %arg3[%c37, %c0_173, %c0_174] : memref<45x4x20xbf16, #tpu.memory_space<vmem>>, vector<1x4x20xbf16>
    %262 = vector.shape_cast %261 : vector<1x4x20xbf16> to vector<4x20xbf16>
    %cst_175 = arith.constant dense<0.000000e+00> : vector<64x20xf32>
    %263 = tpu.matmul %260, %262, %cst_175 {dimension_numbers = #tpu.dot_dimension_numbers<[1], [0], [0], [1], [0, 0, 1, 1], [], []>} : vector<64x4xbf16>, vector<4x20xbf16>, vector<64x20xf32> -> vector<64x20xf32>
    %264 = arith.addf %257, %263 : vector<64x20xf32>
    %265 = vector.extract_strided_slice %258 {offsets = [16, 0, 0], sizes = [8, 8, 4], strides = [1, 1, 1]} : vector<40x8x4xbf16> to vector<8x8x4xbf16>
    %266 = vector.shape_cast %265 : vector<8x8x4xbf16> to vector<64x4xbf16>
    %c40 = arith.constant 40 : index
    %c0_176 = arith.constant 0 : index
    %c0_177 = arith.constant 0 : index
    %267 = vector.load %arg3[%c40, %c0_176, %c0_177] : memref<45x4x20xbf16, #tpu.memory_space<vmem>>, vector<1x4x20xbf16>
    %268 = vector.shape_cast %267 : vector<1x4x20xbf16> to vector<4x20xbf16>
    %cst_178 = arith.constant dense<0.000000e+00> : vector<64x20xf32>
    %269 = tpu.matmul %266, %268, %cst_178 {dimension_numbers = #tpu.dot_dimension_numbers<[1], [0], [0], [1], [0, 0, 1, 1], [], []>} : vector<64x4xbf16>, vector<4x20xbf16>, vector<64x20xf32> -> vector<64x20xf32>
    %270 = arith.addf %264, %269 : vector<64x20xf32>
    %271 = vector.extract_strided_slice %258 {offsets = [32, 0, 0], sizes = [8, 8, 4], strides = [1, 1, 1]} : vector<40x8x4xbf16> to vector<8x8x4xbf16>
    %272 = vector.shape_cast %271 : vector<8x8x4xbf16> to vector<64x4xbf16>
    %c43 = arith.constant 43 : index
    %c0_179 = arith.constant 0 : index
    %c0_180 = arith.constant 0 : index
    %273 = vector.load %arg3[%c43, %c0_179, %c0_180] : memref<45x4x20xbf16, #tpu.memory_space<vmem>>, vector<1x4x20xbf16>
    %274 = vector.shape_cast %273 : vector<1x4x20xbf16> to vector<4x20xbf16>
    %cst_181 = arith.constant dense<0.000000e+00> : vector<64x20xf32>
    %275 = tpu.matmul %272, %274, %cst_181 {dimension_numbers = #tpu.dot_dimension_numbers<[1], [0], [0], [1], [0, 0, 1, 1], [], []>} : vector<64x4xbf16>, vector<4x20xbf16>, vector<64x20xf32> -> vector<64x20xf32>
    %276 = arith.addf %270, %275 : vector<64x20xf32>
    %c0_182 = arith.constant 0 : index
    %c32_183 = arith.constant 32 : index
    %c0_184 = arith.constant 0 : index
    %277 = vector.load %arg7[%c0_182, %c32_183, %c0_184] : memref<40x40x4xbf16, #tpu.memory_space<vmem>>, vector<40x8x4xbf16>
    %278 = vector.extract_strided_slice %277 {offsets = [0, 0, 0], sizes = [8, 8, 4], strides = [1, 1, 1]} : vector<40x8x4xbf16> to vector<8x8x4xbf16>
    %279 = vector.shape_cast %278 : vector<8x8x4xbf16> to vector<64x4xbf16>
    %c38 = arith.constant 38 : index
    %c0_185 = arith.constant 0 : index
    %c0_186 = arith.constant 0 : index
    %280 = vector.load %arg3[%c38, %c0_185, %c0_186] : memref<45x4x20xbf16, #tpu.memory_space<vmem>>, vector<1x4x20xbf16>
    %281 = vector.shape_cast %280 : vector<1x4x20xbf16> to vector<4x20xbf16>
    %cst_187 = arith.constant dense<0.000000e+00> : vector<64x20xf32>
    %282 = tpu.matmul %279, %281, %cst_187 {dimension_numbers = #tpu.dot_dimension_numbers<[1], [0], [0], [1], [0, 0, 1, 1], [], []>} : vector<64x4xbf16>, vector<4x20xbf16>, vector<64x20xf32> -> vector<64x20xf32>
    %283 = arith.addf %276, %282 : vector<64x20xf32>
    %284 = vector.extract_strided_slice %277 {offsets = [16, 0, 0], sizes = [8, 8, 4], strides = [1, 1, 1]} : vector<40x8x4xbf16> to vector<8x8x4xbf16>
    %285 = vector.shape_cast %284 : vector<8x8x4xbf16> to vector<64x4xbf16>
    %c41 = arith.constant 41 : index
    %c0_188 = arith.constant 0 : index
    %c0_189 = arith.constant 0 : index
    %286 = vector.load %arg3[%c41, %c0_188, %c0_189] : memref<45x4x20xbf16, #tpu.memory_space<vmem>>, vector<1x4x20xbf16>
    %287 = vector.shape_cast %286 : vector<1x4x20xbf16> to vector<4x20xbf16>
    %cst_190 = arith.constant dense<0.000000e+00> : vector<64x20xf32>
    %288 = tpu.matmul %285, %287, %cst_190 {dimension_numbers = #tpu.dot_dimension_numbers<[1], [0], [0], [1], [0, 0, 1, 1], [], []>} : vector<64x4xbf16>, vector<4x20xbf16>, vector<64x20xf32> -> vector<64x20xf32>
    %289 = arith.addf %283, %288 : vector<64x20xf32>
    %290 = vector.extract_strided_slice %277 {offsets = [32, 0, 0], sizes = [8, 8, 4], strides = [1, 1, 1]} : vector<40x8x4xbf16> to vector<8x8x4xbf16>
    %291 = vector.shape_cast %290 : vector<8x8x4xbf16> to vector<64x4xbf16>
    %c44 = arith.constant 44 : index
    %c0_191 = arith.constant 0 : index
    %c0_192 = arith.constant 0 : index
    %292 = vector.load %arg3[%c44, %c0_191, %c0_192] : memref<45x4x20xbf16, #tpu.memory_space<vmem>>, vector<1x4x20xbf16>
    %293 = vector.shape_cast %292 : vector<1x4x20xbf16> to vector<4x20xbf16>
    %cst_193 = arith.constant dense<0.000000e+00> : vector<64x20xf32>
    %294 = tpu.matmul %291, %293, %cst_193 {dimension_numbers = #tpu.dot_dimension_numbers<[1], [0], [0], [1], [0, 0, 1, 1], [], []>} : vector<64x4xbf16>, vector<4x20xbf16>, vector<64x20xf32> -> vector<64x20xf32>
    %295 = arith.addf %289, %294 : vector<64x20xf32>
    %c0_194 = arith.constant 0 : index
    %c0_195 = arith.constant 0 : index
    %296 = vector.load %arg4[%c0_194, %c0_195] : memref<1x20xf32, #tpu.memory_space<vmem>>, vector<1x20xf32>
    %297 = vector.broadcast %296 : vector<1x20xf32> to vector<64x20xf32>
    %298 = arith.addf %295, %297 : vector<64x20xf32>
    %cst_196 = arith.constant 0.000000e+00 : f32
    %299 = vector.broadcast %cst_196 : f32 to vector<64x20xf32>
    %300 = arith.cmpf ogt, %298, %299 : vector<64x20xf32>
    %c0_197 = arith.constant 0 : index
    %c0_198 = arith.constant 0 : index
    %301 = vector.load %arg5[%c0_197, %c0_198] : memref<1x20xf32, #tpu.memory_space<vmem>>, vector<1x20xf32>
    %302 = vector.broadcast %301 : vector<1x20xf32> to vector<64x20xf32>
    %303 = arith.mulf %302, %298 : vector<64x20xf32>
    %304 = arith.select %300, %298, %303 : vector<64x20xi1>, vector<64x20xf32>
    %c0_199 = arith.constant 0 : index
    %c0_200 = arith.constant 0 : index
    %c0_201 = arith.constant 0 : index
    %305 = vector.load %arg6[%c0_199, %c0_200, %c0_201] : memref<1x64x20xf32, #tpu.memory_space<vmem>>, vector<1x64x20xf32>
    %306 = vector.shape_cast %305 : vector<1x64x20xf32> to vector<64x20xf32>
    %307 = vector.shape_cast %304 : vector<64x20xf32> to vector<1x64x20xf32>
    tpu.vector_store %arg6[%c0_199, %c0_200, %c0_201], %307 {strides = array<i32>} : memref<1x64x20xf32, #tpu.memory_space<vmem>>, vector<1x64x20xf32>,
    return
  }
  func.func @transform_0(%arg0: i32) -> (i32, i32, i32, i32) {
    %c0_i32 = arith.constant 0 : i32
    %c0_i32_0 = arith.constant 0 : i32
    %c0_i32_1 = arith.constant 0 : i32
    %c0_i32_2 = arith.constant 0 : i32
    return %arg0, %c0_i32, %c0_i32_0, %c0_i32_1 : i32, i32, i32, i32
  }
  func.func @transform_1(%arg0: i32) -> (i32, i32) {
    %c0_i32 = arith.constant 0 : i32
    %c0_i32_0 = arith.constant 0 : i32
    %c0_i32_1 = arith.constant 0 : i32
    return %c0_i32, %c0_i32_0 : i32, i32
  }
  func.func @transform_2(%arg0: i32) -> (i32, i32, i32) {
    %c0_i32 = arith.constant 0 : i32
    %c0_i32_0 = arith.constant 0 : i32
    %c0_i32_1 = arith.constant 0 : i32
    %c0_i32_2 = arith.constant 0 : i32
    return %c0_i32, %c0_i32_0, %c0_i32_1 : i32, i32, i32
  }
  func.func @transform_3(%arg0: i32) -> (i32, i32) {
    %c0_i32 = arith.constant 0 : i32
    %c0_i32_0 = arith.constant 0 : i32
    %c0_i32_1 = arith.constant 0 : i32
    return %c0_i32, %c0_i32_0 : i32, i32
  }
  func.func @transform_4(%arg0: i32) -> (i32, i32) {
    %c0_i32 = arith.constant 0 : i32
    %c0_i32_0 = arith.constant 0 : i32
    %c0_i32_1 = arith.constant 0 : i32
    return %c0_i32, %c0_i32_0 : i32, i32
  }
  func.func @transform_5(%arg0: i32) -> (i32, i32, i32) {
    %c0_i32 = arith.constant 0 : i32
    %c0_i32_0 = arith.constant 0 : i32
    %c0_i32_1 = arith.constant 0 : i32
    return %arg0, %c0_i32, %c0_i32_0 : i32, i32, i32
  }
}

</mosaic_0001>

<llo_original>
// kernel: tpu_custom_call.1
$region0: #{tpu_custom_call.1}
  #allocation0 [shape = 'u32[]', space=smem, size = 0x4, offset = 0x4, fixed_abs, tag = 'smem constant byte address 0x4 - core index']
  #allocation1 [shape = 'u32[144,128]{1,0:T(1,128)}', space=vmem, size = 0x12000, scoped, tag = 'internal scratch']
  #allocation2 [shape = 'bf16[40,40,4]{2,1,0:T(8,128)(2,1)}', space=vmem, size = 0x64000, scoped, tag = 'scratch operand']
  %s0 = inlined_call_operand.vmem [shape: bf16[2,8,8,72], index: 0, kind: input, shape index: {}]
  %s1 = inlined_call_operand.vmem [shape: bf16[72,4], index: 1, kind: input, shape index: {}]
  %s2 = inlined_call_operand.vmem [shape: bf16[45,4,20], index: 2, kind: input, shape index: {}]
  %s3 = inlined_call_operand.vmem [shape: f32[1,20], index: 3, kind: input, shape index: {}]
  %s4 = inlined_call_operand.vmem [shape: f32[1,20], index: 4, kind: input, shape index: {}]
  %s5 = inlined_call_operand.vmem [shape: f32[2,64,20], index: 5, kind: output, shape index: {}]
  %s6 = sld [smem:[#allocation0]]
  $region53: #{tpu_custom_call.1} parent=0
    _
  %s8 = ssub.s32 1, %s6
  %s9 = scalar_select 0, %s8, %s6
  loop: start=0, step=1, limit=4
  $region2: #{tpu_custom_call.1} parent=0 // loop_pre_header
    _
  $region3: #{tpu_custom_call.1} parent=0 // loop_header
    %s11 = sphi 0, %s15
    %p12 = scmp.ge.s32.totalorder %s11, 4
    %s21 = sphi 0, %s23
    %s24 = sphi 0, %s21
    %s25 = sphi 0, %s24
    %s41 = sphi 0, %s25
    %s45 = sphi 0, %s45
    %s47 = sphi 0, %s45
    %s48 = sphi 0, %s47
    %s62 = sphi 0, %s48
    %s66 = sphi 0, %s66
    %s68 = sphi 0, %s66
    %s69 = sphi 0, %s68
    %s83 = sphi 0, %s69
    %s87 = sphi 0, %s87
    %s89 = sphi 0, %s87
    %s90 = sphi 0, %s89
    %s104 = sphi 0, %s90
    %s108 = sphi 0, %s108
    %s110 = sphi 0, %s108
    %s111 = sphi 0, %s110
    %s125 = sphi 0, %s111
    %s131 = sphi 0, %s133
    %s134 = sphi 0, %s131
    %s135 = sphi 0, %s134
    %s151 = sphi 0, %s135
  $region4: #{tpu_custom_call.1} parent=0 // loop_header_branch
    %14 = sbr.rel (%p12) target = $region8
  $region5: #{tpu_custom_call.1} parent=0 // loop_body
    %s16 = ssub.s32 %s11, 1
    %s17 = ssub.s32 %s11, 2
    %s18 = sadd.s32 %s11, 1
    %s19 = ssub.s32 %s11, %s18
    %p20 = scmp.eq.s32.totalorder %s19, 0
    %s22 = sadd.s32 %s21, 1
    %s23 = scalar_select %p20, %s21, %s22
    %p26 = pneg %p20
    %p27 = scmp.eq.s32.totalorder %s11, 1
    %p28 = por %p26, %p27
    %p29 = scmp.ne.s32.totalorder %s21, %s24
    %p30 = scmp.eq.s32.totalorder %s11, 0
    %p31 = por %p29, %p30
    %p32 = scmp.ne.s32.totalorder %s21, %s24
    %p33 = scmp.eq.s32.totalorder %s16, 1
    %p34 = por %p32, %p33
    %p35 = scmp.ne.s32.totalorder %s24, %s25
    %p36 = scmp.eq.s32.totalorder %s16, 0
    %p37 = por %p35, %p36
    %p38 = scmp.ne.s32.totalorder %s24, %s25
    %p39 = scmp.eq.s32.totalorder %s17, 1
    %p40 = por %p38, %p39
    %p42 = scmp.ne.s32.totalorder %s25, %s41
    %p43 = scmp.eq.s32.totalorder %s17, 0
    %p44 = por %p42, %p43
    %s46 = sadd.s32 %s45, 1
    %p49 = scmp.eq.s32.totalorder %s11, 1
    %p50 = scmp.ne.s32.totalorder %s45, %s47
    %p51 = scmp.eq.s32.totalorder %s11, 0
    %p52 = por %p50, %p51
    %p53 = scmp.ne.s32.totalorder %s45, %s47
    %p54 = scmp.eq.s32.totalorder %s16, 1
    %p55 = por %p53, %p54
    %p56 = scmp.ne.s32.totalorder %s47, %s48
    %p57 = scmp.eq.s32.totalorder %s16, 0
    %p58 = por %p56, %p57
    %p59 = scmp.ne.s32.totalorder %s47, %s48
    %p60 = scmp.eq.s32.totalorder %s17, 1
    %p61 = por %p59, %p60
    %p63 = scmp.ne.s32.totalorder %s48, %s62
    %p64 = scmp.eq.s32.totalorder %s17, 0
    %p65 = por %p63, %p64
    %s67 = sadd.s32 %s66, 1
    %p70 = scmp.eq.s32.totalorder %s11, 1
    %p71 = scmp.ne.s32.totalorder %s66, %s68
    %p72 = scmp.eq.s32.totalorder %s11, 0
    %p73 = por %p71, %p72
    %p74 = scmp.ne.s32.totalorder %s66, %s68
    %p75 = scmp.eq.s32.totalorder %s16, 1
    %p76 = por %p74, %p75
    %p77 = scmp.ne.s32.totalorder %s68, %s69
    %p78 = scmp.eq.s32.totalorder %s16, 0
    %p79 = por %p77, %p78
    %p80 = scmp.ne.s32.totalorder %s68, %s69
    %p81 = scmp.eq.s32.totalorder %s17, 1
    %p82 = por %p80, %p81
    %p84 = scmp.ne.s32.totalorder %s69, %s83
    %p85 = scmp.eq.s32.totalorder %s17, 0
    %p86 = por %p84, %p85
    %s88 = sadd.s32 %s87, 1
    %p91 = scmp.eq.s32.totalorder %s11, 1
    %p92 = scmp.ne.s32.totalorder %s87, %s89
    %p93 = scmp.eq.s32.totalorder %s11, 0
    %p94 = por %p92, %p93
    %p95 = scmp.ne.s32.totalorder %s87, %s89
    %p96 = scmp.eq.s32.totalorder %s16, 1
    %p97 = por %p95, %p96
    %p98 = scmp.ne.s32.totalorder %s89, %s90
    %p99 = scmp.eq.s32.totalorder %s16, 0
    %p100 = por %p98, %p99
    %p101 = scmp.ne.s32.totalorder %s89, %s90
    %p102 = scmp.eq.s32.totalorder %s17, 1
    %p103 = por %p101, %p102
    %p105 = scmp.ne.s32.totalorder %s90, %s104
    %p106 = scmp.eq.s32.totalorder %s17, 0
    %p107 = por %p105, %p106
    %s109 = sadd.s32 %s108, 1
    %p112 = scmp.eq.s32.totalorder %s11, 1
    %p113 = scmp.ne.s32.totalorder %s108, %s110
    %p114 = scmp.eq.s32.totalorder %s11, 0
    %p115 = por %p113, %p114
    %p116 = scmp.ne.s32.totalorder %s108, %s110
    %p117 = scmp.eq.s32.totalorder %s16, 1
    %p118 = por %p116, %p117
    %p119 = scmp.ne.s32.totalorder %s110, %s111
    %p120 = scmp.eq.s32.totalorder %s16, 0
    %p121 = por %p119, %p120
    %p122 = scmp.ne.s32.totalorder %s110, %s111
    %p123 = scmp.eq.s32.totalorder %s17, 1
    %p124 = por %p122, %p123
    %p126 = scmp.ne.s32.totalorder %s111, %s125
    %p127 = scmp.eq.s32.totalorder %s17, 0
    %p128 = por %p126, %p127
    %s129 = ssub.s32 %s11, %s18
    %p130 = scmp.eq.s32.totalorder %s129, 0
    %s132 = sadd.s32 %s131, 1
    %s133 = scalar_select %p130, %s131, %s132
    %p136 = pneg %p130
    %p137 = scmp.eq.s32.totalorder %s11, 1
    %p138 = por %p136, %p137
    %p139 = scmp.ne.s32.totalorder %s131, %s134
    %p140 = scmp.eq.s32.totalorder %s11, 0
    %p141 = por %p139, %p140
    %p142 = scmp.ne.s32.totalorder %s131, %s134
    %p143 = scmp.eq.s32.totalorder %s16, 1
    %p144 = por %p142, %p143
    %p145 = scmp.ne.s32.totalorder %s134, %s135
    %p146 = scmp.eq.s32.totalorder %s16, 0
    %p147 = por %p145, %p146
    %p148 = scmp.ne.s32.totalorder %s134, %s135
    %p149 = scmp.eq.s32.totalorder %s17, 1
    %p150 = por %p148, %p149
    %p152 = scmp.ne.s32.totalorder %s135, %s151
    %p153 = scmp.eq.s32.totalorder %s17, 0
    %p154 = por %p152, %p153
    %p155 = scmp.le.s32.totalorder 1, %s11
    %p156 = scmp.lt.s32.totalorder %s11, 3
    %p157 = pnand %p155, %p156
    %p158 = pneg %p157
    // Predicated region
    $region9: #{tpu_custom_call.1} parent=5 // pred_check
      _
    $region10: #{tpu_custom_call.1} parent=5 // pred_check_branch
      %160 = sbr.rel (%p157) target = $region12
    $region11: #{tpu_custom_call.1} parent=5 // pred_region
      %s161 = ssub.s32 %s11, 1
      // Predicated region
      $region13: #{tpu_custom_call.1} parent=11 // pred_check
        %p162 = pneg %p58
      $region14: #{tpu_custom_call.1} parent=11 // pred_check_branch
        %164 = sbr.rel (%p162) target = $region16
      $region15: #{tpu_custom_call.1} parent=11 // pred_region
        _
      $region16: #{tpu_custom_call.1} parent=11 // pred_fallthru
        _
      // Predicated region
      $region17: #{tpu_custom_call.1} parent=11 // pred_check
        %p165 = pneg %p79
      $region18: #{tpu_custom_call.1} parent=11 // pred_check_branch
        %167 = sbr.rel (%p165) target = $region20
      $region19: #{tpu_custom_call.1} parent=11 // pred_region
        _
      $region20: #{tpu_custom_call.1} parent=11 // pred_fallthru
        _
      // Predicated region
      $region21: #{tpu_custom_call.1} parent=11 // pred_check
        %p168 = pneg %p100
      $region22: #{tpu_custom_call.1} parent=11 // pred_check_branch
        %170 = sbr.rel (%p168) target = $region24
      $region23: #{tpu_custom_call.1} parent=11 // pred_region
        _
      $region24: #{tpu_custom_call.1} parent=11 // pred_fallthru
        _
      // Predicated region
      $region25: #{tpu_custom_call.1} parent=11 // pred_check
        %p171 = pneg %p121
      $region26: #{tpu_custom_call.1} parent=11 // pred_check_branch
        %173 = sbr.rel (%p171) target = $region28
      $region27: #{tpu_custom_call.1} parent=11 // pred_region
        _
      $region28: #{tpu_custom_call.1} parent=11 // pred_fallthru
        _
    $region12: #{tpu_custom_call.1} parent=5 // pred_fallthru
      _
    %p174 = scmp.lt.s32.totalorder %s11, 2
    // Predicated region
    $region29: #{tpu_custom_call.1} parent=5 // pred_check
      %p175 = pneg %p174
    $region30: #{tpu_custom_call.1} parent=5 // pred_check_branch
      %177 = sbr.rel (%p175) target = $region32
    $region31: #{tpu_custom_call.1} parent=5 // pred_region
      // Predicated region
      $region33: #{tpu_custom_call.1} parent=31 // pred_check
        %p178 = pneg %p31
      $region34: #{tpu_custom_call.1} parent=31 // pred_check_branch
        %180 = sbr.rel (%p178) target = $region36
      $region35: #{tpu_custom_call.1} parent=31 // pred_region
        %p181 = scmp.lt.s32.totalorder %s11, 1
        %s182 = scalar_select %p181, %s11, 1
        %s183 = smul.addr %s182, 8
        %s184 = smul.addr %s183, 4
        %s185 = scalar_lea.vmem %s0, %s184
      $region36: #{tpu_custom_call.1} parent=31 // pred_fallthru
        _
    $region32: #{tpu_custom_call.1} parent=5 // pred_fallthru
      _
    %p186 = scmp.le.s32.totalorder 1, %s11
    %p187 = scmp.lt.s32.totalorder %s11, 3
    %p188 = pnand %p186, %p187
    %p189 = pneg %p188
    // Predicated region
    $region37: #{tpu_custom_call.1} parent=5 // pred_check
      _
    $region38: #{tpu_custom_call.1} parent=5 // pred_check_branch
      %191 = sbr.rel (%p188) target = $region40
    $region39: #{tpu_custom_call.1} parent=5 // pred_region
      %s192 = ssub.s32 %s11, 1
      %p193 = scmp.lt.s32.totalorder %s16, 1
      %s194 = scalar_select %p193, %s16, 1
      %s195 = smul.addr %s194, 8
      %s196 = smul.addr %s195, 4
      %s197 = scalar_lea.vmem %s0, %s196
      %p198 = pneg %p37
      %p199 = pneg %p34
      %p200 = pneg %p58
      %p201 = pneg %p55
      %p202 = pneg %p79
      %p203 = pneg %p76
      %p204 = pneg %p100
      %p205 = pneg %p97
      %p206 = pneg %p121
      %p207 = pneg %p118
      %p208 = pneg %p147
      %p209 = pneg %p144
      %p210 = scmp.lt.s32.totalorder %s16, 1
      %s211 = scalar_select %p210, %s16, 1
      %s212 = smul.addr %s211, 8
      %s213 = smul.addr %s212, 8
      %s214 = scalar_lea.vmem %s5, %s213
      %p215 = scmp.lt.s32.totalorder %s16, 1
      %s216 = scalar_select %p215, %s16, 1
      %s217 = smul.addr %s216, 8
      %s218 = smul.addr %s217, 4
      %s219 = scalar_lea.vmem %s0, %s218
      %p220 = scmp.lt.s32.totalorder %s16, 1
      %s221 = scalar_select %p220, %s16, 1
      %s222 = smul.addr %s221, 8
      %s223 = smul.addr %s222, 8
      %s224 = scalar_lea.vmem %s5, %s223
      %v226 = vld [vmem:[%s219] sm:$0xf]
      %v227 = vld [vmem:[%s219 + $0x4] sm:$0xf]
      %v228 = vld [vmem:[%s219 + $0x8] sm:$0xf]
      %v229 = vld [vmem:[%s219 + $0xc] sm:$0xf]
      %v230 = vld [vmem:[%s219 + $0x10] sm:$0xf]
      %v231 = vld [vmem:[%s219 + $0x14] sm:$0xf]
      %v232 = vld [vmem:[%s219 + $0x18] sm:$0xf]
      %v233 = vld [vmem:[%s219 + $0x1c] sm:$0xf]
      %v234 = vld [vmem:[%s1] sm:$0xf]
      %v235 = vld [vmem:[%s1 + $0x4] sm:$0xf]
      %v236 = vld [vmem:[%s1 + $0x8] sm:$0xf]
      %v237 = vld [vmem:[%s1 + $0xc] sm:$0xf]
      %v238 = vld [vmem:[%s1 + $0x10] sm:$0xf]
      %v239 = vld [vmem:[%s1 + $0x14] sm:$0xf]
      %v240 = vld [vmem:[%s1 + $0x18] sm:$0xf]
      %v241 = vld [vmem:[%s1 + $0x1c] sm:$0xf]
      %v242 = vld [vmem:[%s1 + $0x20] sm:$0xf]
      %v251 = vunpack.c.l.b16 %v226
      %v252 = vunpack.c.l.b16 %v227
      %v253 = vunpack.c.l.b16 %v228
      %v254 = vunpack.c.l.b16 %v229
      %v255 = vunpack.c.l.b16 %v230
      %v256 = vunpack.c.l.b16 %v231
      %v257 = vunpack.c.l.b16 %v232
      %v258 = vunpack.c.l.b16 %v233
      %v259 = vpack.c.b16 %v252, %v251
      %v260 = vpack.c.b16 %v254, %v253
      %v261 = vpack.c.b16 %v256, %v255
      %v262 = vpack.c.b16 %v258, %v257
      %v272 = vunpack.c.l.b16 %v234
      %v273 = vunpack.c.l.b16 %v235
      %v274 = vunpack.c.l.b16 %v236
      %v275 = vunpack.c.l.b16 %v237
      %v276 = vunpack.c.l.b16 %v238
      %v277 = vunpack.c.l.b16 %v239
      %v278 = vunpack.c.l.b16 %v240
      %v279 = vunpack.c.l.b16 %v241
      %v280 = vunpack.c.l.b16 %v242
      %v281 = vpack.c.b16 %v273, %v272
      %v282 = vpack.c.b16 %v275, %v274
      %v283 = vpack.c.b16 %v277, %v276
      %v284 = vpack.c.b16 %v279, %v278
      %v285 = vpack.c.b16 %v280, %v280
      %vm290 = vcmask 588800
      %v292 = vsel %vm290, %v259, 0
      %v295 = vsel %vm290, %v260, 0
      %v298 = vsel %vm290, %v261, 0
      %v301 = vsel %vm290, %v262, 0
      %vm303 = vcmask 1043456
      %v305 = vsel %vm303, %v285, 0
      %307 = vmatprep.subr.bf16.mxu0 0
      %308 = vmatpush1.bf16.msra.mxu0 %v281
      %309 = vmatprep.subr.bf16.mxu0 0
      %310 = vmatpush1.bf16.msra.mxu0 %v282
      %311 = vmatprep.subr.bf16.mxu0 0
      %312 = vmatpush1.bf16.msra.mxu0 %v283
      %313 = vmatprep.subr.bf16.mxu0 0
      %314 = vmatpush1.bf16.msra.mxu0 %v284
      %315 = vmatprep.subr.bf16.mxu0 0
      %316 = vmatpush1.bf16.msra.mxu0 %v305
      %317 = vmatprep.subr.bf16.mxu0 0
      %318 = vmatpush1.bf16.msra.mxu0 0
      %319 = vmatprep.subr.bf16.mxu0 0
      %320 = vmatpush1.bf16.msra.mxu0 0
      %321 = vmatprep.subr.bf16.mxu0 0
      %322 = vmatpush1.bf16.msra.mxu0 0
      %323 = vmatprep.subr.bf16.mxu0 0
      %324 = vmatpush1.bf16.msra.mxu0 0
      %325 = vmatprep.subr.bf16.mxu0 0
      %326 = vmatpush1.bf16.msra.mxu0 0
      %327 = vmatprep.subr.bf16.mxu0 0
      %328 = vmatpush1.bf16.msra.mxu0 0
      %329 = vmatprep.subr.bf16.mxu0 0
      %330 = vmatpush1.bf16.msra.mxu0 0
      %331 = vmatprep.subr.bf16.mxu0 0
      %332 = vmatpush1.bf16.msra.mxu0 0
      %333 = vmatprep.subr.bf16.mxu0 0
      %334 = vmatpush1.bf16.msra.mxu0 0
      %335 = vmatprep.subr.bf16.mxu0 0
      %336 = vmatpush1.bf16.msra.mxu0 0
      %337 = vmatprep.subr.bf16.mxu0 0
      %338 = vmatpush1.bf16.msra.mxu0 0
      %339 = vmatprep.mubr.bf16.mxu0 0
      %340 = vmatmul.mubr.bf16.gmra.mrb[0].mxu0 %v292
      %v341 = vpop.f32.mrb[0].mxu0
      %v342 = vadd.f32 0.0, %v341
      %v343 = vpop.f32.mrb[0].mxu0
      %v344 = vpop.f32.mrb[0].mxu0
      %v345 = vadd.f32 0.0, %v344
      %v346 = vpop.f32.mrb[0].mxu0
      %347 = vmatprep.mubr.bf16.mxu0 0
      %348 = vmatmul.mubr.bf16.gmra.mrb[0].mxu0 %v295
      %v349 = vpop.f32.mrb[0].mxu0
      %v350 = vadd.f32 0.0, %v349
      %v351 = vpop.f32.mrb[0].mxu0
      %v352 = vpop.f32.mrb[0].mxu0
      %v353 = vadd.f32 0.0, %v352
      %v354 = vpop.f32.mrb[0].mxu0
      %355 = vmatprep.mubr.bf16.mxu0 0
      %356 = vmatmul.mubr.bf16.gmra.mrb[0].mxu0 %v298
      %v357 = vpop.f32.mrb[0].mxu0
      %v358 = vadd.f32 0.0, %v357
      %v359 = vpop.f32.mrb[0].mxu0
      %v360 = vpop.f32.mrb[0].mxu0
      %v361 = vadd.f32 0.0, %v360
      %v362 = vpop.f32.mrb[0].mxu0
      %363 = vmatprep.mubr.bf16.mxu0 0
      %364 = vmatmul.mubr.bf16.gmra.mrb[0].mxu0 %v301
      %v365 = vpop.f32.mrb[0].mxu0
      %v366 = vadd.f32 0.0, %v365
      %v367 = vpop.f32.mrb[0].mxu0
      %v368 = vpop.f32.mrb[0].mxu0
      %v369 = vadd.f32 0.0, %v368
      %v370 = vpop.f32.mrb[0].mxu0
      %371 = vdwg.mxu0
      %v372 = vpack.c.bf16 %v345, %v342
      %v373 = vpack.c.bf16 %v353, %v350
      %v374 = vpack.c.bf16 %v361, %v358
      %v375 = vpack.c.bf16 %v369, %v366
      %vm376 = vcmask 27648
      %377 = vst.msk [vmem:[#allocation2] sm:$0xf] %vm376, 0
      %378 = vst.msk [vmem:[#allocation2 + $0x4] sm:$0xf] %vm376, 0
      %379 = vst.msk [vmem:[#allocation2 + $0x8] sm:$0xf] %vm376, 0
      %380 = vst.msk [vmem:[#allocation2 + $0xc] sm:$0xf] %vm376, 0
      %381 = vst.msk [vmem:[#allocation2 + $0x10] sm:$0xf] %vm376, 0
      %382 = vst.msk [vmem:[#allocation2 + $0x14] sm:$0xf] %vm376, 0
      %383 = vst.msk [vmem:[#allocation2 + $0x18] sm:$0xf] %vm376, 0
      %384 = vst.msk [vmem:[#allocation2 + $0x1c] sm:$0xf] %vm376, 0
      %385 = vst.msk [vmem:[#allocation2 + $0x20] sm:$0xf] %vm376, 0
      %386 = vst.msk [vmem:[#allocation2 + $0x24] sm:$0xf] %vm376, 0
      %387 = vst.msk [vmem:[#allocation2 + $0x28] sm:$0xf] %vm376, 0
      %388 = vst.msk [vmem:[#allocation2 + $0x2c] sm:$0xf] %vm376, 0
      %389 = vst.msk [vmem:[#allocation2 + $0x30] sm:$0xf] %vm376, 0
      %390 = vst.msk [vmem:[#allocation2 + $0x34] sm:$0xf] %vm376, 0
      %391 = vst.msk [vmem:[#allocation2 + $0x38] sm:$0xf] %vm376, 0
      %392 = vst.msk [vmem:[#allocation2 + $0x3c] sm:$0xf] %vm376, 0
      %393 = vst.msk [vmem:[#allocation2 + $0x40] sm:$0xf] %vm376, 0
      %394 = vst.msk [vmem:[#allocation2 + $0x44] sm:$0xf] %vm376, 0
      %395 = vst.msk [vmem:[#allocation2 + $0x48] sm:$0xf] %vm376, 0
      %396 = vst.msk [vmem:[#allocation2 + $0x4c] sm:$0xf] %vm376, 0
      %397 = vst.msk [vmem:[#allocation2 + $0x50] sm:$0xf] %vm376, 0
      %398 = vst.msk [vmem:[#allocation2 + $0x54] sm:$0xf] %vm376, 0
      %399 = vst.msk [vmem:[#allocation2 + $0x58] sm:$0xf] %vm376, 0
      %400 = vst.msk [vmem:[#allocation2 + $0x5c] sm:$0xf] %vm376, 0
      %401 = vst.msk [vmem:[#allocation2 + $0x60] sm:$0xf] %vm376, 0
      %402 = vst.msk [vmem:[#allocation2 + $0x64] sm:$0xf] %vm376, 0
      %403 = vst.msk [vmem:[#allocation2 + $0x68] sm:$0xf] %vm376, 0
      %404 = vst.msk [vmem:[#allocation2 + $0x6c] sm:$0xf] %vm376, 0
      %405 = vst.msk [vmem:[#allocation2 + $0x70] sm:$0xf] %vm376, 0
      %406 = vst.msk [vmem:[#allocation2 + $0x74] sm:$0xf] %vm376, 0
      %407 = vst.msk [vmem:[#allocation2 + $0x78] sm:$0xf] %vm376, 0
      %408 = vst.msk [vmem:[#allocation2 + $0x7c] sm:$0xf] %vm376, 0
      %409 = vst.msk [vmem:[#allocation2 + $0x80] sm:$0xf] %vm376, 0
      %410 = vst.msk [vmem:[#allocation2 + $0x84] sm:$0xf] %vm376, 0
      %411 = vst.msk [vmem:[#allocation2 + $0x88] sm:$0xf] %vm376, 0
      %412 = vst.msk [vmem:[#allocation2 + $0x8c] sm:$0xf] %vm376, 0
      %413 = vst.msk [vmem:[#allocation2 + $0x90] sm:$0xf] %vm376, 0
      %414 = vst.msk [vmem:[#allocation2 + $0x94] sm:$0xf] %vm376, 0
      %415 = vst.msk [vmem:[#allocation2 + $0x98] sm:$0xf] %vm376, 0
      %416 = vst.msk [vmem:[#allocation2 + $0x9c] sm:$0xf] %vm376, 0
      %417 = vst.msk [vmem:[#allocation2 + $0xa0] sm:$0xf] %vm376, 0
      %418 = vst.msk [vmem:[#allocation2 + $0xa4] sm:$0xf] %vm376, 0
      %419 = vst.msk [vmem:[#allocation2 + $0xa8] sm:$0xf] %vm376, 0
      %420 = vst.msk [vmem:[#allocation2 + $0xac] sm:$0xf] %vm376, 0
      %421 = vst.msk [vmem:[#allocation2 + $0xb0] sm:$0xf] %vm376, 0
      %422 = vst.msk [vmem:[#allocation2 + $0xb4] sm:$0xf] %vm376, 0
      %423 = vst.msk [vmem:[#allocation2 + $0xb8] sm:$0xf] %vm376, 0
      %424 = vst.msk [vmem:[#allocation2 + $0xbc] sm:$0xf] %vm376, 0
      %425 = vst.msk [vmem:[#allocation2 + $0xc0] sm:$0xf] %vm376, 0
      %426 = vst.msk [vmem:[#allocation2 + $0xc4] sm:$0xf] %vm376, 0
      %427 = vst.msk [vmem:[#allocation2 + $0xc8] sm:$0xf] %vm376, 0
      %428 = vst.msk [vmem:[#allocation2 + $0xcc] sm:$0xf] %vm376, 0
      %429 = vst.msk [vmem:[#allocation2 + $0xd0] sm:$0xf] %vm376, 0
      %430 = vst.msk [vmem:[#allocation2 + $0xd4] sm:$0xf] %vm376, 0
      %431 = vst.msk [vmem:[#allocation2 + $0xd8] sm:$0xf] %vm376, 0
      %432 = vst.msk [vmem:[#allocation2 + $0xdc] sm:$0xf] %vm376, 0
      %433 = vst.msk [vmem:[#allocation2 + $0xe0] sm:$0xf] %vm376, 0
      %434 = vst.msk [vmem:[#allocation2 + $0xe4] sm:$0xf] %vm376, 0
      %435 = vst.msk [vmem:[#allocation2 + $0xe8] sm:$0xf] %vm376, 0
      %436 = vst.msk [vmem:[#allocation2 + $0xec] sm:$0xf] %vm376, 0
      %437 = vst.msk [vmem:[#allocation2 + $0xf0] sm:$0xf] %vm376, 0
      %438 = vst.msk [vmem:[#allocation2 + $0xf4] sm:$0xf] %vm376, 0
      %439 = vst.msk [vmem:[#allocation2 + $0xf8] sm:$0xf] %vm376, 0
      %440 = vst.msk [vmem:[#allocation2 + $0xfc] sm:$0xf] %vm376, 0
      %441 = vst.msk [vmem:[#allocation2 + $0x100] sm:$0xf] %vm376, 0
      %442 = vst.msk [vmem:[#allocation2 + $0x104] sm:$0xf] %vm376, 0
      %443 = vst.msk [vmem:[#allocation2 + $0x108] sm:$0xf] %vm376, 0
      %444 = vst.msk [vmem:[#allocation2 + $0x10c] sm:$0xf] %vm376, 0
      %445 = vst.msk [vmem:[#allocation2 + $0x110] sm:$0xf] %vm376, 0
      %446 = vst.msk [vmem:[#allocation2 + $0x114] sm:$0xf] %vm376, 0
      %447 = vst.msk [vmem:[#allocation2 + $0x118] sm:$0xf] %vm376, 0
      %448 = vst.msk [vmem:[#allocation2 + $0x11c] sm:$0xf] %vm376, 0
      %449 = vst.msk [vmem:[#allocation2 + $0x120] sm:$0xf] %vm376, 0
      %450 = vst.msk [vmem:[#allocation2 + $0x124] sm:$0xf] %vm376, 0
      %451 = vst.msk [vmem:[#allocation2 + $0x128] sm:$0xf] %vm376, 0
      %452 = vst.msk [vmem:[#allocation2 + $0x12c] sm:$0xf] %vm376, 0
      %453 = vst.msk [vmem:[#allocation2 + $0x130] sm:$0xf] %vm376, 0
      %454 = vst.msk [vmem:[#allocation2 + $0x134] sm:$0xf] %vm376, 0
      %455 = vst.msk [vmem:[#allocation2 + $0x138] sm:$0xf] %vm376, 0
      %456 = vst.msk [vmem:[#allocation2 + $0x13c] sm:$0xf] %vm376, 0
      %457 = vst.msk [vmem:[#allocation2 + $0x140] sm:$0xf] %vm376, 0
      %458 = vst.msk [vmem:[#allocation2 + $0x144] sm:$0xf] %vm376, 0
      %459 = vst.msk [vmem:[#allocation2 + $0x148] sm:$0xf] %vm376, 0
      %460 = vst.msk [vmem:[#allocation2 + $0x14c] sm:$0xf] %vm376, 0
      %461 = vst.msk [vmem:[#allocation2 + $0x150] sm:$0xf] %vm376, 0
      %462 = vst.msk [vmem:[#allocation2 + $0x154] sm:$0xf] %vm376, 0
      %463 = vst.msk [vmem:[#allocation2 + $0x158] sm:$0xf] %vm376, 0
      %464 = vst.msk [vmem:[#allocation2 + $0x15c] sm:$0xf] %vm376, 0
      %465 = vst.msk [vmem:[#allocation2 + $0x160] sm:$0xf] %vm376, 0
      %466 = vst.msk [vmem:[#allocation2 + $0x164] sm:$0xf] %vm376, 0
      %467 = vst.msk [vmem:[#allocation2 + $0x168] sm:$0xf] %vm376, 0
      %468 = vst.msk [vmem:[#allocation2 + $0x16c] sm:$0xf] %vm376, 0
      %469 = vst.msk [vmem:[#allocation2 + $0x170] sm:$0xf] %vm376, 0
      %470 = vst.msk [vmem:[#allocation2 + $0x174] sm:$0xf] %vm376, 0
      %471 = vst.msk [vmem:[#allocation2 + $0x178] sm:$0xf] %vm376, 0
      %472 = vst.msk [vmem:[#allocation2 + $0x17c] sm:$0xf] %vm376, 0
      %473 = vst.msk [vmem:[#allocation2 + $0x180] sm:$0xf] %vm376, 0
      %474 = vst.msk [vmem:[#allocation2 + $0x184] sm:$0xf] %vm376, 0
      %475 = vst.msk [vmem:[#allocation2 + $0x188] sm:$0xf] %vm376, 0
      %476 = vst.msk [vmem:[#allocation2 + $0x18c] sm:$0xf] %vm376, 0
      %477 = vst.msk [vmem:[#allocation2 + $0x190] sm:$0xf] %vm376, 0
      %478 = vst.msk [vmem:[#allocation2 + $0x194] sm:$0xf] %vm376, 0
      %479 = vst.msk [vmem:[#allocation2 + $0x198] sm:$0xf] %vm376, 0
      %480 = vst.msk [vmem:[#allocation2 + $0x19c] sm:$0xf] %vm376, 0
      %481 = vst.msk [vmem:[#allocation2 + $0x1a0] sm:$0xf] %vm376, 0
      %482 = vst.msk [vmem:[#allocation2 + $0x1a4] sm:$0xf] %vm376, 0
      %483 = vst.msk [vmem:[#allocation2 + $0x1a8] sm:$0xf] %vm376, 0
      %484 = vst.msk [vmem:[#allocation2 + $0x1ac] sm:$0xf] %vm376, 0
      %485 = vst.msk [vmem:[#allocation2 + $0x1b0] sm:$0xf] %vm376, 0
      %486 = vst.msk [vmem:[#allocation2 + $0x1b4] sm:$0xf] %vm376, 0
      %487 = vst.msk [vmem:[#allocation2 + $0x1b8] sm:$0xf] %vm376, 0
      %488 = vst.msk [vmem:[#allocation2 + $0x1bc] sm:$0xf] %vm376, 0
      %489 = vst.msk [vmem:[#allocation2 + $0x1c0] sm:$0xf] %vm376, 0
      %490 = vst.msk [vmem:[#allocation2 + $0x1c4] sm:$0xf] %vm376, 0
      %491 = vst.msk [vmem:[#allocation2 + $0x1c8] sm:$0xf] %vm376, 0
      %492 = vst.msk [vmem:[#allocation2 + $0x1cc] sm:$0xf] %vm376, 0
      %493 = vst.msk [vmem:[#allocation2 + $0x1d0] sm:$0xf] %vm376, 0
      %494 = vst.msk [vmem:[#allocation2 + $0x1d4] sm:$0xf] %vm376, 0
      %495 = vst.msk [vmem:[#allocation2 + $0x1d8] sm:$0xf] %vm376, 0
      %496 = vst.msk [vmem:[#allocation2 + $0x1dc] sm:$0xf] %vm376, 0
      %497 = vst.msk [vmem:[#allocation2 + $0x1e0] sm:$0xf] %vm376, 0
      %498 = vst.msk [vmem:[#allocation2 + $0x1e4] sm:$0xf] %vm376, 0
      %499 = vst.msk [vmem:[#allocation2 + $0x1e8] sm:$0xf] %vm376, 0
      %500 = vst.msk [vmem:[#allocation2 + $0x1ec] sm:$0xf] %vm376, 0
      %501 = vst.msk [vmem:[#allocation2 + $0x1f0] sm:$0xf] %vm376, 0
      %502 = vst.msk [vmem:[#allocation2 + $0x1f4] sm:$0xf] %vm376, 0
      %503 = vst.msk [vmem:[#allocation2 + $0x1f8] sm:$0xf] %vm376, 0
      %504 = vst.msk [vmem:[#allocation2 + $0x1fc] sm:$0xf] %vm376, 0
      %505 = vst.msk [vmem:[#allocation2 + $0x200] sm:$0xf] %vm376, 0
      %506 = vst.msk [vmem:[#allocation2 + $0x204] sm:$0xf] %vm376, 0
      %507 = vst.msk [vmem:[#allocation2 + $0x208] sm:$0xf] %vm376, 0
      %508 = vst.msk [vmem:[#allocation2 + $0x20c] sm:$0xf] %vm376, 0
      %509 = vst.msk [vmem:[#allocation2 + $0x210] sm:$0xf] %vm376, 0
      %510 = vst.msk [vmem:[#allocation2 + $0x214] sm:$0xf] %vm376, 0
      %511 = vst.msk [vmem:[#allocation2 + $0x218] sm:$0xf] %vm376, 0
      %512 = vst.msk [vmem:[#allocation2 + $0x21c] sm:$0xf] %vm376, 0
      %513 = vst.msk [vmem:[#allocation2 + $0x220] sm:$0xf] %vm376, 0
      %514 = vst.msk [vmem:[#allocation2 + $0x224] sm:$0xf] %vm376, 0
      %515 = vst.msk [vmem:[#allocation2 + $0x228] sm:$0xf] %vm376, 0
      %516 = vst.msk [vmem:[#allocation2 + $0x22c] sm:$0xf] %vm376, 0
      %517 = vst.msk [vmem:[#allocation2 + $0x230] sm:$0xf] %vm376, 0
      %518 = vst.msk [vmem:[#allocation2 + $0x234] sm:$0xf] %vm376, 0
      %519 = vst.msk [vmem:[#allocation2 + $0x238] sm:$0xf] %vm376, 0
      %520 = vst.msk [vmem:[#allocation2 + $0x23c] sm:$0xf] %vm376, 0
      %521 = vst.msk [vmem:[#allocation2 + $0x240] sm:$0xf] %vm376, 0
      %522 = vst.msk [vmem:[#allocation2 + $0x244] sm:$0xf] %vm376, 0
      %523 = vst.msk [vmem:[#allocation2 + $0x248] sm:$0xf] %vm376, 0
      %524 = vst.msk [vmem:[#allocation2 + $0x24c] sm:$0xf] %vm376, 0
      %525 = vst.msk [vmem:[#allocation2 + $0x250] sm:$0xf] %vm376, 0
      %526 = vst.msk [vmem:[#allocation2 + $0x254] sm:$0xf] %vm376, 0
      %527 = vst.msk [vmem:[#allocation2 + $0x258] sm:$0xf] %vm376, 0
      %528 = vst.msk [vmem:[#allocation2 + $0x25c] sm:$0xf] %vm376, 0
      %529 = vst.msk [vmem:[#allocation2 + $0x260] sm:$0xf] %vm376, 0
      %530 = vst.msk [vmem:[#allocation2 + $0x264] sm:$0xf] %vm376, 0
      %531 = vst.msk [vmem:[#allocation2 + $0x268] sm:$0xf] %vm376, 0
      %532 = vst.msk [vmem:[#allocation2 + $0x26c] sm:$0xf] %vm376, 0
      %533 = vst.msk [vmem:[#allocation2 + $0x270] sm:$0xf] %vm376, 0
      %534 = vst.msk [vmem:[#allocation2 + $0x274] sm:$0xf] %vm376, 0
      %535 = vst.msk [vmem:[#allocation2 + $0x278] sm:$0xf] %vm376, 0
      %536 = vst.msk [vmem:[#allocation2 + $0x27c] sm:$0xf] %vm376, 0
      %537 = vst.msk [vmem:[#allocation2 + $0x280] sm:$0xf] %vm376, 0
      %538 = vst.msk [vmem:[#allocation2 + $0x284] sm:$0xf] %vm376, 0
      %539 = vst.msk [vmem:[#allocation2 + $0x288] sm:$0xf] %vm376, 0
      %540 = vst.msk [vmem:[#allocation2 + $0x28c] sm:$0xf] %vm376, 0
      %541 = vst.msk [vmem:[#allocation2 + $0x290] sm:$0xf] %vm376, 0
      %542 = vst.msk [vmem:[#allocation2 + $0x294] sm:$0xf] %vm376, 0
      %543 = vst.msk [vmem:[#allocation2 + $0x298] sm:$0xf] %vm376, 0
      %544 = vst.msk [vmem:[#allocation2 + $0x29c] sm:$0xf] %vm376, 0
      %545 = vst.msk [vmem:[#allocation2 + $0x2a0] sm:$0xf] %vm376, 0
      %546 = vst.msk [vmem:[#allocation2 + $0x2a4] sm:$0xf] %vm376, 0
      %547 = vst.msk [vmem:[#allocation2 + $0x2a8] sm:$0xf] %vm376, 0
      %548 = vst.msk [vmem:[#allocation2 + $0x2ac] sm:$0xf] %vm376, 0
      %549 = vst.msk [vmem:[#allocation2 + $0x2b0] sm:$0xf] %vm376, 0
      %550 = vst.msk [vmem:[#allocation2 + $0x2b4] sm:$0xf] %vm376, 0
      %551 = vst.msk [vmem:[#allocation2 + $0x2b8] sm:$0xf] %vm376, 0
      %552 = vst.msk [vmem:[#allocation2 + $0x2bc] sm:$0xf] %vm376, 0
      %553 = vst.msk [vmem:[#allocation2 + $0x2c0] sm:$0xf] %vm376, 0
      %554 = vst.msk [vmem:[#allocation2 + $0x2c4] sm:$0xf] %vm376, 0
      %555 = vst.msk [vmem:[#allocation2 + $0x2c8] sm:$0xf] %vm376, 0
      %556 = vst.msk [vmem:[#allocation2 + $0x2cc] sm:$0xf] %vm376, 0
      %557 = vst.msk [vmem:[#allocation2 + $0x2d0] sm:$0xf] %vm376, 0
      %558 = vst.msk [vmem:[#allocation2 + $0x2d4] sm:$0xf] %vm376, 0
      %559 = vst.msk [vmem:[#allocation2 + $0x2d8] sm:$0xf] %vm376, 0
      %560 = vst.msk [vmem:[#allocation2 + $0x2dc] sm:$0xf] %vm376, 0
      %561 = vst.msk [vmem:[#allocation2 + $0x2e0] sm:$0xf] %vm376, 0
      %562 = vst.msk [vmem:[#allocation2 + $0x2e4] sm:$0xf] %vm376, 0
      %563 = vst.msk [vmem:[#allocation2 + $0x2e8] sm:$0xf] %vm376, 0
      %564 = vst.msk [vmem:[#allocation2 + $0x2ec] sm:$0xf] %vm376, 0
      %565 = vst.msk [vmem:[#allocation2 + $0x2f0] sm:$0xf] %vm376, 0
      %566 = vst.msk [vmem:[#allocation2 + $0x2f4] sm:$0xf] %vm376, 0
      %567 = vst.msk [vmem:[#allocation2 + $0x2f8] sm:$0xf] %vm376, 0
      %568 = vst.msk [vmem:[#allocation2 + $0x2fc] sm:$0xf] %vm376, 0
      %569 = vst.msk [vmem:[#allocation2 + $0x300] sm:$0xf] %vm376, 0
      %570 = vst.msk [vmem:[#allocation2 + $0x304] sm:$0xf] %vm376, 0
      %571 = vst.msk [vmem:[#allocation2 + $0x308] sm:$0xf] %vm376, 0
      %572 = vst.msk [vmem:[#allocation2 + $0x30c] sm:$0xf] %vm376, 0
      %573 = vst.msk [vmem:[#allocation2 + $0x310] sm:$0xf] %vm376, 0
      %574 = vst.msk [vmem:[#allocation2 + $0x314] sm:$0xf] %vm376, 0
      %575 = vst.msk [vmem:[#allocation2 + $0x318] sm:$0xf] %vm376, 0
      %576 = vst.msk [vmem:[#allocation2 + $0x31c] sm:$0xf] %vm376, 0
      %v581 = vunpack.c.l.b16 %v372
      %v582 = vunpack.c.h.b16 %v372
      %v583 = vunpack.c.l.b16 %v373
      %v584 = vunpack.c.h.b16 %v373
      %v585 = vunpack.c.l.b16 %v374
      %v586 = vunpack.c.h.b16 %v374
      %v587 = vunpack.c.l.b16 %v375
      %v588 = vunpack.c.h.b16 %v375
      %v589 = vpack.c.b16 %v581, %v581
      %v590 = vpack.c.b16 %v582, %v582
      %v591 = vpack.c.b16 %v583, %v583
      %v592 = vpack.c.b16 %v584, %v584
      %v593 = vpack.c.b16 %v585, %v585
      %v594 = vpack.c.b16 %v586, %v586
      %v595 = vpack.c.b16 %v587, %v587
      %v596 = vpack.c.b16 %v588, %v588
      %s605 = scalar_lea.vmem [#allocation2], 320
      %606 = vst.msk [vmem:[%s605 + $0x8] sm:$0xf] %vm376, %v589
      %607 = vst.msk [vmem:[%s605 + $0x1c] sm:$0xf] %vm376, %v590
      %608 = vst.msk [vmem:[%s605 + $0x30] sm:$0xf] %vm376, %v591
      %609 = vst.msk [vmem:[%s605 + $0x44] sm:$0xf] %vm376, %v592
      %610 = vst.msk [vmem:[%s605 + $0x58] sm:$0xf] %vm376, %v593
      %611 = vst.msk [vmem:[%s605 + $0x6c] sm:$0xf] %vm376, %v594
      %612 = vst.msk [vmem:[%s605 + $0x80] sm:$0xf] %vm376, %v595
      %613 = vst.msk [vmem:[%s605 + $0x94] sm:$0xf] %vm376, %v596
      %v614 = vld [vmem:[#allocation2 + $0x130] sm:$0x8]
      %v615 = vld [vmem:[#allocation2 + $0x134] sm:$0xf]
      %v616 = vld [vmem:[#allocation2 + $0x144] sm:$0x8]
      %v617 = vld [vmem:[#allocation2 + $0x148] sm:$0xf]
      %v618 = vld [vmem:[#allocation2 + $0x158] sm:$0x8]
      %v619 = vld [vmem:[#allocation2 + $0x15c] sm:$0xf]
      %v620 = vld [vmem:[#allocation2 + $0x16c] sm:$0x8]
      %v621 = vld [vmem:[#allocation2 + $0x170] sm:$0xf]
      %v622 = vld [vmem:[#allocation2 + $0x180] sm:$0x8]
      %v623 = vld [vmem:[#allocation2 + $0x184] sm:$0xf]
      %v624 = vld [vmem:[#allocation2 + $0x194] sm:$0x8]
      %v625 = vld [vmem:[#allocation2 + $0x198] sm:$0xf]
      %v626 = vld [vmem:[#allocation2 + $0x1a8] sm:$0x8]
      %v627 = vld [vmem:[#allocation2 + $0x1ac] sm:$0xf]
      %v628 = vld [vmem:[#allocation2 + $0x1bc] sm:$0x8]
      %v629 = vld [vmem:[#allocation2 + $0x1c0] sm:$0xf]
      %v630 = vld [vmem:[#allocation2 + $0x1d0] sm:$0x8]
      %v631 = vld [vmem:[#allocation2 + $0x1d4] sm:$0xf]
      %v632 = vld [vmem:[#allocation2 + $0x1e4] sm:$0x8]
      %v633 = vld [vmem:[#allocation2 + $0x1e8] sm:$0xf]
      %vm634 = vsmask.f32 256
      %vm635 = vsmask.f32 4368
      %vm636 = vmor %vm634, %vm635
      %v638 = vshrl.u32 %v614, 16
      %v640 = vrot.slane %v638, 7
      %v641 = vrot.slane %v640, 4
      %v643 = vshrl.u32 %v615, 16
      %v645 = vrot.slane %v643, 7
      %v646 = vshll.u32 %v615, 16
      %v648 = vor.u32 %v645, %v646
      %v649 = vsel %vm636, %v641, %v648
      %v651 = vshrl.u32 %v616, 16
      %v653 = vrot.slane %v651, 7
      %v654 = vrot.slane %v653, 4
      %v656 = vshrl.u32 %v617, 16
      %v658 = vrot.slane %v656, 7
      %v659 = vshll.u32 %v617, 16
      %v661 = vor.u32 %v658, %v659
      %v662 = vsel %vm636, %v654, %v661
      %v664 = vshrl.u32 %v618, 16
      %v666 = vrot.slane %v664, 7
      %v667 = vrot.slane %v666, 4
      %v669 = vshrl.u32 %v619, 16
      %v671 = vrot.slane %v669, 7
      %v672 = vshll.u32 %v619, 16
      %v674 = vor.u32 %v671, %v672
      %v675 = vsel %vm636, %v667, %v674
      %v677 = vshrl.u32 %v620, 16
      %v679 = vrot.slane %v677, 7
      %v680 = vrot.slane %v679, 4
      %v682 = vshrl.u32 %v621, 16
      %v684 = vrot.slane %v682, 7
      %v685 = vshll.u32 %v621, 16
      %v687 = vor.u32 %v684, %v685
      %v688 = vsel %vm636, %v680, %v687
      %v690 = vshrl.u32 %v622, 16
      %v692 = vrot.slane %v690, 7
      %v693 = vrot.slane %v692, 4
      %v695 = vshrl.u32 %v623, 16
      %v697 = vrot.slane %v695, 7
      %v698 = vshll.u32 %v623, 16
      %v700 = vor.u32 %v697, %v698
      %v701 = vsel %vm636, %v693, %v700
      %v703 = vshrl.u32 %v624, 16
      %v705 = vrot.slane %v703, 7
      %v706 = vrot.slane %v705, 4
      %v708 = vshrl.u32 %v625, 16
      %v710 = vrot.slane %v708, 7
      %v711 = vshll.u32 %v625, 16
      %v713 = vor.u32 %v710, %v711
      %v714 = vsel %vm636, %v706, %v713
      %v716 = vshrl.u32 %v626, 16
      %v718 = vrot.slane %v716, 7
      %v719 = vrot.slane %v718, 4
      %v721 = vshrl.u32 %v627, 16
      %v723 = vrot.slane %v721, 7
      %v724 = vshll.u32 %v627, 16
      %v726 = vor.u32 %v723, %v724
      %v727 = vsel %vm636, %v719, %v726
      %v729 = vshrl.u32 %v628, 16
      %v731 = vrot.slane %v729, 7
      %v732 = vrot.slane %v731, 4
      %v734 = vshrl.u32 %v629, 16
      %v736 = vrot.slane %v734, 7
      %v737 = vshll.u32 %v629, 16
      %v739 = vor.u32 %v736, %v737
      %v740 = vsel %vm636, %v732, %v739
      %v741 = vld [vmem:[%s2] sm:$0x3]
      %v743 = vshrl.u32 %v630, 16
      %v745 = vrot.slane %v743, 7
      %v746 = vrot.slane %v745, 4
      %v748 = vshrl.u32 %v631, 16
      %v750 = vrot.slane %v748, 7
      %v751 = vshll.u32 %v631, 16
      %v753 = vor.u32 %v750, %v751
      %v754 = vsel %vm636, %v746, %v753
      %s755 = scalar_lea.vmem %s2, 6
      %v756 = vld [vmem:[%s755] sm:$0x3]
      %v757 = vunpack.c.l.b16 %v662
      %v758 = vunpack.c.l.b16 %v675
      %v759 = vunpack.c.l.b16 %v688
      %v760 = vunpack.c.l.b16 %v701
      %v761 = vunpack.c.l.b16 %v714
      %v762 = vunpack.c.l.b16 %v727
      %v763 = vunpack.c.l.b16 %v740
      %v764 = vunpack.c.l.b16 %v754
      %v765 = vpack.c.b16 %v758, %v757
      %v766 = vpack.c.b16 %v760, %v759
      %v767 = vpack.c.b16 %v762, %v761
      %v768 = vpack.c.b16 %v764, %v763
      %vm769 = vcmask 31744
      %v771 = vsel %vm769, %v765, 0
      %v774 = vsel %vm769, %v766, 0
      %v777 = vsel %vm769, %v767, 0
      %v780 = vsel %vm769, %v768, 0
      %vm782 = vcmask 1041408
      %v784 = vsel %vm782, %v756, 0
      %786 = vmatprep.subr.bf16.mxu0 0
      %787 = vmatpush1.bf16.msra.mxu0 %v784
      %788 = vmatprep.subr.bf16.mxu0 0
      %789 = vmatpush1.bf16.msra.mxu0 0
      %790 = vmatprep.subr.bf16.mxu0 0
      %791 = vmatpush1.bf16.msra.mxu0 0
      %792 = vmatprep.subr.bf16.mxu0 0
      %793 = vmatpush1.bf16.msra.mxu0 0
      %794 = vmatprep.subr.bf16.mxu0 0
      %795 = vmatpush1.bf16.msra.mxu0 0
      %796 = vmatprep.subr.bf16.mxu0 0
      %797 = vmatpush1.bf16.msra.mxu0 0
      %798 = vmatprep.subr.bf16.mxu0 0
      %799 = vmatpush1.bf16.msra.mxu0 0
      %800 = vmatprep.subr.bf16.mxu0 0
      %801 = vmatpush1.bf16.msra.mxu0 0
      %802 = vmatprep.subr.bf16.mxu0 0
      %803 = vmatpush1.bf16.msra.mxu0 0
      %804 = vmatprep.subr.bf16.mxu0 0
      %805 = vmatpush1.bf16.msra.mxu0 0
      %806 = vmatprep.subr.bf16.mxu0 0
      %807 = vmatpush1.bf16.msra.mxu0 0
      %808 = vmatprep.subr.bf16.mxu0 0
      %809 = vmatpush1.bf16.msra.mxu0 0
      %810 = vmatprep.subr.bf16.mxu0 0
      %811 = vmatpush1.bf16.msra.mxu0 0
      %812 = vmatprep.subr.bf16.mxu0 0
      %813 = vmatpush1.bf16.msra.mxu0 0
      %814 = vmatprep.subr.bf16.mxu0 0
      %815 = vmatpush1.bf16.msra.mxu0 0
      %816 = vmatprep.subr.bf16.mxu0 0
      %817 = vmatpush1.bf16.msra.mxu0 0
      %818 = vmatprep.mubr.bf16.mxu0 0
      %819 = vmatmul.mubr.bf16.gmra.mrb[0].mxu0 %v771
      %v820 = vpop.f32.mrb[0].mxu0
      %v821 = vadd.f32 0.0, %v820
      %v822 = vpop.f32.mrb[0].mxu0
      %v823 = vpop.f32.mrb[0].mxu0
      %v824 = vadd.f32 0.0, %v823
      %v825 = vpop.f32.mrb[0].mxu0
      %826 = vmatprep.mubr.bf16.mxu0 0
      %827 = vmatmul.mubr.bf16.gmra.mrb[0].mxu0 %v774
      %v828 = vpop.f32.mrb[0].mxu0
      %v829 = vadd.f32 0.0, %v828
      %v830 = vpop.f32.mrb[0].mxu0
      %v831 = vpop.f32.mrb[0].mxu0
      %v832 = vadd.f32 0.0, %v831
      %v833 = vpop.f32.mrb[0].mxu0
      %834 = vmatprep.mubr.bf16.mxu0 0
      %835 = vmatmul.mubr.bf16.gmra.mrb[0].mxu0 %v777
      %v836 = vpop.f32.mrb[0].mxu0
      %v837 = vadd.f32 0.0, %v836
      %v838 = vpop.f32.mrb[0].mxu0
      %v839 = vpop.f32.mrb[0].mxu0
      %v840 = vadd.f32 0.0, %v839
      %v841 = vpop.f32.mrb[0].mxu0
      %842 = vmatprep.mubr.bf16.mxu0 0
      %843 = vmatmul.mubr.bf16.gmra.mrb[0].mxu0 %v780
      %v844 = vpop.f32.mrb[0].mxu0
      %v845 = vadd.f32 0.0, %v844
      %v846 = vpop.f32.mrb[0].mxu0
      %v847 = vpop.f32.mrb[0].mxu0
      %v848 = vadd.f32 0.0, %v847
      %v849 = vpop.f32.mrb[0].mxu0
      %850 = vdwg.mxu0
      %v851 = vunpack.c.l.b16 %v649
      %v852 = vpack.c.b16 %v757, %v851
      %v853 = vpack.c.b16 %v759, %v758
      %v854 = vpack.c.b16 %v761, %v760
      %v855 = vpack.c.b16 %v763, %v762
      %v857 = vsel %vm769, %v852, 0
      %v860 = vsel %vm769, %v853, 0
      %v863 = vsel %vm769, %v854, 0
      %v866 = vsel %vm769, %v855, 0
      %v869 = vsel %vm782, %v741, 0
      %871 = vmatprep.subr.bf16.mxu0 0
      %872 = vmatpush1.bf16.msra.mxu0 %v869
      %873 = vmatprep.subr.bf16.mxu0 0
      %874 = vmatpush1.bf16.msra.mxu0 0
      %875 = vmatprep.subr.bf16.mxu0 0
      %876 = vmatpush1.bf16.msra.mxu0 0
      %877 = vmatprep.subr.bf16.mxu0 0
      %878 = vmatpush1.bf16.msra.mxu0 0
      %879 = vmatprep.subr.bf16.mxu0 0
      %880 = vmatpush1.bf16.msra.mxu0 0
      %881 = vmatprep.subr.bf16.mxu0 0
      %882 = vmatpush1.bf16.msra.mxu0 0
      %883 = vmatprep.subr.bf16.mxu0 0
      %884 = vmatpush1.bf16.msra.mxu0 0
      %885 = vmatprep.subr.bf16.mxu0 0
      %886 = vmatpush1.bf16.msra.mxu0 0
      %887 = vmatprep.subr.bf16.mxu0 0
      %888 = vmatpush1.bf16.msra.mxu0 0
      %889 = vmatprep.subr.bf16.mxu0 0
      %890 = vmatpush1.bf16.msra.mxu0 0
      %891 = vmatprep.subr.bf16.mxu0 0
      %892 = vmatpush1.bf16.msra.mxu0 0
      %893 = vmatprep.subr.bf16.mxu0 0
      %894 = vmatpush1.bf16.msra.mxu0 0
      %895 = vmatprep.subr.bf16.mxu0 0
      %896 = vmatpush1.bf16.msra.mxu0 0
      %897 = vmatprep.subr.bf16.mxu0 0
      %898 = vmatpush1.bf16.msra.mxu0 0
      %899 = vmatprep.subr.bf16.mxu0 0
      %900 = vmatpush1.bf16.msra.mxu0 0
      %901 = vmatprep.subr.bf16.mxu0 0
      %902 = vmatpush1.bf16.msra.mxu0 0
      %903 = vmatprep.mubr.bf16.mxu0 0
      %904 = vmatmul.mubr.bf16.gmra.mrb[0].mxu0 %v857
      %v905 = vpop.f32.mrb[0].mxu0
      %v906 = vadd.f32 %v821, %v905
      %v907 = vpop.f32.mrb[0].mxu0
      %v908 = vpop.f32.mrb[0].mxu0
      %v909 = vadd.f32 %v824, %v908
      %v910 = vpop.f32.mrb[0].mxu0
      %911 = vmatprep.mubr.bf16.mxu0 0
      %912 = vmatmul.mubr.bf16.gmra.mrb[0].mxu0 %v860
      %v913 = vpop.f32.mrb[0].mxu0
      %v914 = vadd.f32 %v829, %v913
      %v915 = vpop.f32.mrb[0].mxu0
      %v916 = vpop.f32.mrb[0].mxu0
      %v917 = vadd.f32 %v832, %v916
      %v918 = vpop.f32.mrb[0].mxu0
      %919 = vmatprep.mubr.bf16.mxu0 0
      %920 = vmatmul.mubr.bf16.gmra.mrb[0].mxu0 %v863
      %v921 = vpop.f32.mrb[0].mxu0
      %v922 = vadd.f32 %v837, %v921
      %v923 = vpop.f32.mrb[0].mxu0
      %v924 = vpop.f32.mrb[0].mxu0
      %v925 = vadd.f32 %v840, %v924
      %v926 = vpop.f32.mrb[0].mxu0
      %927 = vmatprep.mubr.bf16.mxu0 0
      %928 = vmatmul.mubr.bf16.gmra.mrb[0].mxu0 %v866
      %v929 = vpop.f32.mrb[0].mxu0
      %v930 = vadd.f32 %v845, %v929
      %v931 = vpop.f32.mrb[0].mxu0
      %v932 = vpop.f32.mrb[0].mxu0
      %v933 = vadd.f32 %v848, %v932
      %v934 = vpop.f32.mrb[0].mxu0
      %935 = vdwg.mxu0
      %v937 = vshrl.u32 %v632, 16
      %v939 = vrot.slane %v937, 7
      %v940 = vrot.slane %v939, 4
      %v942 = vshrl.u32 %v633, 16
      %v944 = vrot.slane %v942, 7
      %v945 = vshll.u32 %v633, 16
      %v947 = vor.u32 %v944, %v945
      %v948 = vsel %vm636, %v940, %v947
      %s949 = scalar_lea.vmem %s2, 12
      %v950 = vld [vmem:[%s949] sm:$0x3]
      %v951 = vunpack.c.l.b16 %v948
      %v952 = vpack.c.b16 %v951, %v764
      %v954 = vsel %vm769, %v952, 0
      %v957 = vsel %vm782, %v950, 0
      %959 = vmatprep.subr.bf16.mxu0 0
      %960 = vmatpush1.bf16.msra.mxu0 %v957
      %961 = vmatprep.subr.bf16.mxu0 0
      %962 = vmatpush1.bf16.msra.mxu0 0
      %963 = vmatprep.subr.bf16.mxu0 0
      %964 = vmatpush1.bf16.msra.mxu0 0
      %965 = vmatprep.subr.bf16.mxu0 0
      %966 = vmatpush1.bf16.msra.mxu0 0
      %967 = vmatprep.subr.bf16.mxu0 0
      %968 = vmatpush1.bf16.msra.mxu0 0
      %969 = vmatprep.subr.bf16.mxu0 0
      %970 = vmatpush1.bf16.msra.mxu0 0
      %971 = vmatprep.subr.bf16.mxu0 0
      %972 = vmatpush1.bf16.msra.mxu0 0
      %973 = vmatprep.subr.bf16.mxu0 0
      %974 = vmatpush1.bf16.msra.mxu0 0
      %975 = vmatprep.subr.bf16.mxu0 0
      %976 = vmatpush1.bf16.msra.mxu0 0
      %977 = vmatprep.subr.bf16.mxu0 0
      %978 = vmatpush1.bf16.msra.mxu0 0
      %979 = vmatprep.subr.bf16.mxu0 0
      %980 = vmatpush1.bf16.msra.mxu0 0
      %981 = vmatprep.subr.bf16.mxu0 0
      %982 = vmatpush1.bf16.msra.mxu0 0
      %983 = vmatprep.subr.bf16.mxu0 0
      %984 = vmatpush1.bf16.msra.mxu0 0
      %985 = vmatprep.subr.bf16.mxu0 0
      %986 = vmatpush1.bf16.msra.mxu0 0
      %987 = vmatprep.subr.bf16.mxu0 0
      %988 = vmatpush1.bf16.msra.mxu0 0
      %989 = vmatprep.subr.bf16.mxu0 0
      %990 = vmatpush1.bf16.msra.mxu0 0
      %991 = vmatprep.mubr.bf16.mxu0 0
      %992 = vmatmul.mubr.bf16.gmra.mrb[0].mxu0 %v860
      %v993 = vpop.f32.mrb[0].mxu0
      %v994 = vadd.f32 0.0, %v993
      %v995 = vpop.f32.mrb[0].mxu0
      %v996 = vpop.f32.mrb[0].mxu0
      %v997 = vadd.f32 0.0, %v996
      %v998 = vpop.f32.mrb[0].mxu0
      %999 = vmatprep.mubr.bf16.mxu0 0
      %1000 = vmatmul.mubr.bf16.gmra.mrb[0].mxu0 %v863
      %v1001 = vpop.f32.mrb[0].mxu0
      %v1002 = vadd.f32 0.0, %v1001
      %v1003 = vpop.f32.mrb[0].mxu0
      %v1004 = vpop.f32.mrb[0].mxu0
      %v1005 = vadd.f32 0.0, %v1004
      %v1006 = vpop.f32.mrb[0].mxu0
      %1007 = vmatprep.mubr.bf16.mxu0 0
      %1008 = vmatmul.mubr.bf16.gmra.mrb[0].mxu0 %v866
      %v1009 = vpop.f32.mrb[0].mxu0
      %v1010 = vadd.f32 0.0, %v1009
      %v1011 = vpop.f32.mrb[0].mxu0
      %v1012 = vpop.f32.mrb[0].mxu0
      %v1013 = vadd.f32 0.0, %v1012
      %v1014 = vpop.f32.mrb[0].mxu0
      %1015 = vmatprep.mubr.bf16.mxu0 0
      %1016 = vmatmul.mubr.bf16.gmra.mrb[0].mxu0 %v954
      %v1017 = vpop.f32.mrb[0].mxu0
      %v1018 = vadd.f32 0.0, %v1017
      %v1019 = vpop.f32.mrb[0].mxu0
      %v1020 = vpop.f32.mrb[0].mxu0
      %v1021 = vadd.f32 0.0, %v1020
      %v1022 = vpop.f32.mrb[0].mxu0
      %1023 = vdwg.mxu0
      %v1024 = vadd.f32 %v906, %v994
      %v1025 = vadd.f32 %v909, %v997
      %v1026 = vadd.f32 %v914, %v1002
      %v1027 = vadd.f32 %v917, %v1005
      %v1028 = vadd.f32 %v922, %v1010
      %v1029 = vadd.f32 %v925, %v1013
      %v1030 = vadd.f32 %v930, %v1018
      %v1031 = vadd.f32 %v933, %v1021
      %v1032 = vld [vmem:[#allocation2 + $0x8] sm:$0xf]
      %v1033 = vld [vmem:[#allocation2 + $0x1c] sm:$0xf]
      %v1034 = vld [vmem:[#allocation2 + $0x30] sm:$0xf]
      %v1035 = vld [vmem:[#allocation2 + $0x44] sm:$0xf]
      %v1036 = vld [vmem:[#allocation2 + $0x58] sm:$0xf]
      %v1037 = vld [vmem:[#allocation2 + $0x6c] sm:$0xf]
      %v1038 = vld [vmem:[#allocation2 + $0x80] sm:$0xf]
      %v1039 = vld [vmem:[#allocation2 + $0x94] sm:$0xf]
      %v1040 = vld [vmem:[#allocation2 + $0xa8] sm:$0xf]
      %v1041 = vld [vmem:[#allocation2 + $0xbc] sm:$0xf]
      %v1042 = vld [vmem:[#allocation2 + $0xd0] sm:$0xf]
      %v1043 = vld [vmem:[#allocation2 + $0xe4] sm:$0xf]
      %v1044 = vld [vmem:[#allocation2 + $0xf8] sm:$0xf]
      %v1045 = vld [vmem:[#allocation2 + $0x10c] sm:$0xf]
      %v1046 = vld [vmem:[#allocation2 + $0x120] sm:$0xf]
      %v1047 = vld [vmem:[#allocation2 + $0x1fc] sm:$0xf]
      %v1048 = vld [vmem:[#allocation2 + $0x210] sm:$0xf]
      %v1049 = vld [vmem:[#allocation2 + $0x224] sm:$0xf]
      %v1050 = vld [vmem:[#allocation2 + $0x238] sm:$0xf]
      %v1051 = vld [vmem:[#allocation2 + $0x24c] sm:$0xf]
      %v1052 = vld [vmem:[#allocation2 + $0x260] sm:$0xf]
      %v1053 = vld [vmem:[#allocation2 + $0x274] sm:$0xf]
      %v1054 = vld [vmem:[#allocation2 + $0x288] sm:$0xf]
      %v1055 = vld [vmem:[#allocation2 + $0x29c] sm:$0xf]
      %v1056 = vld [vmem:[#allocation2 + $0x2b0] sm:$0xf]
      %v1057 = vld [vmem:[#allocation2 + $0x2c4] sm:$0xf]
      %v1058 = vld [vmem:[#allocation2 + $0x2d8] sm:$0xf]
      %v1059 = vld [vmem:[#allocation2 + $0x2ec] sm:$0xf]
      %v1060 = vld [vmem:[#allocation2 + $0x300] sm:$0xf]
      %v1061 = vld [vmem:[#allocation2 + $0x314] sm:$0xf]
      %s1062 = scalar_lea.vmem %s2, 2
      %v1063 = vld [vmem:[%s1062] sm:$0x3]
      %v1072 = vunpack.c.l.b16 %v615
      %v1073 = vunpack.c.l.b16 %v617
      %v1074 = vunpack.c.l.b16 %v619
      %v1075 = vunpack.c.l.b16 %v621
      %v1076 = vunpack.c.l.b16 %v623
      %v1077 = vunpack.c.l.b16 %v625
      %v1078 = vunpack.c.l.b16 %v627
      %v1079 = vunpack.c.l.b16 %v629
      %v1080 = vpack.c.b16 %v1073, %v1072
      %v1081 = vpack.c.b16 %v1075, %v1074
      %v1082 = vpack.c.b16 %v1077, %v1076
      %v1083 = vpack.c.b16 %v1079, %v1078
      %v1085 = vsel %vm769, %v1080, 0
      %v1088 = vsel %vm769, %v1081, 0
      %v1091 = vsel %vm769, %v1082, 0
      %v1094 = vsel %vm769, %v1083, 0
      %v1097 = vsel %vm782, %v1063, 0
      %1099 = vmatprep.subr.bf16.mxu0 0
      %1100 = vmatpush1.bf16.msra.mxu0 %v1097
      %1101 = vmatprep.subr.bf16.mxu0 0
      %1102 = vmatpush1.bf16.msra.mxu0 0
      %1103 = vmatprep.subr.bf16.mxu0 0
      %1104 = vmatpush1.bf16.msra.mxu0 0
      %1105 = vmatprep.subr.bf16.mxu0 0
      %1106 = vmatpush1.bf16.msra.mxu0 0
      %1107 = vmatprep.subr.bf16.mxu0 0
      %1108 = vmatpush1.bf16.msra.mxu0 0
      %1109 = vmatprep.subr.bf16.mxu0 0
      %1110 = vmatpush1.bf16.msra.mxu0 0
      %1111 = vmatprep.subr.bf16.mxu0 0
      %1112 = vmatpush1.bf16.msra.mxu0 0
      %1113 = vmatprep.subr.bf16.mxu0 0
      %1114 = vmatpush1.bf16.msra.mxu0 0
      %1115 = vmatprep.subr.bf16.mxu0 0
      %1116 = vmatpush1.bf16.msra.mxu0 0
      %1117 = vmatprep.subr.bf16.mxu0 0
      %1118 = vmatpush1.bf16.msra.mxu0 0
      %1119 = vmatprep.subr.bf16.mxu0 0
      %1120 = vmatpush1.bf16.msra.mxu0 0
      %1121 = vmatprep.subr.bf16.mxu0 0
      %1122 = vmatpush1.bf16.msra.mxu0 0
      %1123 = vmatprep.subr.bf16.mxu0 0
      %1124 = vmatpush1.bf16.msra.mxu0 0
      %1125 = vmatprep.subr.bf16.mxu0 0
      %1126 = vmatpush1.bf16.msra.mxu0 0
      %1127 = vmatprep.subr.bf16.mxu0 0
      %1128 = vmatpush1.bf16.msra.mxu0 0
      %1129 = vmatprep.subr.bf16.mxu0 0
      %1130 = vmatpush1.bf16.msra.mxu0 0
      %1131 = vmatprep.mubr.bf16.mxu0 0
      %1132 = vmatmul.mubr.bf16.gmra.mrb[0].mxu0 %v1085
      %v1133 = vpop.f32.mrb[0].mxu0
      %v1134 = vadd.f32 0.0, %v1133
      %v1135 = vpop.f32.mrb[0].mxu0
      %v1136 = vpop.f32.mrb[0].mxu0
      %v1137 = vadd.f32 0.0, %v1136
      %v1138 = vpop.f32.mrb[0].mxu0
      %1139 = vmatprep.mubr.bf16.mxu0 0
      %1140 = vmatmul.mubr.bf16.gmra.mrb[0].mxu0 %v1088
      %v1141 = vpop.f32.mrb[0].mxu0
      %v1142 = vadd.f32 0.0, %v1141
      %v1143 = vpop.f32.mrb[0].mxu0
      %v1144 = vpop.f32.mrb[0].mxu0
      %v1145 = vadd.f32 0.0, %v1144
      %v1146 = vpop.f32.mrb[0].mxu0
      %1147 = vmatprep.mubr.bf16.mxu0 0
      %1148 = vmatmul.mubr.bf16.gmra.mrb[0].mxu0 %v1091
      %v1149 = vpop.f32.mrb[0].mxu0
      %v1150 = vadd.f32 0.0, %v1149
      %v1151 = vpop.f32.mrb[0].mxu0
      %v1152 = vpop.f32.mrb[0].mxu0
      %v1153 = vadd.f32 0.0, %v1152
      %v1154 = vpop.f32.mrb[0].mxu0
      %1155 = vmatprep.mubr.bf16.mxu0 0
      %1156 = vmatmul.mubr.bf16.gmra.mrb[0].mxu0 %v1094
      %v1157 = vpop.f32.mrb[0].mxu0
      %v1158 = vadd.f32 0.0, %v1157
      %v1159 = vpop.f32.mrb[0].mxu0
      %v1160 = vpop.f32.mrb[0].mxu0
      %v1161 = vadd.f32 0.0, %v1160
      %v1162 = vpop.f32.mrb[0].mxu0
      %1163 = vdwg.mxu0
      %v1164 = vadd.f32 %v1024, %v1134
      %v1165 = vadd.f32 %v1025, %v1137
      %v1166 = vadd.f32 %v1026, %v1142
      %v1167 = vadd.f32 %v1027, %v1145
      %v1168 = vadd.f32 %v1028, %v1150
      %v1169 = vadd.f32 %v1029, %v1153
      %v1170 = vadd.f32 %v1030, %v1158
      %v1171 = vadd.f32 %v1031, %v1161
      %s1172 = scalar_lea.vmem %s2, 8
      %v1173 = vld [vmem:[%s1172] sm:$0x3]
      %v1175 = vunpack.c.l.b16 %v631
      %v1176 = vpack.c.b16 %v1074, %v1073
      %v1177 = vpack.c.b16 %v1076, %v1075
      %v1178 = vpack.c.b16 %v1078, %v1077
      %v1179 = vpack.c.b16 %v1175, %v1079
      %v1181 = vsel %vm769, %v1176, 0
      %v1184 = vsel %vm769, %v1177, 0
      %v1187 = vsel %vm769, %v1178, 0
      %v1190 = vsel %vm769, %v1179, 0
      %v1193 = vsel %vm782, %v1173, 0
      %1195 = vmatprep.subr.bf16.mxu0 0
      %1196 = vmatpush1.bf16.msra.mxu0 %v1193
      %1197 = vmatprep.subr.bf16.mxu0 0
      %1198 = vmatpush1.bf16.msra.mxu0 0
      %1199 = vmatprep.subr.bf16.mxu0 0
      %1200 = vmatpush1.bf16.msra.mxu0 0
      %1201 = vmatprep.subr.bf16.mxu0 0
      %1202 = vmatpush1.bf16.msra.mxu0 0
      %1203 = vmatprep.subr.bf16.mxu0 0
      %1204 = vmatpush1.bf16.msra.mxu0 0
      %1205 = vmatprep.subr.bf16.mxu0 0
      %1206 = vmatpush1.bf16.msra.mxu0 0
      %1207 = vmatprep.subr.bf16.mxu0 0
      %1208 = vmatpush1.bf16.msra.mxu0 0
      %1209 = vmatprep.subr.bf16.mxu0 0
      %1210 = vmatpush1.bf16.msra.mxu0 0
      %1211 = vmatprep.subr.bf16.mxu0 0
      %1212 = vmatpush1.bf16.msra.mxu0 0
      %1213 = vmatprep.subr.bf16.mxu0 0
      %1214 = vmatpush1.bf16.msra.mxu0 0
      %1215 = vmatprep.subr.bf16.mxu0 0
      %1216 = vmatpush1.bf16.msra.mxu0 0
      %1217 = vmatprep.subr.bf16.mxu0 0
      %1218 = vmatpush1.bf16.msra.mxu0 0
      %1219 = vmatprep.subr.bf16.mxu0 0
      %1220 = vmatpush1.bf16.msra.mxu0 0
      %1221 = vmatprep.subr.bf16.mxu0 0
      %1222 = vmatpush1.bf16.msra.mxu0 0
      %1223 = vmatprep.subr.bf16.mxu0 0
      %1224 = vmatpush1.bf16.msra.mxu0 0
      %1225 = vmatprep.subr.bf16.mxu0 0
      %1226 = vmatpush1.bf16.msra.mxu0 0
      %1227 = vmatprep.mubr.bf16.mxu0 0
      %1228 = vmatmul.mubr.bf16.gmra.mrb[0].mxu0 %v1181
      %v1229 = vpop.f32.mrb[0].mxu0
      %v1230 = vadd.f32 0.0, %v1229
      %v1231 = vpop.f32.mrb[0].mxu0
      %v1232 = vpop.f32.mrb[0].mxu0
      %v1233 = vadd.f32 0.0, %v1232
      %v1234 = vpop.f32.mrb[0].mxu0
      %1235 = vmatprep.mubr.bf16.mxu0 0
      %1236 = vmatmul.mubr.bf16.gmra.mrb[0].mxu0 %v1184
      %v1237 = vpop.f32.mrb[0].mxu0
      %v1238 = vadd.f32 0.0, %v1237
      %v1239 = vpop.f32.mrb[0].mxu0
      %v1240 = vpop.f32.mrb[0].mxu0
      %v1241 = vadd.f32 0.0, %v1240
      %v1242 = vpop.f32.mrb[0].mxu0
      %1243 = vmatprep.mubr.bf16.mxu0 0
      %1244 = vmatmul.mubr.bf16.gmra.mrb[0].mxu0 %v1187
      %v1245 = vpop.f32.mrb[0].mxu0
      %v1246 = vadd.f32 0.0, %v1245
      %v1247 = vpop.f32.mrb[0].mxu0
      %v1248 = vpop.f32.mrb[0].mxu0
      %v1249 = vadd.f32 0.0, %v1248
      %v1250 = vpop.f32.mrb[0].mxu0
      %1251 = vmatprep.mubr.bf16.mxu0 0
      %1252 = vmatmul.mubr.bf16.gmra.mrb[0].mxu0 %v1190
      %v1253 = vpop.f32.mrb[0].mxu0
      %v1254 = vadd.f32 0.0, %v1253
      %v1255 = vpop.f32.mrb[0].mxu0
      %v1256 = vpop.f32.mrb[0].mxu0
      %v1257 = vadd.f32 0.0, %v1256
      %v1258 = vpop.f32.mrb[0].mxu0
      %1259 = vdwg.mxu0
      %v1260 = vadd.f32 %v1164, %v1230
      %v1261 = vadd.f32 %v1165, %v1233
      %v1262 = vadd.f32 %v1166, %v1238
      %v1263 = vadd.f32 %v1167, %v1241
      %v1264 = vadd.f32 %v1168, %v1246
      %v1265 = vadd.f32 %v1169, %v1249
      %v1266 = vadd.f32 %v1170, %v1254
      %v1267 = vadd.f32 %v1171, %v1257
      %s1268 = scalar_lea.vmem %s2, 14
      %v1269 = vld [vmem:[%s1268] sm:$0x3]
      %v1271 = vunpack.c.l.b16 %v633
      %v1272 = vpack.c.b16 %v1271, %v1175
      %v1274 = vsel %vm769, %v1272, 0
      %v1277 = vsel %vm782, %v1269, 0
      %1279 = vmatprep.subr.bf16.mxu0 0
      %1280 = vmatpush1.bf16.msra.mxu0 %v1277
      %1281 = vmatprep.subr.bf16.mxu0 0
      %1282 = vmatpush1.bf16.msra.mxu0 0
      %1283 = vmatprep.subr.bf16.mxu0 0
      %1284 = vmatpush1.bf16.msra.mxu0 0
      %1285 = vmatprep.subr.bf16.mxu0 0
      %1286 = vmatpush1.bf16.msra.mxu0 0
      %1287 = vmatprep.subr.bf16.mxu0 0
      %1288 = vmatpush1.bf16.msra.mxu0 0
      %1289 = vmatprep.subr.bf16.mxu0 0
      %1290 = vmatpush1.bf16.msra.mxu0 0
      %1291 = vmatprep.subr.bf16.mxu0 0
      %1292 = vmatpush1.bf16.msra.mxu0 0
      %1293 = vmatprep.subr.bf16.mxu0 0
      %1294 = vmatpush1.bf16.msra.mxu0 0
      %1295 = vmatprep.subr.bf16.mxu0 0
      %1296 = vmatpush1.bf16.msra.mxu0 0
      %1297 = vmatprep.subr.bf16.mxu0 0
      %1298 = vmatpush1.bf16.msra.mxu0 0
      %1299 = vmatprep.subr.bf16.mxu0 0
      %1300 = vmatpush1.bf16.msra.mxu0 0
      %1301 = vmatprep.subr.bf16.mxu0 0
      %1302 = vmatpush1.bf16.msra.mxu0 0
      %1303 = vmatprep.subr.bf16.mxu0 0
      %1304 = vmatpush1.bf16.msra.mxu0 0
      %1305 = vmatprep.subr.bf16.mxu0 0
      %1306 = vmatpush1.bf16.msra.mxu0 0
      %1307 = vmatprep.subr.bf16.mxu0 0
      %1308 = vmatpush1.bf16.msra.mxu0 0
      %1309 = vmatprep.subr.bf16.mxu0 0
      %1310 = vmatpush1.bf16.msra.mxu0 0
      %1311 = vmatprep.mubr.bf16.mxu0 0
      %1312 = vmatmul.mubr.bf16.gmra.mrb[0].mxu0 %v1088
      %v1313 = vpop.f32.mrb[0].mxu0
      %v1314 = vadd.f32 0.0, %v1313
      %v1315 = vpop.f32.mrb[0].mxu0
      %v1316 = vpop.f32.mrb[0].mxu0
      %v1317 = vadd.f32 0.0, %v1316
      %v1318 = vpop.f32.mrb[0].mxu0
      %1319 = vmatprep.mubr.bf16.mxu0 0
      %1320 = vmatmul.mubr.bf16.gmra.mrb[0].mxu0 %v1091
      %v1321 = vpop.f32.mrb[0].mxu0
      %v1322 = vadd.f32 0.0, %v1321
      %v1323 = vpop.f32.mrb[0].mxu0
      %v1324 = vpop.f32.mrb[0].mxu0
      %v1325 = vadd.f32 0.0, %v1324
      %v1326 = vpop.f32.mrb[0].mxu0
      %1327 = vmatprep.mubr.bf16.mxu0 0
      %1328 = vmatmul.mubr.bf16.gmra.mrb[0].mxu0 %v1094
      %v1329 = vpop.f32.mrb[0].mxu0
      %v1330 = vadd.f32 0.0, %v1329
      %v1331 = vpop.f32.mrb[0].mxu0
      %v1332 = vpop.f32.mrb[0].mxu0
      %v1333 = vadd.f32 0.0, %v1332
      %v1334 = vpop.f32.mrb[0].mxu0
      %1335 = vmatprep.mubr.bf16.mxu0 0
      %1336 = vmatmul.mubr.bf16.gmra.mrb[0].mxu0 %v1274
      %v1337 = vpop.f32.mrb[0].mxu0
      %v1338 = vadd.f32 0.0, %v1337
      %v1339 = vpop.f32.mrb[0].mxu0
      %v1340 = vpop.f32.mrb[0].mxu0
      %v1341 = vadd.f32 0.0, %v1340
      %v1342 = vpop.f32.mrb[0].mxu0
      %1343 = vdwg.mxu0
      %v1344 = vadd.f32 %v1260, %v1314
      %v1345 = vadd.f32 %v1261, %v1317
      %v1346 = vadd.f32 %v1262, %v1322
      %v1347 = vadd.f32 %v1263, %v1325
      %v1348 = vadd.f32 %v1264, %v1330
      %v1349 = vadd.f32 %v1265, %v1333
      %v1350 = vadd.f32 %v1266, %v1338
      %v1351 = vadd.f32 %v1267, %v1341
      %v1352 = vld [vmem:[#allocation2 + $0x134] sm:$0xf]
      %v1353 = vld [vmem:[#allocation2 + $0x138] sm:$0x1]
      %v1354 = vld [vmem:[#allocation2 + $0x148] sm:$0xf]
      %v1355 = vld [vmem:[#allocation2 + $0x14c] sm:$0x1]
      %v1356 = vld [vmem:[#allocation2 + $0x15c] sm:$0xf]
      %v1357 = vld [vmem:[#allocation2 + $0x160] sm:$0x1]
      %v1358 = vld [vmem:[#allocation2 + $0x170] sm:$0xf]
      %v1359 = vld [vmem:[#allocation2 + $0x174] sm:$0x1]
      %v1360 = vld [vmem:[#allocation2 + $0x184] sm:$0xf]
      %v1361 = vld [vmem:[#allocation2 + $0x188] sm:$0x1]
      %v1362 = vld [vmem:[#allocation2 + $0x198] sm:$0xf]
      %v1363 = vld [vmem:[#allocation2 + $0x19c] sm:$0x1]
      %v1364 = vld [vmem:[#allocation2 + $0x1ac] sm:$0xf]
      %v1365 = vld [vmem:[#allocation2 + $0x1b0] sm:$0x1]
      %v1366 = vld [vmem:[#allocation2 + $0x1c0] sm:$0xf]
      %v1367 = vld [vmem:[#allocation2 + $0x1c4] sm:$0x1]
      %v1368 = vld [vmem:[#allocation2 + $0x1d4] sm:$0xf]
      %v1369 = vld [vmem:[#allocation2 + $0x1d8] sm:$0x1]
      %v1370 = vld [vmem:[#allocation2 + $0x1e8] sm:$0xf]
      %v1371 = vld [vmem:[#allocation2 + $0x1ec] sm:$0x1]
      %vm1372 = vsmask.f32 3328
      %vm1373 = vsmask.f32 7440
      %vm1374 = vmor %vm1372, %vm1373
      %v1376 = vshrl.u32 %v1352, 16
      %v1378 = vrot.slane %v1376, 4
      %v1379 = vshll.u32 %v1352, 16
      %v1381 = vrot.slane %v1379, 5
      %v1382 = vor.u32 %v1378, %v1381
      %v1383 = vrot.slane %v1382, 4
      %v1385 = vshll.u32 %v1353, 16
      %v1387 = vrot.slane %v1385, 5
      %v1388 = vsel %vm1374, %v1383, %v1387
      %v1390 = vshrl.u32 %v1354, 16
      %v1392 = vrot.slane %v1390, 4
      %v1393 = vshll.u32 %v1354, 16
      %v1395 = vrot.slane %v1393, 5
      %v1396 = vor.u32 %v1392, %v1395
      %v1397 = vrot.slane %v1396, 4
      %v1399 = vshll.u32 %v1355, 16
      %v1401 = vrot.slane %v1399, 5
      %v1402 = vsel %vm1374, %v1397, %v1401
      %v1404 = vshrl.u32 %v1356, 16
      %v1406 = vrot.slane %v1404, 4
      %v1407 = vshll.u32 %v1356, 16
      %v1409 = vrot.slane %v1407, 5
      %v1410 = vor.u32 %v1406, %v1409
      %v1411 = vrot.slane %v1410, 4
      %v1413 = vshll.u32 %v1357, 16
      %v1415 = vrot.slane %v1413, 5
      %v1416 = vsel %vm1374, %v1411, %v1415
      %v1418 = vshrl.u32 %v1358, 16
      %v1420 = vrot.slane %v1418, 4
      %v1421 = vshll.u32 %v1358, 16
      %v1423 = vrot.slane %v1421, 5
      %v1424 = vor.u32 %v1420, %v1423
      %v1425 = vrot.slane %v1424, 4
      %v1427 = vshll.u32 %v1359, 16
      %v1429 = vrot.slane %v1427, 5
      %v1430 = vsel %vm1374, %v1425, %v1429
      %v1432 = vshrl.u32 %v1360, 16
      %v1434 = vrot.slane %v1432, 4
      %v1435 = vshll.u32 %v1360, 16
      %v1437 = vrot.slane %v1435, 5
      %v1438 = vor.u32 %v1434, %v1437
      %v1439 = vrot.slane %v1438, 4
      %v1441 = vshll.u32 %v1361, 16
      %v1443 = vrot.slane %v1441, 5
      %v1444 = vsel %vm1374, %v1439, %v1443
      %v1446 = vshrl.u32 %v1362, 16
      %v1448 = vrot.slane %v1446, 4
      %v1449 = vshll.u32 %v1362, 16
      %v1451 = vrot.slane %v1449, 5
      %v1452 = vor.u32 %v1448, %v1451
      %v1453 = vrot.slane %v1452, 4
      %v1455 = vshll.u32 %v1363, 16
      %v1457 = vrot.slane %v1455, 5
      %v1458 = vsel %vm1374, %v1453, %v1457
      %v1460 = vshrl.u32 %v1364, 16
      %v1462 = vrot.slane %v1460, 4
      %v1463 = vshll.u32 %v1364, 16
      %v1465 = vrot.slane %v1463, 5
      %v1466 = vor.u32 %v1462, %v1465
      %v1467 = vrot.slane %v1466, 4
      %v1469 = vshll.u32 %v1365, 16
      %v1471 = vrot.slane %v1469, 5
      %v1472 = vsel %vm1374, %v1467, %v1471
      %v1474 = vshrl.u32 %v1366, 16
      %v1476 = vrot.slane %v1474, 4
      %v1477 = vshll.u32 %v1366, 16
      %v1479 = vrot.slane %v1477, 5
      %v1480 = vor.u32 %v1476, %v1479
      %v1481 = vrot.slane %v1480, 4
      %v1483 = vshll.u32 %v1367, 16
      %v1485 = vrot.slane %v1483, 5
      %v1486 = vsel %vm1374, %v1481, %v1485
      %s1487 = scalar_lea.vmem %s2, 4
      %v1488 = vld [vmem:[%s1487] sm:$0x3]
      %v1489 = vunpack.c.l.b16 %v1388
      %v1490 = vunpack.c.l.b16 %v1402
      %v1491 = vunpack.c.l.b16 %v1416
      %v1492 = vunpack.c.l.b16 %v1430
      %v1493 = vunpack.c.l.b16 %v1444
      %v1494 = vunpack.c.l.b16 %v1458
      %v1495 = vunpack.c.l.b16 %v1472
      %v1496 = vunpack.c.l.b16 %v1486
      %v1497 = vpack.c.b16 %v1490, %v1489
      %v1498 = vpack.c.b16 %v1492, %v1491
      %v1499 = vpack.c.b16 %v1494, %v1493
      %v1500 = vpack.c.b16 %v1496, %v1495
      %v1502 = vsel %vm769, %v1497, 0
      %v1505 = vsel %vm769, %v1498, 0
      %v1508 = vsel %vm769, %v1499, 0
      %v1511 = vsel %vm769, %v1500, 0
      %v1514 = vsel %vm782, %v1488, 0
      %1516 = vmatprep.subr.bf16.mxu0 0
      %1517 = vmatpush1.bf16.msra.mxu0 %v1514
      %1518 = vmatprep.subr.bf16.mxu0 0
      %1519 = vmatpush1.bf16.msra.mxu0 0
      %1520 = vmatprep.subr.bf16.mxu0 0
      %1521 = vmatpush1.bf16.msra.mxu0 0
      %1522 = vmatprep.subr.bf16.mxu0 0
      %1523 = vmatpush1.bf16.msra.mxu0 0
      %1524 = vmatprep.subr.bf16.mxu0 0
      %1525 = vmatpush1.bf16.msra.mxu0 0
      %1526 = vmatprep.subr.bf16.mxu0 0
      %1527 = vmatpush1.bf16.msra.mxu0 0
      %1528 = vmatprep.subr.bf16.mxu0 0
      %1529 = vmatpush1.bf16.msra.mxu0 0
      %1530 = vmatprep.subr.bf16.mxu0 0
      %1531 = vmatpush1.bf16.msra.mxu0 0
      %1532 = vmatprep.subr.bf16.mxu0 0
      %1533 = vmatpush1.bf16.msra.mxu0 0
      %1534 = vmatprep.subr.bf16.mxu0 0
      %1535 = vmatpush1.bf16.msra.mxu0 0
      %1536 = vmatprep.subr.bf16.mxu0 0
      %1537 = vmatpush1.bf16.msra.mxu0 0
      %1538 = vmatprep.subr.bf16.mxu0 0
      %1539 = vmatpush1.bf16.msra.mxu0 0
      %1540 = vmatprep.subr.bf16.mxu0 0
      %1541 = vmatpush1.bf16.msra.mxu0 0
      %1542 = vmatprep.subr.bf16.mxu0 0
      %1543 = vmatpush1.bf16.msra.mxu0 0
      %1544 = vmatprep.subr.bf16.mxu0 0
      %1545 = vmatpush1.bf16.msra.mxu0 0
      %1546 = vmatprep.subr.bf16.mxu0 0
      %1547 = vmatpush1.bf16.msra.mxu0 0
      %1548 = vmatprep.mubr.bf16.mxu0 0
      %1549 = vmatmul.mubr.bf16.gmra.mrb[0].mxu0 %v1502
      %v1550 = vpop.f32.mrb[0].mxu0
      %v1551 = vadd.f32 0.0, %v1550
      %v1552 = vpop.f32.mrb[0].mxu0
      %v1553 = vpop.f32.mrb[0].mxu0
      %v1554 = vadd.f32 0.0, %v1553
      %v1555 = vpop.f32.mrb[0].mxu0
      %1556 = vmatprep.mubr.bf16.mxu0 0
      %1557 = vmatmul.mubr.bf16.gmra.mrb[0].mxu0 %v1505
      %v1558 = vpop.f32.mrb[0].mxu0
      %v1559 = vadd.f32 0.0, %v1558
      %v1560 = vpop.f32.mrb[0].mxu0
      %v1561 = vpop.f32.mrb[0].mxu0
      %v1562 = vadd.f32 0.0, %v1561
      %v1563 = vpop.f32.mrb[0].mxu0
      %1564 = vmatprep.mubr.bf16.mxu0 0
      %1565 = vmatmul.mubr.bf16.gmra.mrb[0].mxu0 %v1508
      %v1566 = vpop.f32.mrb[0].mxu0
      %v1567 = vadd.f32 0.0, %v1566
      %v1568 = vpop.f32.mrb[0].mxu0
      %v1569 = vpop.f32.mrb[0].mxu0
      %v1570 = vadd.f32 0.0, %v1569
      %v1571 = vpop.f32.mrb[0].mxu0
      %1572 = vmatprep.mubr.bf16.mxu0 0
      %1573 = vmatmul.mubr.bf16.gmra.mrb[0].mxu0 %v1511
      %v1574 = vpop.f32.mrb[0].mxu0
      %v1575 = vadd.f32 0.0, %v1574
      %v1576 = vpop.f32.mrb[0].mxu0
      %v1577 = vpop.f32.mrb[0].mxu0
      %v1578 = vadd.f32 0.0, %v1577
      %v1579 = vpop.f32.mrb[0].mxu0
      %1580 = vdwg.mxu0
      %v1581 = vadd.f32 %v1344, %v1551
      %v1582 = vadd.f32 %v1345, %v1554
      %v1583 = vadd.f32 %v1346, %v1559
      %v1584 = vadd.f32 %v1347, %v1562
      %v1585 = vadd.f32 %v1348, %v1567
      %v1586 = vadd.f32 %v1349, %v1570
      %v1587 = vadd.f32 %v1350, %v1575
      %v1588 = vadd.f32 %v1351, %v1578
      %v1590 = vshrl.u32 %v1368, 16
      %v1592 = vrot.slane %v1590, 4
      %v1593 = vshll.u32 %v1368, 16
      %v1595 = vrot.slane %v1593, 5
      %v1596 = vor.u32 %v1592, %v1595
      %v1597 = vrot.slane %v1596, 4
      %v1599 = vshll.u32 %v1369, 16
      %v1601 = vrot.slane %v1599, 5
      %v1602 = vsel %vm1374, %v1597, %v1601
      %s1603 = scalar_lea.vmem %s2, 10
      %v1604 = vld [vmem:[%s1603] sm:$0x3]
      %v1605 = vunpack.c.l.b16 %v1602
      %v1606 = vpack.c.b16 %v1491, %v1490
      %v1607 = vpack.c.b16 %v1493, %v1492
      %v1608 = vpack.c.b16 %v1495, %v1494
      %v1609 = vpack.c.b16 %v1605, %v1496
      %v1611 = vsel %vm769, %v1606, 0
      %v1614 = vsel %vm769, %v1607, 0
      %v1617 = vsel %vm769, %v1608, 0
      %v1620 = vsel %vm769, %v1609, 0
      %v1623 = vsel %vm782, %v1604, 0
      %1625 = vmatprep.subr.bf16.mxu0 0
      %1626 = vmatpush1.bf16.msra.mxu0 %v1623
      %1627 = vmatprep.subr.bf16.mxu0 0
      %1628 = vmatpush1.bf16.msra.mxu0 0
      %1629 = vmatprep.subr.bf16.mxu0 0
      %1630 = vmatpush1.bf16.msra.mxu0 0
      %1631 = vmatprep.subr.bf16.mxu0 0
      %1632 = vmatpush1.bf16.msra.mxu0 0
      %1633 = vmatprep.subr.bf16.mxu0 0
      %1634 = vmatpush1.bf16.msra.mxu0 0
      %1635 = vmatprep.subr.bf16.mxu0 0
      %1636 = vmatpush1.bf16.msra.mxu0 0
      %1637 = vmatprep.subr.bf16.mxu0 0
      %1638 = vmatpush1.bf16.msra.mxu0 0
      %1639 = vmatprep.subr.bf16.mxu0 0
      %1640 = vmatpush1.bf16.msra.mxu0 0
      %1641 = vmatprep.subr.bf16.mxu0 0
      %1642 = vmatpush1.bf16.msra.mxu0 0
      %1643 = vmatprep.subr.bf16.mxu0 0
      %1644 = vmatpush1.bf16.msra.mxu0 0
      %1645 = vmatprep.subr.bf16.mxu0 0
      %1646 = vmatpush1.bf16.msra.mxu0 0
      %1647 = vmatprep.subr.bf16.mxu0 0
      %1648 = vmatpush1.bf16.msra.mxu0 0
      %1649 = vmatprep.subr.bf16.mxu0 0
      %1650 = vmatpush1.bf16.msra.mxu0 0
      %1651 = vmatprep.subr.bf16.mxu0 0
      %1652 = vmatpush1.bf16.msra.mxu0 0
      %1653 = vmatprep.subr.bf16.mxu0 0
      %1654 = vmatpush1.bf16.msra.mxu0 0
      %1655 = vmatprep.subr.bf16.mxu0 0
      %1656 = vmatpush1.bf16.msra.mxu0 0
      %1657 = vmatprep.mubr.bf16.mxu0 0
      %1658 = vmatmul.mubr.bf16.gmra.mrb[0].mxu0 %v1611
      %v1659 = vpop.f32.mrb[0].mxu0
      %v1660 = vadd.f32 0.0, %v1659
      %v1661 = vpop.f32.mrb[0].mxu0
      %v1662 = vpop.f32.mrb[0].mxu0
      %v1663 = vadd.f32 0.0, %v1662
      %v1664 = vpop.f32.mrb[0].mxu0
      %1665 = vmatprep.mubr.bf16.mxu0 0
      %1666 = vmatmul.mubr.bf16.gmra.mrb[0].mxu0 %v1614
      %v1667 = vpop.f32.mrb[0].mxu0
      %v1668 = vadd.f32 0.0, %v1667
      %v1669 = vpop.f32.mrb[0].mxu0
      %v1670 = vpop.f32.mrb[0].mxu0
      %v1671 = vadd.f32 0.0, %v1670
      %v1672 = vpop.f32.mrb[0].mxu0
      %1673 = vmatprep.mubr.bf16.mxu0 0
      %1674 = vmatmul.mubr.bf16.gmra.mrb[0].mxu0 %v1617
      %v1675 = vpop.f32.mrb[0].mxu0
      %v1676 = vadd.f32 0.0, %v1675
      %v1677 = vpop.f32.mrb[0].mxu0
      %v1678 = vpop.f32.mrb[0].mxu0
      %v1679 = vadd.f32 0.0, %v1678
      %v1680 = vpop.f32.mrb[0].mxu0
      %1681 = vmatprep.mubr.bf16.mxu0 0
      %1682 = vmatmul.mubr.bf16.gmra.mrb[0].mxu0 %v1620
      %v1683 = vpop.f32.mrb[0].mxu0
      %v1684 = vadd.f32 0.0, %v1683
      %v1685 = vpop.f32.mrb[0].mxu0
      %v1686 = vpop.f32.mrb[0].mxu0
      %v1687 = vadd.f32 0.0, %v1686
      %v1688 = vpop.f32.mrb[0].mxu0
      %1689 = vdwg.mxu0
      %v1690 = vadd.f32 %v1581, %v1660
      %v1691 = vadd.f32 %v1582, %v1663
      %v1692 = vadd.f32 %v1583, %v1668
      %v1693 = vadd.f32 %v1584, %v1671
      %v1694 = vadd.f32 %v1585, %v1676
      %v1695 = vadd.f32 %v1586, %v1679
      %v1696 = vadd.f32 %v1587, %v1684
      %v1697 = vadd.f32 %v1588, %v1687
      %v1699 = vshrl.u32 %v1370, 16
      %v1701 = vrot.slane %v1699, 4
      %v1702 = vshll.u32 %v1370, 16
      %v1704 = vrot.slane %v1702, 5
      %v1705 = vor.u32 %v1701, %v1704
      %v1706 = vrot.slane %v1705, 4
      %v1708 = vshll.u32 %v1371, 16
      %v1710 = vrot.slane %v1708, 5
      %v1711 = vsel %vm1374, %v1706, %v1710
      %s1712 = scalar_lea.vmem %s2, 16
      %v1713 = vld [vmem:[%s1712] sm:$0x3]
      %v1714 = vunpack.c.l.b16 %v1711
      %v1715 = vpack.c.b16 %v1714, %v1605
      %v1717 = vsel %vm769, %v1715, 0
      %v1720 = vsel %vm782, %v1713, 0
      %1722 = vmatprep.subr.bf16.mxu0 0
      %1723 = vmatpush1.bf16.msra.mxu0 %v1720
      %1724 = vmatprep.subr.bf16.mxu0 0
      %1725 = vmatpush1.bf16.msra.mxu0 0
      %1726 = vmatprep.subr.bf16.mxu0 0
      %1727 = vmatpush1.bf16.msra.mxu0 0
      %1728 = vmatprep.subr.bf16.mxu0 0
      %1729 = vmatpush1.bf16.msra.mxu0 0
      %1730 = vmatprep.subr.bf16.mxu0 0
      %1731 = vmatpush1.bf16.msra.mxu0 0
      %1732 = vmatprep.subr.bf16.mxu0 0
      %1733 = vmatpush1.bf16.msra.mxu0 0
      %1734 = vmatprep.subr.bf16.mxu0 0
      %1735 = vmatpush1.bf16.msra.mxu0 0
      %1736 = vmatprep.subr.bf16.mxu0 0
      %1737 = vmatpush1.bf16.msra.mxu0 0
      %1738 = vmatprep.subr.bf16.mxu0 0
      %1739 = vmatpush1.bf16.msra.mxu0 0
      %1740 = vmatprep.subr.bf16.mxu0 0
      %1741 = vmatpush1.bf16.msra.mxu0 0
      %1742 = vmatprep.subr.bf16.mxu0 0
      %1743 = vmatpush1.bf16.msra.mxu0 0
      %1744 = vmatprep.subr.bf16.mxu0 0
      %1745 = vmatpush1.bf16.msra.mxu0 0
      %1746 = vmatprep.subr.bf16.mxu0 0
      %1747 = vmatpush1.bf16.msra.mxu0 0
      %1748 = vmatprep.subr.bf16.mxu0 0
      %1749 = vmatpush1.bf16.msra.mxu0 0
      %1750 = vmatprep.subr.bf16.mxu0 0
      %1751 = vmatpush1.bf16.msra.mxu0 0
      %1752 = vmatprep.subr.bf16.mxu0 0
      %1753 = vmatpush1.bf16.msra.mxu0 0
      %1754 = vmatprep.mubr.bf16.mxu0 0
      %1755 = vmatmul.mubr.bf16.gmra.mrb[0].mxu0 %v1505
      %v1756 = vpop.f32.mrb[0].mxu0
      %v1757 = vadd.f32 0.0, %v1756
      %v1758 = vpop.f32.mrb[0].mxu0
      %v1759 = vpop.f32.mrb[0].mxu0
      %v1760 = vadd.f32 0.0, %v1759
      %v1761 = vpop.f32.mrb[0].mxu0
      %1762 = vmatprep.mubr.bf16.mxu0 0
      %1763 = vmatmul.mubr.bf16.gmra.mrb[0].mxu0 %v1508
      %v1764 = vpop.f32.mrb[0].mxu0
      %v1765 = vadd.f32 0.0, %v1764
      %v1766 = vpop.f32.mrb[0].mxu0
      %v1767 = vpop.f32.mrb[0].mxu0
      %v1768 = vadd.f32 0.0, %v1767
      %v1769 = vpop.f32.mrb[0].mxu0
      %1770 = vmatprep.mubr.bf16.mxu0 0
      %1771 = vmatmul.mubr.bf16.gmra.mrb[0].mxu0 %v1511
      %v1772 = vpop.f32.mrb[0].mxu0
      %v1773 = vadd.f32 0.0, %v1772
      %v1774 = vpop.f32.mrb[0].mxu0
      %v1775 = vpop.f32.mrb[0].mxu0
      %v1776 = vadd.f32 0.0, %v1775
      %v1777 = vpop.f32.mrb[0].mxu0
      %1778 = vmatprep.mubr.bf16.mxu0 0
      %1779 = vmatmul.mubr.bf16.gmra.mrb[0].mxu0 %v1717
      %v1780 = vpop.f32.mrb[0].mxu0
      %v1781 = vadd.f32 0.0, %v1780
      %v1782 = vpop.f32.mrb[0].mxu0
      %v1783 = vpop.f32.mrb[0].mxu0
      %v1784 = vadd.f32 0.0, %v1783
      %v1785 = vpop.f32.mrb[0].mxu0
      %1786 = vdwg.mxu0
      %v1787 = vadd.f32 %v1690, %v1757
      %v1788 = vadd.f32 %v1691, %v1760
      %v1789 = vadd.f32 %v1692, %v1765
      %v1790 = vadd.f32 %v1693, %v1768
      %v1791 = vadd.f32 %v1694, %v1773
      %v1792 = vadd.f32 %v1695, %v1776
      %v1793 = vadd.f32 %v1696, %v1781
      %v1794 = vadd.f32 %v1697, %v1784
      %v1795 = vld [vmem:[#allocation2 + $0x11c] sm:$0x8]
      %v1796 = vld [vmem:[#allocation2 + $0x120] sm:$0x7]
      %v1797 = vld [vmem:[#allocation2 + $0x134] sm:$0x7]
      %v1798 = vld [vmem:[#allocation2 + $0x148] sm:$0x7]
      %v1799 = vld [vmem:[#allocation2 + $0x15c] sm:$0x7]
      %v1800 = vld [vmem:[#allocation2 + $0x170] sm:$0x7]
      %v1801 = vld [vmem:[#allocation2 + $0x184] sm:$0x7]
      %v1802 = vld [vmem:[#allocation2 + $0x198] sm:$0x7]
      %v1803 = vld [vmem:[#allocation2 + $0x1ac] sm:$0x7]
      %v1804 = vld [vmem:[#allocation2 + $0x1c0] sm:$0x7]
      %v1805 = vld [vmem:[#allocation2 + $0x1d4] sm:$0x7]
      %v1806 = vld [vmem:[#allocation2 + $0x1e8] sm:$0x7]
      %v1807 = vld [vmem:[#allocation2 + $0x1f8] sm:$0x8]
      %v1808 = vld [vmem:[#allocation2 + $0x1fc] sm:$0x7]
      %vm1825 = vcmask 1040384
      %vm1826 = vcmask 1044484
      %vm1827 = vmor %vm1825, %vm1826
      %v1828 = vrot.slane %v1795, 7
      %v1829 = vrot.slane %v1828, 4
      %v1830 = vrot.slane %v1796, 7
      %v1831 = vsel %vm1827, %v1829, %v1830
      %v1832 = vrot.slane %v614, 7
      %v1833 = vrot.slane %v1832, 4
      %v1834 = vrot.slane %v1797, 7
      %v1835 = vsel %vm1827, %v1833, %v1834
      %v1836 = vrot.slane %v616, 7
      %v1837 = vrot.slane %v1836, 4
      %v1838 = vrot.slane %v1798, 7
      %v1839 = vsel %vm1827, %v1837, %v1838
      %v1840 = vrot.slane %v618, 7
      %v1841 = vrot.slane %v1840, 4
      %v1842 = vrot.slane %v1799, 7
      %v1843 = vsel %vm1827, %v1841, %v1842
      %v1844 = vrot.slane %v620, 7
      %v1845 = vrot.slane %v1844, 4
      %v1846 = vrot.slane %v1800, 7
      %v1847 = vsel %vm1827, %v1845, %v1846
      %v1848 = vrot.slane %v622, 7
      %v1849 = vrot.slane %v1848, 4
      %v1850 = vrot.slane %v1801, 7
      %v1851 = vsel %vm1827, %v1849, %v1850
      %v1852 = vrot.slane %v624, 7
      %v1853 = vrot.slane %v1852, 4
      %v1854 = vrot.slane %v1802, 7
      %v1855 = vsel %vm1827, %v1853, %v1854
      %v1856 = vrot.slane %v626, 7
      %v1857 = vrot.slane %v1856, 4
      %v1858 = vrot.slane %v1803, 7
      %v1859 = vsel %vm1827, %v1857, %v1858
      %s1860 = scalar_lea.vmem %s2, 18
      %v1861 = vld [vmem:[%s1860] sm:$0x3]
      %v1862 = vunpack.c.l.b16 %v1831
      %v1863 = vunpack.c.l.b16 %v1835
      %v1864 = vunpack.c.l.b16 %v1839
      %v1865 = vunpack.c.l.b16 %v1843
      %v1866 = vunpack.c.l.b16 %v1847
      %v1867 = vunpack.c.l.b16 %v1851
      %v1868 = vunpack.c.l.b16 %v1855
      %v1869 = vunpack.c.l.b16 %v1859
      %v1870 = vpack.c.b16 %v1863, %v1862
      %v1871 = vpack.c.b16 %v1865, %v1864
      %v1872 = vpack.c.b16 %v1867, %v1866
      %v1873 = vpack.c.b16 %v1869, %v1868
      %v1875 = vsel %vm769, %v1870, 0
      %v1878 = vsel %vm769, %v1871, 0
      %v1881 = vsel %vm769, %v1872, 0
      %v1884 = vsel %vm769, %v1873, 0
      %v1887 = vsel %vm782, %v1861, 0
      %1889 = vmatprep.subr.bf16.mxu0 0
      %1890 = vmatpush1.bf16.msra.mxu0 %v1887
      %1891 = vmatprep.subr.bf16.mxu0 0
      %1892 = vmatpush1.bf16.msra.mxu0 0
      %1893 = vmatprep.subr.bf16.mxu0 0
      %1894 = vmatpush1.bf16.msra.mxu0 0
      %1895 = vmatprep.subr.bf16.mxu0 0
      %1896 = vmatpush1.bf16.msra.mxu0 0
      %1897 = vmatprep.subr.bf16.mxu0 0
      %1898 = vmatpush1.bf16.msra.mxu0 0
      %1899 = vmatprep.subr.bf16.mxu0 0
      %1900 = vmatpush1.bf16.msra.mxu0 0
      %1901 = vmatprep.subr.bf16.mxu0 0
      %1902 = vmatpush1.bf16.msra.mxu0 0
      %1903 = vmatprep.subr.bf16.mxu0 0
      %1904 = vmatpush1.bf16.msra.mxu0 0
      %1905 = vmatprep.subr.bf16.mxu0 0
      %1906 = vmatpush1.bf16.msra.mxu0 0
      %1907 = vmatprep.subr.bf16.mxu0 0
      %1908 = vmatpush1.bf16.msra.mxu0 0
      %1909 = vmatprep.subr.bf16.mxu0 0
      %1910 = vmatpush1.bf16.msra.mxu0 0
      %1911 = vmatprep.subr.bf16.mxu0 0
      %1912 = vmatpush1.bf16.msra.mxu0 0
      %1913 = vmatprep.subr.bf16.mxu0 0
      %1914 = vmatpush1.bf16.msra.mxu0 0
      %1915 = vmatprep.subr.bf16.mxu0 0
      %1916 = vmatpush1.bf16.msra.mxu0 0
      %1917 = vmatprep.subr.bf16.mxu0 0
      %1918 = vmatpush1.bf16.msra.mxu0 0
      %1919 = vmatprep.subr.bf16.mxu0 0
      %1920 = vmatpush1.bf16.msra.mxu0 0
      %1921 = vmatprep.mubr.bf16.mxu0 0
      %1922 = vmatmul.mubr.bf16.gmra.mrb[0].mxu0 %v1875
      %v1923 = vpop.f32.mrb[0].mxu0
      %v1924 = vadd.f32 0.0, %v1923
      %v1925 = vpop.f32.mrb[0].mxu0
      %v1926 = vpop.f32.mrb[0].mxu0
      %v1927 = vadd.f32 0.0, %v1926
      %v1928 = vpop.f32.mrb[0].mxu0
      %1929 = vmatprep.mubr.bf16.mxu0 0
      %1930 = vmatmul.mubr.bf16.gmra.mrb[0].mxu0 %v1878
      %v1931 = vpop.f32.mrb[0].mxu0
      %v1932 = vadd.f32 0.0, %v1931
      %v1933 = vpop.f32.mrb[0].mxu0
      %v1934 = vpop.f32.mrb[0].mxu0
      %v1935 = vadd.f32 0.0, %v1934
      %v1936 = vpop.f32.mrb[0].mxu0
      %1937 = vmatprep.mubr.bf16.mxu0 0
      %1938 = vmatmul.mubr.bf16.gmra.mrb[0].mxu0 %v1881
      %v1939 = vpop.f32.mrb[0].mxu0
      %v1940 = vadd.f32 0.0, %v1939
      %v1941 = vpop.f32.mrb[0].mxu0
      %v1942 = vpop.f32.mrb[0].mxu0
      %v1943 = vadd.f32 0.0, %v1942
      %v1944 = vpop.f32.mrb[0].mxu0
      %1945 = vmatprep.mubr.bf16.mxu0 0
      %1946 = vmatmul.mubr.bf16.gmra.mrb[0].mxu0 %v1884
      %v1947 = vpop.f32.mrb[0].mxu0
      %v1948 = vadd.f32 0.0, %v1947
      %v1949 = vpop.f32.mrb[0].mxu0
      %v1950 = vpop.f32.mrb[0].mxu0
      %v1951 = vadd.f32 0.0, %v1950
      %v1952 = vpop.f32.mrb[0].mxu0
      %1953 = vdwg.mxu0
      %v1954 = vadd.f32 %v1787, %v1924
      %v1955 = vadd.f32 %v1788, %v1927
      %v1956 = vadd.f32 %v1789, %v1932
      %v1957 = vadd.f32 %v1790, %v1935
      %v1958 = vadd.f32 %v1791, %v1940
      %v1959 = vadd.f32 %v1792, %v1943
      %v1960 = vadd.f32 %v1793, %v1948
      %v1961 = vadd.f32 %v1794, %v1951
      %v1966 = vrot.slane %v628, 7
      %v1967 = vrot.slane %v1966, 4
      %v1968 = vrot.slane %v1804, 7
      %v1969 = vsel %vm1827, %v1967, %v1968
      %v1970 = vrot.slane %v630, 7
      %v1971 = vrot.slane %v1970, 4
      %v1972 = vrot.slane %v1805, 7
      %v1973 = vsel %vm1827, %v1971, %v1972
      %s1974 = scalar_lea.vmem %s2, 24
      %v1975 = vld [vmem:[%s1974] sm:$0x3]
      %v1976 = vunpack.c.l.b16 %v1969
      %v1977 = vunpack.c.l.b16 %v1973
      %v1978 = vpack.c.b16 %v1977, %v1976
      %v1980 = vsel %vm769, %v1978, 0
      %v1983 = vsel %vm782, %v1975, 0
      %1985 = vmatprep.subr.bf16.mxu0 0
      %1986 = vmatpush1.bf16.msra.mxu0 %v1983
      %1987 = vmatprep.subr.bf16.mxu0 0
      %1988 = vmatpush1.bf16.msra.mxu0 0
      %1989 = vmatprep.subr.bf16.mxu0 0
      %1990 = vmatpush1.bf16.msra.mxu0 0
      %1991 = vmatprep.subr.bf16.mxu0 0
      %1992 = vmatpush1.bf16.msra.mxu0 0
      %1993 = vmatprep.subr.bf16.mxu0 0
      %1994 = vmatpush1.bf16.msra.mxu0 0
      %1995 = vmatprep.subr.bf16.mxu0 0
      %1996 = vmatpush1.bf16.msra.mxu0 0
      %1997 = vmatprep.subr.bf16.mxu0 0
      %1998 = vmatpush1.bf16.msra.mxu0 0
      %1999 = vmatprep.subr.bf16.mxu0 0
      %2000 = vmatpush1.bf16.msra.mxu0 0
      %2001 = vmatprep.subr.bf16.mxu0 0
      %2002 = vmatpush1.bf16.msra.mxu0 0
      %2003 = vmatprep.subr.bf16.mxu0 0
      %2004 = vmatpush1.bf16.msra.mxu0 0
      %2005 = vmatprep.subr.bf16.mxu0 0
      %2006 = vmatpush1.bf16.msra.mxu0 0
      %2007 = vmatprep.subr.bf16.mxu0 0
      %2008 = vmatpush1.bf16.msra.mxu0 0
      %2009 = vmatprep.subr.bf16.mxu0 0
      %2010 = vmatpush1.bf16.msra.mxu0 0
      %2011 = vmatprep.subr.bf16.mxu0 0
      %2012 = vmatpush1.bf16.msra.mxu0 0
      %2013 = vmatprep.subr.bf16.mxu0 0
      %2014 = vmatpush1.bf16.msra.mxu0 0
      %2015 = vmatprep.subr.bf16.mxu0 0
      %2016 = vmatpush1.bf16.msra.mxu0 0
      %2017 = vmatprep.mubr.bf16.mxu0 0
      %2018 = vmatmul.mubr.bf16.gmra.mrb[0].mxu0 %v1878
      %v2019 = vpop.f32.mrb[0].mxu0
      %v2020 = vadd.f32 0.0, %v2019
      %v2021 = vpop.f32.mrb[0].mxu0
      %v2022 = vpop.f32.mrb[0].mxu0
      %v2023 = vadd.f32 0.0, %v2022
      %v2024 = vpop.f32.mrb[0].mxu0
      %2025 = vmatprep.mubr.bf16.mxu0 0
      %2026 = vmatmul.mubr.bf16.gmra.mrb[0].mxu0 %v1881
      %v2027 = vpop.f32.mrb[0].mxu0
      %v2028 = vadd.f32 0.0, %v2027
      %v2029 = vpop.f32.mrb[0].mxu0
      %v2030 = vpop.f32.mrb[0].mxu0
      %v2031 = vadd.f32 0.0, %v2030
      %v2032 = vpop.f32.mrb[0].mxu0
      %2033 = vmatprep.mubr.bf16.mxu0 0
      %2034 = vmatmul.mubr.bf16.gmra.mrb[0].mxu0 %v1884
      %v2035 = vpop.f32.mrb[0].mxu0
      %v2036 = vadd.f32 0.0, %v2035
      %v2037 = vpop.f32.mrb[0].mxu0
      %v2038 = vpop.f32.mrb[0].mxu0
      %v2039 = vadd.f32 0.0, %v2038
      %v2040 = vpop.f32.mrb[0].mxu0
      %2041 = vmatprep.mubr.bf16.mxu0 0
      %2042 = vmatmul.mubr.bf16.gmra.mrb[0].mxu0 %v1980
      %v2043 = vpop.f32.mrb[0].mxu0
      %v2044 = vadd.f32 0.0, %v2043
      %v2045 = vpop.f32.mrb[0].mxu0
      %v2046 = vpop.f32.mrb[0].mxu0
      %v2047 = vadd.f32 0.0, %v2046
      %v2048 = vpop.f32.mrb[0].mxu0
      %2049 = vdwg.mxu0
      %v2050 = vadd.f32 %v1954, %v2020
      %v2051 = vadd.f32 %v1955, %v2023
      %v2052 = vadd.f32 %v1956, %v2028
      %v2053 = vadd.f32 %v1957, %v2031
      %v2054 = vadd.f32 %v1958, %v2036
      %v2055 = vadd.f32 %v1959, %v2039
      %v2056 = vadd.f32 %v1960, %v2044
      %v2057 = vadd.f32 %v1961, %v2047
      %v2062 = vrot.slane %v632, 7
      %v2063 = vrot.slane %v2062, 4
      %v2064 = vrot.slane %v1806, 7
      %v2065 = vsel %vm1827, %v2063, %v2064
      %v2066 = vrot.slane %v1807, 7
      %v2067 = vrot.slane %v2066, 4
      %v2068 = vrot.slane %v1808, 7
      %v2069 = vsel %vm1827, %v2067, %v2068
      %s2070 = scalar_lea.vmem %s2, 30
      %v2071 = vld [vmem:[%s2070] sm:$0x3]
      %v2072 = vunpack.c.l.b16 %v2065
      %v2073 = vunpack.c.l.b16 %v2069
      %v2074 = vpack.c.b16 %v2073, %v2072
      %v2076 = vsel %vm769, %v2074, 0
      %v2079 = vsel %vm782, %v2071, 0
      %2081 = vmatprep.subr.bf16.mxu0 0
      %2082 = vmatpush1.bf16.msra.mxu0 %v2079
      %2083 = vmatprep.subr.bf16.mxu0 0
      %2084 = vmatpush1.bf16.msra.mxu0 0
      %2085 = vmatprep.subr.bf16.mxu0 0
      %2086 = vmatpush1.bf16.msra.mxu0 0
      %2087 = vmatprep.subr.bf16.mxu0 0
      %2088 = vmatpush1.bf16.msra.mxu0 0
      %2089 = vmatprep.subr.bf16.mxu0 0
      %2090 = vmatpush1.bf16.msra.mxu0 0
      %2091 = vmatprep.subr.bf16.mxu0 0
      %2092 = vmatpush1.bf16.msra.mxu0 0
      %2093 = vmatprep.subr.bf16.mxu0 0
      %2094 = vmatpush1.bf16.msra.mxu0 0
      %2095 = vmatprep.subr.bf16.mxu0 0
      %2096 = vmatpush1.bf16.msra.mxu0 0
      %2097 = vmatprep.subr.bf16.mxu0 0
      %2098 = vmatpush1.bf16.msra.mxu0 0
      %2099 = vmatprep.subr.bf16.mxu0 0
      %2100 = vmatpush1.bf16.msra.mxu0 0
      %2101 = vmatprep.subr.bf16.mxu0 0
      %2102 = vmatpush1.bf16.msra.mxu0 0
      %2103 = vmatprep.subr.bf16.mxu0 0
      %2104 = vmatpush1.bf16.msra.mxu0 0
      %2105 = vmatprep.subr.bf16.mxu0 0
      %2106 = vmatpush1.bf16.msra.mxu0 0
      %2107 = vmatprep.subr.bf16.mxu0 0
      %2108 = vmatpush1.bf16.msra.mxu0 0
      %2109 = vmatprep.subr.bf16.mxu0 0
      %2110 = vmatpush1.bf16.msra.mxu0 0
      %2111 = vmatprep.subr.bf16.mxu0 0
      %2112 = vmatpush1.bf16.msra.mxu0 0
      %2113 = vmatprep.mubr.bf16.mxu0 0
      %2114 = vmatmul.mubr.bf16.gmra.mrb[0].mxu0 %v1881
      %v2115 = vpop.f32.mrb[0].mxu0
      %v2116 = vadd.f32 0.0, %v2115
      %v2117 = vpop.f32.mrb[0].mxu0
      %v2118 = vpop.f32.mrb[0].mxu0
      %v2119 = vadd.f32 0.0, %v2118
      %v2120 = vpop.f32.mrb[0].mxu0
      %2121 = vmatprep.mubr.bf16.mxu0 0
      %2122 = vmatmul.mubr.bf16.gmra.mrb[0].mxu0 %v1884
      %v2123 = vpop.f32.mrb[0].mxu0
      %v2124 = vadd.f32 0.0, %v2123
      %v2125 = vpop.f32.mrb[0].mxu0
      %v2126 = vpop.f32.mrb[0].mxu0
      %v2127 = vadd.f32 0.0, %v2126
      %v2128 = vpop.f32.mrb[0].mxu0
      %2129 = vmatprep.mubr.bf16.mxu0 0
      %2130 = vmatmul.mubr.bf16.gmra.mrb[0].mxu0 %v1980
      %v2131 = vpop.f32.mrb[0].mxu0
      %v2132 = vadd.f32 0.0, %v2131
      %v2133 = vpop.f32.mrb[0].mxu0
      %v2134 = vpop.f32.mrb[0].mxu0
      %v2135 = vadd.f32 0.0, %v2134
      %v2136 = vpop.f32.mrb[0].mxu0
      %2137 = vmatprep.mubr.bf16.mxu0 0
      %2138 = vmatmul.mubr.bf16.gmra.mrb[0].mxu0 %v2076
      %v2139 = vpop.f32.mrb[0].mxu0
      %v2140 = vadd.f32 0.0, %v2139
      %v2141 = vpop.f32.mrb[0].mxu0
      %v2142 = vpop.f32.mrb[0].mxu0
      %v2143 = vadd.f32 0.0, %v2142
      %v2144 = vpop.f32.mrb[0].mxu0
      %2145 = vdwg.mxu0
      %v2146 = vadd.f32 %v2050, %v2116
      %v2147 = vadd.f32 %v2051, %v2119
      %v2148 = vadd.f32 %v2052, %v2124
      %v2149 = vadd.f32 %v2053, %v2127
      %v2150 = vadd.f32 %v2054, %v2132
      %v2151 = vadd.f32 %v2055, %v2135
      %v2152 = vadd.f32 %v2056, %v2140
      %v2153 = vadd.f32 %v2057, %v2143
      %s2154 = scalar_lea.vmem %s2, 20
      %v2155 = vld [vmem:[%s2154] sm:$0x3]
      %v2157 = vunpack.c.l.b16 %v1046
      %v2158 = vpack.c.b16 %v1072, %v2157
      %v2160 = vsel %vm769, %v2158, 0
      %v2163 = vsel %vm782, %v2155, 0
      %2165 = vmatprep.subr.bf16.mxu0 0
      %2166 = vmatpush1.bf16.msra.mxu0 %v2163
      %2167 = vmatprep.subr.bf16.mxu0 0
      %2168 = vmatpush1.bf16.msra.mxu0 0
      %2169 = vmatprep.subr.bf16.mxu0 0
      %2170 = vmatpush1.bf16.msra.mxu0 0
      %2171 = vmatprep.subr.bf16.mxu0 0
      %2172 = vmatpush1.bf16.msra.mxu0 0
      %2173 = vmatprep.subr.bf16.mxu0 0
      %2174 = vmatpush1.bf16.msra.mxu0 0
      %2175 = vmatprep.subr.bf16.mxu0 0
      %2176 = vmatpush1.bf16.msra.mxu0 0
      %2177 = vmatprep.subr.bf16.mxu0 0
      %2178 = vmatpush1.bf16.msra.mxu0 0
      %2179 = vmatprep.subr.bf16.mxu0 0
      %2180 = vmatpush1.bf16.msra.mxu0 0
      %2181 = vmatprep.subr.bf16.mxu0 0
      %2182 = vmatpush1.bf16.msra.mxu0 0
      %2183 = vmatprep.subr.bf16.mxu0 0
      %2184 = vmatpush1.bf16.msra.mxu0 0
      %2185 = vmatprep.subr.bf16.mxu0 0
      %2186 = vmatpush1.bf16.msra.mxu0 0
      %2187 = vmatprep.subr.bf16.mxu0 0
      %2188 = vmatpush1.bf16.msra.mxu0 0
      %2189 = vmatprep.subr.bf16.mxu0 0
      %2190 = vmatpush1.bf16.msra.mxu0 0
      %2191 = vmatprep.subr.bf16.mxu0 0
      %2192 = vmatpush1.bf16.msra.mxu0 0
      %2193 = vmatprep.subr.bf16.mxu0 0
      %2194 = vmatpush1.bf16.msra.mxu0 0
      %2195 = vmatprep.subr.bf16.mxu0 0
      %2196 = vmatpush1.bf16.msra.mxu0 0
      %2197 = vmatprep.mubr.bf16.mxu0 0
      %2198 = vmatmul.mubr.bf16.gmra.mrb[0].mxu0 %v2160
      %v2199 = vpop.f32.mrb[0].mxu0
      %v2200 = vadd.f32 0.0, %v2199
      %v2201 = vpop.f32.mrb[0].mxu0
      %v2202 = vpop.f32.mrb[0].mxu0
      %v2203 = vadd.f32 0.0, %v2202
      %v2204 = vpop.f32.mrb[0].mxu0
      %2205 = vmatprep.mubr.bf16.mxu0 0
      %2206 = vmatmul.mubr.bf16.gmra.mrb[0].mxu0 %v1181
      %v2207 = vpop.f32.mrb[0].mxu0
      %v2208 = vadd.f32 0.0, %v2207
      %v2209 = vpop.f32.mrb[0].mxu0
      %v2210 = vpop.f32.mrb[0].mxu0
      %v2211 = vadd.f32 0.0, %v2210
      %v2212 = vpop.f32.mrb[0].mxu0
      %2213 = vmatprep.mubr.bf16.mxu0 0
      %2214 = vmatmul.mubr.bf16.gmra.mrb[0].mxu0 %v1184
      %v2215 = vpop.f32.mrb[0].mxu0
      %v2216 = vadd.f32 0.0, %v2215
      %v2217 = vpop.f32.mrb[0].mxu0
      %v2218 = vpop.f32.mrb[0].mxu0
      %v2219 = vadd.f32 0.0, %v2218
      %v2220 = vpop.f32.mrb[0].mxu0
      %2221 = vmatprep.mubr.bf16.mxu0 0
      %2222 = vmatmul.mubr.bf16.gmra.mrb[0].mxu0 %v1187
      %v2223 = vpop.f32.mrb[0].mxu0
      %v2224 = vadd.f32 0.0, %v2223
      %v2225 = vpop.f32.mrb[0].mxu0
      %v2226 = vpop.f32.mrb[0].mxu0
      %v2227 = vadd.f32 0.0, %v2226
      %v2228 = vpop.f32.mrb[0].mxu0
      %2229 = vdwg.mxu0
      %v2230 = vadd.f32 %v2146, %v2200
      %v2231 = vadd.f32 %v2147, %v2203
      %v2232 = vadd.f32 %v2148, %v2208
      %v2233 = vadd.f32 %v2149, %v2211
      %v2234 = vadd.f32 %v2150, %v2216
      %v2235 = vadd.f32 %v2151, %v2219
      %v2236 = vadd.f32 %v2152, %v2224
      %v2237 = vadd.f32 %v2153, %v2227
      %s2238 = scalar_lea.vmem %s2, 26
      %v2239 = vld [vmem:[%s2238] sm:$0x3]
      %v2241 = vsel %vm782, %v2239, 0
      %2243 = vmatprep.subr.bf16.mxu0 0
      %2244 = vmatpush1.bf16.msra.mxu0 %v2241
      %2245 = vmatprep.subr.bf16.mxu0 0
      %2246 = vmatpush1.bf16.msra.mxu0 0
      %2247 = vmatprep.subr.bf16.mxu0 0
      %2248 = vmatpush1.bf16.msra.mxu0 0
      %2249 = vmatprep.subr.bf16.mxu0 0
      %2250 = vmatpush1.bf16.msra.mxu0 0
      %2251 = vmatprep.subr.bf16.mxu0 0
      %2252 = vmatpush1.bf16.msra.mxu0 0
      %2253 = vmatprep.subr.bf16.mxu0 0
      %2254 = vmatpush1.bf16.msra.mxu0 0
      %2255 = vmatprep.subr.bf16.mxu0 0
      %2256 = vmatpush1.bf16.msra.mxu0 0
      %2257 = vmatprep.subr.bf16.mxu0 0
      %2258 = vmatpush1.bf16.msra.mxu0 0
      %2259 = vmatprep.subr.bf16.mxu0 0
      %2260 = vmatpush1.bf16.msra.mxu0 0
      %2261 = vmatprep.subr.bf16.mxu0 0
      %2262 = vmatpush1.bf16.msra.mxu0 0
      %2263 = vmatprep.subr.bf16.mxu0 0
      %2264 = vmatpush1.bf16.msra.mxu0 0
      %2265 = vmatprep.subr.bf16.mxu0 0
      %2266 = vmatpush1.bf16.msra.mxu0 0
      %2267 = vmatprep.subr.bf16.mxu0 0
      %2268 = vmatpush1.bf16.msra.mxu0 0
      %2269 = vmatprep.subr.bf16.mxu0 0
      %2270 = vmatpush1.bf16.msra.mxu0 0
      %2271 = vmatprep.subr.bf16.mxu0 0
      %2272 = vmatpush1.bf16.msra.mxu0 0
      %2273 = vmatprep.subr.bf16.mxu0 0
      %2274 = vmatpush1.bf16.msra.mxu0 0
      %2275 = vmatprep.mubr.bf16.mxu0 0
      %2276 = vmatmul.mubr.bf16.gmra.mrb[0].mxu0 %v1181
      %v2277 = vpop.f32.mrb[0].mxu0
      %v2278 = vadd.f32 0.0, %v2277
      %v2279 = vpop.f32.mrb[0].mxu0
      %v2280 = vpop.f32.mrb[0].mxu0
      %v2281 = vadd.f32 0.0, %v2280
      %v2282 = vpop.f32.mrb[0].mxu0
      %2283 = vmatprep.mubr.bf16.mxu0 0
      %2284 = vmatmul.mubr.bf16.gmra.mrb[0].mxu0 %v1184
      %v2285 = vpop.f32.mrb[0].mxu0
      %v2286 = vadd.f32 0.0, %v2285
      %v2287 = vpop.f32.mrb[0].mxu0
      %v2288 = vpop.f32.mrb[0].mxu0
      %v2289 = vadd.f32 0.0, %v2288
      %v2290 = vpop.f32.mrb[0].mxu0
      %2291 = vmatprep.mubr.bf16.mxu0 0
      %2292 = vmatmul.mubr.bf16.gmra.mrb[0].mxu0 %v1187
      %v2293 = vpop.f32.mrb[0].mxu0
      %v2294 = vadd.f32 0.0, %v2293
      %v2295 = vpop.f32.mrb[0].mxu0
      %v2296 = vpop.f32.mrb[0].mxu0
      %v2297 = vadd.f32 0.0, %v2296
      %v2298 = vpop.f32.mrb[0].mxu0
      %2299 = vmatprep.mubr.bf16.mxu0 0
      %2300 = vmatmul.mubr.bf16.gmra.mrb[0].mxu0 %v1190
      %v2301 = vpop.f32.mrb[0].mxu0
      %v2302 = vadd.f32 0.0, %v2301
      %v2303 = vpop.f32.mrb[0].mxu0
      %v2304 = vpop.f32.mrb[0].mxu0
      %v2305 = vadd.f32 0.0, %v2304
      %v2306 = vpop.f32.mrb[0].mxu0
      %2307 = vdwg.mxu0
      %v2308 = vadd.f32 %v2230, %v2278
      %v2309 = vadd.f32 %v2231, %v2281
      %v2310 = vadd.f32 %v2232, %v2286
      %v2311 = vadd.f32 %v2233, %v2289
      %v2312 = vadd.f32 %v2234, %v2294
      %v2313 = vadd.f32 %v2235, %v2297
      %v2314 = vadd.f32 %v2236, %v2302
      %v2315 = vadd.f32 %v2237, %v2305
      %s2316 = scalar_lea.vmem %s2, 32
      %v2317 = vld [vmem:[%s2316] sm:$0x3]
      %v2319 = vunpack.c.l.b16 %v1047
      %v2320 = vpack.c.b16 %v2319, %v1271
      %v2322 = vsel %vm769, %v2320, 0
      %v2325 = vsel %vm782, %v2317, 0
      %2327 = vmatprep.subr.bf16.mxu0 0
      %2328 = vmatpush1.bf16.msra.mxu0 %v2325
      %2329 = vmatprep.subr.bf16.mxu0 0
      %2330 = vmatpush1.bf16.msra.mxu0 0
      %2331 = vmatprep.subr.bf16.mxu0 0
      %2332 = vmatpush1.bf16.msra.mxu0 0
      %2333 = vmatprep.subr.bf16.mxu0 0
      %2334 = vmatpush1.bf16.msra.mxu0 0
      %2335 = vmatprep.subr.bf16.mxu0 0
      %2336 = vmatpush1.bf16.msra.mxu0 0
      %2337 = vmatprep.subr.bf16.mxu0 0
      %2338 = vmatpush1.bf16.msra.mxu0 0
      %2339 = vmatprep.subr.bf16.mxu0 0
      %2340 = vmatpush1.bf16.msra.mxu0 0
      %2341 = vmatprep.subr.bf16.mxu0 0
      %2342 = vmatpush1.bf16.msra.mxu0 0
      %2343 = vmatprep.subr.bf16.mxu0 0
      %2344 = vmatpush1.bf16.msra.mxu0 0
      %2345 = vmatprep.subr.bf16.mxu0 0
      %2346 = vmatpush1.bf16.msra.mxu0 0
      %2347 = vmatprep.subr.bf16.mxu0 0
      %2348 = vmatpush1.bf16.msra.mxu0 0
      %2349 = vmatprep.subr.bf16.mxu0 0
      %2350 = vmatpush1.bf16.msra.mxu0 0
      %2351 = vmatprep.subr.bf16.mxu0 0
      %2352 = vmatpush1.bf16.msra.mxu0 0
      %2353 = vmatprep.subr.bf16.mxu0 0
      %2354 = vmatpush1.bf16.msra.mxu0 0
      %2355 = vmatprep.subr.bf16.mxu0 0
      %2356 = vmatpush1.bf16.msra.mxu0 0
      %2357 = vmatprep.subr.bf16.mxu0 0
      %2358 = vmatpush1.bf16.msra.mxu0 0
      %2359 = vmatprep.mubr.bf16.mxu0 0
      %2360 = vmatmul.mubr.bf16.gmra.mrb[0].mxu0 %v1184
      %v2361 = vpop.f32.mrb[0].mxu0
      %v2362 = vadd.f32 0.0, %v2361
      %v2363 = vpop.f32.mrb[0].mxu0
      %v2364 = vpop.f32.mrb[0].mxu0
      %v2365 = vadd.f32 0.0, %v2364
      %v2366 = vpop.f32.mrb[0].mxu0
      %2367 = vmatprep.mubr.bf16.mxu0 0
      %2368 = vmatmul.mubr.bf16.gmra.mrb[0].mxu0 %v1187
      %v2369 = vpop.f32.mrb[0].mxu0
      %v2370 = vadd.f32 0.0, %v2369
      %v2371 = vpop.f32.mrb[0].mxu0
      %v2372 = vpop.f32.mrb[0].mxu0
      %v2373 = vadd.f32 0.0, %v2372
      %v2374 = vpop.f32.mrb[0].mxu0
      %2375 = vmatprep.mubr.bf16.mxu0 0
      %2376 = vmatmul.mubr.bf16.gmra.mrb[0].mxu0 %v1190
      %v2377 = vpop.f32.mrb[0].mxu0
      %v2378 = vadd.f32 0.0, %v2377
      %v2379 = vpop.f32.mrb[0].mxu0
      %v2380 = vpop.f32.mrb[0].mxu0
      %v2381 = vadd.f32 0.0, %v2380
      %v2382 = vpop.f32.mrb[0].mxu0
      %2383 = vmatprep.mubr.bf16.mxu0 0
      %2384 = vmatmul.mubr.bf16.gmra.mrb[0].mxu0 %v2322
      %v2385 = vpop.f32.mrb[0].mxu0
      %v2386 = vadd.f32 0.0, %v2385
      %v2387 = vpop.f32.mrb[0].mxu0
      %v2388 = vpop.f32.mrb[0].mxu0
      %v2389 = vadd.f32 0.0, %v2388
      %v2390 = vpop.f32.mrb[0].mxu0
      %2391 = vdwg.mxu0
      %v2392 = vadd.f32 %v2308, %v2362
      %v2393 = vadd.f32 %v2309, %v2365
      %v2394 = vadd.f32 %v2310, %v2370
      %v2395 = vadd.f32 %v2311, %v2373
      %v2396 = vadd.f32 %v2312, %v2378
      %v2397 = vadd.f32 %v2313, %v2381
      %v2398 = vadd.f32 %v2314, %v2386
      %v2399 = vadd.f32 %v2315, %v2389
      %v2400 = vld [vmem:[#allocation2 + $0x120] sm:$0xe]
      %v2401 = vld [vmem:[#allocation2 + $0x124] sm:$0x1]
      %v2402 = vld [vmem:[#allocation2 + $0x134] sm:$0xe]
      %v2403 = vld [vmem:[#allocation2 + $0x148] sm:$0xe]
      %v2404 = vld [vmem:[#allocation2 + $0x15c] sm:$0xe]
      %v2405 = vld [vmem:[#allocation2 + $0x170] sm:$0xe]
      %v2406 = vld [vmem:[#allocation2 + $0x184] sm:$0xe]
      %v2407 = vld [vmem:[#allocation2 + $0x198] sm:$0xe]
      %v2408 = vld [vmem:[#allocation2 + $0x1ac] sm:$0xe]
      %v2409 = vld [vmem:[#allocation2 + $0x1c0] sm:$0xe]
      %v2410 = vld [vmem:[#allocation2 + $0x1d4] sm:$0xe]
      %v2411 = vld [vmem:[#allocation2 + $0x1e8] sm:$0xe]
      %v2412 = vld [vmem:[#allocation2 + $0x1fc] sm:$0xe]
      %v2413 = vld [vmem:[#allocation2 + $0x200] sm:$0x1]
      %vm2430 = vcmask 1042432
      %vm2431 = vcmask 1046532
      %vm2432 = vmor %vm2430, %vm2431
      %v2433 = vrot.slane %v2400, 5
      %v2434 = vrot.slane %v2433, 4
      %v2435 = vrot.slane %v2401, 5
      %v2436 = vsel %vm2432, %v2434, %v2435
      %v2437 = vrot.slane %v2402, 5
      %v2438 = vrot.slane %v2437, 4
      %v2439 = vrot.slane %v1353, 5
      %v2440 = vsel %vm2432, %v2438, %v2439
      %v2441 = vrot.slane %v2403, 5
      %v2442 = vrot.slane %v2441, 4
      %v2443 = vrot.slane %v1355, 5
      %v2444 = vsel %vm2432, %v2442, %v2443
      %v2445 = vrot.slane %v2404, 5
      %v2446 = vrot.slane %v2445, 4
      %v2447 = vrot.slane %v1357, 5
      %v2448 = vsel %vm2432, %v2446, %v2447
      %v2449 = vrot.slane %v2405, 5
      %v2450 = vrot.slane %v2449, 4
      %v2451 = vrot.slane %v1359, 5
      %v2452 = vsel %vm2432, %v2450, %v2451
      %v2453 = vrot.slane %v2406, 5
      %v2454 = vrot.slane %v2453, 4
      %v2455 = vrot.slane %v1361, 5
      %v2456 = vsel %vm2432, %v2454, %v2455
      %v2457 = vrot.slane %v2407, 5
      %v2458 = vrot.slane %v2457, 4
      %v2459 = vrot.slane %v1363, 5
      %v2460 = vsel %vm2432, %v2458, %v2459
      %v2461 = vrot.slane %v2408, 5
      %v2462 = vrot.slane %v2461, 4
      %v2463 = vrot.slane %v1365, 5
      %v2464 = vsel %vm2432, %v2462, %v2463
      %s2465 = scalar_lea.vmem %s2, 22
      %v2466 = vld [vmem:[%s2465] sm:$0x3]
      %v2467 = vunpack.c.l.b16 %v2436
      %v2468 = vunpack.c.l.b16 %v2440
      %v2469 = vunpack.c.l.b16 %v2444
      %v2470 = vunpack.c.l.b16 %v2448
      %v2471 = vunpack.c.l.b16 %v2452
      %v2472 = vunpack.c.l.b16 %v2456
      %v2473 = vunpack.c.l.b16 %v2460
      %v2474 = vunpack.c.l.b16 %v2464
      %v2475 = vpack.c.b16 %v2468, %v2467
      %v2476 = vpack.c.b16 %v2470, %v2469
      %v2477 = vpack.c.b16 %v2472, %v2471
      %v2478 = vpack.c.b16 %v2474, %v2473
      %v2480 = vsel %vm769, %v2475, 0
      %v2483 = vsel %vm769, %v2476, 0
      %v2486 = vsel %vm769, %v2477, 0
      %v2489 = vsel %vm769, %v2478, 0
      %v2492 = vsel %vm782, %v2466, 0
      %2494 = vmatprep.subr.bf16.mxu0 0
      %2495 = vmatpush1.bf16.msra.mxu0 %v2492
      %2496 = vmatprep.subr.bf16.mxu0 0
      %2497 = vmatpush1.bf16.msra.mxu0 0
      %2498 = vmatprep.subr.bf16.mxu0 0
      %2499 = vmatpush1.bf16.msra.mxu0 0
      %2500 = vmatprep.subr.bf16.mxu0 0
      %2501 = vmatpush1.bf16.msra.mxu0 0
      %2502 = vmatprep.subr.bf16.mxu0 0
      %2503 = vmatpush1.bf16.msra.mxu0 0
      %2504 = vmatprep.subr.bf16.mxu0 0
      %2505 = vmatpush1.bf16.msra.mxu0 0
      %2506 = vmatprep.subr.bf16.mxu0 0
      %2507 = vmatpush1.bf16.msra.mxu0 0
      %2508 = vmatprep.subr.bf16.mxu0 0
      %2509 = vmatpush1.bf16.msra.mxu0 0
      %2510 = vmatprep.subr.bf16.mxu0 0
      %2511 = vmatpush1.bf16.msra.mxu0 0
      %2512 = vmatprep.subr.bf16.mxu0 0
      %2513 = vmatpush1.bf16.msra.mxu0 0
      %2514 = vmatprep.subr.bf16.mxu0 0
      %2515 = vmatpush1.bf16.msra.mxu0 0
      %2516 = vmatprep.subr.bf16.mxu0 0
      %2517 = vmatpush1.bf16.msra.mxu0 0
      %2518 = vmatprep.subr.bf16.mxu0 0
      %2519 = vmatpush1.bf16.msra.mxu0 0
      %2520 = vmatprep.subr.bf16.mxu0 0
      %2521 = vmatpush1.bf16.msra.mxu0 0
      %2522 = vmatprep.subr.bf16.mxu0 0
      %2523 = vmatpush1.bf16.msra.mxu0 0
      %2524 = vmatprep.subr.bf16.mxu0 0
      %2525 = vmatpush1.bf16.msra.mxu0 0
      %2526 = vmatprep.mubr.bf16.mxu0 0
      %2527 = vmatmul.mubr.bf16.gmra.mrb[0].mxu0 %v2480
      %v2528 = vpop.f32.mrb[0].mxu0
      %v2529 = vadd.f32 0.0, %v2528
      %v2530 = vpop.f32.mrb[0].mxu0
      %v2531 = vpop.f32.mrb[0].mxu0
      %v2532 = vadd.f32 0.0, %v2531
      %v2533 = vpop.f32.mrb[0].mxu0
      %2534 = vmatprep.mubr.bf16.mxu0 0
      %2535 = vmatmul.mubr.bf16.gmra.mrb[0].mxu0 %v2483
      %v2536 = vpop.f32.mrb[0].mxu0
      %v2537 = vadd.f32 0.0, %v2536
      %v2538 = vpop.f32.mrb[0].mxu0
      %v2539 = vpop.f32.mrb[0].mxu0
      %v2540 = vadd.f32 0.0, %v2539
      %v2541 = vpop.f32.mrb[0].mxu0
      %2542 = vmatprep.mubr.bf16.mxu0 0
      %2543 = vmatmul.mubr.bf16.gmra.mrb[0].mxu0 %v2486
      %v2544 = vpop.f32.mrb[0].mxu0
      %v2545 = vadd.f32 0.0, %v2544
      %v2546 = vpop.f32.mrb[0].mxu0
      %v2547 = vpop.f32.mrb[0].mxu0
      %v2548 = vadd.f32 0.0, %v2547
      %v2549 = vpop.f32.mrb[0].mxu0
      %2550 = vmatprep.mubr.bf16.mxu0 0
      %2551 = vmatmul.mubr.bf16.gmra.mrb[0].mxu0 %v2489
      %v2552 = vpop.f32.mrb[0].mxu0
      %v2553 = vadd.f32 0.0, %v2552
      %v2554 = vpop.f32.mrb[0].mxu0
      %v2555 = vpop.f32.mrb[0].mxu0
      %v2556 = vadd.f32 0.0, %v2555
      %v2557 = vpop.f32.mrb[0].mxu0
      %2558 = vdwg.mxu0
      %v2559 = vadd.f32 %v2392, %v2529
      %v2560 = vadd.f32 %v2393, %v2532
      %v2561 = vadd.f32 %v2394, %v2537
      %v2562 = vadd.f32 %v2395, %v2540
      %v2563 = vadd.f32 %v2396, %v2545
      %v2564 = vadd.f32 %v2397, %v2548
      %v2565 = vadd.f32 %v2398, %v2553
      %v2566 = vadd.f32 %v2399, %v2556
      %v2571 = vrot.slane %v2409, 5
      %v2572 = vrot.slane %v2571, 4
      %v2573 = vrot.slane %v1367, 5
      %v2574 = vsel %vm2432, %v2572, %v2573
      %v2575 = vrot.slane %v2410, 5
      %v2576 = vrot.slane %v2575, 4
      %v2577 = vrot.slane %v1369, 5
      %v2578 = vsel %vm2432, %v2576, %v2577
      %s2579 = scalar_lea.vmem %s2, 28
      %v2580 = vld [vmem:[%s2579] sm:$0x3]
      %v2581 = vunpack.c.l.b16 %v2574
      %v2582 = vunpack.c.l.b16 %v2578
      %v2583 = vpack.c.b16 %v2582, %v2581
      %v2585 = vsel %vm769, %v2583, 0
      %v2588 = vsel %vm782, %v2580, 0
      %2590 = vmatprep.subr.bf16.mxu0 0
      %2591 = vmatpush1.bf16.msra.mxu0 %v2588
      %2592 = vmatprep.subr.bf16.mxu0 0
      %2593 = vmatpush1.bf16.msra.mxu0 0
      %2594 = vmatprep.subr.bf16.mxu0 0
      %2595 = vmatpush1.bf16.msra.mxu0 0
      %2596 = vmatprep.subr.bf16.mxu0 0
      %2597 = vmatpush1.bf16.msra.mxu0 0
      %2598 = vmatprep.subr.bf16.mxu0 0
      %2599 = vmatpush1.bf16.msra.mxu0 0
      %2600 = vmatprep.subr.bf16.mxu0 0
      %2601 = vmatpush1.bf16.msra.mxu0 0
      %2602 = vmatprep.subr.bf16.mxu0 0
      %2603 = vmatpush1.bf16.msra.mxu0 0
      %2604 = vmatprep.subr.bf16.mxu0 0
      %2605 = vmatpush1.bf16.msra.mxu0 0
      %2606 = vmatprep.subr.bf16.mxu0 0
      %2607 = vmatpush1.bf16.msra.mxu0 0
      %2608 = vmatprep.subr.bf16.mxu0 0
      %2609 = vmatpush1.bf16.msra.mxu0 0
      %2610 = vmatprep.subr.bf16.mxu0 0
      %2611 = vmatpush1.bf16.msra.mxu0 0
      %2612 = vmatprep.subr.bf16.mxu0 0
      %2613 = vmatpush1.bf16.msra.mxu0 0
      %2614 = vmatprep.subr.bf16.mxu0 0
      %2615 = vmatpush1.bf16.msra.mxu0 0
      %2616 = vmatprep.subr.bf16.mxu0 0
      %2617 = vmatpush1.bf16.msra.mxu0 0
      %2618 = vmatprep.subr.bf16.mxu0 0
      %2619 = vmatpush1.bf16.msra.mxu0 0
      %2620 = vmatprep.subr.bf16.mxu0 0
      %2621 = vmatpush1.bf16.msra.mxu0 0
      %2622 = vmatprep.mubr.bf16.mxu0 0
      %2623 = vmatmul.mubr.bf16.gmra.mrb[0].mxu0 %v2483
      %v2624 = vpop.f32.mrb[0].mxu0
      %v2625 = vadd.f32 0.0, %v2624
      %v2626 = vpop.f32.mrb[0].mxu0
      %v2627 = vpop.f32.mrb[0].mxu0
      %v2628 = vadd.f32 0.0, %v2627
      %v2629 = vpop.f32.mrb[0].mxu0
      %2630 = vmatprep.mubr.bf16.mxu0 0
      %2631 = vmatmul.mubr.bf16.gmra.mrb[0].mxu0 %v2486
      %v2632 = vpop.f32.mrb[0].mxu0
      %v2633 = vadd.f32 0.0, %v2632
      %v2634 = vpop.f32.mrb[0].mxu0
      %v2635 = vpop.f32.mrb[0].mxu0
      %v2636 = vadd.f32 0.0, %v2635
      %v2637 = vpop.f32.mrb[0].mxu0
      %2638 = vmatprep.mubr.bf16.mxu0 0
      %2639 = vmatmul.mubr.bf16.gmra.mrb[0].mxu0 %v2489
      %v2640 = vpop.f32.mrb[0].mxu0
      %v2641 = vadd.f32 0.0, %v2640
      %v2642 = vpop.f32.mrb[0].mxu0
      %v2643 = vpop.f32.mrb[0].mxu0
      %v2644 = vadd.f32 0.0, %v2643
      %v2645 = vpop.f32.mrb[0].mxu0
      %2646 = vmatprep.mubr.bf16.mxu0 0
      %2647 = vmatmul.mubr.bf16.gmra.mrb[0].mxu0 %v2585
      %v2648 = vpop.f32.mrb[0].mxu0
      %v2649 = vadd.f32 0.0, %v2648
      %v2650 = vpop.f32.mrb[0].mxu0
      %v2651 = vpop.f32.mrb[0].mxu0
      %v2652 = vadd.f32 0.0, %v2651
      %v2653 = vpop.f32.mrb[0].mxu0
      %2654 = vdwg.mxu0
      %v2655 = vadd.f32 %v2559, %v2625
      %v2656 = vadd.f32 %v2560, %v2628
      %v2657 = vadd.f32 %v2561, %v2633
      %v2658 = vadd.f32 %v2562, %v2636
      %v2659 = vadd.f32 %v2563, %v2641
      %v2660 = vadd.f32 %v2564, %v2644
      %v2661 = vadd.f32 %v2565, %v2649
      %v2662 = vadd.f32 %v2566, %v2652
      %v2667 = vrot.slane %v2411, 5
      %v2668 = vrot.slane %v2667, 4
      %v2669 = vrot.slane %v1371, 5
      %v2670 = vsel %vm2432, %v2668, %v2669
      %v2671 = vrot.slane %v2412, 5
      %v2672 = vrot.slane %v2671, 4
      %v2673 = vrot.slane %v2413, 5
      %v2674 = vsel %vm2432, %v2672, %v2673
      %s2675 = scalar_lea.vmem %s2, 34
      %v2676 = vld [vmem:[%s2675] sm:$0x3]
      %v2677 = vunpack.c.l.b16 %v2670
      %v2678 = vunpack.c.l.b16 %v2674
      %v2679 = vpack.c.b16 %v2678, %v2677
      %v2681 = vsel %vm769, %v2679, 0
      %v2684 = vsel %vm782, %v2676, 0
      %2686 = vmatprep.subr.bf16.mxu0 0
      %2687 = vmatpush1.bf16.msra.mxu0 %v2684
      %2688 = vmatprep.subr.bf16.mxu0 0
      %2689 = vmatpush1.bf16.msra.mxu0 0
      %2690 = vmatprep.subr.bf16.mxu0 0
      %2691 = vmatpush1.bf16.msra.mxu0 0
      %2692 = vmatprep.subr.bf16.mxu0 0
      %2693 = vmatpush1.bf16.msra.mxu0 0
      %2694 = vmatprep.subr.bf16.mxu0 0
      %2695 = vmatpush1.bf16.msra.mxu0 0
      %2696 = vmatprep.subr.bf16.mxu0 0
      %2697 = vmatpush1.bf16.msra.mxu0 0
      %2698 = vmatprep.subr.bf16.mxu0 0
      %2699 = vmatpush1.bf16.msra.mxu0 0
      %2700 = vmatprep.subr.bf16.mxu0 0
      %2701 = vmatpush1.bf16.msra.mxu0 0
      %2702 = vmatprep.subr.bf16.mxu0 0
      %2703 = vmatpush1.bf16.msra.mxu0 0
      %2704 = vmatprep.subr.bf16.mxu0 0
      %2705 = vmatpush1.bf16.msra.mxu0 0
      %2706 = vmatprep.subr.bf16.mxu0 0
      %2707 = vmatpush1.bf16.msra.mxu0 0
      %2708 = vmatprep.subr.bf16.mxu0 0
      %2709 = vmatpush1.bf16.msra.mxu0 0
      %2710 = vmatprep.subr.bf16.mxu0 0
      %2711 = vmatpush1.bf16.msra.mxu0 0
      %2712 = vmatprep.subr.bf16.mxu0 0
      %2713 = vmatpush1.bf16.msra.mxu0 0
      %2714 = vmatprep.subr.bf16.mxu0 0
      %2715 = vmatpush1.bf16.msra.mxu0 0
      %2716 = vmatprep.subr.bf16.mxu0 0
      %2717 = vmatpush1.bf16.msra.mxu0 0
      %2718 = vmatprep.mubr.bf16.mxu0 0
      %2719 = vmatmul.mubr.bf16.gmra.mrb[0].mxu0 %v2486
      %v2720 = vpop.f32.mrb[0].mxu0
      %v2721 = vadd.f32 0.0, %v2720
      %v2722 = vpop.f32.mrb[0].mxu0
      %v2723 = vpop.f32.mrb[0].mxu0
      %v2724 = vadd.f32 0.0, %v2723
      %v2725 = vpop.f32.mrb[0].mxu0
      %2726 = vmatprep.mubr.bf16.mxu0 0
      %2727 = vmatmul.mubr.bf16.gmra.mrb[0].mxu0 %v2489
      %v2728 = vpop.f32.mrb[0].mxu0
      %v2729 = vadd.f32 0.0, %v2728
      %v2730 = vpop.f32.mrb[0].mxu0
      %v2731 = vpop.f32.mrb[0].mxu0
      %v2732 = vadd.f32 0.0, %v2731
      %v2733 = vpop.f32.mrb[0].mxu0
      %2734 = vmatprep.mubr.bf16.mxu0 0
      %2735 = vmatmul.mubr.bf16.gmra.mrb[0].mxu0 %v2585
      %v2736 = vpop.f32.mrb[0].mxu0
      %v2737 = vadd.f32 0.0, %v2736
      %v2738 = vpop.f32.mrb[0].mxu0
      %v2739 = vpop.f32.mrb[0].mxu0
      %v2740 = vadd.f32 0.0, %v2739
      %v2741 = vpop.f32.mrb[0].mxu0
      %2742 = vmatprep.mubr.bf16.mxu0 0
      %2743 = vmatmul.mubr.bf16.gmra.mrb[0].mxu0 %v2681
      %v2744 = vpop.f32.mrb[0].mxu0
      %v2745 = vadd.f32 0.0, %v2744
      %v2746 = vpop.f32.mrb[0].mxu0
      %v2747 = vpop.f32.mrb[0].mxu0
      %v2748 = vadd.f32 0.0, %v2747
      %v2749 = vpop.f32.mrb[0].mxu0
      %2750 = vdwg.mxu0
      %v2751 = vadd.f32 %v2655, %v2721
      %v2752 = vadd.f32 %v2656, %v2724
      %v2753 = vadd.f32 %v2657, %v2729
      %v2754 = vadd.f32 %v2658, %v2732
      %v2755 = vadd.f32 %v2659, %v2737
      %v2756 = vadd.f32 %v2660, %v2740
      %v2757 = vadd.f32 %v2661, %v2745
      %v2758 = vadd.f32 %v2662, %v2748
      %v2759 = vld [vmem:[#allocation2 + $0xf4] sm:$0xc]
      %v2760 = vld [vmem:[#allocation2 + $0xf8] sm:$0x3]
      %v2761 = vld [vmem:[#allocation2 + $0x108] sm:$0xc]
      %v2762 = vld [vmem:[#allocation2 + $0x10c] sm:$0x3]
      %v2763 = vld [vmem:[#allocation2 + $0x11c] sm:$0xc]
      %v2764 = vld [vmem:[#allocation2 + $0x120] sm:$0x3]
      %v2765 = vld [vmem:[#allocation2 + $0x130] sm:$0xc]
      %v2766 = vld [vmem:[#allocation2 + $0x134] sm:$0x3]
      %v2767 = vld [vmem:[#allocation2 + $0x144] sm:$0xc]
      %v2768 = vld [vmem:[#allocation2 + $0x148] sm:$0x3]
      %v2769 = vld [vmem:[#allocation2 + $0x158] sm:$0xc]
      %v2770 = vld [vmem:[#allocation2 + $0x15c] sm:$0x3]
      %v2771 = vld [vmem:[#allocation2 + $0x16c] sm:$0xc]
      %v2772 = vld [vmem:[#allocation2 + $0x170] sm:$0x3]
      %v2773 = vld [vmem:[#allocation2 + $0x180] sm:$0xc]
      %v2774 = vld [vmem:[#allocation2 + $0x184] sm:$0x3]
      %v2775 = vld [vmem:[#allocation2 + $0x194] sm:$0xc]
      %v2776 = vld [vmem:[#allocation2 + $0x198] sm:$0x3]
      %v2777 = vld [vmem:[#allocation2 + $0x1a8] sm:$0xc]
      %v2778 = vld [vmem:[#allocation2 + $0x1ac] sm:$0x3]
      %v2779 = vld [vmem:[#allocation2 + $0x1bc] sm:$0xc]
      %v2780 = vld [vmem:[#allocation2 + $0x1c0] sm:$0x3]
      %v2781 = vld [vmem:[#allocation2 + $0x1d0] sm:$0xc]
      %v2782 = vld [vmem:[#allocation2 + $0x1d4] sm:$0x3]
      %v2783 = vld [vmem:[#allocation2 + $0x1e4] sm:$0xc]
      %v2784 = vld [vmem:[#allocation2 + $0x1e8] sm:$0x3]
      %v2785 = vld [vmem:[#allocation2 + $0x1f8] sm:$0xc]
      %v2786 = vld [vmem:[#allocation2 + $0x1fc] sm:$0x3]
      %v2787 = vld [vmem:[#allocation2 + $0x20c] sm:$0xc]
      %v2788 = vld [vmem:[#allocation2 + $0x210] sm:$0x3]
      %v2789 = vld [vmem:[#allocation2 + $0x220] sm:$0xc]
      %v2790 = vld [vmem:[#allocation2 + $0x224] sm:$0x3]
      %vm2807 = vcmask 1041408
      %vm2808 = vcmask 1045508
      %vm2809 = vmor %vm2807, %vm2808
      %v2810 = vrot.slane %v2759, 6
      %v2811 = vrot.slane %v2810, 4
      %v2812 = vrot.slane %v2760, 6
      %v2813 = vsel %vm2809, %v2811, %v2812
      %v2814 = vrot.slane %v2761, 6
      %v2815 = vrot.slane %v2814, 4
      %v2816 = vrot.slane %v2762, 6
      %v2817 = vsel %vm2809, %v2815, %v2816
      %v2818 = vrot.slane %v2763, 6
      %v2819 = vrot.slane %v2818, 4
      %v2820 = vrot.slane %v2764, 6
      %v2821 = vsel %vm2809, %v2819, %v2820
      %v2822 = vrot.slane %v2765, 6
      %v2823 = vrot.slane %v2822, 4
      %v2824 = vrot.slane %v2766, 6
      %v2825 = vsel %vm2809, %v2823, %v2824
      %v2826 = vrot.slane %v2767, 6
      %v2827 = vrot.slane %v2826, 4
      %v2828 = vrot.slane %v2768, 6
      %v2829 = vsel %vm2809, %v2827, %v2828
      %v2830 = vrot.slane %v2769, 6
      %v2831 = vrot.slane %v2830, 4
      %v2832 = vrot.slane %v2770, 6
      %v2833 = vsel %vm2809, %v2831, %v2832
      %v2834 = vrot.slane %v2771, 6
      %v2835 = vrot.slane %v2834, 4
      %v2836 = vrot.slane %v2772, 6
      %v2837 = vsel %vm2809, %v2835, %v2836
      %v2838 = vrot.slane %v2773, 6
      %v2839 = vrot.slane %v2838, 4
      %v2840 = vrot.slane %v2774, 6
      %v2841 = vsel %vm2809, %v2839, %v2840
      %s2842 = scalar_lea.vmem %s2, 36
      %v2843 = vld [vmem:[%s2842] sm:$0x3]
      %v2844 = vunpack.c.l.b16 %v2813
      %v2845 = vunpack.c.l.b16 %v2817
      %v2846 = vunpack.c.l.b16 %v2821
      %v2847 = vunpack.c.l.b16 %v2825
      %v2848 = vunpack.c.l.b16 %v2829
      %v2849 = vunpack.c.l.b16 %v2833
      %v2850 = vunpack.c.l.b16 %v2837
      %v2851 = vunpack.c.l.b16 %v2841
      %v2852 = vpack.c.b16 %v2845, %v2844
      %v2853 = vpack.c.b16 %v2847, %v2846
      %v2854 = vpack.c.b16 %v2849, %v2848
      %v2855 = vpack.c.b16 %v2851, %v2850
      %v2857 = vsel %vm769, %v2852, 0
      %v2860 = vsel %vm769, %v2853, 0
      %v2863 = vsel %vm769, %v2854, 0
      %v2866 = vsel %vm769, %v2855, 0
      %v2869 = vsel %vm782, %v2843, 0
      %2871 = vmatprep.subr.bf16.mxu0 0
      %2872 = vmatpush1.bf16.msra.mxu0 %v2869
      %2873 = vmatprep.subr.bf16.mxu0 0
      %2874 = vmatpush1.bf16.msra.mxu0 0
      %2875 = vmatprep.subr.bf16.mxu0 0
      %2876 = vmatpush1.bf16.msra.mxu0 0
      %2877 = vmatprep.subr.bf16.mxu0 0
      %2878 = vmatpush1.bf16.msra.mxu0 0
      %2879 = vmatprep.subr.bf16.mxu0 0
      %2880 = vmatpush1.bf16.msra.mxu0 0
      %2881 = vmatprep.subr.bf16.mxu0 0
      %2882 = vmatpush1.bf16.msra.mxu0 0
      %2883 = vmatprep.subr.bf16.mxu0 0
      %2884 = vmatpush1.bf16.msra.mxu0 0
      %2885 = vmatprep.subr.bf16.mxu0 0
      %2886 = vmatpush1.bf16.msra.mxu0 0
      %2887 = vmatprep.subr.bf16.mxu0 0
      %2888 = vmatpush1.bf16.msra.mxu0 0
      %2889 = vmatprep.subr.bf16.mxu0 0
      %2890 = vmatpush1.bf16.msra.mxu0 0
      %2891 = vmatprep.subr.bf16.mxu0 0
      %2892 = vmatpush1.bf16.msra.mxu0 0
      %2893 = vmatprep.subr.bf16.mxu0 0
      %2894 = vmatpush1.bf16.msra.mxu0 0
      %2895 = vmatprep.subr.bf16.mxu0 0
      %2896 = vmatpush1.bf16.msra.mxu0 0
      %2897 = vmatprep.subr.bf16.mxu0 0
      %2898 = vmatpush1.bf16.msra.mxu0 0
      %2899 = vmatprep.subr.bf16.mxu0 0
      %2900 = vmatpush1.bf16.msra.mxu0 0
      %2901 = vmatprep.subr.bf16.mxu0 0
      %2902 = vmatpush1.bf16.msra.mxu0 0
      %2903 = vmatprep.mubr.bf16.mxu0 0
      %2904 = vmatmul.mubr.bf16.gmra.mrb[0].mxu0 %v2857
      %v2905 = vpop.f32.mrb[0].mxu0
      %v2906 = vadd.f32 0.0, %v2905
      %v2907 = vpop.f32.mrb[0].mxu0
      %v2908 = vpop.f32.mrb[0].mxu0
      %v2909 = vadd.f32 0.0, %v2908
      %v2910 = vpop.f32.mrb[0].mxu0
      %2911 = vmatprep.mubr.bf16.mxu0 0
      %2912 = vmatmul.mubr.bf16.gmra.mrb[0].mxu0 %v2860
      %v2913 = vpop.f32.mrb[0].mxu0
      %v2914 = vadd.f32 0.0, %v2913
      %v2915 = vpop.f32.mrb[0].mxu0
      %v2916 = vpop.f32.mrb[0].mxu0
      %v2917 = vadd.f32 0.0, %v2916
      %v2918 = vpop.f32.mrb[0].mxu0
      %2919 = vmatprep.mubr.bf16.mxu0 0
      %2920 = vmatmul.mubr.bf16.gmra.mrb[0].mxu0 %v2863
      %v2921 = vpop.f32.mrb[0].mxu0
      %v2922 = vadd.f32 0.0, %v2921
      %v2923 = vpop.f32.mrb[0].mxu0
      %v2924 = vpop.f32.mrb[0].mxu0
      %v2925 = vadd.f32 0.0, %v2924
      %v2926 = vpop.f32.mrb[0].mxu0
      %2927 = vmatprep.mubr.bf16.mxu0 0
      %2928 = vmatmul.mubr.bf16.gmra.mrb[0].mxu0 %v2866
      %v2929 = vpop.f32.mrb[0].mxu0
      %v2930 = vadd.f32 0.0, %v2929
      %v2931 = vpop.f32.mrb[0].mxu0
      %v2932 = vpop.f32.mrb[0].mxu0
      %v2933 = vadd.f32 0.0, %v2932
      %v2934 = vpop.f32.mrb[0].mxu0
      %2935 = vdwg.mxu0
      %v2936 = vadd.f32 %v2751, %v2906
      %v2937 = vadd.f32 %v2752, %v2909
      %v2938 = vadd.f32 %v2753, %v2914
      %v2939 = vadd.f32 %v2754, %v2917
      %v2940 = vadd.f32 %v2755, %v2922
      %v2941 = vadd.f32 %v2756, %v2925
      %v2942 = vadd.f32 %v2757, %v2930
      %v2943 = vadd.f32 %v2758, %v2933
      %v2952 = vrot.slane %v2775, 6
      %v2953 = vrot.slane %v2952, 4
      %v2954 = vrot.slane %v2776, 6
      %v2955 = vsel %vm2809, %v2953, %v2954
      %v2956 = vrot.slane %v2777, 6
      %v2957 = vrot.slane %v2956, 4
      %v2958 = vrot.slane %v2778, 6
      %v2959 = vsel %vm2809, %v2957, %v2958
      %v2960 = vrot.slane %v2779, 6
      %v2961 = vrot.slane %v2960, 4
      %v2962 = vrot.slane %v2780, 6
      %v2963 = vsel %vm2809, %v2961, %v2962
      %v2964 = vrot.slane %v2781, 6
      %v2965 = vrot.slane %v2964, 4
      %v2966 = vrot.slane %v2782, 6
      %v2967 = vsel %vm2809, %v2965, %v2966
      %s2968 = scalar_lea.vmem %s2, 42
      %v2969 = vld [vmem:[%s2968] sm:$0x3]
      %v2970 = vunpack.c.l.b16 %v2955
      %v2971 = vunpack.c.l.b16 %v2959
      %v2972 = vunpack.c.l.b16 %v2963
      %v2973 = vunpack.c.l.b16 %v2967
      %v2974 = vpack.c.b16 %v2971, %v2970
      %v2975 = vpack.c.b16 %v2973, %v2972
      %v2977 = vsel %vm769, %v2974, 0
      %v2980 = vsel %vm769, %v2975, 0
      %v2983 = vsel %vm782, %v2969, 0
      %2985 = vmatprep.subr.bf16.mxu0 0
      %2986 = vmatpush1.bf16.msra.mxu0 %v2983
      %2987 = vmatprep.subr.bf16.mxu0 0
      %2988 = vmatpush1.bf16.msra.mxu0 0
      %2989 = vmatprep.subr.bf16.mxu0 0
      %2990 = vmatpush1.bf16.msra.mxu0 0
      %2991 = vmatprep.subr.bf16.mxu0 0
      %2992 = vmatpush1.bf16.msra.mxu0 0
      %2993 = vmatprep.subr.bf16.mxu0 0
      %2994 = vmatpush1.bf16.msra.mxu0 0
      %2995 = vmatprep.subr.bf16.mxu0 0
      %2996 = vmatpush1.bf16.msra.mxu0 0
      %2997 = vmatprep.subr.bf16.mxu0 0
      %2998 = vmatpush1.bf16.msra.mxu0 0
      %2999 = vmatprep.subr.bf16.mxu0 0
      %3000 = vmatpush1.bf16.msra.mxu0 0
      %3001 = vmatprep.subr.bf16.mxu0 0
      %3002 = vmatpush1.bf16.msra.mxu0 0
      %3003 = vmatprep.subr.bf16.mxu0 0
      %3004 = vmatpush1.bf16.msra.mxu0 0
      %3005 = vmatprep.subr.bf16.mxu0 0
      %3006 = vmatpush1.bf16.msra.mxu0 0
      %3007 = vmatprep.subr.bf16.mxu0 0
      %3008 = vmatpush1.bf16.msra.mxu0 0
      %3009 = vmatprep.subr.bf16.mxu0 0
      %3010 = vmatpush1.bf16.msra.mxu0 0
      %3011 = vmatprep.subr.bf16.mxu0 0
      %3012 = vmatpush1.bf16.msra.mxu0 0
      %3013 = vmatprep.subr.bf16.mxu0 0
      %3014 = vmatpush1.bf16.msra.mxu0 0
      %3015 = vmatprep.subr.bf16.mxu0 0
      %3016 = vmatpush1.bf16.msra.mxu0 0
      %3017 = vmatprep.mubr.bf16.mxu0 0
      %3018 = vmatmul.mubr.bf16.gmra.mrb[0].mxu0 %v2863
      %v3019 = vpop.f32.mrb[0].mxu0
      %v3020 = vadd.f32 0.0, %v3019
      %v3021 = vpop.f32.mrb[0].mxu0
      %v3022 = vpop.f32.mrb[0].mxu0
      %v3023 = vadd.f32 0.0, %v3022
      %v3024 = vpop.f32.mrb[0].mxu0
      %3025 = vmatprep.mubr.bf16.mxu0 0
      %3026 = vmatmul.mubr.bf16.gmra.mrb[0].mxu0 %v2866
      %v3027 = vpop.f32.mrb[0].mxu0
      %v3028 = vadd.f32 0.0, %v3027
      %v3029 = vpop.f32.mrb[0].mxu0
      %v3030 = vpop.f32.mrb[0].mxu0
      %v3031 = vadd.f32 0.0, %v3030
      %v3032 = vpop.f32.mrb[0].mxu0
      %3033 = vmatprep.mubr.bf16.mxu0 0
      %3034 = vmatmul.mubr.bf16.gmra.mrb[0].mxu0 %v2977
      %v3035 = vpop.f32.mrb[0].mxu0
      %v3036 = vadd.f32 0.0, %v3035
      %v3037 = vpop.f32.mrb[0].mxu0
      %v3038 = vpop.f32.mrb[0].mxu0
      %v3039 = vadd.f32 0.0, %v3038
      %v3040 = vpop.f32.mrb[0].mxu0
      %3041 = vmatprep.mubr.bf16.mxu0 0
      %3042 = vmatmul.mubr.bf16.gmra.mrb[0].mxu0 %v2980
      %v3043 = vpop.f32.mrb[0].mxu0
      %v3044 = vadd.f32 0.0, %v3043
      %v3045 = vpop.f32.mrb[0].mxu0
      %v3046 = vpop.f32.mrb[0].mxu0
      %v3047 = vadd.f32 0.0, %v3046
      %v3048 = vpop.f32.mrb[0].mxu0
      %3049 = vdwg.mxu0
      %v3050 = vadd.f32 %v2936, %v3020
      %v3051 = vadd.f32 %v2937, %v3023
      %v3052 = vadd.f32 %v2938, %v3028
      %v3053 = vadd.f32 %v2939, %v3031
      %v3054 = vadd.f32 %v2940, %v3036
      %v3055 = vadd.f32 %v2941, %v3039
      %v3056 = vadd.f32 %v2942, %v3044
      %v3057 = vadd.f32 %v2943, %v3047
      %v3066 = vrot.slane %v2783, 6
      %v3067 = vrot.slane %v3066, 4
      %v3068 = vrot.slane %v2784, 6
      %v3069 = vsel %vm2809, %v3067, %v3068
      %v3070 = vrot.slane %v2785, 6
      %v3071 = vrot.slane %v3070, 4
      %v3072 = vrot.slane %v2786, 6
      %v3073 = vsel %vm2809, %v3071, %v3072
      %v3074 = vrot.slane %v2787, 6
      %v3075 = vrot.slane %v3074, 4
      %v3076 = vrot.slane %v2788, 6
      %v3077 = vsel %vm2809, %v3075, %v3076
      %v3078 = vrot.slane %v2789, 6
      %v3079 = vrot.slane %v3078, 4
      %v3080 = vrot.slane %v2790, 6
      %v3081 = vsel %vm2809, %v3079, %v3080
      %s3082 = scalar_lea.vmem %s2, 48
      %v3083 = vld [vmem:[%s3082] sm:$0x3]
      %v3084 = vunpack.c.l.b16 %v3069
      %v3085 = vunpack.c.l.b16 %v3073
      %v3086 = vunpack.c.l.b16 %v3077
      %v3087 = vunpack.c.l.b16 %v3081
      %v3088 = vpack.c.b16 %v3085, %v3084
      %v3089 = vpack.c.b16 %v3087, %v3086
      %v3091 = vsel %vm769, %v3088, 0
      %v3094 = vsel %vm769, %v3089, 0
      %v3097 = vsel %vm782, %v3083, 0
      %3099 = vmatprep.subr.bf16.mxu0 0
      %3100 = vmatpush1.bf16.msra.mxu0 %v3097
      %3101 = vmatprep.subr.bf16.mxu0 0
      %3102 = vmatpush1.bf16.msra.mxu0 0
      %3103 = vmatprep.subr.bf16.mxu0 0
      %3104 = vmatpush1.bf16.msra.mxu0 0
      %3105 = vmatprep.subr.bf16.mxu0 0
      %3106 = vmatpush1.bf16.msra.mxu0 0
      %3107 = vmatprep.subr.bf16.mxu0 0
      %3108 = vmatpush1.bf16.msra.mxu0 0
      %3109 = vmatprep.subr.bf16.mxu0 0
      %3110 = vmatpush1.bf16.msra.mxu0 0
      %3111 = vmatprep.subr.bf16.mxu0 0
      %3112 = vmatpush1.bf16.msra.mxu0 0
      %3113 = vmatprep.subr.bf16.mxu0 0
      %3114 = vmatpush1.bf16.msra.mxu0 0
      %3115 = vmatprep.subr.bf16.mxu0 0
      %3116 = vmatpush1.bf16.msra.mxu0 0
      %3117 = vmatprep.subr.bf16.mxu0 0
      %3118 = vmatpush1.bf16.msra.mxu0 0
      %3119 = vmatprep.subr.bf16.mxu0 0
      %3120 = vmatpush1.bf16.msra.mxu0 0
      %3121 = vmatprep.subr.bf16.mxu0 0
      %3122 = vmatpush1.bf16.msra.mxu0 0
      %3123 = vmatprep.subr.bf16.mxu0 0
      %3124 = vmatpush1.bf16.msra.mxu0 0
      %3125 = vmatprep.subr.bf16.mxu0 0
      %3126 = vmatpush1.bf16.msra.mxu0 0
      %3127 = vmatprep.subr.bf16.mxu0 0
      %3128 = vmatpush1.bf16.msra.mxu0 0
      %3129 = vmatprep.subr.bf16.mxu0 0
      %3130 = vmatpush1.bf16.msra.mxu0 0
      %3131 = vmatprep.mubr.bf16.mxu0 0
      %3132 = vmatmul.mubr.bf16.gmra.mrb[0].mxu0 %v2977
      %v3133 = vpop.f32.mrb[0].mxu0
      %v3134 = vadd.f32 0.0, %v3133
      %v3135 = vpop.f32.mrb[0].mxu0
      %v3136 = vpop.f32.mrb[0].mxu0
      %v3137 = vadd.f32 0.0, %v3136
      %v3138 = vpop.f32.mrb[0].mxu0
      %3139 = vmatprep.mubr.bf16.mxu0 0
      %3140 = vmatmul.mubr.bf16.gmra.mrb[0].mxu0 %v2980
      %v3141 = vpop.f32.mrb[0].mxu0
      %v3142 = vadd.f32 0.0, %v3141
      %v3143 = vpop.f32.mrb[0].mxu0
      %v3144 = vpop.f32.mrb[0].mxu0
      %v3145 = vadd.f32 0.0, %v3144
      %v3146 = vpop.f32.mrb[0].mxu0
      %3147 = vmatprep.mubr.bf16.mxu0 0
      %3148 = vmatmul.mubr.bf16.gmra.mrb[0].mxu0 %v3091
      %v3149 = vpop.f32.mrb[0].mxu0
      %v3150 = vadd.f32 0.0, %v3149
      %v3151 = vpop.f32.mrb[0].mxu0
      %v3152 = vpop.f32.mrb[0].mxu0
      %v3153 = vadd.f32 0.0, %v3152
      %v3154 = vpop.f32.mrb[0].mxu0
      %3155 = vmatprep.mubr.bf16.mxu0 0
      %3156 = vmatmul.mubr.bf16.gmra.mrb[0].mxu0 %v3094
      %v3157 = vpop.f32.mrb[0].mxu0
      %v3158 = vadd.f32 0.0, %v3157
      %v3159 = vpop.f32.mrb[0].mxu0
      %v3160 = vpop.f32.mrb[0].mxu0
      %v3161 = vadd.f32 0.0, %v3160
      %v3162 = vpop.f32.mrb[0].mxu0
      %3163 = vdwg.mxu0
      %v3164 = vadd.f32 %v3050, %v3134
      %v3165 = vadd.f32 %v3051, %v3137
      %v3166 = vadd.f32 %v3052, %v3142
      %v3167 = vadd.f32 %v3053, %v3145
      %v3168 = vadd.f32 %v3054, %v3150
      %v3169 = vadd.f32 %v3055, %v3153
      %v3170 = vadd.f32 %v3056, %v3158
      %v3171 = vadd.f32 %v3057, %v3161
      %s3172 = scalar_lea.vmem %s2, 38
      %v3173 = vld [vmem:[%s3172] sm:$0x3]
      %v3176 = vunpack.c.l.b16 %v1044
      %v3177 = vunpack.c.l.b16 %v1045
      %v3178 = vpack.c.b16 %v3177, %v3176
      %v3180 = vsel %vm769, %v3178, 0
      %v3183 = vsel %vm782, %v3173, 0
      %3185 = vmatprep.subr.bf16.mxu0 0
      %3186 = vmatpush1.bf16.msra.mxu0 %v3183
      %3187 = vmatprep.subr.bf16.mxu0 0
      %3188 = vmatpush1.bf16.msra.mxu0 0
      %3189 = vmatprep.subr.bf16.mxu0 0
      %3190 = vmatpush1.bf16.msra.mxu0 0
      %3191 = vmatprep.subr.bf16.mxu0 0
      %3192 = vmatpush1.bf16.msra.mxu0 0
      %3193 = vmatprep.subr.bf16.mxu0 0
      %3194 = vmatpush1.bf16.msra.mxu0 0
      %3195 = vmatprep.subr.bf16.mxu0 0
      %3196 = vmatpush1.bf16.msra.mxu0 0
      %3197 = vmatprep.subr.bf16.mxu0 0
      %3198 = vmatpush1.bf16.msra.mxu0 0
      %3199 = vmatprep.subr.bf16.mxu0 0
      %3200 = vmatpush1.bf16.msra.mxu0 0
      %3201 = vmatprep.subr.bf16.mxu0 0
      %3202 = vmatpush1.bf16.msra.mxu0 0
      %3203 = vmatprep.subr.bf16.mxu0 0
      %3204 = vmatpush1.bf16.msra.mxu0 0
      %3205 = vmatprep.subr.bf16.mxu0 0
      %3206 = vmatpush1.bf16.msra.mxu0 0
      %3207 = vmatprep.subr.bf16.mxu0 0
      %3208 = vmatpush1.bf16.msra.mxu0 0
      %3209 = vmatprep.subr.bf16.mxu0 0
      %3210 = vmatpush1.bf16.msra.mxu0 0
      %3211 = vmatprep.subr.bf16.mxu0 0
      %3212 = vmatpush1.bf16.msra.mxu0 0
      %3213 = vmatprep.subr.bf16.mxu0 0
      %3214 = vmatpush1.bf16.msra.mxu0 0
      %3215 = vmatprep.subr.bf16.mxu0 0
      %3216 = vmatpush1.bf16.msra.mxu0 0
      %3217 = vmatprep.mubr.bf16.mxu0 0
      %3218 = vmatmul.mubr.bf16.gmra.mrb[0].mxu0 %v3180
      %v3219 = vpop.f32.mrb[0].mxu0
      %v3220 = vadd.f32 0.0, %v3219
      %v3221 = vpop.f32.mrb[0].mxu0
      %v3222 = vpop.f32.mrb[0].mxu0
      %v3223 = vadd.f32 0.0, %v3222
      %v3224 = vpop.f32.mrb[0].mxu0
      %3225 = vmatprep.mubr.bf16.mxu0 0
      %3226 = vmatmul.mubr.bf16.gmra.mrb[0].mxu0 %v2160
      %v3227 = vpop.f32.mrb[0].mxu0
      %v3228 = vadd.f32 0.0, %v3227
      %v3229 = vpop.f32.mrb[0].mxu0
      %v3230 = vpop.f32.mrb[0].mxu0
      %v3231 = vadd.f32 0.0, %v3230
      %v3232 = vpop.f32.mrb[0].mxu0
      %3233 = vmatprep.mubr.bf16.mxu0 0
      %3234 = vmatmul.mubr.bf16.gmra.mrb[0].mxu0 %v1181
      %v3235 = vpop.f32.mrb[0].mxu0
      %v3236 = vadd.f32 0.0, %v3235
      %v3237 = vpop.f32.mrb[0].mxu0
      %v3238 = vpop.f32.mrb[0].mxu0
      %v3239 = vadd.f32 0.0, %v3238
      %v3240 = vpop.f32.mrb[0].mxu0
      %3241 = vmatprep.mubr.bf16.mxu0 0
      %3242 = vmatmul.mubr.bf16.gmra.mrb[0].mxu0 %v1184
      %v3243 = vpop.f32.mrb[0].mxu0
      %v3244 = vadd.f32 0.0, %v3243
      %v3245 = vpop.f32.mrb[0].mxu0
      %v3246 = vpop.f32.mrb[0].mxu0
      %v3247 = vadd.f32 0.0, %v3246
      %v3248 = vpop.f32.mrb[0].mxu0
      %3249 = vdwg.mxu0
      %v3250 = vadd.f32 %v3164, %v3220
      %v3251 = vadd.f32 %v3165, %v3223
      %v3252 = vadd.f32 %v3166, %v3228
      %v3253 = vadd.f32 %v3167, %v3231
      %v3254 = vadd.f32 %v3168, %v3236
      %v3255 = vadd.f32 %v3169, %v3239
      %v3256 = vadd.f32 %v3170, %v3244
      %v3257 = vadd.f32 %v3171, %v3247
      %s3258 = scalar_lea.vmem %s2, 44
      %v3259 = vld [vmem:[%s3258] sm:$0x3]
      %v3261 = vsel %vm782, %v3259, 0
      %3263 = vmatprep.subr.bf16.mxu0 0
      %3264 = vmatpush1.bf16.msra.mxu0 %v3261
      %3265 = vmatprep.subr.bf16.mxu0 0
      %3266 = vmatpush1.bf16.msra.mxu0 0
      %3267 = vmatprep.subr.bf16.mxu0 0
      %3268 = vmatpush1.bf16.msra.mxu0 0
      %3269 = vmatprep.subr.bf16.mxu0 0
      %3270 = vmatpush1.bf16.msra.mxu0 0
      %3271 = vmatprep.subr.bf16.mxu0 0
      %3272 = vmatpush1.bf16.msra.mxu0 0
      %3273 = vmatprep.subr.bf16.mxu0 0
      %3274 = vmatpush1.bf16.msra.mxu0 0
      %3275 = vmatprep.subr.bf16.mxu0 0
      %3276 = vmatpush1.bf16.msra.mxu0 0
      %3277 = vmatprep.subr.bf16.mxu0 0
      %3278 = vmatpush1.bf16.msra.mxu0 0
      %3279 = vmatprep.subr.bf16.mxu0 0
      %3280 = vmatpush1.bf16.msra.mxu0 0
      %3281 = vmatprep.subr.bf16.mxu0 0
      %3282 = vmatpush1.bf16.msra.mxu0 0
      %3283 = vmatprep.subr.bf16.mxu0 0
      %3284 = vmatpush1.bf16.msra.mxu0 0
      %3285 = vmatprep.subr.bf16.mxu0 0
      %3286 = vmatpush1.bf16.msra.mxu0 0
      %3287 = vmatprep.subr.bf16.mxu0 0
      %3288 = vmatpush1.bf16.msra.mxu0 0
      %3289 = vmatprep.subr.bf16.mxu0 0
      %3290 = vmatpush1.bf16.msra.mxu0 0
      %3291 = vmatprep.subr.bf16.mxu0 0
      %3292 = vmatpush1.bf16.msra.mxu0 0
      %3293 = vmatprep.subr.bf16.mxu0 0
      %3294 = vmatpush1.bf16.msra.mxu0 0
      %3295 = vmatprep.mubr.bf16.mxu0 0
      %3296 = vmatmul.mubr.bf16.gmra.mrb[0].mxu0 %v1181
      %v3297 = vpop.f32.mrb[0].mxu0
      %v3298 = vadd.f32 0.0, %v3297
      %v3299 = vpop.f32.mrb[0].mxu0
      %v3300 = vpop.f32.mrb[0].mxu0
      %v3301 = vadd.f32 0.0, %v3300
      %v3302 = vpop.f32.mrb[0].mxu0
      %3303 = vmatprep.mubr.bf16.mxu0 0
      %3304 = vmatmul.mubr.bf16.gmra.mrb[0].mxu0 %v1184
      %v3305 = vpop.f32.mrb[0].mxu0
      %v3306 = vadd.f32 0.0, %v3305
      %v3307 = vpop.f32.mrb[0].mxu0
      %v3308 = vpop.f32.mrb[0].mxu0
      %v3309 = vadd.f32 0.0, %v3308
      %v3310 = vpop.f32.mrb[0].mxu0
      %3311 = vmatprep.mubr.bf16.mxu0 0
      %3312 = vmatmul.mubr.bf16.gmra.mrb[0].mxu0 %v1187
      %v3313 = vpop.f32.mrb[0].mxu0
      %v3314 = vadd.f32 0.0, %v3313
      %v3315 = vpop.f32.mrb[0].mxu0
      %v3316 = vpop.f32.mrb[0].mxu0
      %v3317 = vadd.f32 0.0, %v3316
      %v3318 = vpop.f32.mrb[0].mxu0
      %3319 = vmatprep.mubr.bf16.mxu0 0
      %3320 = vmatmul.mubr.bf16.gmra.mrb[0].mxu0 %v1190
      %v3321 = vpop.f32.mrb[0].mxu0
      %v3322 = vadd.f32 0.0, %v3321
      %v3323 = vpop.f32.mrb[0].mxu0
      %v3324 = vpop.f32.mrb[0].mxu0
      %v3325 = vadd.f32 0.0, %v3324
      %v3326 = vpop.f32.mrb[0].mxu0
      %3327 = vdwg.mxu0
      %v3328 = vadd.f32 %v3250, %v3298
      %v3329 = vadd.f32 %v3251, %v3301
      %v3330 = vadd.f32 %v3252, %v3306
      %v3331 = vadd.f32 %v3253, %v3309
      %v3332 = vadd.f32 %v3254, %v3314
      %v3333 = vadd.f32 %v3255, %v3317
      %v3334 = vadd.f32 %v3256, %v3322
      %v3335 = vadd.f32 %v3257, %v3325
      %s3336 = scalar_lea.vmem %s2, 50
      %v3337 = vld [vmem:[%s3336] sm:$0x3]
      %v3340 = vunpack.c.l.b16 %v1048
      %v3341 = vunpack.c.l.b16 %v1049
      %v3342 = vpack.c.b16 %v3341, %v3340
      %v3344 = vsel %vm769, %v3342, 0
      %v3347 = vsel %vm782, %v3337, 0
      %3349 = vmatprep.subr.bf16.mxu0 0
      %3350 = vmatpush1.bf16.msra.mxu0 %v3347
      %3351 = vmatprep.subr.bf16.mxu0 0
      %3352 = vmatpush1.bf16.msra.mxu0 0
      %3353 = vmatprep.subr.bf16.mxu0 0
      %3354 = vmatpush1.bf16.msra.mxu0 0
      %3355 = vmatprep.subr.bf16.mxu0 0
      %3356 = vmatpush1.bf16.msra.mxu0 0
      %3357 = vmatprep.subr.bf16.mxu0 0
      %3358 = vmatpush1.bf16.msra.mxu0 0
      %3359 = vmatprep.subr.bf16.mxu0 0
      %3360 = vmatpush1.bf16.msra.mxu0 0
      %3361 = vmatprep.subr.bf16.mxu0 0
      %3362 = vmatpush1.bf16.msra.mxu0 0
      %3363 = vmatprep.subr.bf16.mxu0 0
      %3364 = vmatpush1.bf16.msra.mxu0 0
      %3365 = vmatprep.subr.bf16.mxu0 0
      %3366 = vmatpush1.bf16.msra.mxu0 0
      %3367 = vmatprep.subr.bf16.mxu0 0
      %3368 = vmatpush1.bf16.msra.mxu0 0
      %3369 = vmatprep.subr.bf16.mxu0 0
      %3370 = vmatpush1.bf16.msra.mxu0 0
      %3371 = vmatprep.subr.bf16.mxu0 0
      %3372 = vmatpush1.bf16.msra.mxu0 0
      %3373 = vmatprep.subr.bf16.mxu0 0
      %3374 = vmatpush1.bf16.msra.mxu0 0
      %3375 = vmatprep.subr.bf16.mxu0 0
      %3376 = vmatpush1.bf16.msra.mxu0 0
      %3377 = vmatprep.subr.bf16.mxu0 0
      %3378 = vmatpush1.bf16.msra.mxu0 0
      %3379 = vmatprep.subr.bf16.mxu0 0
      %3380 = vmatpush1.bf16.msra.mxu0 0
      %3381 = vmatprep.mubr.bf16.mxu0 0
      %3382 = vmatmul.mubr.bf16.gmra.mrb[0].mxu0 %v1187
      %v3383 = vpop.f32.mrb[0].mxu0
      %v3384 = vadd.f32 0.0, %v3383
      %v3385 = vpop.f32.mrb[0].mxu0
      %v3386 = vpop.f32.mrb[0].mxu0
      %v3387 = vadd.f32 0.0, %v3386
      %v3388 = vpop.f32.mrb[0].mxu0
      %3389 = vmatprep.mubr.bf16.mxu0 0
      %3390 = vmatmul.mubr.bf16.gmra.mrb[0].mxu0 %v1190
      %v3391 = vpop.f32.mrb[0].mxu0
      %v3392 = vadd.f32 0.0, %v3391
      %v3393 = vpop.f32.mrb[0].mxu0
      %v3394 = vpop.f32.mrb[0].mxu0
      %v3395 = vadd.f32 0.0, %v3394
      %v3396 = vpop.f32.mrb[0].mxu0
      %3397 = vmatprep.mubr.bf16.mxu0 0
      %3398 = vmatmul.mubr.bf16.gmra.mrb[0].mxu0 %v2322
      %v3399 = vpop.f32.mrb[0].mxu0
      %v3400 = vadd.f32 0.0, %v3399
      %v3401 = vpop.f32.mrb[0].mxu0
      %v3402 = vpop.f32.mrb[0].mxu0
      %v3403 = vadd.f32 0.0, %v3402
      %v3404 = vpop.f32.mrb[0].mxu0
      %3405 = vmatprep.mubr.bf16.mxu0 0
      %3406 = vmatmul.mubr.bf16.gmra.mrb[0].mxu0 %v3344
      %v3407 = vpop.f32.mrb[0].mxu0
      %v3408 = vadd.f32 0.0, %v3407
      %v3409 = vpop.f32.mrb[0].mxu0
      %v3410 = vpop.f32.mrb[0].mxu0
      %v3411 = vadd.f32 0.0, %v3410
      %v3412 = vpop.f32.mrb[0].mxu0
      %3413 = vdwg.mxu0
      %v3414 = vadd.f32 %v3328, %v3384
      %v3415 = vadd.f32 %v3329, %v3387
      %v3416 = vadd.f32 %v3330, %v3392
      %v3417 = vadd.f32 %v3331, %v3395
      %v3418 = vadd.f32 %v3332, %v3400
      %v3419 = vadd.f32 %v3333, %v3403
      %v3420 = vadd.f32 %v3334, %v3408
      %v3421 = vadd.f32 %v3335, %v3411
      %v3422 = vld [vmem:[#allocation2 + $0xf8] sm:$0xc]
      %v3423 = vld [vmem:[#allocation2 + $0xfc] sm:$0x3]
      %v3424 = vld [vmem:[#allocation2 + $0x10c] sm:$0xc]
      %v3425 = vld [vmem:[#allocation2 + $0x110] sm:$0x3]
      %v3426 = vld [vmem:[#allocation2 + $0x120] sm:$0xc]
      %v3427 = vld [vmem:[#allocation2 + $0x124] sm:$0x3]
      %v3428 = vld [vmem:[#allocation2 + $0x134] sm:$0xc]
      %v3429 = vld [vmem:[#allocation2 + $0x138] sm:$0x3]
      %v3430 = vld [vmem:[#allocation2 + $0x148] sm:$0xc]
      %v3431 = vld [vmem:[#allocation2 + $0x14c] sm:$0x3]
      %v3432 = vld [vmem:[#allocation2 + $0x15c] sm:$0xc]
      %v3433 = vld [vmem:[#allocation2 + $0x160] sm:$0x3]
      %v3434 = vld [vmem:[#allocation2 + $0x170] sm:$0xc]
      %v3435 = vld [vmem:[#allocation2 + $0x174] sm:$0x3]
      %v3436 = vld [vmem:[#allocation2 + $0x184] sm:$0xc]
      %v3437 = vld [vmem:[#allocation2 + $0x188] sm:$0x3]
      %v3438 = vld [vmem:[#allocation2 + $0x198] sm:$0xc]
      %v3439 = vld [vmem:[#allocation2 + $0x19c] sm:$0x3]
      %v3440 = vld [vmem:[#allocation2 + $0x1ac] sm:$0xc]
      %v3441 = vld [vmem:[#allocation2 + $0x1b0] sm:$0x3]
      %v3442 = vld [vmem:[#allocation2 + $0x1c0] sm:$0xc]
      %v3443 = vld [vmem:[#allocation2 + $0x1c4] sm:$0x3]
      %v3444 = vld [vmem:[#allocation2 + $0x1d4] sm:$0xc]
      %v3445 = vld [vmem:[#allocation2 + $0x1d8] sm:$0x3]
      %v3446 = vld [vmem:[#allocation2 + $0x1e8] sm:$0xc]
      %v3447 = vld [vmem:[#allocation2 + $0x1ec] sm:$0x3]
      %v3448 = vld [vmem:[#allocation2 + $0x1fc] sm:$0xc]
      %v3449 = vld [vmem:[#allocation2 + $0x200] sm:$0x3]
      %v3450 = vld [vmem:[#allocation2 + $0x210] sm:$0xc]
      %v3451 = vld [vmem:[#allocation2 + $0x214] sm:$0x3]
      %v3452 = vld [vmem:[#allocation2 + $0x224] sm:$0xc]
      %v3453 = vld [vmem:[#allocation2 + $0x228] sm:$0x3]
      %v3470 = vrot.slane %v3422, 6
      %v3471 = vrot.slane %v3470, 4
      %v3472 = vrot.slane %v3423, 6
      %v3473 = vsel %vm2809, %v3471, %v3472
      %v3474 = vrot.slane %v3424, 6
      %v3475 = vrot.slane %v3474, 4
      %v3476 = vrot.slane %v3425, 6
      %v3477 = vsel %vm2809, %v3475, %v3476
      %v3478 = vrot.slane %v3426, 6
      %v3479 = vrot.slane %v3478, 4
      %v3480 = vrot.slane %v3427, 6
      %v3481 = vsel %vm2809, %v3479, %v3480
      %v3482 = vrot.slane %v3428, 6
      %v3483 = vrot.slane %v3482, 4
      %v3484 = vrot.slane %v3429, 6
      %v3485 = vsel %vm2809, %v3483, %v3484
      %v3486 = vrot.slane %v3430, 6
      %v3487 = vrot.slane %v3486, 4
      %v3488 = vrot.slane %v3431, 6
      %v3489 = vsel %vm2809, %v3487, %v3488
      %v3490 = vrot.slane %v3432, 6
      %v3491 = vrot.slane %v3490, 4
      %v3492 = vrot.slane %v3433, 6
      %v3493 = vsel %vm2809, %v3491, %v3492
      %v3494 = vrot.slane %v3434, 6
      %v3495 = vrot.slane %v3494, 4
      %v3496 = vrot.slane %v3435, 6
      %v3497 = vsel %vm2809, %v3495, %v3496
      %v3498 = vrot.slane %v3436, 6
      %v3499 = vrot.slane %v3498, 4
      %v3500 = vrot.slane %v3437, 6
      %v3501 = vsel %vm2809, %v3499, %v3500
      %s3502 = scalar_lea.vmem %s2, 40
      %v3503 = vld [vmem:[%s3502] sm:$0x3]
      %v3504 = vunpack.c.l.b16 %v3473
      %v3505 = vunpack.c.l.b16 %v3477
      %v3506 = vunpack.c.l.b16 %v3481
      %v3507 = vunpack.c.l.b16 %v3485
      %v3508 = vunpack.c.l.b16 %v3489
      %v3509 = vunpack.c.l.b16 %v3493
      %v3510 = vunpack.c.l.b16 %v3497
      %v3511 = vunpack.c.l.b16 %v3501
      %v3512 = vpack.c.b16 %v3505, %v3504
      %v3513 = vpack.c.b16 %v3507, %v3506
      %v3514 = vpack.c.b16 %v3509, %v3508
      %v3515 = vpack.c.b16 %v3511, %v3510
      %v3517 = vsel %vm769, %v3512, 0
      %v3520 = vsel %vm769, %v3513, 0
      %v3523 = vsel %vm769, %v3514, 0
      %v3526 = vsel %vm769, %v3515, 0
      %v3529 = vsel %vm782, %v3503, 0
      %3531 = vmatprep.subr.bf16.mxu0 0
      %3532 = vmatpush1.bf16.msra.mxu0 %v3529
      %3533 = vmatprep.subr.bf16.mxu0 0
      %3534 = vmatpush1.bf16.msra.mxu0 0
      %3535 = vmatprep.subr.bf16.mxu0 0
      %3536 = vmatpush1.bf16.msra.mxu0 0
      %3537 = vmatprep.subr.bf16.mxu0 0
      %3538 = vmatpush1.bf16.msra.mxu0 0
      %3539 = vmatprep.subr.bf16.mxu0 0
      %3540 = vmatpush1.bf16.msra.mxu0 0
      %3541 = vmatprep.subr.bf16.mxu0 0
      %3542 = vmatpush1.bf16.msra.mxu0 0
      %3543 = vmatprep.subr.bf16.mxu0 0
      %3544 = vmatpush1.bf16.msra.mxu0 0
      %3545 = vmatprep.subr.bf16.mxu0 0
      %3546 = vmatpush1.bf16.msra.mxu0 0
      %3547 = vmatprep.subr.bf16.mxu0 0
      %3548 = vmatpush1.bf16.msra.mxu0 0
      %3549 = vmatprep.subr.bf16.mxu0 0
      %3550 = vmatpush1.bf16.msra.mxu0 0
      %3551 = vmatprep.subr.bf16.mxu0 0
      %3552 = vmatpush1.bf16.msra.mxu0 0
      %3553 = vmatprep.subr.bf16.mxu0 0
      %3554 = vmatpush1.bf16.msra.mxu0 0
      %3555 = vmatprep.subr.bf16.mxu0 0
      %3556 = vmatpush1.bf16.msra.mxu0 0
      %3557 = vmatprep.subr.bf16.mxu0 0
      %3558 = vmatpush1.bf16.msra.mxu0 0
      %3559 = vmatprep.subr.bf16.mxu0 0
      %3560 = vmatpush1.bf16.msra.mxu0 0
      %3561 = vmatprep.subr.bf16.mxu0 0
      %3562 = vmatpush1.bf16.msra.mxu0 0
      %3563 = vmatprep.mubr.bf16.mxu0 0
      %3564 = vmatmul.mubr.bf16.gmra.mrb[0].mxu0 %v3517
      %v3565 = vpop.f32.mrb[0].mxu0
      %v3566 = vadd.f32 0.0, %v3565
      %v3567 = vpop.f32.mrb[0].mxu0
      %v3568 = vpop.f32.mrb[0].mxu0
      %v3569 = vadd.f32 0.0, %v3568
      %v3570 = vpop.f32.mrb[0].mxu0
      %3571 = vmatprep.mubr.bf16.mxu0 0
      %3572 = vmatmul.mubr.bf16.gmra.mrb[0].mxu0 %v3520
      %v3573 = vpop.f32.mrb[0].mxu0
      %v3574 = vadd.f32 0.0, %v3573
      %v3575 = vpop.f32.mrb[0].mxu0
      %v3576 = vpop.f32.mrb[0].mxu0
      %v3577 = vadd.f32 0.0, %v3576
      %v3578 = vpop.f32.mrb[0].mxu0
      %3579 = vmatprep.mubr.bf16.mxu0 0
      %3580 = vmatmul.mubr.bf16.gmra.mrb[0].mxu0 %v3523
      %v3581 = vpop.f32.mrb[0].mxu0
      %v3582 = vadd.f32 0.0, %v3581
      %v3583 = vpop.f32.mrb[0].mxu0
      %v3584 = vpop.f32.mrb[0].mxu0
      %v3585 = vadd.f32 0.0, %v3584
      %v3586 = vpop.f32.mrb[0].mxu0
      %3587 = vmatprep.mubr.bf16.mxu0 0
      %3588 = vmatmul.mubr.bf16.gmra.mrb[0].mxu0 %v3526
      %v3589 = vpop.f32.mrb[0].mxu0
      %v3590 = vadd.f32 0.0, %v3589
      %v3591 = vpop.f32.mrb[0].mxu0
      %v3592 = vpop.f32.mrb[0].mxu0
      %v3593 = vadd.f32 0.0, %v3592
      %v3594 = vpop.f32.mrb[0].mxu0
      %3595 = vdwg.mxu0
      %v3596 = vadd.f32 %v3414, %v3566
      %v3597 = vadd.f32 %v3415, %v3569
      %v3598 = vadd.f32 %v3416, %v3574
      %v3599 = vadd.f32 %v3417, %v3577
      %v3600 = vadd.f32 %v3418, %v3582
      %v3601 = vadd.f32 %v3419, %v3585
      %v3602 = vadd.f32 %v3420, %v3590
      %v3603 = vadd.f32 %v3421, %v3593
      %v3612 = vrot.slane %v3438, 6
      %v3613 = vrot.slane %v3612, 4
      %v3614 = vrot.slane %v3439, 6
      %v3615 = vsel %vm2809, %v3613, %v3614
      %v3616 = vrot.slane %v3440, 6
      %v3617 = vrot.slane %v3616, 4
      %v3618 = vrot.slane %v3441, 6
      %v3619 = vsel %vm2809, %v3617, %v3618
      %v3620 = vrot.slane %v3442, 6
      %v3621 = vrot.slane %v3620, 4
      %v3622 = vrot.slane %v3443, 6
      %v3623 = vsel %vm2809, %v3621, %v3622
      %v3624 = vrot.slane %v3444, 6
      %v3625 = vrot.slane %v3624, 4
      %v3626 = vrot.slane %v3445, 6
      %v3627 = vsel %vm2809, %v3625, %v3626
      %s3628 = scalar_lea.vmem %s2, 46
      %v3629 = vld [vmem:[%s3628] sm:$0x3]
      %v3630 = vunpack.c.l.b16 %v3615
      %v3631 = vunpack.c.l.b16 %v3619
      %v3632 = vunpack.c.l.b16 %v3623
      %v3633 = vunpack.c.l.b16 %v3627
      %v3634 = vpack.c.b16 %v3631, %v3630
      %v3635 = vpack.c.b16 %v3633, %v3632
      %v3637 = vsel %vm769, %v3634, 0
      %v3640 = vsel %vm769, %v3635, 0
      %v3643 = vsel %vm782, %v3629, 0
      %3645 = vmatprep.subr.bf16.mxu0 0
      %3646 = vmatpush1.bf16.msra.mxu0 %v3643
      %3647 = vmatprep.subr.bf16.mxu0 0
      %3648 = vmatpush1.bf16.msra.mxu0 0
      %3649 = vmatprep.subr.bf16.mxu0 0
      %3650 = vmatpush1.bf16.msra.mxu0 0
      %3651 = vmatprep.subr.bf16.mxu0 0
      %3652 = vmatpush1.bf16.msra.mxu0 0
      %3653 = vmatprep.subr.bf16.mxu0 0
      %3654 = vmatpush1.bf16.msra.mxu0 0
      %3655 = vmatprep.subr.bf16.mxu0 0
      %3656 = vmatpush1.bf16.msra.mxu0 0
      %3657 = vmatprep.subr.bf16.mxu0 0
      %3658 = vmatpush1.bf16.msra.mxu0 0
      %3659 = vmatprep.subr.bf16.mxu0 0
      %3660 = vmatpush1.bf16.msra.mxu0 0
      %3661 = vmatprep.subr.bf16.mxu0 0
      %3662 = vmatpush1.bf16.msra.mxu0 0
      %3663 = vmatprep.subr.bf16.mxu0 0
      %3664 = vmatpush1.bf16.msra.mxu0 0
      %3665 = vmatprep.subr.bf16.mxu0 0
      %3666 = vmatpush1.bf16.msra.mxu0 0
      %3667 = vmatprep.subr.bf16.mxu0 0
      %3668 = vmatpush1.bf16.msra.mxu0 0
      %3669 = vmatprep.subr.bf16.mxu0 0
      %3670 = vmatpush1.bf16.msra.mxu0 0
      %3671 = vmatprep.subr.bf16.mxu0 0
      %3672 = vmatpush1.bf16.msra.mxu0 0
      %3673 = vmatprep.subr.bf16.mxu0 0
      %3674 = vmatpush1.bf16.msra.mxu0 0
      %3675 = vmatprep.subr.bf16.mxu0 0
      %3676 = vmatpush1.bf16.msra.mxu0 0
      %3677 = vmatprep.mubr.bf16.mxu0 0
      %3678 = vmatmul.mubr.bf16.gmra.mrb[0].mxu0 %v3523
      %v3679 = vpop.f32.mrb[0].mxu0
      %v3680 = vadd.f32 0.0, %v3679
      %v3681 = vpop.f32.mrb[0].mxu0
      %v3682 = vpop.f32.mrb[0].mxu0
      %v3683 = vadd.f32 0.0, %v3682
      %v3684 = vpop.f32.mrb[0].mxu0
      %3685 = vmatprep.mubr.bf16.mxu0 0
      %3686 = vmatmul.mubr.bf16.gmra.mrb[0].mxu0 %v3526
      %v3687 = vpop.f32.mrb[0].mxu0
      %v3688 = vadd.f32 0.0, %v3687
      %v3689 = vpop.f32.mrb[0].mxu0
      %v3690 = vpop.f32.mrb[0].mxu0
      %v3691 = vadd.f32 0.0, %v3690
      %v3692 = vpop.f32.mrb[0].mxu0
      %3693 = vmatprep.mubr.bf16.mxu0 0
      %3694 = vmatmul.mubr.bf16.gmra.mrb[0].mxu0 %v3637
      %v3695 = vpop.f32.mrb[0].mxu0
      %v3696 = vadd.f32 0.0, %v3695
      %v3697 = vpop.f32.mrb[0].mxu0
      %v3698 = vpop.f32.mrb[0].mxu0
      %v3699 = vadd.f32 0.0, %v3698
      %v3700 = vpop.f32.mrb[0].mxu0
      %3701 = vmatprep.mubr.bf16.mxu0 0
      %3702 = vmatmul.mubr.bf16.gmra.mrb[0].mxu0 %v3640
      %v3703 = vpop.f32.mrb[0].mxu0
      %v3704 = vadd.f32 0.0, %v3703
      %v3705 = vpop.f32.mrb[0].mxu0
      %v3706 = vpop.f32.mrb[0].mxu0
      %v3707 = vadd.f32 0.0, %v3706
      %v3708 = vpop.f32.mrb[0].mxu0
      %3709 = vdwg.mxu0
      %v3710 = vadd.f32 %v3596, %v3680
      %v3711 = vadd.f32 %v3597, %v3683
      %v3712 = vadd.f32 %v3598, %v3688
      %v3713 = vadd.f32 %v3599, %v3691
      %v3714 = vadd.f32 %v3600, %v3696
      %v3715 = vadd.f32 %v3601, %v3699
      %v3716 = vadd.f32 %v3602, %v3704
      %v3717 = vadd.f32 %v3603, %v3707
      %v3726 = vrot.slane %v3446, 6
      %v3727 = vrot.slane %v3726, 4
      %v3728 = vrot.slane %v3447, 6
      %v3729 = vsel %vm2809, %v3727, %v3728
      %v3730 = vrot.slane %v3448, 6
      %v3731 = vrot.slane %v3730, 4
      %v3732 = vrot.slane %v3449, 6
      %v3733 = vsel %vm2809, %v3731, %v3732
      %v3734 = vrot.slane %v3450, 6
      %v3735 = vrot.slane %v3734, 4
      %v3736 = vrot.slane %v3451, 6
      %v3737 = vsel %vm2809, %v3735, %v3736
      %v3738 = vrot.slane %v3452, 6
      %v3739 = vrot.slane %v3738, 4
      %v3740 = vrot.slane %v3453, 6
      %v3741 = vsel %vm2809, %v3739, %v3740
      %s3742 = scalar_lea.vmem %s2, 52
      %v3743 = vld [vmem:[%s3742] sm:$0x3]
      %v3744 = vunpack.c.l.b16 %v3729
      %v3745 = vunpack.c.l.b16 %v3733
      %v3746 = vunpack.c.l.b16 %v3737
      %v3747 = vunpack.c.l.b16 %v3741
      %v3748 = vpack.c.b16 %v3745, %v3744
      %v3749 = vpack.c.b16 %v3747, %v3746
      %v3751 = vsel %vm769, %v3748, 0
      %v3754 = vsel %vm769, %v3749, 0
      %v3757 = vsel %vm782, %v3743, 0
      %3759 = vmatprep.subr.bf16.mxu0 0
      %3760 = vmatpush1.bf16.msra.mxu0 %v3757
      %3761 = vmatprep.subr.bf16.mxu0 0
      %3762 = vmatpush1.bf16.msra.mxu0 0
      %3763 = vmatprep.subr.bf16.mxu0 0
      %3764 = vmatpush1.bf16.msra.mxu0 0
      %3765 = vmatprep.subr.bf16.mxu0 0
      %3766 = vmatpush1.bf16.msra.mxu0 0
      %3767 = vmatprep.subr.bf16.mxu0 0
      %3768 = vmatpush1.bf16.msra.mxu0 0
      %3769 = vmatprep.subr.bf16.mxu0 0
      %3770 = vmatpush1.bf16.msra.mxu0 0
      %3771 = vmatprep.subr.bf16.mxu0 0
      %3772 = vmatpush1.bf16.msra.mxu0 0
      %3773 = vmatprep.subr.bf16.mxu0 0
      %3774 = vmatpush1.bf16.msra.mxu0 0
      %3775 = vmatprep.subr.bf16.mxu0 0
      %3776 = vmatpush1.bf16.msra.mxu0 0
      %3777 = vmatprep.subr.bf16.mxu0 0
      %3778 = vmatpush1.bf16.msra.mxu0 0
      %3779 = vmatprep.subr.bf16.mxu0 0
      %3780 = vmatpush1.bf16.msra.mxu0 0
      %3781 = vmatprep.subr.bf16.mxu0 0
      %3782 = vmatpush1.bf16.msra.mxu0 0
      %3783 = vmatprep.subr.bf16.mxu0 0
      %3784 = vmatpush1.bf16.msra.mxu0 0
      %3785 = vmatprep.subr.bf16.mxu0 0
      %3786 = vmatpush1.bf16.msra.mxu0 0
      %3787 = vmatprep.subr.bf16.mxu0 0
      %3788 = vmatpush1.bf16.msra.mxu0 0
      %3789 = vmatprep.subr.bf16.mxu0 0
      %3790 = vmatpush1.bf16.msra.mxu0 0
      %3791 = vmatprep.mubr.bf16.mxu0 0
      %3792 = vmatmul.mubr.bf16.gmra.mrb[0].mxu0 %v3637
      %v3793 = vpop.f32.mrb[0].mxu0
      %v3794 = vadd.f32 0.0, %v3793
      %v3795 = vpop.f32.mrb[0].mxu0
      %v3796 = vpop.f32.mrb[0].mxu0
      %v3797 = vadd.f32 0.0, %v3796
      %v3798 = vpop.f32.mrb[0].mxu0
      %3799 = vmatprep.mubr.bf16.mxu0 0
      %3800 = vmatmul.mubr.bf16.gmra.mrb[0].mxu0 %v3640
      %v3801 = vpop.f32.mrb[0].mxu0
      %v3802 = vadd.f32 0.0, %v3801
      %v3803 = vpop.f32.mrb[0].mxu0
      %v3804 = vpop.f32.mrb[0].mxu0
      %v3805 = vadd.f32 0.0, %v3804
      %v3806 = vpop.f32.mrb[0].mxu0
      %3807 = vmatprep.mubr.bf16.mxu0 0
      %3808 = vmatmul.mubr.bf16.gmra.mrb[0].mxu0 %v3751
      %v3809 = vpop.f32.mrb[0].mxu0
      %v3810 = vadd.f32 0.0, %v3809
      %v3811 = vpop.f32.mrb[0].mxu0
      %v3812 = vpop.f32.mrb[0].mxu0
      %v3813 = vadd.f32 0.0, %v3812
      %v3814 = vpop.f32.mrb[0].mxu0
      %3815 = vmatprep.mubr.bf16.mxu0 0
      %3816 = vmatmul.mubr.bf16.gmra.mrb[0].mxu0 %v3754
      %v3817 = vpop.f32.mrb[0].mxu0
      %v3818 = vadd.f32 0.0, %v3817
      %v3819 = vpop.f32.mrb[0].mxu0
      %v3820 = vpop.f32.mrb[0].mxu0
      %v3821 = vadd.f32 0.0, %v3820
      %v3822 = vpop.f32.mrb[0].mxu0
      %3823 = vdwg.mxu0
      %v3824 = vadd.f32 %v3710, %v3794
      %v3825 = vadd.f32 %v3711, %v3797
      %v3826 = vadd.f32 %v3712, %v3802
      %v3827 = vadd.f32 %v3713, %v3805
      %v3828 = vadd.f32 %v3714, %v3810
      %v3829 = vadd.f32 %v3715, %v3813
      %v3830 = vadd.f32 %v3716, %v3818
      %v3831 = vadd.f32 %v3717, %v3821
      %v3832 = vld [vmem:[#allocation2 + $0xa4] sm:$0xf]
      %v3833 = vld [vmem:[#allocation2 + $0xb8] sm:$0xf]
      %v3834 = vld [vmem:[#allocation2 + $0xcc] sm:$0xf]
      %v3835 = vld [vmem:[#allocation2 + $0xe0] sm:$0xf]
      %v3836 = vld [vmem:[#allocation2 + $0xf4] sm:$0xf]
      %v3837 = vld [vmem:[#allocation2 + $0x108] sm:$0xf]
      %v3838 = vld [vmem:[#allocation2 + $0x11c] sm:$0xf]
      %v3839 = vld [vmem:[#allocation2 + $0x130] sm:$0xf]
      %v3840 = vld [vmem:[#allocation2 + $0x144] sm:$0xf]
      %v3841 = vld [vmem:[#allocation2 + $0x158] sm:$0xf]
      %v3842 = vld [vmem:[#allocation2 + $0x16c] sm:$0xf]
      %v3843 = vld [vmem:[#allocation2 + $0x180] sm:$0xf]
      %v3844 = vld [vmem:[#allocation2 + $0x194] sm:$0xf]
      %v3845 = vld [vmem:[#allocation2 + $0x1a8] sm:$0xf]
      %v3846 = vld [vmem:[#allocation2 + $0x1bc] sm:$0xf]
      %v3847 = vld [vmem:[#allocation2 + $0x1d0] sm:$0xf]
      %v3848 = vld [vmem:[#allocation2 + $0x1e4] sm:$0xf]
      %v3849 = vld [vmem:[#allocation2 + $0x1f8] sm:$0xf]
      %v3850 = vld [vmem:[#allocation2 + $0x20c] sm:$0xf]
      %v3851 = vld [vmem:[#allocation2 + $0x220] sm:$0xf]
      %v3852 = vld [vmem:[#allocation2 + $0x234] sm:$0xf]
      %v3853 = vld [vmem:[#allocation2 + $0x248] sm:$0xf]
      %v3854 = vld [vmem:[#allocation2 + $0x25c] sm:$0xf]
      %v3855 = vld [vmem:[#allocation2 + $0x270] sm:$0xf]
      %s3856 = scalar_lea.vmem %s2, 54
      %v3857 = vld [vmem:[%s3856] sm:$0x3]
      %v3866 = vunpack.c.l.b16 %v3832
      %v3867 = vunpack.c.l.b16 %v3833
      %v3868 = vunpack.c.l.b16 %v3834
      %v3869 = vunpack.c.l.b16 %v3835
      %v3870 = vunpack.c.l.b16 %v3836
      %v3871 = vunpack.c.l.b16 %v3837
      %v3872 = vunpack.c.l.b16 %v3838
      %v3873 = vunpack.c.l.b16 %v3839
      %v3874 = vpack.c.b16 %v3867, %v3866
      %v3875 = vpack.c.b16 %v3869, %v3868
      %v3876 = vpack.c.b16 %v3871, %v3870
      %v3877 = vpack.c.b16 %v3873, %v3872
      %v3879 = vsel %vm769, %v3874, 0
      %v3882 = vsel %vm769, %v3875, 0
      %v3885 = vsel %vm769, %v3876, 0
      %v3888 = vsel %vm769, %v3877, 0
      %v3891 = vsel %vm782, %v3857, 0
      %3893 = vmatprep.subr.bf16.mxu0 0
      %3894 = vmatpush1.bf16.msra.mxu0 %v3891
      %3895 = vmatprep.subr.bf16.mxu0 0
      %3896 = vmatpush1.bf16.msra.mxu0 0
      %3897 = vmatprep.subr.bf16.mxu0 0
      %3898 = vmatpush1.bf16.msra.mxu0 0
      %3899 = vmatprep.subr.bf16.mxu0 0
      %3900 = vmatpush1.bf16.msra.mxu0 0
      %3901 = vmatprep.subr.bf16.mxu0 0
      %3902 = vmatpush1.bf16.msra.mxu0 0
      %3903 = vmatprep.subr.bf16.mxu0 0
      %3904 = vmatpush1.bf16.msra.mxu0 0
      %3905 = vmatprep.subr.bf16.mxu0 0
      %3906 = vmatpush1.bf16.msra.mxu0 0
      %3907 = vmatprep.subr.bf16.mxu0 0
      %3908 = vmatpush1.bf16.msra.mxu0 0
      %3909 = vmatprep.subr.bf16.mxu0 0
      %3910 = vmatpush1.bf16.msra.mxu0 0
      %3911 = vmatprep.subr.bf16.mxu0 0
      %3912 = vmatpush1.bf16.msra.mxu0 0
      %3913 = vmatprep.subr.bf16.mxu0 0
      %3914 = vmatpush1.bf16.msra.mxu0 0
      %3915 = vmatprep.subr.bf16.mxu0 0
      %3916 = vmatpush1.bf16.msra.mxu0 0
      %3917 = vmatprep.subr.bf16.mxu0 0
      %3918 = vmatpush1.bf16.msra.mxu0 0
      %3919 = vmatprep.subr.bf16.mxu0 0
      %3920 = vmatpush1.bf16.msra.mxu0 0
      %3921 = vmatprep.subr.bf16.mxu0 0
      %3922 = vmatpush1.bf16.msra.mxu0 0
      %3923 = vmatprep.subr.bf16.mxu0 0
      %3924 = vmatpush1.bf16.msra.mxu0 0
      %3925 = vmatprep.mubr.bf16.mxu0 0
      %3926 = vmatmul.mubr.bf16.gmra.mrb[0].mxu0 %v3879
      %v3927 = vpop.f32.mrb[0].mxu0
      %v3928 = vadd.f32 0.0, %v3927
      %v3929 = vpop.f32.mrb[0].mxu0
      %v3930 = vpop.f32.mrb[0].mxu0
      %v3931 = vadd.f32 0.0, %v3930
      %v3932 = vpop.f32.mrb[0].mxu0
      %3933 = vmatprep.mubr.bf16.mxu0 0
      %3934 = vmatmul.mubr.bf16.gmra.mrb[0].mxu0 %v3882
      %v3935 = vpop.f32.mrb[0].mxu0
      %v3936 = vadd.f32 0.0, %v3935
      %v3937 = vpop.f32.mrb[0].mxu0
      %v3938 = vpop.f32.mrb[0].mxu0
      %v3939 = vadd.f32 0.0, %v3938
      %v3940 = vpop.f32.mrb[0].mxu0
      %3941 = vmatprep.mubr.bf16.mxu0 0
      %3942 = vmatmul.mubr.bf16.gmra.mrb[0].mxu0 %v3885
      %v3943 = vpop.f32.mrb[0].mxu0
      %v3944 = vadd.f32 0.0, %v3943
      %v3945 = vpop.f32.mrb[0].mxu0
      %v3946 = vpop.f32.mrb[0].mxu0
      %v3947 = vadd.f32 0.0, %v3946
      %v3948 = vpop.f32.mrb[0].mxu0
      %3949 = vmatprep.mubr.bf16.mxu0 0
      %3950 = vmatmul.mubr.bf16.gmra.mrb[0].mxu0 %v3888
      %v3951 = vpop.f32.mrb[0].mxu0
      %v3952 = vadd.f32 0.0, %v3951
      %v3953 = vpop.f32.mrb[0].mxu0
      %v3954 = vpop.f32.mrb[0].mxu0
      %v3955 = vadd.f32 0.0, %v3954
      %v3956 = vpop.f32.mrb[0].mxu0
      %3957 = vdwg.mxu0
      %v3958 = vadd.f32 %v3824, %v3928
      %v3959 = vadd.f32 %v3825, %v3931
      %v3960 = vadd.f32 %v3826, %v3936
      %v3961 = vadd.f32 %v3827, %v3939
      %v3962 = vadd.f32 %v3828, %v3944
      %v3963 = vadd.f32 %v3829, %v3947
      %v3964 = vadd.f32 %v3830, %v3952
      %v3965 = vadd.f32 %v3831, %v3955
      %s3966 = scalar_lea.vmem %s2, 60
      %v3967 = vld [vmem:[%s3966] sm:$0x3]
      %v3976 = vunpack.c.l.b16 %v3840
      %v3977 = vunpack.c.l.b16 %v3841
      %v3978 = vunpack.c.l.b16 %v3842
      %v3979 = vunpack.c.l.b16 %v3843
      %v3980 = vunpack.c.l.b16 %v3844
      %v3981 = vunpack.c.l.b16 %v3845
      %v3982 = vunpack.c.l.b16 %v3846
      %v3983 = vunpack.c.l.b16 %v3847
      %v3984 = vpack.c.b16 %v3977, %v3976
      %v3985 = vpack.c.b16 %v3979, %v3978
      %v3986 = vpack.c.b16 %v3981, %v3980
      %v3987 = vpack.c.b16 %v3983, %v3982
      %v3989 = vsel %vm769, %v3984, 0
      %v3992 = vsel %vm769, %v3985, 0
      %v3995 = vsel %vm769, %v3986, 0
      %v3998 = vsel %vm769, %v3987, 0
      %v4001 = vsel %vm782, %v3967, 0
      %4003 = vmatprep.subr.bf16.mxu0 0
      %4004 = vmatpush1.bf16.msra.mxu0 %v4001
      %4005 = vmatprep.subr.bf16.mxu0 0
      %4006 = vmatpush1.bf16.msra.mxu0 0
      %4007 = vmatprep.subr.bf16.mxu0 0
      %4008 = vmatpush1.bf16.msra.mxu0 0
      %4009 = vmatprep.subr.bf16.mxu0 0
      %4010 = vmatpush1.bf16.msra.mxu0 0
      %4011 = vmatprep.subr.bf16.mxu0 0
      %4012 = vmatpush1.bf16.msra.mxu0 0
      %4013 = vmatprep.subr.bf16.mxu0 0
      %4014 = vmatpush1.bf16.msra.mxu0 0
      %4015 = vmatprep.subr.bf16.mxu0 0
      %4016 = vmatpush1.bf16.msra.mxu0 0
      %4017 = vmatprep.subr.bf16.mxu0 0
      %4018 = vmatpush1.bf16.msra.mxu0 0
      %4019 = vmatprep.subr.bf16.mxu0 0
      %4020 = vmatpush1.bf16.msra.mxu0 0
      %4021 = vmatprep.subr.bf16.mxu0 0
      %4022 = vmatpush1.bf16.msra.mxu0 0
      %4023 = vmatprep.subr.bf16.mxu0 0
      %4024 = vmatpush1.bf16.msra.mxu0 0
      %4025 = vmatprep.subr.bf16.mxu0 0
      %4026 = vmatpush1.bf16.msra.mxu0 0
      %4027 = vmatprep.subr.bf16.mxu0 0
      %4028 = vmatpush1.bf16.msra.mxu0 0
      %4029 = vmatprep.subr.bf16.mxu0 0
      %4030 = vmatpush1.bf16.msra.mxu0 0
      %4031 = vmatprep.subr.bf16.mxu0 0
      %4032 = vmatpush1.bf16.msra.mxu0 0
      %4033 = vmatprep.subr.bf16.mxu0 0
      %4034 = vmatpush1.bf16.msra.mxu0 0
      %4035 = vmatprep.mubr.bf16.mxu0 0
      %4036 = vmatmul.mubr.bf16.gmra.mrb[0].mxu0 %v3989
      %v4037 = vpop.f32.mrb[0].mxu0
      %v4038 = vadd.f32 0.0, %v4037
      %v4039 = vpop.f32.mrb[0].mxu0
      %v4040 = vpop.f32.mrb[0].mxu0
      %v4041 = vadd.f32 0.0, %v4040
      %v4042 = vpop.f32.mrb[0].mxu0
      %4043 = vmatprep.mubr.bf16.mxu0 0
      %4044 = vmatmul.mubr.bf16.gmra.mrb[0].mxu0 %v3992
      %v4045 = vpop.f32.mrb[0].mxu0
      %v4046 = vadd.f32 0.0, %v4045
      %v4047 = vpop.f32.mrb[0].mxu0
      %v4048 = vpop.f32.mrb[0].mxu0
      %v4049 = vadd.f32 0.0, %v4048
      %v4050 = vpop.f32.mrb[0].mxu0
      %4051 = vmatprep.mubr.bf16.mxu0 0
      %4052 = vmatmul.mubr.bf16.gmra.mrb[0].mxu0 %v3995
      %v4053 = vpop.f32.mrb[0].mxu0
      %v4054 = vadd.f32 0.0, %v4053
      %v4055 = vpop.f32.mrb[0].mxu0
      %v4056 = vpop.f32.mrb[0].mxu0
      %v4057 = vadd.f32 0.0, %v4056
      %v4058 = vpop.f32.mrb[0].mxu0
      %4059 = vmatprep.mubr.bf16.mxu0 0
      %4060 = vmatmul.mubr.bf16.gmra.mrb[0].mxu0 %v3998
      %v4061 = vpop.f32.mrb[0].mxu0
      %v4062 = vadd.f32 0.0, %v4061
      %v4063 = vpop.f32.mrb[0].mxu0
      %v4064 = vpop.f32.mrb[0].mxu0
      %v4065 = vadd.f32 0.0, %v4064
      %v4066 = vpop.f32.mrb[0].mxu0
      %4067 = vdwg.mxu0
      %v4068 = vadd.f32 %v3958, %v4038
      %v4069 = vadd.f32 %v3959, %v4041
      %v4070 = vadd.f32 %v3960, %v4046
      %v4071 = vadd.f32 %v3961, %v4049
      %v4072 = vadd.f32 %v3962, %v4054
      %v4073 = vadd.f32 %v3963, %v4057
      %v4074 = vadd.f32 %v3964, %v4062
      %v4075 = vadd.f32 %v3965, %v4065
      %s4076 = scalar_lea.vmem %s2, 66
      %v4077 = vld [vmem:[%s4076] sm:$0x3]
      %v4086 = vunpack.c.l.b16 %v3848
      %v4087 = vunpack.c.l.b16 %v3849
      %v4088 = vunpack.c.l.b16 %v3850
      %v4089 = vunpack.c.l.b16 %v3851
      %v4090 = vunpack.c.l.b16 %v3852
      %v4091 = vunpack.c.l.b16 %v3853
      %v4092 = vunpack.c.l.b16 %v3854
      %v4093 = vunpack.c.l.b16 %v3855
      %v4094 = vpack.c.b16 %v4087, %v4086
      %v4095 = vpack.c.b16 %v4089, %v4088
      %v4096 = vpack.c.b16 %v4091, %v4090
      %v4097 = vpack.c.b16 %v4093, %v4092
      %v4099 = vsel %vm769, %v4094, 0
      %v4102 = vsel %vm769, %v4095, 0
      %v4105 = vsel %vm769, %v4096, 0
      %v4108 = vsel %vm769, %v4097, 0
      %v4111 = vsel %vm782, %v4077, 0
      %4113 = vmatprep.subr.bf16.mxu0 0
      %4114 = vmatpush1.bf16.msra.mxu0 %v4111
      %4115 = vmatprep.subr.bf16.mxu0 0
      %4116 = vmatpush1.bf16.msra.mxu0 0
      %4117 = vmatprep.subr.bf16.mxu0 0
      %4118 = vmatpush1.bf16.msra.mxu0 0
      %4119 = vmatprep.subr.bf16.mxu0 0
      %4120 = vmatpush1.bf16.msra.mxu0 0
      %4121 = vmatprep.subr.bf16.mxu0 0
      %4122 = vmatpush1.bf16.msra.mxu0 0
      %4123 = vmatprep.subr.bf16.mxu0 0
      %4124 = vmatpush1.bf16.msra.mxu0 0
      %4125 = vmatprep.subr.bf16.mxu0 0
      %4126 = vmatpush1.bf16.msra.mxu0 0
      %4127 = vmatprep.subr.bf16.mxu0 0
      %4128 = vmatpush1.bf16.msra.mxu0 0
      %4129 = vmatprep.subr.bf16.mxu0 0
      %4130 = vmatpush1.bf16.msra.mxu0 0
      %4131 = vmatprep.subr.bf16.mxu0 0
      %4132 = vmatpush1.bf16.msra.mxu0 0
      %4133 = vmatprep.subr.bf16.mxu0 0
      %4134 = vmatpush1.bf16.msra.mxu0 0
      %4135 = vmatprep.subr.bf16.mxu0 0
      %4136 = vmatpush1.bf16.msra.mxu0 0
      %4137 = vmatprep.subr.bf16.mxu0 0
      %4138 = vmatpush1.bf16.msra.mxu0 0
      %4139 = vmatprep.subr.bf16.mxu0 0
      %4140 = vmatpush1.bf16.msra.mxu0 0
      %4141 = vmatprep.subr.bf16.mxu0 0
      %4142 = vmatpush1.bf16.msra.mxu0 0
      %4143 = vmatprep.subr.bf16.mxu0 0
      %4144 = vmatpush1.bf16.msra.mxu0 0
      %4145 = vmatprep.mubr.bf16.mxu0 0
      %4146 = vmatmul.mubr.bf16.gmra.mrb[0].mxu0 %v4099
      %v4147 = vpop.f32.mrb[0].mxu0
      %v4148 = vadd.f32 0.0, %v4147
      %v4149 = vpop.f32.mrb[0].mxu0
      %v4150 = vpop.f32.mrb[0].mxu0
      %v4151 = vadd.f32 0.0, %v4150
      %v4152 = vpop.f32.mrb[0].mxu0
      %4153 = vmatprep.mubr.bf16.mxu0 0
      %4154 = vmatmul.mubr.bf16.gmra.mrb[0].mxu0 %v4102
      %v4155 = vpop.f32.mrb[0].mxu0
      %v4156 = vadd.f32 0.0, %v4155
      %v4157 = vpop.f32.mrb[0].mxu0
      %v4158 = vpop.f32.mrb[0].mxu0
      %v4159 = vadd.f32 0.0, %v4158
      %v4160 = vpop.f32.mrb[0].mxu0
      %4161 = vmatprep.mubr.bf16.mxu0 0
      %4162 = vmatmul.mubr.bf16.gmra.mrb[0].mxu0 %v4105
      %v4163 = vpop.f32.mrb[0].mxu0
      %v4164 = vadd.f32 0.0, %v4163
      %v4165 = vpop.f32.mrb[0].mxu0
      %v4166 = vpop.f32.mrb[0].mxu0
      %v4167 = vadd.f32 0.0, %v4166
      %v4168 = vpop.f32.mrb[0].mxu0
      %4169 = vmatprep.mubr.bf16.mxu0 0
      %4170 = vmatmul.mubr.bf16.gmra.mrb[0].mxu0 %v4108
      %v4171 = vpop.f32.mrb[0].mxu0
      %v4172 = vadd.f32 0.0, %v4171
      %v4173 = vpop.f32.mrb[0].mxu0
      %v4174 = vpop.f32.mrb[0].mxu0
      %v4175 = vadd.f32 0.0, %v4174
      %v4176 = vpop.f32.mrb[0].mxu0
      %4177 = vdwg.mxu0
      %v4178 = vadd.f32 %v4068, %v4148
      %v4179 = vadd.f32 %v4069, %v4151
      %v4180 = vadd.f32 %v4070, %v4156
      %v4181 = vadd.f32 %v4071, %v4159
      %v4182 = vadd.f32 %v4072, %v4164
      %v4183 = vadd.f32 %v4073, %v4167
      %v4184 = vadd.f32 %v4074, %v4172
      %v4185 = vadd.f32 %v4075, %v4175
      %s4186 = scalar_lea.vmem %s2, 56
      %v4187 = vld [vmem:[%s4186] sm:$0x3]
      %v4192 = vunpack.c.l.b16 %v1040
      %v4193 = vunpack.c.l.b16 %v1041
      %v4194 = vunpack.c.l.b16 %v1042
      %v4195 = vunpack.c.l.b16 %v1043
      %v4196 = vpack.c.b16 %v4193, %v4192
      %v4197 = vpack.c.b16 %v4195, %v4194
      %v4199 = vsel %vm769, %v4196, 0
      %v4202 = vsel %vm769, %v4197, 0
      %v4205 = vsel %vm782, %v4187, 0
      %4207 = vmatprep.subr.bf16.mxu0 0
      %4208 = vmatpush1.bf16.msra.mxu0 %v4205
      %4209 = vmatprep.subr.bf16.mxu0 0
      %4210 = vmatpush1.bf16.msra.mxu0 0
      %4211 = vmatprep.subr.bf16.mxu0 0
      %4212 = vmatpush1.bf16.msra.mxu0 0
      %4213 = vmatprep.subr.bf16.mxu0 0
      %4214 = vmatpush1.bf16.msra.mxu0 0
      %4215 = vmatprep.subr.bf16.mxu0 0
      %4216 = vmatpush1.bf16.msra.mxu0 0
      %4217 = vmatprep.subr.bf16.mxu0 0
      %4218 = vmatpush1.bf16.msra.mxu0 0
      %4219 = vmatprep.subr.bf16.mxu0 0
      %4220 = vmatpush1.bf16.msra.mxu0 0
      %4221 = vmatprep.subr.bf16.mxu0 0
      %4222 = vmatpush1.bf16.msra.mxu0 0
      %4223 = vmatprep.subr.bf16.mxu0 0
      %4224 = vmatpush1.bf16.msra.mxu0 0
      %4225 = vmatprep.subr.bf16.mxu0 0
      %4226 = vmatpush1.bf16.msra.mxu0 0
      %4227 = vmatprep.subr.bf16.mxu0 0
      %4228 = vmatpush1.bf16.msra.mxu0 0
      %4229 = vmatprep.subr.bf16.mxu0 0
      %4230 = vmatpush1.bf16.msra.mxu0 0
      %4231 = vmatprep.subr.bf16.mxu0 0
      %4232 = vmatpush1.bf16.msra.mxu0 0
      %4233 = vmatprep.subr.bf16.mxu0 0
      %4234 = vmatpush1.bf16.msra.mxu0 0
      %4235 = vmatprep.subr.bf16.mxu0 0
      %4236 = vmatpush1.bf16.msra.mxu0 0
      %4237 = vmatprep.subr.bf16.mxu0 0
      %4238 = vmatpush1.bf16.msra.mxu0 0
      %4239 = vmatprep.mubr.bf16.mxu0 0
      %4240 = vmatmul.mubr.bf16.gmra.mrb[0].mxu0 %v4199
      %v4241 = vpop.f32.mrb[0].mxu0
      %v4242 = vadd.f32 0.0, %v4241
      %v4243 = vpop.f32.mrb[0].mxu0
      %v4244 = vpop.f32.mrb[0].mxu0
      %v4245 = vadd.f32 0.0, %v4244
      %v4246 = vpop.f32.mrb[0].mxu0
      %4247 = vmatprep.mubr.bf16.mxu0 0
      %4248 = vmatmul.mubr.bf16.gmra.mrb[0].mxu0 %v4202
      %v4249 = vpop.f32.mrb[0].mxu0
      %v4250 = vadd.f32 0.0, %v4249
      %v4251 = vpop.f32.mrb[0].mxu0
      %v4252 = vpop.f32.mrb[0].mxu0
      %v4253 = vadd.f32 0.0, %v4252
      %v4254 = vpop.f32.mrb[0].mxu0
      %4255 = vmatprep.mubr.bf16.mxu0 0
      %4256 = vmatmul.mubr.bf16.gmra.mrb[0].mxu0 %v3180
      %v4257 = vpop.f32.mrb[0].mxu0
      %v4258 = vadd.f32 0.0, %v4257
      %v4259 = vpop.f32.mrb[0].mxu0
      %v4260 = vpop.f32.mrb[0].mxu0
      %v4261 = vadd.f32 0.0, %v4260
      %v4262 = vpop.f32.mrb[0].mxu0
      %4263 = vmatprep.mubr.bf16.mxu0 0
      %4264 = vmatmul.mubr.bf16.gmra.mrb[0].mxu0 %v2160
      %v4265 = vpop.f32.mrb[0].mxu0
      %v4266 = vadd.f32 0.0, %v4265
      %v4267 = vpop.f32.mrb[0].mxu0
      %v4268 = vpop.f32.mrb[0].mxu0
      %v4269 = vadd.f32 0.0, %v4268
      %v4270 = vpop.f32.mrb[0].mxu0
      %4271 = vdwg.mxu0
      %v4272 = vadd.f32 %v4178, %v4242
      %v4273 = vadd.f32 %v4179, %v4245
      %v4274 = vadd.f32 %v4180, %v4250
      %v4275 = vadd.f32 %v4181, %v4253
      %v4276 = vadd.f32 %v4182, %v4258
      %v4277 = vadd.f32 %v4183, %v4261
      %v4278 = vadd.f32 %v4184, %v4266
      %v4279 = vadd.f32 %v4185, %v4269
      %s4280 = scalar_lea.vmem %s2, 62
      %v4281 = vld [vmem:[%s4280] sm:$0x3]
      %v4283 = vsel %vm782, %v4281, 0
      %4285 = vmatprep.subr.bf16.mxu0 0
      %4286 = vmatpush1.bf16.msra.mxu0 %v4283
      %4287 = vmatprep.subr.bf16.mxu0 0
      %4288 = vmatpush1.bf16.msra.mxu0 0
      %4289 = vmatprep.subr.bf16.mxu0 0
      %4290 = vmatpush1.bf16.msra.mxu0 0
      %4291 = vmatprep.subr.bf16.mxu0 0
      %4292 = vmatpush1.bf16.msra.mxu0 0
      %4293 = vmatprep.subr.bf16.mxu0 0
      %4294 = vmatpush1.bf16.msra.mxu0 0
      %4295 = vmatprep.subr.bf16.mxu0 0
      %4296 = vmatpush1.bf16.msra.mxu0 0
      %4297 = vmatprep.subr.bf16.mxu0 0
      %4298 = vmatpush1.bf16.msra.mxu0 0
      %4299 = vmatprep.subr.bf16.mxu0 0
      %4300 = vmatpush1.bf16.msra.mxu0 0
      %4301 = vmatprep.subr.bf16.mxu0 0
      %4302 = vmatpush1.bf16.msra.mxu0 0
      %4303 = vmatprep.subr.bf16.mxu0 0
      %4304 = vmatpush1.bf16.msra.mxu0 0
      %4305 = vmatprep.subr.bf16.mxu0 0
      %4306 = vmatpush1.bf16.msra.mxu0 0
      %4307 = vmatprep.subr.bf16.mxu0 0
      %4308 = vmatpush1.bf16.msra.mxu0 0
      %4309 = vmatprep.subr.bf16.mxu0 0
      %4310 = vmatpush1.bf16.msra.mxu0 0
      %4311 = vmatprep.subr.bf16.mxu0 0
      %4312 = vmatpush1.bf16.msra.mxu0 0
      %4313 = vmatprep.subr.bf16.mxu0 0
      %4314 = vmatpush1.bf16.msra.mxu0 0
      %4315 = vmatprep.subr.bf16.mxu0 0
      %4316 = vmatpush1.bf16.msra.mxu0 0
      %4317 = vmatprep.mubr.bf16.mxu0 0
      %4318 = vmatmul.mubr.bf16.gmra.mrb[0].mxu0 %v1181
      %v4319 = vpop.f32.mrb[0].mxu0
      %v4320 = vadd.f32 0.0, %v4319
      %v4321 = vpop.f32.mrb[0].mxu0
      %v4322 = vpop.f32.mrb[0].mxu0
      %v4323 = vadd.f32 0.0, %v4322
      %v4324 = vpop.f32.mrb[0].mxu0
      %4325 = vmatprep.mubr.bf16.mxu0 0
      %4326 = vmatmul.mubr.bf16.gmra.mrb[0].mxu0 %v1184
      %v4327 = vpop.f32.mrb[0].mxu0
      %v4328 = vadd.f32 0.0, %v4327
      %v4329 = vpop.f32.mrb[0].mxu0
      %v4330 = vpop.f32.mrb[0].mxu0
      %v4331 = vadd.f32 0.0, %v4330
      %v4332 = vpop.f32.mrb[0].mxu0
      %4333 = vmatprep.mubr.bf16.mxu0 0
      %4334 = vmatmul.mubr.bf16.gmra.mrb[0].mxu0 %v1187
      %v4335 = vpop.f32.mrb[0].mxu0
      %v4336 = vadd.f32 0.0, %v4335
      %v4337 = vpop.f32.mrb[0].mxu0
      %v4338 = vpop.f32.mrb[0].mxu0
      %v4339 = vadd.f32 0.0, %v4338
      %v4340 = vpop.f32.mrb[0].mxu0
      %4341 = vmatprep.mubr.bf16.mxu0 0
      %4342 = vmatmul.mubr.bf16.gmra.mrb[0].mxu0 %v1190
      %v4343 = vpop.f32.mrb[0].mxu0
      %v4344 = vadd.f32 0.0, %v4343
      %v4345 = vpop.f32.mrb[0].mxu0
      %v4346 = vpop.f32.mrb[0].mxu0
      %v4347 = vadd.f32 0.0, %v4346
      %v4348 = vpop.f32.mrb[0].mxu0
      %4349 = vdwg.mxu0
      %v4350 = vadd.f32 %v4272, %v4320
      %v4351 = vadd.f32 %v4273, %v4323
      %v4352 = vadd.f32 %v4274, %v4328
      %v4353 = vadd.f32 %v4275, %v4331
      %v4354 = vadd.f32 %v4276, %v4336
      %v4355 = vadd.f32 %v4277, %v4339
      %v4356 = vadd.f32 %v4278, %v4344
      %v4357 = vadd.f32 %v4279, %v4347
      %s4358 = scalar_lea.vmem %s2, 68
      %v4359 = vld [vmem:[%s4358] sm:$0x3]
      %v4364 = vunpack.c.l.b16 %v1050
      %v4365 = vunpack.c.l.b16 %v1051
      %v4366 = vunpack.c.l.b16 %v1052
      %v4367 = vunpack.c.l.b16 %v1053
      %v4368 = vpack.c.b16 %v4365, %v4364
      %v4369 = vpack.c.b16 %v4367, %v4366
      %v4371 = vsel %vm769, %v4368, 0
      %v4374 = vsel %vm769, %v4369, 0
      %v4377 = vsel %vm782, %v4359, 0
      %4379 = vmatprep.subr.bf16.mxu0 0
      %4380 = vmatpush1.bf16.msra.mxu0 %v4377
      %4381 = vmatprep.subr.bf16.mxu0 0
      %4382 = vmatpush1.bf16.msra.mxu0 0
      %4383 = vmatprep.subr.bf16.mxu0 0
      %4384 = vmatpush1.bf16.msra.mxu0 0
      %4385 = vmatprep.subr.bf16.mxu0 0
      %4386 = vmatpush1.bf16.msra.mxu0 0
      %4387 = vmatprep.subr.bf16.mxu0 0
      %4388 = vmatpush1.bf16.msra.mxu0 0
      %4389 = vmatprep.subr.bf16.mxu0 0
      %4390 = vmatpush1.bf16.msra.mxu0 0
      %4391 = vmatprep.subr.bf16.mxu0 0
      %4392 = vmatpush1.bf16.msra.mxu0 0
      %4393 = vmatprep.subr.bf16.mxu0 0
      %4394 = vmatpush1.bf16.msra.mxu0 0
      %4395 = vmatprep.subr.bf16.mxu0 0
      %4396 = vmatpush1.bf16.msra.mxu0 0
      %4397 = vmatprep.subr.bf16.mxu0 0
      %4398 = vmatpush1.bf16.msra.mxu0 0
      %4399 = vmatprep.subr.bf16.mxu0 0
      %4400 = vmatpush1.bf16.msra.mxu0 0
      %4401 = vmatprep.subr.bf16.mxu0 0
      %4402 = vmatpush1.bf16.msra.mxu0 0
      %4403 = vmatprep.subr.bf16.mxu0 0
      %4404 = vmatpush1.bf16.msra.mxu0 0
      %4405 = vmatprep.subr.bf16.mxu0 0
      %4406 = vmatpush1.bf16.msra.mxu0 0
      %4407 = vmatprep.subr.bf16.mxu0 0
      %4408 = vmatpush1.bf16.msra.mxu0 0
      %4409 = vmatprep.subr.bf16.mxu0 0
      %4410 = vmatpush1.bf16.msra.mxu0 0
      %4411 = vmatprep.mubr.bf16.mxu0 0
      %4412 = vmatmul.mubr.bf16.gmra.mrb[0].mxu0 %v2322
      %v4413 = vpop.f32.mrb[0].mxu0
      %v4414 = vadd.f32 0.0, %v4413
      %v4415 = vpop.f32.mrb[0].mxu0
      %v4416 = vpop.f32.mrb[0].mxu0
      %v4417 = vadd.f32 0.0, %v4416
      %v4418 = vpop.f32.mrb[0].mxu0
      %4419 = vmatprep.mubr.bf16.mxu0 0
      %4420 = vmatmul.mubr.bf16.gmra.mrb[0].mxu0 %v3344
      %v4421 = vpop.f32.mrb[0].mxu0
      %v4422 = vadd.f32 0.0, %v4421
      %v4423 = vpop.f32.mrb[0].mxu0
      %v4424 = vpop.f32.mrb[0].mxu0
      %v4425 = vadd.f32 0.0, %v4424
      %v4426 = vpop.f32.mrb[0].mxu0
      %4427 = vmatprep.mubr.bf16.mxu0 0
      %4428 = vmatmul.mubr.bf16.gmra.mrb[0].mxu0 %v4371
      %v4429 = vpop.f32.mrb[0].mxu0
      %v4430 = vadd.f32 0.0, %v4429
      %v4431 = vpop.f32.mrb[0].mxu0
      %v4432 = vpop.f32.mrb[0].mxu0
      %v4433 = vadd.f32 0.0, %v4432
      %v4434 = vpop.f32.mrb[0].mxu0
      %4435 = vmatprep.mubr.bf16.mxu0 0
      %4436 = vmatmul.mubr.bf16.gmra.mrb[0].mxu0 %v4374
      %v4437 = vpop.f32.mrb[0].mxu0
      %v4438 = vadd.f32 0.0, %v4437
      %v4439 = vpop.f32.mrb[0].mxu0
      %v4440 = vpop.f32.mrb[0].mxu0
      %v4441 = vadd.f32 0.0, %v4440
      %v4442 = vpop.f32.mrb[0].mxu0
      %4443 = vdwg.mxu0
      %v4444 = vadd.f32 %v4350, %v4414
      %v4445 = vadd.f32 %v4351, %v4417
      %v4446 = vadd.f32 %v4352, %v4422
      %v4447 = vadd.f32 %v4353, %v4425
      %v4448 = vadd.f32 %v4354, %v4430
      %v4449 = vadd.f32 %v4355, %v4433
      %v4450 = vadd.f32 %v4356, %v4438
      %v4451 = vadd.f32 %v4357, %v4441
      %v4452 = vld [vmem:[#allocation2 + $0xac] sm:$0xf]
      %v4453 = vld [vmem:[#allocation2 + $0xc0] sm:$0xf]
      %v4454 = vld [vmem:[#allocation2 + $0xd4] sm:$0xf]
      %v4455 = vld [vmem:[#allocation2 + $0xe8] sm:$0xf]
      %v4456 = vld [vmem:[#allocation2 + $0xfc] sm:$0xf]
      %v4457 = vld [vmem:[#allocation2 + $0x110] sm:$0xf]
      %v4458 = vld [vmem:[#allocation2 + $0x124] sm:$0xf]
      %v4459 = vld [vmem:[#allocation2 + $0x138] sm:$0xf]
      %v4460 = vld [vmem:[#allocation2 + $0x14c] sm:$0xf]
      %v4461 = vld [vmem:[#allocation2 + $0x160] sm:$0xf]
      %v4462 = vld [vmem:[#allocation2 + $0x174] sm:$0xf]
      %v4463 = vld [vmem:[#allocation2 + $0x188] sm:$0xf]
      %v4464 = vld [vmem:[#allocation2 + $0x19c] sm:$0xf]
      %v4465 = vld [vmem:[#allocation2 + $0x1b0] sm:$0xf]
      %v4466 = vld [vmem:[#allocation2 + $0x1c4] sm:$0xf]
      %v4467 = vld [vmem:[#allocation2 + $0x1d8] sm:$0xf]
      %v4468 = vld [vmem:[#allocation2 + $0x1ec] sm:$0xf]
      %v4469 = vld [vmem:[#allocation2 + $0x200] sm:$0xf]
      %v4470 = vld [vmem:[#allocation2 + $0x214] sm:$0xf]
      %v4471 = vld [vmem:[#allocation2 + $0x228] sm:$0xf]
      %v4472 = vld [vmem:[#allocation2 + $0x23c] sm:$0xf]
      %v4473 = vld [vmem:[#allocation2 + $0x250] sm:$0xf]
      %v4474 = vld [vmem:[#allocation2 + $0x264] sm:$0xf]
      %v4475 = vld [vmem:[#allocation2 + $0x278] sm:$0xf]
      %s4476 = scalar_lea.vmem %s2, 58
      %v4477 = vld [vmem:[%s4476] sm:$0x3]
      %v4486 = vunpack.c.l.b16 %v4452
      %v4487 = vunpack.c.l.b16 %v4453
      %v4488 = vunpack.c.l.b16 %v4454
      %v4489 = vunpack.c.l.b16 %v4455
      %v4490 = vunpack.c.l.b16 %v4456
      %v4491 = vunpack.c.l.b16 %v4457
      %v4492 = vunpack.c.l.b16 %v4458
      %v4493 = vunpack.c.l.b16 %v4459
      %v4494 = vpack.c.b16 %v4487, %v4486
      %v4495 = vpack.c.b16 %v4489, %v4488
      %v4496 = vpack.c.b16 %v4491, %v4490
      %v4497 = vpack.c.b16 %v4493, %v4492
      %v4499 = vsel %vm769, %v4494, 0
      %v4502 = vsel %vm769, %v4495, 0
      %v4505 = vsel %vm769, %v4496, 0
      %v4508 = vsel %vm769, %v4497, 0
      %v4511 = vsel %vm782, %v4477, 0
      %4513 = vmatprep.subr.bf16.mxu0 0
      %4514 = vmatpush1.bf16.msra.mxu0 %v4511
      %4515 = vmatprep.subr.bf16.mxu0 0
      %4516 = vmatpush1.bf16.msra.mxu0 0
      %4517 = vmatprep.subr.bf16.mxu0 0
      %4518 = vmatpush1.bf16.msra.mxu0 0
      %4519 = vmatprep.subr.bf16.mxu0 0
      %4520 = vmatpush1.bf16.msra.mxu0 0
      %4521 = vmatprep.subr.bf16.mxu0 0
      %4522 = vmatpush1.bf16.msra.mxu0 0
      %4523 = vmatprep.subr.bf16.mxu0 0
      %4524 = vmatpush1.bf16.msra.mxu0 0
      %4525 = vmatprep.subr.bf16.mxu0 0
      %4526 = vmatpush1.bf16.msra.mxu0 0
      %4527 = vmatprep.subr.bf16.mxu0 0
      %4528 = vmatpush1.bf16.msra.mxu0 0
      %4529 = vmatprep.subr.bf16.mxu0 0
      %4530 = vmatpush1.bf16.msra.mxu0 0
      %4531 = vmatprep.subr.bf16.mxu0 0
      %4532 = vmatpush1.bf16.msra.mxu0 0
      %4533 = vmatprep.subr.bf16.mxu0 0
      %4534 = vmatpush1.bf16.msra.mxu0 0
      %4535 = vmatprep.subr.bf16.mxu0 0
      %4536 = vmatpush1.bf16.msra.mxu0 0
      %4537 = vmatprep.subr.bf16.mxu0 0
      %4538 = vmatpush1.bf16.msra.mxu0 0
      %4539 = vmatprep.subr.bf16.mxu0 0
      %4540 = vmatpush1.bf16.msra.mxu0 0
      %4541 = vmatprep.subr.bf16.mxu0 0
      %4542 = vmatpush1.bf16.msra.mxu0 0
      %4543 = vmatprep.subr.bf16.mxu0 0
      %4544 = vmatpush1.bf16.msra.mxu0 0
      %4545 = vmatprep.mubr.bf16.mxu0 0
      %4546 = vmatmul.mubr.bf16.gmra.mrb[0].mxu0 %v4499
      %v4547 = vpop.f32.mrb[0].mxu0
      %v4548 = vadd.f32 0.0, %v4547
      %v4549 = vpop.f32.mrb[0].mxu0
      %v4550 = vpop.f32.mrb[0].mxu0
      %v4551 = vadd.f32 0.0, %v4550
      %v4552 = vpop.f32.mrb[0].mxu0
      %4553 = vmatprep.mubr.bf16.mxu0 0
      %4554 = vmatmul.mubr.bf16.gmra.mrb[0].mxu0 %v4502
      %v4555 = vpop.f32.mrb[0].mxu0
      %v4556 = vadd.f32 0.0, %v4555
      %v4557 = vpop.f32.mrb[0].mxu0
      %v4558 = vpop.f32.mrb[0].mxu0
      %v4559 = vadd.f32 0.0, %v4558
      %v4560 = vpop.f32.mrb[0].mxu0
      %4561 = vmatprep.mubr.bf16.mxu0 0
      %4562 = vmatmul.mubr.bf16.gmra.mrb[0].mxu0 %v4505
      %v4563 = vpop.f32.mrb[0].mxu0
      %v4564 = vadd.f32 0.0, %v4563
      %v4565 = vpop.f32.mrb[0].mxu0
      %v4566 = vpop.f32.mrb[0].mxu0
      %v4567 = vadd.f32 0.0, %v4566
      %v4568 = vpop.f32.mrb[0].mxu0
      %4569 = vmatprep.mubr.bf16.mxu0 0
      %4570 = vmatmul.mubr.bf16.gmra.mrb[0].mxu0 %v4508
      %v4571 = vpop.f32.mrb[0].mxu0
      %v4572 = vadd.f32 0.0, %v4571
      %v4573 = vpop.f32.mrb[0].mxu0
      %v4574 = vpop.f32.mrb[0].mxu0
      %v4575 = vadd.f32 0.0, %v4574
      %v4576 = vpop.f32.mrb[0].mxu0
      %4577 = vdwg.mxu0
      %v4578 = vadd.f32 %v4444, %v4548
      %v4579 = vadd.f32 %v4445, %v4551
      %v4580 = vadd.f32 %v4446, %v4556
      %v4581 = vadd.f32 %v4447, %v4559
      %v4582 = vadd.f32 %v4448, %v4564
      %v4583 = vadd.f32 %v4449, %v4567
      %v4584 = vadd.f32 %v4450, %v4572
      %v4585 = vadd.f32 %v4451, %v4575
      %s4586 = scalar_lea.vmem %s2, 64
      %v4587 = vld [vmem:[%s4586] sm:$0x3]
      %v4596 = vunpack.c.l.b16 %v4460
      %v4597 = vunpack.c.l.b16 %v4461
      %v4598 = vunpack.c.l.b16 %v4462
      %v4599 = vunpack.c.l.b16 %v4463
      %v4600 = vunpack.c.l.b16 %v4464
      %v4601 = vunpack.c.l.b16 %v4465
      %v4602 = vunpack.c.l.b16 %v4466
      %v4603 = vunpack.c.l.b16 %v4467
      %v4604 = vpack.c.b16 %v4597, %v4596
      %v4605 = vpack.c.b16 %v4599, %v4598
      %v4606 = vpack.c.b16 %v4601, %v4600
      %v4607 = vpack.c.b16 %v4603, %v4602
      %v4609 = vsel %vm769, %v4604, 0
      %v4612 = vsel %vm769, %v4605, 0
      %v4615 = vsel %vm769, %v4606, 0
      %v4618 = vsel %vm769, %v4607, 0
      %v4621 = vsel %vm782, %v4587, 0
      %4623 = vmatprep.subr.bf16.mxu0 0
      %4624 = vmatpush1.bf16.msra.mxu0 %v4621
      %4625 = vmatprep.subr.bf16.mxu0 0
      %4626 = vmatpush1.bf16.msra.mxu0 0
      %4627 = vmatprep.subr.bf16.mxu0 0
      %4628 = vmatpush1.bf16.msra.mxu0 0
      %4629 = vmatprep.subr.bf16.mxu0 0
      %4630 = vmatpush1.bf16.msra.mxu0 0
      %4631 = vmatprep.subr.bf16.mxu0 0
      %4632 = vmatpush1.bf16.msra.mxu0 0
      %4633 = vmatprep.subr.bf16.mxu0 0
      %4634 = vmatpush1.bf16.msra.mxu0 0
      %4635 = vmatprep.subr.bf16.mxu0 0
      %4636 = vmatpush1.bf16.msra.mxu0 0
      %4637 = vmatprep.subr.bf16.mxu0 0
      %4638 = vmatpush1.bf16.msra.mxu0 0
      %4639 = vmatprep.subr.bf16.mxu0 0
      %4640 = vmatpush1.bf16.msra.mxu0 0
      %4641 = vmatprep.subr.bf16.mxu0 0
      %4642 = vmatpush1.bf16.msra.mxu0 0
      %4643 = vmatprep.subr.bf16.mxu0 0
      %4644 = vmatpush1.bf16.msra.mxu0 0
      %4645 = vmatprep.subr.bf16.mxu0 0
      %4646 = vmatpush1.bf16.msra.mxu0 0
      %4647 = vmatprep.subr.bf16.mxu0 0
      %4648 = vmatpush1.bf16.msra.mxu0 0
      %4649 = vmatprep.subr.bf16.mxu0 0
      %4650 = vmatpush1.bf16.msra.mxu0 0
      %4651 = vmatprep.subr.bf16.mxu0 0
      %4652 = vmatpush1.bf16.msra.mxu0 0
      %4653 = vmatprep.subr.bf16.mxu0 0
      %4654 = vmatpush1.bf16.msra.mxu0 0
      %4655 = vmatprep.mubr.bf16.mxu0 0
      %4656 = vmatmul.mubr.bf16.gmra.mrb[0].mxu0 %v4609
      %v4657 = vpop.f32.mrb[0].mxu0
      %v4658 = vadd.f32 0.0, %v4657
      %v4659 = vpop.f32.mrb[0].mxu0
      %v4660 = vpop.f32.mrb[0].mxu0
      %v4661 = vadd.f32 0.0, %v4660
      %v4662 = vpop.f32.mrb[0].mxu0
      %4663 = vmatprep.mubr.bf16.mxu0 0
      %4664 = vmatmul.mubr.bf16.gmra.mrb[0].mxu0 %v4612
      %v4665 = vpop.f32.mrb[0].mxu0
      %v4666 = vadd.f32 0.0, %v4665
      %v4667 = vpop.f32.mrb[0].mxu0
      %v4668 = vpop.f32.mrb[0].mxu0
      %v4669 = vadd.f32 0.0, %v4668
      %v4670 = vpop.f32.mrb[0].mxu0
      %4671 = vmatprep.mubr.bf16.mxu0 0
      %4672 = vmatmul.mubr.bf16.gmra.mrb[0].mxu0 %v4615
      %v4673 = vpop.f32.mrb[0].mxu0
      %v4674 = vadd.f32 0.0, %v4673
      %v4675 = vpop.f32.mrb[0].mxu0
      %v4676 = vpop.f32.mrb[0].mxu0
      %v4677 = vadd.f32 0.0, %v4676
      %v4678 = vpop.f32.mrb[0].mxu0
      %4679 = vmatprep.mubr.bf16.mxu0 0
      %4680 = vmatmul.mubr.bf16.gmra.mrb[0].mxu0 %v4618
      %v4681 = vpop.f32.mrb[0].mxu0
      %v4682 = vadd.f32 0.0, %v4681
      %v4683 = vpop.f32.mrb[0].mxu0
      %v4684 = vpop.f32.mrb[0].mxu0
      %v4685 = vadd.f32 0.0, %v4684
      %v4686 = vpop.f32.mrb[0].mxu0
      %4687 = vdwg.mxu0
      %v4688 = vadd.f32 %v4578, %v4658
      %v4689 = vadd.f32 %v4579, %v4661
      %v4690 = vadd.f32 %v4580, %v4666
      %v4691 = vadd.f32 %v4581, %v4669
      %v4692 = vadd.f32 %v4582, %v4674
      %v4693 = vadd.f32 %v4583, %v4677
      %v4694 = vadd.f32 %v4584, %v4682
      %v4695 = vadd.f32 %v4585, %v4685
      %s4696 = scalar_lea.vmem %s2, 70
      %v4697 = vld [vmem:[%s4696] sm:$0x3]
      %v4706 = vunpack.c.l.b16 %v4468
      %v4707 = vunpack.c.l.b16 %v4469
      %v4708 = vunpack.c.l.b16 %v4470
      %v4709 = vunpack.c.l.b16 %v4471
      %v4710 = vunpack.c.l.b16 %v4472
      %v4711 = vunpack.c.l.b16 %v4473
      %v4712 = vunpack.c.l.b16 %v4474
      %v4713 = vunpack.c.l.b16 %v4475
      %v4714 = vpack.c.b16 %v4707, %v4706
      %v4715 = vpack.c.b16 %v4709, %v4708
      %v4716 = vpack.c.b16 %v4711, %v4710
      %v4717 = vpack.c.b16 %v4713, %v4712
      %v4719 = vsel %vm769, %v4714, 0
      %v4722 = vsel %vm769, %v4715, 0
      %v4725 = vsel %vm769, %v4716, 0
      %v4728 = vsel %vm769, %v4717, 0
      %v4731 = vsel %vm782, %v4697, 0
      %4733 = vmatprep.subr.bf16.mxu0 0
      %4734 = vmatpush1.bf16.msra.mxu0 %v4731
      %4735 = vmatprep.subr.bf16.mxu0 0
      %4736 = vmatpush1.bf16.msra.mxu0 0
      %4737 = vmatprep.subr.bf16.mxu0 0
      %4738 = vmatpush1.bf16.msra.mxu0 0
      %4739 = vmatprep.subr.bf16.mxu0 0
      %4740 = vmatpush1.bf16.msra.mxu0 0
      %4741 = vmatprep.subr.bf16.mxu0 0
      %4742 = vmatpush1.bf16.msra.mxu0 0
      %4743 = vmatprep.subr.bf16.mxu0 0
      %4744 = vmatpush1.bf16.msra.mxu0 0
      %4745 = vmatprep.subr.bf16.mxu0 0
      %4746 = vmatpush1.bf16.msra.mxu0 0
      %4747 = vmatprep.subr.bf16.mxu0 0
      %4748 = vmatpush1.bf16.msra.mxu0 0
      %4749 = vmatprep.subr.bf16.mxu0 0
      %4750 = vmatpush1.bf16.msra.mxu0 0
      %4751 = vmatprep.subr.bf16.mxu0 0
      %4752 = vmatpush1.bf16.msra.mxu0 0
      %4753 = vmatprep.subr.bf16.mxu0 0
      %4754 = vmatpush1.bf16.msra.mxu0 0
      %4755 = vmatprep.subr.bf16.mxu0 0
      %4756 = vmatpush1.bf16.msra.mxu0 0
      %4757 = vmatprep.subr.bf16.mxu0 0
      %4758 = vmatpush1.bf16.msra.mxu0 0
      %4759 = vmatprep.subr.bf16.mxu0 0
      %4760 = vmatpush1.bf16.msra.mxu0 0
      %4761 = vmatprep.subr.bf16.mxu0 0
      %4762 = vmatpush1.bf16.msra.mxu0 0
      %4763 = vmatprep.subr.bf16.mxu0 0
      %4764 = vmatpush1.bf16.msra.mxu0 0
      %4765 = vmatprep.mubr.bf16.mxu0 0
      %4766 = vmatmul.mubr.bf16.gmra.mrb[0].mxu0 %v4719
      %v4767 = vpop.f32.mrb[0].mxu0
      %v4768 = vadd.f32 0.0, %v4767
      %v4769 = vpop.f32.mrb[0].mxu0
      %v4770 = vpop.f32.mrb[0].mxu0
      %v4771 = vadd.f32 0.0, %v4770
      %v4772 = vpop.f32.mrb[0].mxu0
      %4773 = vmatprep.mubr.bf16.mxu0 0
      %4774 = vmatmul.mubr.bf16.gmra.mrb[0].mxu0 %v4722
      %v4775 = vpop.f32.mrb[0].mxu0
      %v4776 = vadd.f32 0.0, %v4775
      %v4777 = vpop.f32.mrb[0].mxu0
      %v4778 = vpop.f32.mrb[0].mxu0
      %v4779 = vadd.f32 0.0, %v4778
      %v4780 = vpop.f32.mrb[0].mxu0
      %4781 = vmatprep.mubr.bf16.mxu0 0
      %4782 = vmatmul.mubr.bf16.gmra.mrb[0].mxu0 %v4725
      %v4783 = vpop.f32.mrb[0].mxu0
      %v4784 = vadd.f32 0.0, %v4783
      %v4785 = vpop.f32.mrb[0].mxu0
      %v4786 = vpop.f32.mrb[0].mxu0
      %v4787 = vadd.f32 0.0, %v4786
      %v4788 = vpop.f32.mrb[0].mxu0
      %4789 = vmatprep.mubr.bf16.mxu0 0
      %4790 = vmatmul.mubr.bf16.gmra.mrb[0].mxu0 %v4728
      %v4791 = vpop.f32.mrb[0].mxu0
      %v4792 = vadd.f32 0.0, %v4791
      %v4793 = vpop.f32.mrb[0].mxu0
      %v4794 = vpop.f32.mrb[0].mxu0
      %v4795 = vadd.f32 0.0, %v4794
      %v4796 = vpop.f32.mrb[0].mxu0
      %4797 = vdwg.mxu0
      %v4798 = vadd.f32 %v4688, %v4768
      %v4799 = vadd.f32 %v4689, %v4771
      %v4800 = vadd.f32 %v4690, %v4776
      %v4801 = vadd.f32 %v4691, %v4779
      %v4802 = vadd.f32 %v4692, %v4784
      %v4803 = vadd.f32 %v4693, %v4787
      %v4804 = vadd.f32 %v4694, %v4792
      %v4805 = vadd.f32 %v4695, %v4795
      %v4806 = vld [vmem:[#allocation2] sm:$0xf]
      %v4807 = vld [vmem:[#allocation2 + $0x14] sm:$0xf]
      %v4808 = vld [vmem:[#allocation2 + $0x28] sm:$0xf]
      %v4809 = vld [vmem:[#allocation2 + $0x3c] sm:$0xf]
      %v4810 = vld [vmem:[#allocation2 + $0x50] sm:$0xf]
      %v4811 = vld [vmem:[#allocation2 + $0x64] sm:$0xf]
      %v4812 = vld [vmem:[#allocation2 + $0x78] sm:$0xf]
      %v4813 = vld [vmem:[#allocation2 + $0x8c] sm:$0xf]
      %v4814 = vld [vmem:[#allocation2 + $0x140] sm:$0xf]
      %v4815 = vld [vmem:[#allocation2 + $0x154] sm:$0xf]
      %v4816 = vld [vmem:[#allocation2 + $0x168] sm:$0xf]
      %v4817 = vld [vmem:[#allocation2 + $0x17c] sm:$0xf]
      %v4818 = vld [vmem:[#allocation2 + $0x190] sm:$0xf]
      %v4819 = vld [vmem:[#allocation2 + $0x1a4] sm:$0xf]
      %v4820 = vld [vmem:[#allocation2 + $0x1b8] sm:$0xf]
      %v4821 = vld [vmem:[#allocation2 + $0x1cc] sm:$0xf]
      %v4822 = vld [vmem:[#allocation2 + $0x280] sm:$0xf]
      %v4823 = vld [vmem:[#allocation2 + $0x294] sm:$0xf]
      %v4824 = vld [vmem:[#allocation2 + $0x2a8] sm:$0xf]
      %v4825 = vld [vmem:[#allocation2 + $0x2bc] sm:$0xf]
      %v4826 = vld [vmem:[#allocation2 + $0x2d0] sm:$0xf]
      %v4827 = vld [vmem:[#allocation2 + $0x2e4] sm:$0xf]
      %v4828 = vld [vmem:[#allocation2 + $0x2f8] sm:$0xf]
      %v4829 = vld [vmem:[#allocation2 + $0x30c] sm:$0xf]
      %s4830 = scalar_lea.vmem %s2, 72
      %v4831 = vld [vmem:[%s4830] sm:$0x3]
      %v4840 = vunpack.c.l.b16 %v4806
      %v4841 = vunpack.c.l.b16 %v4807
      %v4842 = vunpack.c.l.b16 %v4808
      %v4843 = vunpack.c.l.b16 %v4809
      %v4844 = vunpack.c.l.b16 %v4810
      %v4845 = vunpack.c.l.b16 %v4811
      %v4846 = vunpack.c.l.b16 %v4812
      %v4847 = vunpack.c.l.b16 %v4813
      %v4848 = vpack.c.b16 %v4841, %v4840
      %v4849 = vpack.c.b16 %v4843, %v4842
      %v4850 = vpack.c.b16 %v4845, %v4844
      %v4851 = vpack.c.b16 %v4847, %v4846
      %v4853 = vsel %vm769, %v4848, 0
      %v4856 = vsel %vm769, %v4849, 0
      %v4859 = vsel %vm769, %v4850, 0
      %v4862 = vsel %vm769, %v4851, 0
      %v4865 = vsel %vm782, %v4831, 0
      %4867 = vmatprep.subr.bf16.mxu0 0
      %4868 = vmatpush1.bf16.msra.mxu0 %v4865
      %4869 = vmatprep.subr.bf16.mxu0 0
      %4870 = vmatpush1.bf16.msra.mxu0 0
      %4871 = vmatprep.subr.bf16.mxu0 0
      %4872 = vmatpush1.bf16.msra.mxu0 0
      %4873 = vmatprep.subr.bf16.mxu0 0
      %4874 = vmatpush1.bf16.msra.mxu0 0
      %4875 = vmatprep.subr.bf16.mxu0 0
      %4876 = vmatpush1.bf16.msra.mxu0 0
      %4877 = vmatprep.subr.bf16.mxu0 0
      %4878 = vmatpush1.bf16.msra.mxu0 0
      %4879 = vmatprep.subr.bf16.mxu0 0
      %4880 = vmatpush1.bf16.msra.mxu0 0
      %4881 = vmatprep.subr.bf16.mxu0 0
      %4882 = vmatpush1.bf16.msra.mxu0 0
      %4883 = vmatprep.subr.bf16.mxu0 0
      %4884 = vmatpush1.bf16.msra.mxu0 0
      %4885 = vmatprep.subr.bf16.mxu0 0
      %4886 = vmatpush1.bf16.msra.mxu0 0
      %4887 = vmatprep.subr.bf16.mxu0 0
      %4888 = vmatpush1.bf16.msra.mxu0 0
      %4889 = vmatprep.subr.bf16.mxu0 0
      %4890 = vmatpush1.bf16.msra.mxu0 0
      %4891 = vmatprep.subr.bf16.mxu0 0
      %4892 = vmatpush1.bf16.msra.mxu0 0
      %4893 = vmatprep.subr.bf16.mxu0 0
      %4894 = vmatpush1.bf16.msra.mxu0 0
      %4895 = vmatprep.subr.bf16.mxu0 0
      %4896 = vmatpush1.bf16.msra.mxu0 0
      %4897 = vmatprep.subr.bf16.mxu0 0
      %4898 = vmatpush1.bf16.msra.mxu0 0
      %4899 = vmatprep.mubr.bf16.mxu0 0
      %4900 = vmatmul.mubr.bf16.gmra.mrb[0].mxu0 %v4853
      %v4901 = vpop.f32.mrb[0].mxu0
      %v4902 = vadd.f32 0.0, %v4901
      %v4903 = vpop.f32.mrb[0].mxu0
      %v4904 = vpop.f32.mrb[0].mxu0
      %v4905 = vadd.f32 0.0, %v4904
      %v4906 = vpop.f32.mrb[0].mxu0
      %4907 = vmatprep.mubr.bf16.mxu0 0
      %4908 = vmatmul.mubr.bf16.gmra.mrb[0].mxu0 %v4856
      %v4909 = vpop.f32.mrb[0].mxu0
      %v4910 = vadd.f32 0.0, %v4909
      %v4911 = vpop.f32.mrb[0].mxu0
      %v4912 = vpop.f32.mrb[0].mxu0
      %v4913 = vadd.f32 0.0, %v4912
      %v4914 = vpop.f32.mrb[0].mxu0
      %4915 = vmatprep.mubr.bf16.mxu0 0
      %4916 = vmatmul.mubr.bf16.gmra.mrb[0].mxu0 %v4859
      %v4917 = vpop.f32.mrb[0].mxu0
      %v4918 = vadd.f32 0.0, %v4917
      %v4919 = vpop.f32.mrb[0].mxu0
      %v4920 = vpop.f32.mrb[0].mxu0
      %v4921 = vadd.f32 0.0, %v4920
      %v4922 = vpop.f32.mrb[0].mxu0
      %4923 = vmatprep.mubr.bf16.mxu0 0
      %4924 = vmatmul.mubr.bf16.gmra.mrb[0].mxu0 %v4862
      %v4925 = vpop.f32.mrb[0].mxu0
      %v4926 = vadd.f32 0.0, %v4925
      %v4927 = vpop.f32.mrb[0].mxu0
      %v4928 = vpop.f32.mrb[0].mxu0
      %v4929 = vadd.f32 0.0, %v4928
      %v4930 = vpop.f32.mrb[0].mxu0
      %4931 = vdwg.mxu0
      %v4932 = vadd.f32 %v4798, %v4902
      %v4933 = vadd.f32 %v4799, %v4905
      %v4934 = vadd.f32 %v4800, %v4910
      %v4935 = vadd.f32 %v4801, %v4913
      %v4936 = vadd.f32 %v4802, %v4918
      %v4937 = vadd.f32 %v4803, %v4921
      %v4938 = vadd.f32 %v4804, %v4926
      %v4939 = vadd.f32 %v4805, %v4929
      %s4940 = scalar_lea.vmem %s2, 78
      %v4941 = vld [vmem:[%s4940] sm:$0x3]
      %v4950 = vunpack.c.l.b16 %v4814
      %v4951 = vunpack.c.l.b16 %v4815
      %v4952 = vunpack.c.l.b16 %v4816
      %v4953 = vunpack.c.l.b16 %v4817
      %v4954 = vunpack.c.l.b16 %v4818
      %v4955 = vunpack.c.l.b16 %v4819
      %v4956 = vunpack.c.l.b16 %v4820
      %v4957 = vunpack.c.l.b16 %v4821
      %v4958 = vpack.c.b16 %v4951, %v4950
      %v4959 = vpack.c.b16 %v4953, %v4952
      %v4960 = vpack.c.b16 %v4955, %v4954
      %v4961 = vpack.c.b16 %v4957, %v4956
      %v4963 = vsel %vm769, %v4958, 0
      %v4966 = vsel %vm769, %v4959, 0
      %v4969 = vsel %vm769, %v4960, 0
      %v4972 = vsel %vm769, %v4961, 0
      %v4975 = vsel %vm782, %v4941, 0
      %4977 = vmatprep.subr.bf16.mxu0 0
      %4978 = vmatpush1.bf16.msra.mxu0 %v4975
      %4979 = vmatprep.subr.bf16.mxu0 0
      %4980 = vmatpush1.bf16.msra.mxu0 0
      %4981 = vmatprep.subr.bf16.mxu0 0
      %4982 = vmatpush1.bf16.msra.mxu0 0
      %4983 = vmatprep.subr.bf16.mxu0 0
      %4984 = vmatpush1.bf16.msra.mxu0 0
      %4985 = vmatprep.subr.bf16.mxu0 0
      %4986 = vmatpush1.bf16.msra.mxu0 0
      %4987 = vmatprep.subr.bf16.mxu0 0
      %4988 = vmatpush1.bf16.msra.mxu0 0
      %4989 = vmatprep.subr.bf16.mxu0 0
      %4990 = vmatpush1.bf16.msra.mxu0 0
      %4991 = vmatprep.subr.bf16.mxu0 0
      %4992 = vmatpush1.bf16.msra.mxu0 0
      %4993 = vmatprep.subr.bf16.mxu0 0
      %4994 = vmatpush1.bf16.msra.mxu0 0
      %4995 = vmatprep.subr.bf16.mxu0 0
      %4996 = vmatpush1.bf16.msra.mxu0 0
      %4997 = vmatprep.subr.bf16.mxu0 0
      %4998 = vmatpush1.bf16.msra.mxu0 0
      %4999 = vmatprep.subr.bf16.mxu0 0
      %5000 = vmatpush1.bf16.msra.mxu0 0
      %5001 = vmatprep.subr.bf16.mxu0 0
      %5002 = vmatpush1.bf16.msra.mxu0 0
      %5003 = vmatprep.subr.bf16.mxu0 0
      %5004 = vmatpush1.bf16.msra.mxu0 0
      %5005 = vmatprep.subr.bf16.mxu0 0
      %5006 = vmatpush1.bf16.msra.mxu0 0
      %5007 = vmatprep.subr.bf16.mxu0 0
      %5008 = vmatpush1.bf16.msra.mxu0 0
      %5009 = vmatprep.mubr.bf16.mxu0 0
      %5010 = vmatmul.mubr.bf16.gmra.mrb[0].mxu0 %v4963
      %v5011 = vpop.f32.mrb[0].mxu0
      %v5012 = vadd.f32 0.0, %v5011
      %v5013 = vpop.f32.mrb[0].mxu0
      %v5014 = vpop.f32.mrb[0].mxu0
      %v5015 = vadd.f32 0.0, %v5014
      %v5016 = vpop.f32.mrb[0].mxu0
      %5017 = vmatprep.mubr.bf16.mxu0 0
      %5018 = vmatmul.mubr.bf16.gmra.mrb[0].mxu0 %v4966
      %v5019 = vpop.f32.mrb[0].mxu0
      %v5020 = vadd.f32 0.0, %v5019
      %v5021 = vpop.f32.mrb[0].mxu0
      %v5022 = vpop.f32.mrb[0].mxu0
      %v5023 = vadd.f32 0.0, %v5022
      %v5024 = vpop.f32.mrb[0].mxu0
      %5025 = vmatprep.mubr.bf16.mxu0 0
      %5026 = vmatmul.mubr.bf16.gmra.mrb[0].mxu0 %v4969
      %v5027 = vpop.f32.mrb[0].mxu0
      %v5028 = vadd.f32 0.0, %v5027
      %v5029 = vpop.f32.mrb[0].mxu0
      %v5030 = vpop.f32.mrb[0].mxu0
      %v5031 = vadd.f32 0.0, %v5030
      %v5032 = vpop.f32.mrb[0].mxu0
      %5033 = vmatprep.mubr.bf16.mxu0 0
      %5034 = vmatmul.mubr.bf16.gmra.mrb[0].mxu0 %v4972
      %v5035 = vpop.f32.mrb[0].mxu0
      %v5036 = vadd.f32 0.0, %v5035
      %v5037 = vpop.f32.mrb[0].mxu0
      %v5038 = vpop.f32.mrb[0].mxu0
      %v5039 = vadd.f32 0.0, %v5038
      %v5040 = vpop.f32.mrb[0].mxu0
      %5041 = vdwg.mxu0
      %v5042 = vadd.f32 %v4932, %v5012
      %v5043 = vadd.f32 %v4933, %v5015
      %v5044 = vadd.f32 %v4934, %v5020
      %v5045 = vadd.f32 %v4935, %v5023
      %v5046 = vadd.f32 %v4936, %v5028
      %v5047 = vadd.f32 %v4937, %v5031
      %v5048 = vadd.f32 %v4938, %v5036
      %v5049 = vadd.f32 %v4939, %v5039
      %s5050 = scalar_lea.vmem %s2, 84
      %v5051 = vld [vmem:[%s5050] sm:$0x3]
      %v5060 = vunpack.c.l.b16 %v4822
      %v5061 = vunpack.c.l.b16 %v4823
      %v5062 = vunpack.c.l.b16 %v4824
      %v5063 = vunpack.c.l.b16 %v4825
      %v5064 = vunpack.c.l.b16 %v4826
      %v5065 = vunpack.c.l.b16 %v4827
      %v5066 = vunpack.c.l.b16 %v4828
      %v5067 = vunpack.c.l.b16 %v4829
      %v5068 = vpack.c.b16 %v5061, %v5060
      %v5069 = vpack.c.b16 %v5063, %v5062
      %v5070 = vpack.c.b16 %v5065, %v5064
      %v5071 = vpack.c.b16 %v5067, %v5066
      %v5073 = vsel %vm769, %v5068, 0
      %v5076 = vsel %vm769, %v5069, 0
      %v5079 = vsel %vm769, %v5070, 0
      %v5082 = vsel %vm769, %v5071, 0
      %v5085 = vsel %vm782, %v5051, 0
      %5087 = vmatprep.subr.bf16.mxu0 0
      %5088 = vmatpush1.bf16.msra.mxu0 %v5085
      %5089 = vmatprep.subr.bf16.mxu0 0
      %5090 = vmatpush1.bf16.msra.mxu0 0
      %5091 = vmatprep.subr.bf16.mxu0 0
      %5092 = vmatpush1.bf16.msra.mxu0 0
      %5093 = vmatprep.subr.bf16.mxu0 0
      %5094 = vmatpush1.bf16.msra.mxu0 0
      %5095 = vmatprep.subr.bf16.mxu0 0
      %5096 = vmatpush1.bf16.msra.mxu0 0
      %5097 = vmatprep.subr.bf16.mxu0 0
      %5098 = vmatpush1.bf16.msra.mxu0 0
      %5099 = vmatprep.subr.bf16.mxu0 0
      %5100 = vmatpush1.bf16.msra.mxu0 0
      %5101 = vmatprep.subr.bf16.mxu0 0
      %5102 = vmatpush1.bf16.msra.mxu0 0
      %5103 = vmatprep.subr.bf16.mxu0 0
      %5104 = vmatpush1.bf16.msra.mxu0 0
      %5105 = vmatprep.subr.bf16.mxu0 0
      %5106 = vmatpush1.bf16.msra.mxu0 0
      %5107 = vmatprep.subr.bf16.mxu0 0
      %5108 = vmatpush1.bf16.msra.mxu0 0
      %5109 = vmatprep.subr.bf16.mxu0 0
      %5110 = vmatpush1.bf16.msra.mxu0 0
      %5111 = vmatprep.subr.bf16.mxu0 0
      %5112 = vmatpush1.bf16.msra.mxu0 0
      %5113 = vmatprep.subr.bf16.mxu0 0
      %5114 = vmatpush1.bf16.msra.mxu0 0
      %5115 = vmatprep.subr.bf16.mxu0 0
      %5116 = vmatpush1.bf16.msra.mxu0 0
      %5117 = vmatprep.subr.bf16.mxu0 0
      %5118 = vmatpush1.bf16.msra.mxu0 0
      %5119 = vmatprep.mubr.bf16.mxu0 0
      %5120 = vmatmul.mubr.bf16.gmra.mrb[0].mxu0 %v5073
      %v5121 = vpop.f32.mrb[0].mxu0
      %v5122 = vadd.f32 0.0, %v5121
      %v5123 = vpop.f32.mrb[0].mxu0
      %v5124 = vpop.f32.mrb[0].mxu0
      %v5125 = vadd.f32 0.0, %v5124
      %v5126 = vpop.f32.mrb[0].mxu0
      %5127 = vmatprep.mubr.bf16.mxu0 0
      %5128 = vmatmul.mubr.bf16.gmra.mrb[0].mxu0 %v5076
      %v5129 = vpop.f32.mrb[0].mxu0
      %v5130 = vadd.f32 0.0, %v5129
      %v5131 = vpop.f32.mrb[0].mxu0
      %v5132 = vpop.f32.mrb[0].mxu0
      %v5133 = vadd.f32 0.0, %v5132
      %v5134 = vpop.f32.mrb[0].mxu0
      %5135 = vmatprep.mubr.bf16.mxu0 0
      %5136 = vmatmul.mubr.bf16.gmra.mrb[0].mxu0 %v5079
      %v5137 = vpop.f32.mrb[0].mxu0
      %v5138 = vadd.f32 0.0, %v5137
      %v5139 = vpop.f32.mrb[0].mxu0
      %v5140 = vpop.f32.mrb[0].mxu0
      %v5141 = vadd.f32 0.0, %v5140
      %v5142 = vpop.f32.mrb[0].mxu0
      %5143 = vmatprep.mubr.bf16.mxu0 0
      %5144 = vmatmul.mubr.bf16.gmra.mrb[0].mxu0 %v5082
      %v5145 = vpop.f32.mrb[0].mxu0
      %v5146 = vadd.f32 0.0, %v5145
      %v5147 = vpop.f32.mrb[0].mxu0
      %v5148 = vpop.f32.mrb[0].mxu0
      %v5149 = vadd.f32 0.0, %v5148
      %v5150 = vpop.f32.mrb[0].mxu0
      %5151 = vdwg.mxu0
      %v5152 = vadd.f32 %v5042, %v5122
      %v5153 = vadd.f32 %v5043, %v5125
      %v5154 = vadd.f32 %v5044, %v5130
      %v5155 = vadd.f32 %v5045, %v5133
      %v5156 = vadd.f32 %v5046, %v5138
      %v5157 = vadd.f32 %v5047, %v5141
      %v5158 = vadd.f32 %v5048, %v5146
      %v5159 = vadd.f32 %v5049, %v5149
      %s5160 = scalar_lea.vmem %s2, 74
      %v5161 = vld [vmem:[%s5160] sm:$0x3]
      %v5170 = vunpack.c.l.b16 %v1032
      %v5171 = vunpack.c.l.b16 %v1033
      %v5172 = vunpack.c.l.b16 %v1034
      %v5173 = vunpack.c.l.b16 %v1035
      %v5174 = vunpack.c.l.b16 %v1036
      %v5175 = vunpack.c.l.b16 %v1037
      %v5176 = vunpack.c.l.b16 %v1038
      %v5177 = vunpack.c.l.b16 %v1039
      %v5178 = vpack.c.b16 %v5171, %v5170
      %v5179 = vpack.c.b16 %v5173, %v5172
      %v5180 = vpack.c.b16 %v5175, %v5174
      %v5181 = vpack.c.b16 %v5177, %v5176
      %v5183 = vsel %vm769, %v5178, 0
      %v5186 = vsel %vm769, %v5179, 0
      %v5189 = vsel %vm769, %v5180, 0
      %v5192 = vsel %vm769, %v5181, 0
      %v5195 = vsel %vm782, %v5161, 0
      %5197 = vmatprep.subr.bf16.mxu0 0
      %5198 = vmatpush1.bf16.msra.mxu0 %v5195
      %5199 = vmatprep.subr.bf16.mxu0 0
      %5200 = vmatpush1.bf16.msra.mxu0 0
      %5201 = vmatprep.subr.bf16.mxu0 0
      %5202 = vmatpush1.bf16.msra.mxu0 0
      %5203 = vmatprep.subr.bf16.mxu0 0
      %5204 = vmatpush1.bf16.msra.mxu0 0
      %5205 = vmatprep.subr.bf16.mxu0 0
      %5206 = vmatpush1.bf16.msra.mxu0 0
      %5207 = vmatprep.subr.bf16.mxu0 0
      %5208 = vmatpush1.bf16.msra.mxu0 0
      %5209 = vmatprep.subr.bf16.mxu0 0
      %5210 = vmatpush1.bf16.msra.mxu0 0
      %5211 = vmatprep.subr.bf16.mxu0 0
      %5212 = vmatpush1.bf16.msra.mxu0 0
      %5213 = vmatprep.subr.bf16.mxu0 0
      %5214 = vmatpush1.bf16.msra.mxu0 0
      %5215 = vmatprep.subr.bf16.mxu0 0
      %5216 = vmatpush1.bf16.msra.mxu0 0
      %5217 = vmatprep.subr.bf16.mxu0 0
      %5218 = vmatpush1.bf16.msra.mxu0 0
      %5219 = vmatprep.subr.bf16.mxu0 0
      %5220 = vmatpush1.bf16.msra.mxu0 0
      %5221 = vmatprep.subr.bf16.mxu0 0
      %5222 = vmatpush1.bf16.msra.mxu0 0
      %5223 = vmatprep.subr.bf16.mxu0 0
      %5224 = vmatpush1.bf16.msra.mxu0 0
      %5225 = vmatprep.subr.bf16.mxu0 0
      %5226 = vmatpush1.bf16.msra.mxu0 0
      %5227 = vmatprep.subr.bf16.mxu0 0
      %5228 = vmatpush1.bf16.msra.mxu0 0
      %5229 = vmatprep.mubr.bf16.mxu0 0
      %5230 = vmatmul.mubr.bf16.gmra.mrb[0].mxu0 %v5183
      %v5231 = vpop.f32.mrb[0].mxu0
      %v5232 = vadd.f32 0.0, %v5231
      %v5233 = vpop.f32.mrb[0].mxu0
      %v5234 = vpop.f32.mrb[0].mxu0
      %v5235 = vadd.f32 0.0, %v5234
      %v5236 = vpop.f32.mrb[0].mxu0
      %5237 = vmatprep.mubr.bf16.mxu0 0
      %5238 = vmatmul.mubr.bf16.gmra.mrb[0].mxu0 %v5186
      %v5239 = vpop.f32.mrb[0].mxu0
      %v5240 = vadd.f32 0.0, %v5239
      %v5241 = vpop.f32.mrb[0].mxu0
      %v5242 = vpop.f32.mrb[0].mxu0
      %v5243 = vadd.f32 0.0, %v5242
      %v5244 = vpop.f32.mrb[0].mxu0
      %5245 = vmatprep.mubr.bf16.mxu0 0
      %5246 = vmatmul.mubr.bf16.gmra.mrb[0].mxu0 %v5189
      %v5247 = vpop.f32.mrb[0].mxu0
      %v5248 = vadd.f32 0.0, %v5247
      %v5249 = vpop.f32.mrb[0].mxu0
      %v5250 = vpop.f32.mrb[0].mxu0
      %v5251 = vadd.f32 0.0, %v5250
      %v5252 = vpop.f32.mrb[0].mxu0
      %5253 = vmatprep.mubr.bf16.mxu0 0
      %5254 = vmatmul.mubr.bf16.gmra.mrb[0].mxu0 %v5192
      %v5255 = vpop.f32.mrb[0].mxu0
      %v5256 = vadd.f32 0.0, %v5255
      %v5257 = vpop.f32.mrb[0].mxu0
      %v5258 = vpop.f32.mrb[0].mxu0
      %v5259 = vadd.f32 0.0, %v5258
      %v5260 = vpop.f32.mrb[0].mxu0
      %5261 = vdwg.mxu0
      %v5262 = vadd.f32 %v5152, %v5232
      %v5263 = vadd.f32 %v5153, %v5235
      %v5264 = vadd.f32 %v5154, %v5240
      %v5265 = vadd.f32 %v5155, %v5243
      %v5266 = vadd.f32 %v5156, %v5248
      %v5267 = vadd.f32 %v5157, %v5251
      %v5268 = vadd.f32 %v5158, %v5256
      %v5269 = vadd.f32 %v5159, %v5259
      %s5270 = scalar_lea.vmem %s2, 80
      %v5271 = vld [vmem:[%s5270] sm:$0x3]
      %v5273 = vsel %vm782, %v5271, 0
      %5275 = vmatprep.subr.bf16.mxu0 0
      %5276 = vmatpush1.bf16.msra.mxu0 %v5273
      %5277 = vmatprep.subr.bf16.mxu0 0
      %5278 = vmatpush1.bf16.msra.mxu0 0
      %5279 = vmatprep.subr.bf16.mxu0 0
      %5280 = vmatpush1.bf16.msra.mxu0 0
      %5281 = vmatprep.subr.bf16.mxu0 0
      %5282 = vmatpush1.bf16.msra.mxu0 0
      %5283 = vmatprep.subr.bf16.mxu0 0
      %5284 = vmatpush1.bf16.msra.mxu0 0
      %5285 = vmatprep.subr.bf16.mxu0 0
      %5286 = vmatpush1.bf16.msra.mxu0 0
      %5287 = vmatprep.subr.bf16.mxu0 0
      %5288 = vmatpush1.bf16.msra.mxu0 0
      %5289 = vmatprep.subr.bf16.mxu0 0
      %5290 = vmatpush1.bf16.msra.mxu0 0
      %5291 = vmatprep.subr.bf16.mxu0 0
      %5292 = vmatpush1.bf16.msra.mxu0 0
      %5293 = vmatprep.subr.bf16.mxu0 0
      %5294 = vmatpush1.bf16.msra.mxu0 0
      %5295 = vmatprep.subr.bf16.mxu0 0
      %5296 = vmatpush1.bf16.msra.mxu0 0
      %5297 = vmatprep.subr.bf16.mxu0 0
      %5298 = vmatpush1.bf16.msra.mxu0 0
      %5299 = vmatprep.subr.bf16.mxu0 0
      %5300 = vmatpush1.bf16.msra.mxu0 0
      %5301 = vmatprep.subr.bf16.mxu0 0
      %5302 = vmatpush1.bf16.msra.mxu0 0
      %5303 = vmatprep.subr.bf16.mxu0 0
      %5304 = vmatpush1.bf16.msra.mxu0 0
      %5305 = vmatprep.subr.bf16.mxu0 0
      %5306 = vmatpush1.bf16.msra.mxu0 0
      %5307 = vmatprep.mubr.bf16.mxu0 0
      %5308 = vmatmul.mubr.bf16.gmra.mrb[0].mxu0 %v1181
      %v5309 = vpop.f32.mrb[0].mxu0
      %v5310 = vadd.f32 0.0, %v5309
      %v5311 = vpop.f32.mrb[0].mxu0
      %v5312 = vpop.f32.mrb[0].mxu0
      %v5313 = vadd.f32 0.0, %v5312
      %v5314 = vpop.f32.mrb[0].mxu0
      %5315 = vmatprep.mubr.bf16.mxu0 0
      %5316 = vmatmul.mubr.bf16.gmra.mrb[0].mxu0 %v1184
      %v5317 = vpop.f32.mrb[0].mxu0
      %v5318 = vadd.f32 0.0, %v5317
      %v5319 = vpop.f32.mrb[0].mxu0
      %v5320 = vpop.f32.mrb[0].mxu0
      %v5321 = vadd.f32 0.0, %v5320
      %v5322 = vpop.f32.mrb[0].mxu0
      %5323 = vmatprep.mubr.bf16.mxu0 0
      %5324 = vmatmul.mubr.bf16.gmra.mrb[0].mxu0 %v1187
      %v5325 = vpop.f32.mrb[0].mxu0
      %v5326 = vadd.f32 0.0, %v5325
      %v5327 = vpop.f32.mrb[0].mxu0
      %v5328 = vpop.f32.mrb[0].mxu0
      %v5329 = vadd.f32 0.0, %v5328
      %v5330 = vpop.f32.mrb[0].mxu0
      %5331 = vmatprep.mubr.bf16.mxu0 0
      %5332 = vmatmul.mubr.bf16.gmra.mrb[0].mxu0 %v1190
      %v5333 = vpop.f32.mrb[0].mxu0
      %v5334 = vadd.f32 0.0, %v5333
      %v5335 = vpop.f32.mrb[0].mxu0
      %v5336 = vpop.f32.mrb[0].mxu0
      %v5337 = vadd.f32 0.0, %v5336
      %v5338 = vpop.f32.mrb[0].mxu0
      %5339 = vdwg.mxu0
      %v5340 = vadd.f32 %v5262, %v5310
      %v5341 = vadd.f32 %v5263, %v5313
      %v5342 = vadd.f32 %v5264, %v5318
      %v5343 = vadd.f32 %v5265, %v5321
      %v5344 = vadd.f32 %v5266, %v5326
      %v5345 = vadd.f32 %v5267, %v5329
      %v5346 = vadd.f32 %v5268, %v5334
      %v5347 = vadd.f32 %v5269, %v5337
      %s5348 = scalar_lea.vmem %s2, 86
      %v5349 = vld [vmem:[%s5348] sm:$0x3]
      %v5358 = vunpack.c.l.b16 %v1054
      %v5359 = vunpack.c.l.b16 %v1055
      %v5360 = vunpack.c.l.b16 %v1056
      %v5361 = vunpack.c.l.b16 %v1057
      %v5362 = vunpack.c.l.b16 %v1058
      %v5363 = vunpack.c.l.b16 %v1059
      %v5364 = vunpack.c.l.b16 %v1060
      %v5365 = vunpack.c.l.b16 %v1061
      %v5366 = vpack.c.b16 %v5359, %v5358
      %v5367 = vpack.c.b16 %v5361, %v5360
      %v5368 = vpack.c.b16 %v5363, %v5362
      %v5369 = vpack.c.b16 %v5365, %v5364
      %v5371 = vsel %vm769, %v5366, 0
      %v5374 = vsel %vm769, %v5367, 0
      %v5377 = vsel %vm769, %v5368, 0
      %v5380 = vsel %vm769, %v5369, 0
      %v5383 = vsel %vm782, %v5349, 0
      %5385 = vmatprep.subr.bf16.mxu0 0
      %5386 = vmatpush1.bf16.msra.mxu0 %v5383
      %5387 = vmatprep.subr.bf16.mxu0 0
      %5388 = vmatpush1.bf16.msra.mxu0 0
      %5389 = vmatprep.subr.bf16.mxu0 0
      %5390 = vmatpush1.bf16.msra.mxu0 0
      %5391 = vmatprep.subr.bf16.mxu0 0
      %5392 = vmatpush1.bf16.msra.mxu0 0
      %5393 = vmatprep.subr.bf16.mxu0 0
      %5394 = vmatpush1.bf16.msra.mxu0 0
      %5395 = vmatprep.subr.bf16.mxu0 0
      %5396 = vmatpush1.bf16.msra.mxu0 0
      %5397 = vmatprep.subr.bf16.mxu0 0
      %5398 = vmatpush1.bf16.msra.mxu0 0
      %5399 = vmatprep.subr.bf16.mxu0 0
      %5400 = vmatpush1.bf16.msra.mxu0 0
      %5401 = vmatprep.subr.bf16.mxu0 0
      %5402 = vmatpush1.bf16.msra.mxu0 0
      %5403 = vmatprep.subr.bf16.mxu0 0
      %5404 = vmatpush1.bf16.msra.mxu0 0
      %5405 = vmatprep.subr.bf16.mxu0 0
      %5406 = vmatpush1.bf16.msra.mxu0 0
      %5407 = vmatprep.subr.bf16.mxu0 0
      %5408 = vmatpush1.bf16.msra.mxu0 0
      %5409 = vmatprep.subr.bf16.mxu0 0
      %5410 = vmatpush1.bf16.msra.mxu0 0
      %5411 = vmatprep.subr.bf16.mxu0 0
      %5412 = vmatpush1.bf16.msra.mxu0 0
      %5413 = vmatprep.subr.bf16.mxu0 0
      %5414 = vmatpush1.bf16.msra.mxu0 0
      %5415 = vmatprep.subr.bf16.mxu0 0
      %5416 = vmatpush1.bf16.msra.mxu0 0
      %5417 = vmatprep.mubr.bf16.mxu0 0
      %5418 = vmatmul.mubr.bf16.gmra.mrb[0].mxu0 %v5371
      %v5419 = vpop.f32.mrb[0].mxu0
      %v5420 = vadd.f32 0.0, %v5419
      %v5421 = vpop.f32.mrb[0].mxu0
      %v5422 = vpop.f32.mrb[0].mxu0
      %v5423 = vadd.f32 0.0, %v5422
      %v5424 = vpop.f32.mrb[0].mxu0
      %5425 = vmatprep.mubr.bf16.mxu0 0
      %5426 = vmatmul.mubr.bf16.gmra.mrb[0].mxu0 %v5374
      %v5427 = vpop.f32.mrb[0].mxu0
      %v5428 = vadd.f32 0.0, %v5427
      %v5429 = vpop.f32.mrb[0].mxu0
      %v5430 = vpop.f32.mrb[0].mxu0
      %v5431 = vadd.f32 0.0, %v5430
      %v5432 = vpop.f32.mrb[0].mxu0
      %5433 = vmatprep.mubr.bf16.mxu0 0
      %5434 = vmatmul.mubr.bf16.gmra.mrb[0].mxu0 %v5377
      %v5435 = vpop.f32.mrb[0].mxu0
      %v5436 = vadd.f32 0.0, %v5435
      %v5437 = vpop.f32.mrb[0].mxu0
      %v5438 = vpop.f32.mrb[0].mxu0
      %v5439 = vadd.f32 0.0, %v5438
      %v5440 = vpop.f32.mrb[0].mxu0
      %5441 = vmatprep.mubr.bf16.mxu0 0
      %5442 = vmatmul.mubr.bf16.gmra.mrb[0].mxu0 %v5380
      %v5443 = vpop.f32.mrb[0].mxu0
      %v5444 = vadd.f32 0.0, %v5443
      %v5445 = vpop.f32.mrb[0].mxu0
      %v5446 = vpop.f32.mrb[0].mxu0
      %v5447 = vadd.f32 0.0, %v5446
      %v5448 = vpop.f32.mrb[0].mxu0
      %5449 = vdwg.mxu0
      %v5450 = vadd.f32 %v5340, %v5420
      %v5451 = vadd.f32 %v5341, %v5423
      %v5452 = vadd.f32 %v5342, %v5428
      %v5453 = vadd.f32 %v5343, %v5431
      %v5454 = vadd.f32 %v5344, %v5436
      %v5455 = vadd.f32 %v5345, %v5439
      %v5456 = vadd.f32 %v5346, %v5444
      %v5457 = vadd.f32 %v5347, %v5447
      %v5458 = vld [vmem:[#allocation2 + $0x10] sm:$0xf]
      %v5459 = vld [vmem:[#allocation2 + $0x24] sm:$0xf]
      %v5460 = vld [vmem:[#allocation2 + $0x38] sm:$0xf]
      %v5461 = vld [vmem:[#allocation2 + $0x4c] sm:$0xf]
      %v5462 = vld [vmem:[#allocation2 + $0x60] sm:$0xf]
      %v5463 = vld [vmem:[#allocation2 + $0x74] sm:$0xf]
      %v5464 = vld [vmem:[#allocation2 + $0x88] sm:$0xf]
      %v5465 = vld [vmem:[#allocation2 + $0x9c] sm:$0xf]
      %v5466 = vld [vmem:[#allocation2 + $0x150] sm:$0xf]
      %v5467 = vld [vmem:[#allocation2 + $0x164] sm:$0xf]
      %v5468 = vld [vmem:[#allocation2 + $0x178] sm:$0xf]
      %v5469 = vld [vmem:[#allocation2 + $0x18c] sm:$0xf]
      %v5470 = vld [vmem:[#allocation2 + $0x1a0] sm:$0xf]
      %v5471 = vld [vmem:[#allocation2 + $0x1b4] sm:$0xf]
      %v5472 = vld [vmem:[#allocation2 + $0x1c8] sm:$0xf]
      %v5473 = vld [vmem:[#allocation2 + $0x1dc] sm:$0xf]
      %v5474 = vld [vmem:[#allocation2 + $0x290] sm:$0xf]
      %v5475 = vld [vmem:[#allocation2 + $0x2a4] sm:$0xf]
      %v5476 = vld [vmem:[#allocation2 + $0x2b8] sm:$0xf]
      %v5477 = vld [vmem:[#allocation2 + $0x2cc] sm:$0xf]
      %v5478 = vld [vmem:[#allocation2 + $0x2e0] sm:$0xf]
      %v5479 = vld [vmem:[#allocation2 + $0x2f4] sm:$0xf]
      %v5480 = vld [vmem:[#allocation2 + $0x308] sm:$0xf]
      %v5481 = vld [vmem:[#allocation2 + $0x31c] sm:$0xf]
      %s5482 = scalar_lea.vmem %s2, 76
      %v5483 = vld [vmem:[%s5482] sm:$0x3]
      %v5492 = vunpack.c.l.b16 %v5458
      %v5493 = vunpack.c.l.b16 %v5459
      %v5494 = vunpack.c.l.b16 %v5460
      %v5495 = vunpack.c.l.b16 %v5461
      %v5496 = vunpack.c.l.b16 %v5462
      %v5497 = vunpack.c.l.b16 %v5463
      %v5498 = vunpack.c.l.b16 %v5464
      %v5499 = vunpack.c.l.b16 %v5465
      %v5500 = vpack.c.b16 %v5493, %v5492
      %v5501 = vpack.c.b16 %v5495, %v5494
      %v5502 = vpack.c.b16 %v5497, %v5496
      %v5503 = vpack.c.b16 %v5499, %v5498
      %v5505 = vsel %vm769, %v5500, 0
      %v5508 = vsel %vm769, %v5501, 0
      %v5511 = vsel %vm769, %v5502, 0
      %v5514 = vsel %vm769, %v5503, 0
      %v5517 = vsel %vm782, %v5483, 0
      %5519 = vmatprep.subr.bf16.mxu0 0
      %5520 = vmatpush1.bf16.msra.mxu0 %v5517
      %5521 = vmatprep.subr.bf16.mxu0 0
      %5522 = vmatpush1.bf16.msra.mxu0 0
      %5523 = vmatprep.subr.bf16.mxu0 0
      %5524 = vmatpush1.bf16.msra.mxu0 0
      %5525 = vmatprep.subr.bf16.mxu0 0
      %5526 = vmatpush1.bf16.msra.mxu0 0
      %5527 = vmatprep.subr.bf16.mxu0 0
      %5528 = vmatpush1.bf16.msra.mxu0 0
      %5529 = vmatprep.subr.bf16.mxu0 0
      %5530 = vmatpush1.bf16.msra.mxu0 0
      %5531 = vmatprep.subr.bf16.mxu0 0
      %5532 = vmatpush1.bf16.msra.mxu0 0
      %5533 = vmatprep.subr.bf16.mxu0 0
      %5534 = vmatpush1.bf16.msra.mxu0 0
      %5535 = vmatprep.subr.bf16.mxu0 0
      %5536 = vmatpush1.bf16.msra.mxu0 0
      %5537 = vmatprep.subr.bf16.mxu0 0
      %5538 = vmatpush1.bf16.msra.mxu0 0
      %5539 = vmatprep.subr.bf16.mxu0 0
      %5540 = vmatpush1.bf16.msra.mxu0 0
      %5541 = vmatprep.subr.bf16.mxu0 0
      %5542 = vmatpush1.bf16.msra.mxu0 0
      %5543 = vmatprep.subr.bf16.mxu0 0
      %5544 = vmatpush1.bf16.msra.mxu0 0
      %5545 = vmatprep.subr.bf16.mxu0 0
      %5546 = vmatpush1.bf16.msra.mxu0 0
      %5547 = vmatprep.subr.bf16.mxu0 0
      %5548 = vmatpush1.bf16.msra.mxu0 0
      %5549 = vmatprep.subr.bf16.mxu0 0
      %5550 = vmatpush1.bf16.msra.mxu0 0
      %5551 = vmatprep.mubr.bf16.mxu0 0
      %5552 = vmatmul.mubr.bf16.gmra.mrb[0].mxu0 %v5505
      %v5553 = vpop.f32.mrb[0].mxu0
      %v5554 = vadd.f32 0.0, %v5553
      %v5555 = vpop.f32.mrb[0].mxu0
      %v5556 = vpop.f32.mrb[0].mxu0
      %v5557 = vadd.f32 0.0, %v5556
      %v5558 = vpop.f32.mrb[0].mxu0
      %5559 = vmatprep.mubr.bf16.mxu0 0
      %5560 = vmatmul.mubr.bf16.gmra.mrb[0].mxu0 %v5508
      %v5561 = vpop.f32.mrb[0].mxu0
      %v5562 = vadd.f32 0.0, %v5561
      %v5563 = vpop.f32.mrb[0].mxu0
      %v5564 = vpop.f32.mrb[0].mxu0
      %v5565 = vadd.f32 0.0, %v5564
      %v5566 = vpop.f32.mrb[0].mxu0
      %5567 = vmatprep.mubr.bf16.mxu0 0
      %5568 = vmatmul.mubr.bf16.gmra.mrb[0].mxu0 %v5511
      %v5569 = vpop.f32.mrb[0].mxu0
      %v5570 = vadd.f32 0.0, %v5569
      %v5571 = vpop.f32.mrb[0].mxu0
      %v5572 = vpop.f32.mrb[0].mxu0
      %v5573 = vadd.f32 0.0, %v5572
      %v5574 = vpop.f32.mrb[0].mxu0
      %5575 = vmatprep.mubr.bf16.mxu0 0
      %5576 = vmatmul.mubr.bf16.gmra.mrb[0].mxu0 %v5514
      %v5577 = vpop.f32.mrb[0].mxu0
      %v5578 = vadd.f32 0.0, %v5577
      %v5579 = vpop.f32.mrb[0].mxu0
      %v5580 = vpop.f32.mrb[0].mxu0
      %v5581 = vadd.f32 0.0, %v5580
      %v5582 = vpop.f32.mrb[0].mxu0
      %5583 = vdwg.mxu0
      %v5584 = vadd.f32 %v5450, %v5554
      %v5585 = vadd.f32 %v5451, %v5557
      %v5586 = vadd.f32 %v5452, %v5562
      %v5587 = vadd.f32 %v5453, %v5565
      %v5588 = vadd.f32 %v5454, %v5570
      %v5589 = vadd.f32 %v5455, %v5573
      %v5590 = vadd.f32 %v5456, %v5578
      %v5591 = vadd.f32 %v5457, %v5581
      %s5592 = scalar_lea.vmem %s2, 82
      %v5593 = vld [vmem:[%s5592] sm:$0x3]
      %v5602 = vunpack.c.l.b16 %v5466
      %v5603 = vunpack.c.l.b16 %v5467
      %v5604 = vunpack.c.l.b16 %v5468
      %v5605 = vunpack.c.l.b16 %v5469
      %v5606 = vunpack.c.l.b16 %v5470
      %v5607 = vunpack.c.l.b16 %v5471
      %v5608 = vunpack.c.l.b16 %v5472
      %v5609 = vunpack.c.l.b16 %v5473
      %v5610 = vpack.c.b16 %v5603, %v5602
      %v5611 = vpack.c.b16 %v5605, %v5604
      %v5612 = vpack.c.b16 %v5607, %v5606
      %v5613 = vpack.c.b16 %v5609, %v5608
      %v5615 = vsel %vm769, %v5610, 0
      %v5618 = vsel %vm769, %v5611, 0
      %v5621 = vsel %vm769, %v5612, 0
      %v5624 = vsel %vm769, %v5613, 0
      %v5627 = vsel %vm782, %v5593, 0
      %5629 = vmatprep.subr.bf16.mxu0 0
      %5630 = vmatpush1.bf16.msra.mxu0 %v5627
      %5631 = vmatprep.subr.bf16.mxu0 0
      %5632 = vmatpush1.bf16.msra.mxu0 0
      %5633 = vmatprep.subr.bf16.mxu0 0
      %5634 = vmatpush1.bf16.msra.mxu0 0
      %5635 = vmatprep.subr.bf16.mxu0 0
      %5636 = vmatpush1.bf16.msra.mxu0 0
      %5637 = vmatprep.subr.bf16.mxu0 0
      %5638 = vmatpush1.bf16.msra.mxu0 0
      %5639 = vmatprep.subr.bf16.mxu0 0
      %5640 = vmatpush1.bf16.msra.mxu0 0
      %5641 = vmatprep.subr.bf16.mxu0 0
      %5642 = vmatpush1.bf16.msra.mxu0 0
      %5643 = vmatprep.subr.bf16.mxu0 0
      %5644 = vmatpush1.bf16.msra.mxu0 0
      %5645 = vmatprep.subr.bf16.mxu0 0
      %5646 = vmatpush1.bf16.msra.mxu0 0
      %5647 = vmatprep.subr.bf16.mxu0 0
      %5648 = vmatpush1.bf16.msra.mxu0 0
      %5649 = vmatprep.subr.bf16.mxu0 0
      %5650 = vmatpush1.bf16.msra.mxu0 0
      %5651 = vmatprep.subr.bf16.mxu0 0
      %5652 = vmatpush1.bf16.msra.mxu0 0
      %5653 = vmatprep.subr.bf16.mxu0 0
      %5654 = vmatpush1.bf16.msra.mxu0 0
      %5655 = vmatprep.subr.bf16.mxu0 0
      %5656 = vmatpush1.bf16.msra.mxu0 0
      %5657 = vmatprep.subr.bf16.mxu0 0
      %5658 = vmatpush1.bf16.msra.mxu0 0
      %5659 = vmatprep.subr.bf16.mxu0 0
      %5660 = vmatpush1.bf16.msra.mxu0 0
      %5661 = vmatprep.mubr.bf16.mxu0 0
      %5662 = vmatmul.mubr.bf16.gmra.mrb[0].mxu0 %v5615
      %v5663 = vpop.f32.mrb[0].mxu0
      %v5664 = vadd.f32 0.0, %v5663
      %v5665 = vpop.f32.mrb[0].mxu0
      %v5666 = vpop.f32.mrb[0].mxu0
      %v5667 = vadd.f32 0.0, %v5666
      %v5668 = vpop.f32.mrb[0].mxu0
      %5669 = vmatprep.mubr.bf16.mxu0 0
      %5670 = vmatmul.mubr.bf16.gmra.mrb[0].mxu0 %v5618
      %v5671 = vpop.f32.mrb[0].mxu0
      %v5672 = vadd.f32 0.0, %v5671
      %v5673 = vpop.f32.mrb[0].mxu0
      %v5674 = vpop.f32.mrb[0].mxu0
      %v5675 = vadd.f32 0.0, %v5674
      %v5676 = vpop.f32.mrb[0].mxu0
      %5677 = vmatprep.mubr.bf16.mxu0 0
      %5678 = vmatmul.mubr.bf16.gmra.mrb[0].mxu0 %v5621
      %v5679 = vpop.f32.mrb[0].mxu0
      %v5680 = vadd.f32 0.0, %v5679
      %v5681 = vpop.f32.mrb[0].mxu0
      %v5682 = vpop.f32.mrb[0].mxu0
      %v5683 = vadd.f32 0.0, %v5682
      %v5684 = vpop.f32.mrb[0].mxu0
      %5685 = vmatprep.mubr.bf16.mxu0 0
      %5686 = vmatmul.mubr.bf16.gmra.mrb[0].mxu0 %v5624
      %v5687 = vpop.f32.mrb[0].mxu0
      %v5688 = vadd.f32 0.0, %v5687
      %v5689 = vpop.f32.mrb[0].mxu0
      %v5690 = vpop.f32.mrb[0].mxu0
      %v5691 = vadd.f32 0.0, %v5690
      %v5692 = vpop.f32.mrb[0].mxu0
      %5693 = vdwg.mxu0
      %v5694 = vadd.f32 %v5584, %v5664
      %v5695 = vadd.f32 %v5585, %v5667
      %v5696 = vadd.f32 %v5586, %v5672
      %v5697 = vadd.f32 %v5587, %v5675
      %v5698 = vadd.f32 %v5588, %v5680
      %v5699 = vadd.f32 %v5589, %v5683
      %v5700 = vadd.f32 %v5590, %v5688
      %v5701 = vadd.f32 %v5591, %v5691
      %s5702 = scalar_lea.vmem %s2, 88
      %v5703 = vld [vmem:[%s5702] sm:$0x3]
      %v5712 = vunpack.c.l.b16 %v5474
      %v5713 = vunpack.c.l.b16 %v5475
      %v5714 = vunpack.c.l.b16 %v5476
      %v5715 = vunpack.c.l.b16 %v5477
      %v5716 = vunpack.c.l.b16 %v5478
      %v5717 = vunpack.c.l.b16 %v5479
      %v5718 = vunpack.c.l.b16 %v5480
      %v5719 = vunpack.c.l.b16 %v5481
      %v5720 = vpack.c.b16 %v5713, %v5712
      %v5721 = vpack.c.b16 %v5715, %v5714
      %v5722 = vpack.c.b16 %v5717, %v5716
      %v5723 = vpack.c.b16 %v5719, %v5718
      %v5725 = vsel %vm769, %v5720, 0
      %v5728 = vsel %vm769, %v5721, 0
      %v5731 = vsel %vm769, %v5722, 0
      %v5734 = vsel %vm769, %v5723, 0
      %v5737 = vsel %vm782, %v5703, 0
      %5739 = vmatprep.subr.bf16.mxu0 0
      %5740 = vmatpush1.bf16.msra.mxu0 %v5737
      %5741 = vmatprep.subr.bf16.mxu0 0
      %5742 = vmatpush1.bf16.msra.mxu0 0
      %5743 = vmatprep.subr.bf16.mxu0 0
      %5744 = vmatpush1.bf16.msra.mxu0 0
      %5745 = vmatprep.subr.bf16.mxu0 0
      %5746 = vmatpush1.bf16.msra.mxu0 0
      %5747 = vmatprep.subr.bf16.mxu0 0
      %5748 = vmatpush1.bf16.msra.mxu0 0
      %5749 = vmatprep.subr.bf16.mxu0 0
      %5750 = vmatpush1.bf16.msra.mxu0 0
      %5751 = vmatprep.subr.bf16.mxu0 0
      %5752 = vmatpush1.bf16.msra.mxu0 0
      %5753 = vmatprep.subr.bf16.mxu0 0
      %5754 = vmatpush1.bf16.msra.mxu0 0
      %5755 = vmatprep.subr.bf16.mxu0 0
      %5756 = vmatpush1.bf16.msra.mxu0 0
      %5757 = vmatprep.subr.bf16.mxu0 0
      %5758 = vmatpush1.bf16.msra.mxu0 0
      %5759 = vmatprep.subr.bf16.mxu0 0
      %5760 = vmatpush1.bf16.msra.mxu0 0
      %5761 = vmatprep.subr.bf16.mxu0 0
      %5762 = vmatpush1.bf16.msra.mxu0 0
      %5763 = vmatprep.subr.bf16.mxu0 0
      %5764 = vmatpush1.bf16.msra.mxu0 0
      %5765 = vmatprep.subr.bf16.mxu0 0
      %5766 = vmatpush1.bf16.msra.mxu0 0
      %5767 = vmatprep.subr.bf16.mxu0 0
      %5768 = vmatpush1.bf16.msra.mxu0 0
      %5769 = vmatprep.subr.bf16.mxu0 0
      %5770 = vmatpush1.bf16.msra.mxu0 0
      %5771 = vmatprep.mubr.bf16.mxu0 0
      %5772 = vmatmul.mubr.bf16.gmra.mrb[0].mxu0 %v5725
      %v5773 = vpop.f32.mrb[0].mxu0
      %v5774 = vadd.f32 0.0, %v5773
      %v5775 = vpop.f32.mrb[0].mxu0
      %v5776 = vpop.f32.mrb[0].mxu0
      %v5777 = vadd.f32 0.0, %v5776
      %v5778 = vpop.f32.mrb[0].mxu0
      %5779 = vmatprep.mubr.bf16.mxu0 0
      %5780 = vmatmul.mubr.bf16.gmra.mrb[0].mxu0 %v5728
      %v5781 = vpop.f32.mrb[0].mxu0
      %v5782 = vadd.f32 0.0, %v5781
      %v5783 = vpop.f32.mrb[0].mxu0
      %v5784 = vpop.f32.mrb[0].mxu0
      %v5785 = vadd.f32 0.0, %v5784
      %v5786 = vpop.f32.mrb[0].mxu0
      %5787 = vmatprep.mubr.bf16.mxu0 0
      %5788 = vmatmul.mubr.bf16.gmra.mrb[0].mxu0 %v5731
      %v5789 = vpop.f32.mrb[0].mxu0
      %v5790 = vadd.f32 0.0, %v5789
      %v5791 = vpop.f32.mrb[0].mxu0
      %v5792 = vpop.f32.mrb[0].mxu0
      %v5793 = vadd.f32 0.0, %v5792
      %v5794 = vpop.f32.mrb[0].mxu0
      %5795 = vmatprep.mubr.bf16.mxu0 0
      %5796 = vmatmul.mubr.bf16.gmra.mrb[0].mxu0 %v5734
      %v5797 = vpop.f32.mrb[0].mxu0
      %v5798 = vadd.f32 0.0, %v5797
      %v5799 = vpop.f32.mrb[0].mxu0
      %v5800 = vpop.f32.mrb[0].mxu0
      %v5801 = vadd.f32 0.0, %v5800
      %v5802 = vpop.f32.mrb[0].mxu0
      %5803 = vdwg.mxu0
      %v5804 = vadd.f32 %v5694, %v5774
      %v5805 = vadd.f32 %v5695, %v5777
      %v5806 = vadd.f32 %v5696, %v5782
      %v5807 = vadd.f32 %v5697, %v5785
      %v5808 = vadd.f32 %v5698, %v5790
      %v5809 = vadd.f32 %v5699, %v5793
      %v5810 = vadd.f32 %v5700, %v5798
      %v5811 = vadd.f32 %v5701, %v5801
      %v5812 = vld [vmem:[%s3] sm:$0x1]
      %v5814 = vlaneseq
      %v5815 = vshrl.u32 %v5814, 7
      %v5816 = vsub.s32 0, %v5815
      %v5817 = vrot.slane %v5812, %v5816
      %v5819 = vadd.f32 %v5804, %v5817
      %v5820 = vadd.f32 %v5805, %v5817
      %v5821 = vadd.f32 %v5806, %v5817
      %v5822 = vadd.f32 %v5807, %v5817
      %v5823 = vadd.f32 %v5808, %v5817
      %v5824 = vadd.f32 %v5809, %v5817
      %v5825 = vadd.f32 %v5810, %v5817
      %v5826 = vadd.f32 %v5811, %v5817
      %vm5827 = vcmp.gt.f32.partialorder %v5819, 0.0
      %vm5828 = vcmp.gt.f32.partialorder %v5820, 0.0
      %vm5829 = vcmp.gt.f32.partialorder %v5821, 0.0
      %vm5830 = vcmp.gt.f32.partialorder %v5822, 0.0
      %vm5831 = vcmp.gt.f32.partialorder %v5823, 0.0
      %vm5832 = vcmp.gt.f32.partialorder %v5824, 0.0
      %vm5833 = vcmp.gt.f32.partialorder %v5825, 0.0
      %vm5834 = vcmp.gt.f32.partialorder %v5826, 0.0
      %v5835 = vld [vmem:[%s4] sm:$0x1]
      %v5837 = vlaneseq
      %v5838 = vshrl.u32 %v5837, 7
      %v5839 = vsub.s32 0, %v5838
      %v5840 = vrot.slane %v5835, %v5839
      %v5842 = vmul.f32 %v5840, %v5819
      %v5843 = vmul.f32 %v5840, %v5820
      %v5844 = vmul.f32 %v5840, %v5821
      %v5845 = vmul.f32 %v5840, %v5822
      %v5846 = vmul.f32 %v5840, %v5823
      %v5847 = vmul.f32 %v5840, %v5824
      %v5848 = vmul.f32 %v5840, %v5825
      %v5849 = vmul.f32 %v5840, %v5826
      %v5850 = vsel %vm5827, %v5819, %v5842
      %v5851 = vsel %vm5828, %v5820, %v5843
      %v5852 = vsel %vm5829, %v5821, %v5844
      %v5853 = vsel %vm5830, %v5822, %v5845
      %v5854 = vsel %vm5831, %v5823, %v5846
      %v5855 = vsel %vm5832, %v5824, %v5847
      %v5856 = vsel %vm5833, %v5825, %v5848
      %v5857 = vsel %vm5834, %v5826, %v5849
      %vm5858 = vcmask 162816
      %5859 = vst.msk [vmem:[%s224] sm:$0xff] %vm5858, %v5850
      %5860 = vst.msk [vmem:[%s224 + $0x8] sm:$0xff] %vm5858, %v5851
      %5861 = vst.msk [vmem:[%s224 + $0x10] sm:$0xff] %vm5858, %v5852
      %5862 = vst.msk [vmem:[%s224 + $0x18] sm:$0xff] %vm5858, %v5853
      %5863 = vst.msk [vmem:[%s224 + $0x20] sm:$0xff] %vm5858, %v5854
      %5864 = vst.msk [vmem:[%s224 + $0x28] sm:$0xff] %vm5858, %v5855
      %5865 = vst.msk [vmem:[%s224 + $0x30] sm:$0xff] %vm5858, %v5856
      %5866 = vst.msk [vmem:[%s224 + $0x38] sm:$0xff] %vm5858, %v5857
      %p5867 = scmp.lt.s32.totalorder %s16, 1
      %s5868 = scalar_select %p5867, %s16, 1
      %s5869 = smul.addr %s5868, 8
      %s5870 = smul.addr %s5869, 8
      %s5871 = scalar_lea.vmem %s5, %s5870
      // Predicated region
      $region41: #{tpu_custom_call.1} parent=39 // pred_check
        %p5872 = pneg %p144
      $region42: #{tpu_custom_call.1} parent=39 // pred_check_branch
        %5874 = sbr.rel (%p5872) target = $region44
      $region43: #{tpu_custom_call.1} parent=39 // pred_region
        _
      $region44: #{tpu_custom_call.1} parent=39 // pred_fallthru
        _
    $region40: #{tpu_custom_call.1} parent=5 // pred_fallthru
      _
    %p5875 = scmp.le.s32.totalorder 2, %s11
    // Predicated region
    $region45: #{tpu_custom_call.1} parent=5 // pred_check
      %p5876 = pneg %p5875
    $region46: #{tpu_custom_call.1} parent=5 // pred_check_branch
      %5878 = sbr.rel (%p5876) target = $region48
    $region47: #{tpu_custom_call.1} parent=5 // pred_region
      %s5879 = ssub.s32 %s11, 2
      // Predicated region
      $region49: #{tpu_custom_call.1} parent=47 // pred_check
        %p5880 = pneg %p150
      $region50: #{tpu_custom_call.1} parent=47 // pred_check_branch
        %5882 = sbr.rel (%p5880) target = $region52
      $region51: #{tpu_custom_call.1} parent=47 // pred_region
        %p5883 = scmp.lt.s32.totalorder %s17, 1
        %s5884 = scalar_select %p5883, %s17, 1
        %s5885 = smul.addr %s5884, 8
        %s5886 = smul.addr %s5885, 8
        %s5887 = scalar_lea.vmem %s5, %s5886
      $region52: #{tpu_custom_call.1} parent=47 // pred_fallthru
        _
    $region48: #{tpu_custom_call.1} parent=5 // pred_fallthru
      _
  $region6: #{tpu_custom_call.1} parent=0 // loop_footer
    %s15 = sadd.s32 1, %s11
  $region7: #{tpu_custom_call.1} parent=0 // loop_footer_branch
    %10 = sbr.rel target = $region3
  $region8: #{tpu_custom_call.1} parent=0 // loop_exit
    _

</llo_original>
